<compile_context>
chip_gen: v7x
topology: tpu7x:2x2x1
jax: 0.10.0
libtpu: 0.0.40
codegen_flags: <defaults>
</compile_context>

<pallas_src>
import functools

import jax
import jax.numpy as jnp
import numpy as np
from jax.experimental import pallas as pl
from jax.experimental.pallas import tpu as pltpu

EPS = 1e-5  # nn.BatchNorm2d default


def bottleneck_kernel(x_ref, w1_ref, g1_ref, b1_ref,
                      w2_ref, g2_ref, b2_ref,
                      w3_ref, g3_ref, b3_ref,
                      out_ref, *, H, W):
    N, Cin, HW = x_ref.shape
    M = N * HW
    inv_m = 1.0 / M

    def bn(y, g_ref, b_ref):
        # PyTorch training-mode BatchNorm over (N, H, W) == the lane axis here,
        # folded into one per-channel FMA.  Single sum/sumsq pass (fine at these
        # magnitudes).  TODO(synk): two-pass / Welford for production scale.
        mu = jnp.sum(y, axis=1, keepdims=True) * inv_m            # (C, 1)
        ex2 = jnp.sum(y * y, axis=1, keepdims=True) * inv_m
        var = ex2 - mu * mu
        scale = g_ref[...] * jax.lax.rsqrt(var + EPS)             # (C, 1)
        shift = b_ref[...] - mu * scale
        return y * scale + shift

    # ---- conv1 (1x1) + bn1 + relu: (C, Cin) @ (Cin, HW) per image, lane-concat ----
    # TODO(synk): replace the Python range(N) loops with a grid axis / fori_loop
    #             when N grows beyond a few images.
    w1 = w1_ref[...]
    o1 = jnp.concatenate(
        [jnp.dot(w1, x_ref[n], preferred_element_type=jnp.float32) for n in range(N)],
        axis=1)                                                   # (C, M), lane-aligned concat
    o1 = jnp.maximum(bn(o1, g1_ref, b1_ref), 0.0)

    # ---- conv2 (3x3, pad=1, stride=1): 9 accumulating matmuls on rolled taps ------
    # Spatial positions live on the lane axis; each off-center tap is a flat lane
    # roll of o1 masked by an image-edge validity mask (wraps across image
    # boundaries always land on masked positions, so no halo is needed).
    col = jax.lax.broadcasted_iota(jnp.int32, (1, M), 1)
    w_idx = col & (W - 1)                       # H, W are powers of two (asserted)
    h_idx = (col >> (W.bit_length() - 1)) & (H - 1)
    ok_up = h_idx >= 1                          # source row h-1 exists
    ok_dn = h_idx <= H - 2                      # source row h+1 exists
    ok_lf = w_idx >= 1
    ok_rt = w_idx <= W - 2

    acc = jnp.dot(w2_ref[4], o1, preferred_element_type=jnp.float32)   # center tap
    t = 0
    for dy in (-1, 0, 1):
        for dx in (-1, 0, 1):
            if dy == 0 and dx == 0:
                t += 1
                continue
            mask = None
            if dy == -1:
                mask = ok_up
            elif dy == 1:
                mask = ok_dn
            if dx == -1:
                mask = ok_lf if mask is None else (mask & ok_lf)
            elif dx == 1:
                mask = ok_rt if mask is None else (mask & ok_rt)
            s = dy * W + dx                                   # flat lane shift of this tap
            tap = pltpu.roll(o1, (-s) % M, axis=1)            # tap[:, p] = o1[:, p + s]
            tap = jnp.where(mask, tap, 0.0)
            acc += jnp.dot(w2_ref[t], tap, preferred_element_type=jnp.float32)
            t += 1
    o2 = jnp.maximum(bn(acc, g2_ref, b2_ref), 0.0)            # (C, M)

    # ---- conv3 (1x1) + bn3; residual add + relu fused into the NCHW store ---------
    o3 = bn(jnp.dot(w3_ref[...], o2, preferred_element_type=jnp.float32),
            g3_ref, b3_ref)                                   # (Cout, M)
    for n in range(N):
        out_ref[n] = jnp.maximum(o3[:, n * HW:(n + 1) * HW] + x_ref[n], 0.0)


def convert_params(w1_oihw, w2_oihw, w3_oihw, g1, b1, g2, b2, g3, b3):
    """PyTorch Conv2d (out, in, kh, kw) weights -> (out, in) matmul layouts (host-side)."""
    C = w2_oihw.shape[0]
    w1 = jnp.asarray(w1_oihw[:, :, 0, 0], jnp.float32)                      # (C, Cin)
    w2 = jnp.transpose(jnp.asarray(w2_oihw, jnp.float32),
                       (2, 3, 0, 1)).reshape(9, C, C)                       # (9, Cout, Cin), t=(dy+1)*3+(dx+1)
    w3 = jnp.asarray(w3_oihw[:, :, 0, 0], jnp.float32)                      # (Cout, C)
    colvec = lambda v: jnp.asarray(v, jnp.float32).reshape(-1, 1)
    return (w1, colvec(g1), colvec(b1),
            w2, colvec(g2), colvec(b2),
            w3, colvec(g3), colvec(b3))


@jax.jit
def bottleneck_forward(x_nchw, params):
    """Fused Bottleneck forward (stride=1, downsample=None).  NCHW f32 in/out."""
    w1, g1, b1, w2, g2, b2, w3, g3, b3 = params
    N, Cin, H, W = x_nchw.shape
    Cout = w3.shape[0]
    assert Cout == Cin, "identity residual requires in_channels == 4*out_channels"
    assert (H & (H - 1)) == 0 and (W & (W - 1)) == 0, \
        "power-of-two H, W assumed for the in-kernel index math"
    # TODO(synk): general H, W needs a different index construction (or host-built masks).

    x_flat = x_nchw.reshape(N, Cin, H * W)     # free reshape (row-major trailing merge)
    kernel = functools.partial(bottleneck_kernel, H=int(H), W=int(W))
    vmem = pl.BlockSpec(memory_space=pltpu.MemorySpace.VMEM)

    out_flat = pl.pallas_call(
        kernel,
        out_shape=jax.ShapeDtypeStruct((N, Cout, H * W), jnp.float32),
        in_specs=[vmem] * 10,
        out_specs=vmem,
        compiler_params=pltpu.CompilerParams(vmem_limit_bytes=32 * 1024 * 1024),
    )(x_flat, w1, g1, b1, w2, g2, b2, w3, g3, b3)
    return out_flat.reshape(N, Cout, H, W)


def bottleneck_reference(x, w1_oihw, w2_oihw, w3_oihw, g1, b1, g2, b2, g3, b3):
    """Pure-JAX NCHW reference (training-mode BN), full precision."""
    dn = ('NCHW', 'OIHW', 'NCHW')
    hi = jax.lax.Precision.HIGHEST

    def bn(y, g, b):
        mu = jnp.mean(y, axis=(0, 2, 3), keepdims=True)
        var = jnp.mean((y - mu) ** 2, axis=(0, 2, 3), keepdims=True)
        return ((y - mu) / jnp.sqrt(var + EPS) * g.reshape(1, -1, 1, 1)
                + b.reshape(1, -1, 1, 1))

    o = jax.lax.conv_general_dilated(x, w1_oihw, (1, 1), 'VALID',
                                     dimension_numbers=dn, precision=hi)
    o = jax.nn.relu(bn(o, g1, b1))
    o = jax.lax.conv_general_dilated(o, w2_oihw, (1, 1), 'SAME',
                                     dimension_numbers=dn, precision=hi)
    o = jax.nn.relu(bn(o, g2, b2))
    o = jax.lax.conv_general_dilated(o, w3_oihw, (1, 1), 'VALID',
                                     dimension_numbers=dn, precision=hi)
    o = bn(o, g3, b3)
    return jax.nn.relu(o + x)


if __name__ == "__main__":
    # Bottleneck(in_channels=256, out_channels=64, stride=1, downsample=None)
    N, H, W = 2, 16, 16
    C = 64                    # out_channels
    Cin = 4 * C               # in_channels == expansion*out_channels (identity residual)

    key = jax.random.PRNGKey(0)
    ks = jax.random.split(key, 10)
    x = jax.random.normal(ks[0], (N, Cin, H, W), jnp.float32)

    # conv weights in PyTorch Conv2d (out, in, kh, kw) layout, bias=False
    w1_oihw = 0.1 * jax.random.normal(ks[1], (C, Cin, 1, 1), jnp.float32)
    w2_oihw = 0.1 * jax.random.normal(ks[2], (C, C, 3, 3), jnp.float32)
    w3_oihw = 0.1 * jax.random.normal(ks[3], (Cin, C, 1, 1), jnp.float32)
    # BatchNorm affine params (non-trivial to exercise the scale/shift path)
    g1 = 1.0 + 0.1 * jax.random.normal(ks[4], (C,), jnp.float32)
    b1 = 0.1 * jax.random.normal(ks[5], (C,), jnp.float32)
    g2 = 1.0 + 0.1 * jax.random.normal(ks[6], (C,), jnp.float32)
    b2 = 0.1 * jax.random.normal(ks[7], (C,), jnp.float32)
    g3 = 1.0 + 0.1 * jax.random.normal(ks[8], (Cin,), jnp.float32)
    b3 = 0.1 * jax.random.normal(ks[9], (Cin,), jnp.float32)

    params = convert_params(w1_oihw, w2_oihw, w3_oihw, g1, b1, g2, b2, g3, b3)

    out = bottleneck_forward(x, params)
    jax.block_until_ready(out)

    ref = bottleneck_reference(x, w1_oihw, w2_oihw, w3_oihw, g1, b1, g2, b2, g3, b3)
    assert out.shape == (N, Cin, H, W)
    assert np.allclose(np.asarray(out), np.asarray(ref), atol=1e-4, rtol=1e-4), \
        "Pallas kernel mismatch vs JAX reference"
    print("KERNEL_OK")
</pallas_src>

<mosaic_0001>
module attributes {stable_mosaic.version = 11 : i64} {
  func.func @bottleneck_kernel(%arg0: memref<2x256x256xf32, #tpu.memory_space<vmem>>, %arg1: memref<64x256xf32, #tpu.memory_space<vmem>>, %arg2: memref<64x1xf32, #tpu.memory_space<vmem>>, %arg3: memref<64x1xf32, #tpu.memory_space<vmem>>, %arg4: memref<9x64x64xf32, #tpu.memory_space<vmem>>, %arg5: memref<64x1xf32, #tpu.memory_space<vmem>>, %arg6: memref<64x1xf32, #tpu.memory_space<vmem>>, %arg7: memref<256x64xf32, #tpu.memory_space<vmem>>, %arg8: memref<256x1xf32, #tpu.memory_space<vmem>>, %arg9: memref<256x1xf32, #tpu.memory_space<vmem>>, %arg10: memref<2x256x256xf32, #tpu.memory_space<vmem>>) attributes {dimension_semantics = [], scalar_prefetch = 0 : i64, scratch_operands = 0 : i64, tpu.core_type = #tpu.core_type<tc>} {
    %c0 = arith.constant 0 : index
    %c0_0 = arith.constant 0 : index
    %0 = vector.load %arg1[%c0, %c0_0] : memref<64x256xf32, #tpu.memory_space<vmem>>, vector<64x256xf32>
    %c0_1 = arith.constant 0 : index
    %c0_2 = arith.constant 0 : index
    %c0_3 = arith.constant 0 : index
    %1 = vector.load %arg0[%c0_1, %c0_2, %c0_3] : memref<2x256x256xf32, #tpu.memory_space<vmem>>, vector<1x256x256xf32>
    %2 = vector.shape_cast %1 : vector<1x256x256xf32> to vector<256x256xf32>
    %cst = arith.constant dense<0.000000e+00> : vector<64x256xf32>
    %3 = tpu.matmul %0, %2, %cst {dimension_numbers = #tpu.dot_dimension_numbers<[1], [0], [0], [1], [0, 0, 1, 1], [], []>} : vector<64x256xf32>, vector<256x256xf32>, vector<64x256xf32> -> vector<64x256xf32>
    %c1 = arith.constant 1 : index
    %c0_4 = arith.constant 0 : index
    %c0_5 = arith.constant 0 : index
    %4 = vector.load %arg0[%c1, %c0_4, %c0_5] : memref<2x256x256xf32, #tpu.memory_space<vmem>>, vector<1x256x256xf32>
    %5 = vector.shape_cast %4 : vector<1x256x256xf32> to vector<256x256xf32>
    %cst_6 = arith.constant dense<0.000000e+00> : vector<64x256xf32>
    %6 = tpu.matmul %0, %5, %cst_6 {dimension_numbers = #tpu.dot_dimension_numbers<[1], [0], [0], [1], [0, 0, 1, 1], [], []>} : vector<64x256xf32>, vector<256x256xf32>, vector<64x256xf32> -> vector<64x256xf32>
    %7 = tpu.concatenate %3, %6 in 1 : vector<64x256xf32>, vector<64x256xf32> -> vector<64x512xf32>
    %cst_7 = arith.constant dense<0.000000e+00> : vector<64xf32>
    %8 = vector.multi_reduction <add>, %7, %cst_7 [1] : vector<64x512xf32> to vector<64xf32>
    %9 = vector.shape_cast %8 : vector<64xf32> to vector<64x1xf32>
    %cst_8 = arith.constant 0.001953125 : f32
    %10 = vector.broadcast %cst_8 : f32 to vector<64x1xf32>
    %11 = arith.mulf %9, %10 : vector<64x1xf32>
    %12 = arith.mulf %7, %7 : vector<64x512xf32>
    %cst_9 = arith.constant dense<0.000000e+00> : vector<64xf32>
    %13 = vector.multi_reduction <add>, %12, %cst_9 [1] : vector<64x512xf32> to vector<64xf32>
    %14 = vector.shape_cast %13 : vector<64xf32> to vector<64x1xf32>
    %cst_10 = arith.constant 0.001953125 : f32
    %15 = vector.broadcast %cst_10 : f32 to vector<64x1xf32>
    %16 = arith.mulf %14, %15 : vector<64x1xf32>
    %17 = arith.mulf %11, %11 : vector<64x1xf32>
    %18 = arith.subf %16, %17 : vector<64x1xf32>
    %c0_11 = arith.constant 0 : index
    %c0_12 = arith.constant 0 : index
    %19 = vector.load %arg2[%c0_11, %c0_12] : memref<64x1xf32, #tpu.memory_space<vmem>>, vector<64x1xf32>
    %cst_13 = arith.constant 9.99999974E-6 : f32
    %20 = vector.broadcast %cst_13 : f32 to vector<64x1xf32>
    %21 = arith.addf %18, %20 : vector<64x1xf32>
    %22 = math.rsqrt %21 : vector<64x1xf32>
    %23 = arith.mulf %19, %22 : vector<64x1xf32>
    %c0_14 = arith.constant 0 : index
    %c0_15 = arith.constant 0 : index
    %24 = vector.load %arg3[%c0_14, %c0_15] : memref<64x1xf32, #tpu.memory_space<vmem>>, vector<64x1xf32>
    %25 = arith.mulf %11, %23 : vector<64x1xf32>
    %26 = arith.subf %24, %25 : vector<64x1xf32>
    %27 = vector.broadcast %23 : vector<64x1xf32> to vector<64x512xf32>
    %28 = arith.mulf %7, %27 : vector<64x512xf32>
    %29 = vector.broadcast %26 : vector<64x1xf32> to vector<64x512xf32>
    %30 = arith.addf %28, %29 : vector<64x512xf32>
    %cst_16 = arith.constant 0.000000e+00 : f32
    %31 = vector.broadcast %cst_16 : f32 to vector<64x512xf32>
    %32 = arith.maximumf %30, %31 : vector<64x512xf32>
    %33 = tpu.iota {dimensions = array<i32: 1>} : vector<1x512xi32>
    %c15_i32 = arith.constant 15 : i32
    %34 = vector.broadcast %c15_i32 : i32 to vector<1x512xi32>
    %35 = arith.andi %33, %34 : vector<1x512xi32>
    %c4_i32 = arith.constant 4 : i32
    %36 = vector.broadcast %c4_i32 : i32 to vector<1x512xi32>
    %37 = arith.shrsi %33, %36 : vector<1x512xi32>
    %c15_i32_17 = arith.constant 15 : i32
    %38 = vector.broadcast %c15_i32_17 : i32 to vector<1x512xi32>
    %39 = arith.andi %37, %38 : vector<1x512xi32>
    %c1_i32 = arith.constant 1 : i32
    %40 = vector.broadcast %c1_i32 : i32 to vector<1x512xi32>
    %41 = arith.cmpi sge, %39, %40 : vector<1x512xi32>
    %c14_i32 = arith.constant 14 : i32
    %42 = vector.broadcast %c14_i32 : i32 to vector<1x512xi32>
    %43 = arith.cmpi sle, %39, %42 : vector<1x512xi32>
    %c1_i32_18 = arith.constant 1 : i32
    %44 = vector.broadcast %c1_i32_18 : i32 to vector<1x512xi32>
    %45 = arith.cmpi sge, %35, %44 : vector<1x512xi32>
    %c14_i32_19 = arith.constant 14 : i32
    %46 = vector.broadcast %c14_i32_19 : i32 to vector<1x512xi32>
    %47 = arith.cmpi sle, %35, %46 : vector<1x512xi32>
    %c4 = arith.constant 4 : index
    %c0_20 = arith.constant 0 : index
    %c0_21 = arith.constant 0 : index
    %48 = vector.load %arg4[%c4, %c0_20, %c0_21] : memref<9x64x64xf32, #tpu.memory_space<vmem>>, vector<1x64x64xf32>
    %49 = vector.shape_cast %48 : vector<1x64x64xf32> to vector<64x64xf32>
    %cst_22 = arith.constant dense<0.000000e+00> : vector<64x512xf32>
    %50 = tpu.matmul %49, %32, %cst_22 {dimension_numbers = #tpu.dot_dimension_numbers<[1], [0], [0], [1], [0, 0, 1, 1], [], []>} : vector<64x64xf32>, vector<64x512xf32>, vector<64x512xf32> -> vector<64x512xf32>
    %51 = arith.andi %41, %45 : vector<1x512xi1>
    %c17_i32 = arith.constant 17 : i32
    %52 = tpu.dynamic_rotate %32 by %c17_i32 dim 1 : vector<64x512xf32>, i32 -> vector<64x512xf32>
    %cst_23 = arith.constant 0.000000e+00 : f32
    %53 = vector.shape_cast %51 : vector<1x512xi1> to vector<1x512xi1>
    %54 = vector.broadcast %53 : vector<1x512xi1> to vector<64x512xi1>
    %55 = vector.broadcast %cst_23 : f32 to vector<64x512xf32>
    %56 = arith.select %54, %52, %55 : vector<64x512xi1>, vector<64x512xf32>
    %c0_24 = arith.constant 0 : index
    %c0_25 = arith.constant 0 : index
    %c0_26 = arith.constant 0 : index
    %57 = vector.load %arg4[%c0_24, %c0_25, %c0_26] : memref<9x64x64xf32, #tpu.memory_space<vmem>>, vector<1x64x64xf32>
    %58 = vector.shape_cast %57 : vector<1x64x64xf32> to vector<64x64xf32>
    %cst_27 = arith.constant dense<0.000000e+00> : vector<64x512xf32>
    %59 = tpu.matmul %58, %56, %cst_27 {dimension_numbers = #tpu.dot_dimension_numbers<[1], [0], [0], [1], [0, 0, 1, 1], [], []>} : vector<64x64xf32>, vector<64x512xf32>, vector<64x512xf32> -> vector<64x512xf32>
    %60 = arith.addf %50, %59 : vector<64x512xf32>
    %c16_i32 = arith.constant 16 : i32
    %61 = tpu.dynamic_rotate %32 by %c16_i32 dim 1 : vector<64x512xf32>, i32 -> vector<64x512xf32>
    %cst_28 = arith.constant 0.000000e+00 : f32
    %62 = vector.shape_cast %41 : vector<1x512xi1> to vector<1x512xi1>
    %63 = vector.broadcast %62 : vector<1x512xi1> to vector<64x512xi1>
    %64 = vector.broadcast %cst_28 : f32 to vector<64x512xf32>
    %65 = arith.select %63, %61, %64 : vector<64x512xi1>, vector<64x512xf32>
    %c1_29 = arith.constant 1 : index
    %c0_30 = arith.constant 0 : index
    %c0_31 = arith.constant 0 : index
    %66 = vector.load %arg4[%c1_29, %c0_30, %c0_31] : memref<9x64x64xf32, #tpu.memory_space<vmem>>, vector<1x64x64xf32>
    %67 = vector.shape_cast %66 : vector<1x64x64xf32> to vector<64x64xf32>
    %cst_32 = arith.constant dense<0.000000e+00> : vector<64x512xf32>
    %68 = tpu.matmul %67, %65, %cst_32 {dimension_numbers = #tpu.dot_dimension_numbers<[1], [0], [0], [1], [0, 0, 1, 1], [], []>} : vector<64x64xf32>, vector<64x512xf32>, vector<64x512xf32> -> vector<64x512xf32>
    %69 = arith.addf %60, %68 : vector<64x512xf32>
    %70 = arith.andi %41, %47 : vector<1x512xi1>
    %c15_i32_33 = arith.constant 15 : i32
    %71 = tpu.dynamic_rotate %32 by %c15_i32_33 dim 1 : vector<64x512xf32>, i32 -> vector<64x512xf32>
    %cst_34 = arith.constant 0.000000e+00 : f32
    %72 = vector.shape_cast %70 : vector<1x512xi1> to vector<1x512xi1>
    %73 = vector.broadcast %72 : vector<1x512xi1> to vector<64x512xi1>
    %74 = vector.broadcast %cst_34 : f32 to vector<64x512xf32>
    %75 = arith.select %73, %71, %74 : vector<64x512xi1>, vector<64x512xf32>
    %c2 = arith.constant 2 : index
    %c0_35 = arith.constant 0 : index
    %c0_36 = arith.constant 0 : index
    %76 = vector.load %arg4[%c2, %c0_35, %c0_36] : memref<9x64x64xf32, #tpu.memory_space<vmem>>, vector<1x64x64xf32>
    %77 = vector.shape_cast %76 : vector<1x64x64xf32> to vector<64x64xf32>
    %cst_37 = arith.constant dense<0.000000e+00> : vector<64x512xf32>
    %78 = tpu.matmul %77, %75, %cst_37 {dimension_numbers = #tpu.dot_dimension_numbers<[1], [0], [0], [1], [0, 0, 1, 1], [], []>} : vector<64x64xf32>, vector<64x512xf32>, vector<64x512xf32> -> vector<64x512xf32>
    %79 = arith.addf %69, %78 : vector<64x512xf32>
    %c1_i32_38 = arith.constant 1 : i32
    %80 = tpu.dynamic_rotate %32 by %c1_i32_38 dim 1 : vector<64x512xf32>, i32 -> vector<64x512xf32>
    %cst_39 = arith.constant 0.000000e+00 : f32
    %81 = vector.shape_cast %45 : vector<1x512xi1> to vector<1x512xi1>
    %82 = vector.broadcast %81 : vector<1x512xi1> to vector<64x512xi1>
    %83 = vector.broadcast %cst_39 : f32 to vector<64x512xf32>
    %84 = arith.select %82, %80, %83 : vector<64x512xi1>, vector<64x512xf32>
    %c3 = arith.constant 3 : index
    %c0_40 = arith.constant 0 : index
    %c0_41 = arith.constant 0 : index
    %85 = vector.load %arg4[%c3, %c0_40, %c0_41] : memref<9x64x64xf32, #tpu.memory_space<vmem>>, vector<1x64x64xf32>
    %86 = vector.shape_cast %85 : vector<1x64x64xf32> to vector<64x64xf32>
    %cst_42 = arith.constant dense<0.000000e+00> : vector<64x512xf32>
    %87 = tpu.matmul %86, %84, %cst_42 {dimension_numbers = #tpu.dot_dimension_numbers<[1], [0], [0], [1], [0, 0, 1, 1], [], []>} : vector<64x64xf32>, vector<64x512xf32>, vector<64x512xf32> -> vector<64x512xf32>
    %88 = arith.addf %79, %87 : vector<64x512xf32>
    %c511_i32 = arith.constant 511 : i32
    %89 = tpu.dynamic_rotate %32 by %c511_i32 dim 1 : vector<64x512xf32>, i32 -> vector<64x512xf32>
    %cst_43 = arith.constant 0.000000e+00 : f32
    %90 = vector.shape_cast %47 : vector<1x512xi1> to vector<1x512xi1>
    %91 = vector.broadcast %90 : vector<1x512xi1> to vector<64x512xi1>
    %92 = vector.broadcast %cst_43 : f32 to vector<64x512xf32>
    %93 = arith.select %91, %89, %92 : vector<64x512xi1>, vector<64x512xf32>
    %c5 = arith.constant 5 : index
    %c0_44 = arith.constant 0 : index
    %c0_45 = arith.constant 0 : index
    %94 = vector.load %arg4[%c5, %c0_44, %c0_45] : memref<9x64x64xf32, #tpu.memory_space<vmem>>, vector<1x64x64xf32>
    %95 = vector.shape_cast %94 : vector<1x64x64xf32> to vector<64x64xf32>
    %cst_46 = arith.constant dense<0.000000e+00> : vector<64x512xf32>
    %96 = tpu.matmul %95, %93, %cst_46 {dimension_numbers = #tpu.dot_dimension_numbers<[1], [0], [0], [1], [0, 0, 1, 1], [], []>} : vector<64x64xf32>, vector<64x512xf32>, vector<64x512xf32> -> vector<64x512xf32>
    %97 = arith.addf %88, %96 : vector<64x512xf32>
    %98 = arith.andi %43, %45 : vector<1x512xi1>
    %c497_i32 = arith.constant 497 : i32
    %99 = tpu.dynamic_rotate %32 by %c497_i32 dim 1 : vector<64x512xf32>, i32 -> vector<64x512xf32>
    %cst_47 = arith.constant 0.000000e+00 : f32
    %100 = vector.shape_cast %98 : vector<1x512xi1> to vector<1x512xi1>
    %101 = vector.broadcast %100 : vector<1x512xi1> to vector<64x512xi1>
    %102 = vector.broadcast %cst_47 : f32 to vector<64x512xf32>
    %103 = arith.select %101, %99, %102 : vector<64x512xi1>, vector<64x512xf32>
    %c6 = arith.constant 6 : index
    %c0_48 = arith.constant 0 : index
    %c0_49 = arith.constant 0 : index
    %104 = vector.load %arg4[%c6, %c0_48, %c0_49] : memref<9x64x64xf32, #tpu.memory_space<vmem>>, vector<1x64x64xf32>
    %105 = vector.shape_cast %104 : vector<1x64x64xf32> to vector<64x64xf32>
    %cst_50 = arith.constant dense<0.000000e+00> : vector<64x512xf32>
    %106 = tpu.matmul %105, %103, %cst_50 {dimension_numbers = #tpu.dot_dimension_numbers<[1], [0], [0], [1], [0, 0, 1, 1], [], []>} : vector<64x64xf32>, vector<64x512xf32>, vector<64x512xf32> -> vector<64x512xf32>
    %107 = arith.addf %97, %106 : vector<64x512xf32>
    %c496_i32 = arith.constant 496 : i32
    %108 = tpu.dynamic_rotate %32 by %c496_i32 dim 1 : vector<64x512xf32>, i32 -> vector<64x512xf32>
    %cst_51 = arith.constant 0.000000e+00 : f32
    %109 = vector.shape_cast %43 : vector<1x512xi1> to vector<1x512xi1>
    %110 = vector.broadcast %109 : vector<1x512xi1> to vector<64x512xi1>
    %111 = vector.broadcast %cst_51 : f32 to vector<64x512xf32>
    %112 = arith.select %110, %108, %111 : vector<64x512xi1>, vector<64x512xf32>
    %c7 = arith.constant 7 : index
    %c0_52 = arith.constant 0 : index
    %c0_53 = arith.constant 0 : index
    %113 = vector.load %arg4[%c7, %c0_52, %c0_53] : memref<9x64x64xf32, #tpu.memory_space<vmem>>, vector<1x64x64xf32>
    %114 = vector.shape_cast %113 : vector<1x64x64xf32> to vector<64x64xf32>
    %cst_54 = arith.constant dense<0.000000e+00> : vector<64x512xf32>
    %115 = tpu.matmul %114, %112, %cst_54 {dimension_numbers = #tpu.dot_dimension_numbers<[1], [0], [0], [1], [0, 0, 1, 1], [], []>} : vector<64x64xf32>, vector<64x512xf32>, vector<64x512xf32> -> vector<64x512xf32>
    %116 = arith.addf %107, %115 : vector<64x512xf32>
    %117 = arith.andi %43, %47 : vector<1x512xi1>
    %c495_i32 = arith.constant 495 : i32
    %118 = tpu.dynamic_rotate %32 by %c495_i32 dim 1 : vector<64x512xf32>, i32 -> vector<64x512xf32>
    %cst_55 = arith.constant 0.000000e+00 : f32
    %119 = vector.shape_cast %117 : vector<1x512xi1> to vector<1x512xi1>
    %120 = vector.broadcast %119 : vector<1x512xi1> to vector<64x512xi1>
    %121 = vector.broadcast %cst_55 : f32 to vector<64x512xf32>
    %122 = arith.select %120, %118, %121 : vector<64x512xi1>, vector<64x512xf32>
    %c8 = arith.constant 8 : index
    %c0_56 = arith.constant 0 : index
    %c0_57 = arith.constant 0 : index
    %123 = vector.load %arg4[%c8, %c0_56, %c0_57] : memref<9x64x64xf32, #tpu.memory_space<vmem>>, vector<1x64x64xf32>
    %124 = vector.shape_cast %123 : vector<1x64x64xf32> to vector<64x64xf32>
    %cst_58 = arith.constant dense<0.000000e+00> : vector<64x512xf32>
    %125 = tpu.matmul %124, %122, %cst_58 {dimension_numbers = #tpu.dot_dimension_numbers<[1], [0], [0], [1], [0, 0, 1, 1], [], []>} : vector<64x64xf32>, vector<64x512xf32>, vector<64x512xf32> -> vector<64x512xf32>
    %126 = arith.addf %116, %125 : vector<64x512xf32>
    %cst_59 = arith.constant dense<0.000000e+00> : vector<64xf32>
    %127 = vector.multi_reduction <add>, %126, %cst_59 [1] : vector<64x512xf32> to vector<64xf32>
    %128 = vector.shape_cast %127 : vector<64xf32> to vector<64x1xf32>
    %cst_60 = arith.constant 0.001953125 : f32
    %129 = vector.broadcast %cst_60 : f32 to vector<64x1xf32>
    %130 = arith.mulf %128, %129 : vector<64x1xf32>
    %131 = arith.mulf %126, %126 : vector<64x512xf32>
    %cst_61 = arith.constant dense<0.000000e+00> : vector<64xf32>
    %132 = vector.multi_reduction <add>, %131, %cst_61 [1] : vector<64x512xf32> to vector<64xf32>
    %133 = vector.shape_cast %132 : vector<64xf32> to vector<64x1xf32>
    %cst_62 = arith.constant 0.001953125 : f32
    %134 = vector.broadcast %cst_62 : f32 to vector<64x1xf32>
    %135 = arith.mulf %133, %134 : vector<64x1xf32>
    %136 = arith.mulf %130, %130 : vector<64x1xf32>
    %137 = arith.subf %135, %136 : vector<64x1xf32>
    %c0_63 = arith.constant 0 : index
    %c0_64 = arith.constant 0 : index
    %138 = vector.load %arg5[%c0_63, %c0_64] : memref<64x1xf32, #tpu.memory_space<vmem>>, vector<64x1xf32>
    %cst_65 = arith.constant 9.99999974E-6 : f32
    %139 = vector.broadcast %cst_65 : f32 to vector<64x1xf32>
    %140 = arith.addf %137, %139 : vector<64x1xf32>
    %141 = math.rsqrt %140 : vector<64x1xf32>
    %142 = arith.mulf %138, %141 : vector<64x1xf32>
    %c0_66 = arith.constant 0 : index
    %c0_67 = arith.constant 0 : index
    %143 = vector.load %arg6[%c0_66, %c0_67] : memref<64x1xf32, #tpu.memory_space<vmem>>, vector<64x1xf32>
    %144 = arith.mulf %130, %142 : vector<64x1xf32>
    %145 = arith.subf %143, %144 : vector<64x1xf32>
    %146 = vector.broadcast %142 : vector<64x1xf32> to vector<64x512xf32>
    %147 = arith.mulf %126, %146 : vector<64x512xf32>
    %148 = vector.broadcast %145 : vector<64x1xf32> to vector<64x512xf32>
    %149 = arith.addf %147, %148 : vector<64x512xf32>
    %cst_68 = arith.constant 0.000000e+00 : f32
    %150 = vector.broadcast %cst_68 : f32 to vector<64x512xf32>
    %151 = arith.maximumf %149, %150 : vector<64x512xf32>
    %c0_69 = arith.constant 0 : index
    %c0_70 = arith.constant 0 : index
    %152 = vector.load %arg7[%c0_69, %c0_70] : memref<256x64xf32, #tpu.memory_space<vmem>>, vector<256x64xf32>
    %cst_71 = arith.constant dense<0.000000e+00> : vector<256x512xf32>
    %153 = tpu.matmul %152, %151, %cst_71 {dimension_numbers = #tpu.dot_dimension_numbers<[1], [0], [0], [1], [0, 0, 1, 1], [], []>} : vector<256x64xf32>, vector<64x512xf32>, vector<256x512xf32> -> vector<256x512xf32>
    %cst_72 = arith.constant dense<0.000000e+00> : vector<256xf32>
    %154 = vector.multi_reduction <add>, %153, %cst_72 [1] : vector<256x512xf32> to vector<256xf32>
    %155 = vector.shape_cast %154 : vector<256xf32> to vector<256x1xf32>
    %cst_73 = arith.constant 0.001953125 : f32
    %156 = vector.broadcast %cst_73 : f32 to vector<256x1xf32>
    %157 = arith.mulf %155, %156 : vector<256x1xf32>
    %158 = arith.mulf %153, %153 : vector<256x512xf32>
    %cst_74 = arith.constant dense<0.000000e+00> : vector<256xf32>
    %159 = vector.multi_reduction <add>, %158, %cst_74 [1] : vector<256x512xf32> to vector<256xf32>
    %160 = vector.shape_cast %159 : vector<256xf32> to vector<256x1xf32>
    %cst_75 = arith.constant 0.001953125 : f32
    %161 = vector.broadcast %cst_75 : f32 to vector<256x1xf32>
    %162 = arith.mulf %160, %161 : vector<256x1xf32>
    %163 = arith.mulf %157, %157 : vector<256x1xf32>
    %164 = arith.subf %162, %163 : vector<256x1xf32>
    %c0_76 = arith.constant 0 : index
    %c0_77 = arith.constant 0 : index
    %165 = vector.load %arg8[%c0_76, %c0_77] : memref<256x1xf32, #tpu.memory_space<vmem>>, vector<256x1xf32>
    %cst_78 = arith.constant 9.99999974E-6 : f32
    %166 = vector.broadcast %cst_78 : f32 to vector<256x1xf32>
    %167 = arith.addf %164, %166 : vector<256x1xf32>
    %168 = math.rsqrt %167 : vector<256x1xf32>
    %169 = arith.mulf %165, %168 : vector<256x1xf32>
    %c0_79 = arith.constant 0 : index
    %c0_80 = arith.constant 0 : index
    %170 = vector.load %arg9[%c0_79, %c0_80] : memref<256x1xf32, #tpu.memory_space<vmem>>, vector<256x1xf32>
    %171 = arith.mulf %157, %169 : vector<256x1xf32>
    %172 = arith.subf %170, %171 : vector<256x1xf32>
    %173 = vector.broadcast %169 : vector<256x1xf32> to vector<256x512xf32>
    %174 = arith.mulf %153, %173 : vector<256x512xf32>
    %175 = vector.broadcast %172 : vector<256x1xf32> to vector<256x512xf32>
    %176 = arith.addf %174, %175 : vector<256x512xf32>
    %177 = vector.extract_strided_slice %176 {offsets = [0, 0], sizes = [256, 256], strides = [1, 1]} : vector<256x512xf32> to vector<256x256xf32>
    %c0_81 = arith.constant 0 : index
    %c0_82 = arith.constant 0 : index
    %c0_83 = arith.constant 0 : index
    %178 = vector.load %arg0[%c0_81, %c0_82, %c0_83] : memref<2x256x256xf32, #tpu.memory_space<vmem>>, vector<1x256x256xf32>
    %179 = vector.shape_cast %178 : vector<1x256x256xf32> to vector<256x256xf32>
    %180 = arith.addf %177, %179 : vector<256x256xf32>
    %cst_84 = arith.constant 0.000000e+00 : f32
    %181 = vector.broadcast %cst_84 : f32 to vector<256x256xf32>
    %182 = arith.maximumf %180, %181 : vector<256x256xf32>
    %c0_85 = arith.constant 0 : index
    %c0_86 = arith.constant 0 : index
    %c0_87 = arith.constant 0 : index
    %183 = vector.load %arg10[%c0_85, %c0_86, %c0_87] : memref<2x256x256xf32, #tpu.memory_space<vmem>>, vector<1x256x256xf32>
    %184 = vector.shape_cast %183 : vector<1x256x256xf32> to vector<256x256xf32>
    %185 = vector.shape_cast %182 : vector<256x256xf32> to vector<1x256x256xf32>
    tpu.vector_store %arg10[%c0_85, %c0_86, %c0_87], %185 {strides = array<i32>} : memref<2x256x256xf32, #tpu.memory_space<vmem>>, vector<1x256x256xf32>,
    %186 = vector.extract_strided_slice %176 {offsets = [0, 256], sizes = [256, 256], strides = [1, 1]} : vector<256x512xf32> to vector<256x256xf32>
    %c1_88 = arith.constant 1 : index
    %c0_89 = arith.constant 0 : index
    %c0_90 = arith.constant 0 : index
    %187 = vector.load %arg0[%c1_88, %c0_89, %c0_90] : memref<2x256x256xf32, #tpu.memory_space<vmem>>, vector<1x256x256xf32>
    %188 = vector.shape_cast %187 : vector<1x256x256xf32> to vector<256x256xf32>
    %189 = arith.addf %186, %188 : vector<256x256xf32>
    %cst_91 = arith.constant 0.000000e+00 : f32
    %190 = vector.broadcast %cst_91 : f32 to vector<256x256xf32>
    %191 = arith.maximumf %189, %190 : vector<256x256xf32>
    %c1_92 = arith.constant 1 : index
    %c0_93 = arith.constant 0 : index
    %c0_94 = arith.constant 0 : index
    %192 = vector.load %arg10[%c1_92, %c0_93, %c0_94] : memref<2x256x256xf32, #tpu.memory_space<vmem>>, vector<1x256x256xf32>
    %193 = vector.shape_cast %192 : vector<1x256x256xf32> to vector<256x256xf32>
    %194 = vector.shape_cast %191 : vector<256x256xf32> to vector<1x256x256xf32>
    tpu.vector_store %arg10[%c1_92, %c0_93, %c0_94], %194 {strides = array<i32>} : memref<2x256x256xf32, #tpu.memory_space<vmem>>, vector<1x256x256xf32>,
    return
  }
}

</mosaic_0001>

<llo_original>
// kernel: bottleneck_forward.1
$region0: #{bottleneck_forward.1}
  #allocation0 [shape = 'u32[]', space=smem, size = 0x4, offset = 0x4, fixed_abs, tag = 'smem constant byte address 0x4 - core index']
  #allocation1 [shape = 'u32[144,128]{1,0:T(1,128)}', space=vmem, size = 0x12000, scoped, tag = 'internal scratch']
  %s0 = inlined_call_operand.vmem [shape: f32[2,256,256], index: 0, kind: input, shape index: {}]
  %s1 = inlined_call_operand.vmem [shape: f32[64,256], index: 1, kind: input, shape index: {}]
  %s2 = inlined_call_operand.vmem [shape: f32[64,1], index: 2, kind: input, shape index: {}]
  %s3 = inlined_call_operand.vmem [shape: f32[64,1], index: 3, kind: input, shape index: {}]
  %s4 = inlined_call_operand.vmem [shape: f32[9,64,64], index: 4, kind: input, shape index: {}]
  %s5 = inlined_call_operand.vmem [shape: f32[64,1], index: 5, kind: input, shape index: {}]
  %s6 = inlined_call_operand.vmem [shape: f32[64,1], index: 6, kind: input, shape index: {}]
  %s7 = inlined_call_operand.vmem [shape: f32[256,64], index: 7, kind: input, shape index: {}]
  %s8 = inlined_call_operand.vmem [shape: f32[256,1], index: 8, kind: input, shape index: {}]
  %s9 = inlined_call_operand.vmem [shape: f32[256,1], index: 9, kind: input, shape index: {}]
  %s10 = inlined_call_operand.vmem [shape: f32[2,256,256], index: 10, kind: output, shape index: {}]
  %s11 = sld [smem:[#allocation0]]
  $region50: #{bottleneck_forward.1} parent=0
    _
  %s13 = ssub.s32 1, %s11
  %s14 = scalar_select 0, %s13, %s11
  // Predicated region
  $region2: #{bottleneck_forward.1} parent=0 // pred_check
    _
  $region3: #{bottleneck_forward.1} parent=0 // pred_check_branch
    %16 = sbr.rel (0) target = $region5
  $region4: #{bottleneck_forward.1} parent=0 // pred_region
    _
  $region5: #{bottleneck_forward.1} parent=0 // pred_fallthru
    _
  // Predicated region
  $region6: #{bottleneck_forward.1} parent=0 // pred_check
    _
  $region7: #{bottleneck_forward.1} parent=0 // pred_check_branch
    %18 = sbr.rel (0) target = $region9
  $region8: #{bottleneck_forward.1} parent=0 // pred_region
    _
  $region9: #{bottleneck_forward.1} parent=0 // pred_fallthru
    _
  // Predicated region
  $region10: #{bottleneck_forward.1} parent=0 // pred_check
    _
  $region11: #{bottleneck_forward.1} parent=0 // pred_check_branch
    %20 = sbr.rel (0) target = $region13
  $region12: #{bottleneck_forward.1} parent=0 // pred_region
    _
  $region13: #{bottleneck_forward.1} parent=0 // pred_fallthru
    _
  // Predicated region
  $region14: #{bottleneck_forward.1} parent=0 // pred_check
    _
  $region15: #{bottleneck_forward.1} parent=0 // pred_check_branch
    %22 = sbr.rel (0) target = $region17
  $region16: #{bottleneck_forward.1} parent=0 // pred_region
    _
  $region17: #{bottleneck_forward.1} parent=0 // pred_fallthru
    _
  // Predicated region
  $region18: #{bottleneck_forward.1} parent=0 // pred_check
    _
  $region19: #{bottleneck_forward.1} parent=0 // pred_check_branch
    %24 = sbr.rel (0) target = $region21
  $region20: #{bottleneck_forward.1} parent=0 // pred_region
    _
  $region21: #{bottleneck_forward.1} parent=0 // pred_fallthru
    _
  // Predicated region
  $region22: #{bottleneck_forward.1} parent=0 // pred_check
    _
  $region23: #{bottleneck_forward.1} parent=0 // pred_check_branch
    %26 = sbr.rel (0) target = $region25
  $region24: #{bottleneck_forward.1} parent=0 // pred_region
    _
  $region25: #{bottleneck_forward.1} parent=0 // pred_fallthru
    _
  // Predicated region
  $region26: #{bottleneck_forward.1} parent=0 // pred_check
    _
  $region27: #{bottleneck_forward.1} parent=0 // pred_check_branch
    %28 = sbr.rel (0) target = $region29
  $region28: #{bottleneck_forward.1} parent=0 // pred_region
    _
  $region29: #{bottleneck_forward.1} parent=0 // pred_fallthru
    _
  // Predicated region
  $region30: #{bottleneck_forward.1} parent=0 // pred_check
    _
  $region31: #{bottleneck_forward.1} parent=0 // pred_check_branch
    %30 = sbr.rel (0) target = $region33
  $region32: #{bottleneck_forward.1} parent=0 // pred_region
    _
  $region33: #{bottleneck_forward.1} parent=0 // pred_fallthru
    _
  // Predicated region
  $region34: #{bottleneck_forward.1} parent=0 // pred_check
    _
  $region35: #{bottleneck_forward.1} parent=0 // pred_check_branch
    %32 = sbr.rel (0) target = $region37
  $region36: #{bottleneck_forward.1} parent=0 // pred_region
    _
  $region37: #{bottleneck_forward.1} parent=0 // pred_fallthru
    _
  // Predicated region
  $region38: #{bottleneck_forward.1} parent=0 // pred_check
    _
  $region39: #{bottleneck_forward.1} parent=0 // pred_check_branch
    %34 = sbr.rel (0) target = $region41
  $region40: #{bottleneck_forward.1} parent=0 // pred_region
    _
  $region41: #{bottleneck_forward.1} parent=0 // pred_fallthru
    _
  %v35 = vld [vmem:[%s1] sm:$0xff]
  %v36 = vld [vmem:[%s1 + $0x8] sm:$0xff]
  %v37 = vld [vmem:[%s1 + $0x10] sm:$0xff]
  %v38 = vld [vmem:[%s1 + $0x18] sm:$0xff]
  %v39 = vld [vmem:[%s1 + $0x20] sm:$0xff]
  %v40 = vld [vmem:[%s1 + $0x28] sm:$0xff]
  %v41 = vld [vmem:[%s1 + $0x30] sm:$0xff]
  %v42 = vld [vmem:[%s1 + $0x38] sm:$0xff]
  %v43 = vld [vmem:[%s1 + $0x40] sm:$0xff]
  %v44 = vld [vmem:[%s1 + $0x48] sm:$0xff]
  %v45 = vld [vmem:[%s1 + $0x50] sm:$0xff]
  %v46 = vld [vmem:[%s1 + $0x58] sm:$0xff]
  %v47 = vld [vmem:[%s1 + $0x60] sm:$0xff]
  %v48 = vld [vmem:[%s1 + $0x68] sm:$0xff]
  %v49 = vld [vmem:[%s1 + $0x70] sm:$0xff]
  %v50 = vld [vmem:[%s1 + $0x78] sm:$0xff]
  %v51 = vld [vmem:[%s0] sm:$0xff]
  %v52 = vld [vmem:[%s0 + $0x8] sm:$0xff]
  %v53 = vld [vmem:[%s0 + $0x10] sm:$0xff]
  %v54 = vld [vmem:[%s0 + $0x18] sm:$0xff]
  %v55 = vld [vmem:[%s0 + $0x20] sm:$0xff]
  %v56 = vld [vmem:[%s0 + $0x28] sm:$0xff]
  %v57 = vld [vmem:[%s0 + $0x30] sm:$0xff]
  %v58 = vld [vmem:[%s0 + $0x38] sm:$0xff]
  %v59 = vld [vmem:[%s0 + $0x40] sm:$0xff]
  %v60 = vld [vmem:[%s0 + $0x48] sm:$0xff]
  %v61 = vld [vmem:[%s0 + $0x50] sm:$0xff]
  %v62 = vld [vmem:[%s0 + $0x58] sm:$0xff]
  %v63 = vld [vmem:[%s0 + $0x60] sm:$0xff]
  %v64 = vld [vmem:[%s0 + $0x68] sm:$0xff]
  %v65 = vld [vmem:[%s0 + $0x70] sm:$0xff]
  %v66 = vld [vmem:[%s0 + $0x78] sm:$0xff]
  %v67 = vld [vmem:[%s0 + $0x80] sm:$0xff]
  %v68 = vld [vmem:[%s0 + $0x88] sm:$0xff]
  %v69 = vld [vmem:[%s0 + $0x90] sm:$0xff]
  %v70 = vld [vmem:[%s0 + $0x98] sm:$0xff]
  %v71 = vld [vmem:[%s0 + $0xa0] sm:$0xff]
  %v72 = vld [vmem:[%s0 + $0xa8] sm:$0xff]
  %v73 = vld [vmem:[%s0 + $0xb0] sm:$0xff]
  %v74 = vld [vmem:[%s0 + $0xb8] sm:$0xff]
  %v75 = vld [vmem:[%s0 + $0xc0] sm:$0xff]
  %v76 = vld [vmem:[%s0 + $0xc8] sm:$0xff]
  %v77 = vld [vmem:[%s0 + $0xd0] sm:$0xff]
  %v78 = vld [vmem:[%s0 + $0xd8] sm:$0xff]
  %v79 = vld [vmem:[%s0 + $0xe0] sm:$0xff]
  %v80 = vld [vmem:[%s0 + $0xe8] sm:$0xff]
  %v81 = vld [vmem:[%s0 + $0xf0] sm:$0xff]
  %v82 = vld [vmem:[%s0 + $0xf8] sm:$0xff]
  %v83 = vld [vmem:[%s0 + $0x100] sm:$0xff]
  %v84 = vld [vmem:[%s0 + $0x108] sm:$0xff]
  %v85 = vld [vmem:[%s0 + $0x110] sm:$0xff]
  %v86 = vld [vmem:[%s0 + $0x118] sm:$0xff]
  %v87 = vld [vmem:[%s0 + $0x120] sm:$0xff]
  %v88 = vld [vmem:[%s0 + $0x128] sm:$0xff]
  %v89 = vld [vmem:[%s0 + $0x130] sm:$0xff]
  %v90 = vld [vmem:[%s0 + $0x138] sm:$0xff]
  %v91 = vld [vmem:[%s0 + $0x140] sm:$0xff]
  %v92 = vld [vmem:[%s0 + $0x148] sm:$0xff]
  %v93 = vld [vmem:[%s0 + $0x150] sm:$0xff]
  %v94 = vld [vmem:[%s0 + $0x158] sm:$0xff]
  %v95 = vld [vmem:[%s0 + $0x160] sm:$0xff]
  %v96 = vld [vmem:[%s0 + $0x168] sm:$0xff]
  %v97 = vld [vmem:[%s0 + $0x170] sm:$0xff]
  %v98 = vld [vmem:[%s0 + $0x178] sm:$0xff]
  %v99 = vld [vmem:[%s0 + $0x180] sm:$0xff]
  %v100 = vld [vmem:[%s0 + $0x188] sm:$0xff]
  %v101 = vld [vmem:[%s0 + $0x190] sm:$0xff]
  %v102 = vld [vmem:[%s0 + $0x198] sm:$0xff]
  %v103 = vld [vmem:[%s0 + $0x1a0] sm:$0xff]
  %v104 = vld [vmem:[%s0 + $0x1a8] sm:$0xff]
  %v105 = vld [vmem:[%s0 + $0x1b0] sm:$0xff]
  %v106 = vld [vmem:[%s0 + $0x1b8] sm:$0xff]
  %v107 = vld [vmem:[%s0 + $0x1c0] sm:$0xff]
  %v108 = vld [vmem:[%s0 + $0x1c8] sm:$0xff]
  %v109 = vld [vmem:[%s0 + $0x1d0] sm:$0xff]
  %v110 = vld [vmem:[%s0 + $0x1d8] sm:$0xff]
  %v111 = vld [vmem:[%s0 + $0x1e0] sm:$0xff]
  %v112 = vld [vmem:[%s0 + $0x1e8] sm:$0xff]
  %v113 = vld [vmem:[%s0 + $0x1f0] sm:$0xff]
  %v114 = vld [vmem:[%s0 + $0x1f8] sm:$0xff]
  %115 = vmatprep.subr.mxu0 %v52
  %116 = vmatpush1.msra.mxu0 %v51
  %117 = vmatprep.subr.mxu0 %v54
  %118 = vmatpush1.msra.mxu0 %v53
  %119 = vmatprep.subr.mxu0 %v56
  %120 = vmatpush1.msra.mxu0 %v55
  %121 = vmatprep.subr.mxu0 %v58
  %122 = vmatpush1.msra.mxu0 %v57
  %123 = vmatprep.subr.mxu0 %v60
  %124 = vmatpush1.msra.mxu0 %v59
  %125 = vmatprep.subr.mxu0 %v62
  %126 = vmatpush1.msra.mxu0 %v61
  %127 = vmatprep.subr.mxu0 %v64
  %128 = vmatpush1.msra.mxu0 %v63
  %129 = vmatprep.subr.mxu0 %v66
  %130 = vmatpush1.msra.mxu0 %v65
  %131 = vmatprep.subr.mxu0 %v68
  %132 = vmatpush1.msra.mxu0 %v67
  %133 = vmatprep.subr.mxu0 %v70
  %134 = vmatpush1.msra.mxu0 %v69
  %135 = vmatprep.subr.mxu0 %v72
  %136 = vmatpush1.msra.mxu0 %v71
  %137 = vmatprep.subr.mxu0 %v74
  %138 = vmatpush1.msra.mxu0 %v73
  %139 = vmatprep.subr.mxu0 %v76
  %140 = vmatpush1.msra.mxu0 %v75
  %141 = vmatprep.subr.mxu0 %v78
  %142 = vmatpush1.msra.mxu0 %v77
  %143 = vmatprep.subr.mxu0 %v80
  %144 = vmatpush1.msra.mxu0 %v79
  %145 = vmatprep.subr.mxu0 %v82
  %146 = vmatpush1.msra.mxu0 %v81
  %147 = vmatprep.subr.mxu0 %v84
  %148 = vmatpush1.msra.mxu0 %v83
  %149 = vmatprep.subr.mxu0 %v86
  %150 = vmatpush1.msra.mxu0 %v85
  %151 = vmatprep.subr.mxu0 %v88
  %152 = vmatpush1.msra.mxu0 %v87
  %153 = vmatprep.subr.mxu0 %v90
  %154 = vmatpush1.msra.mxu0 %v89
  %155 = vmatprep.subr.mxu0 %v92
  %156 = vmatpush1.msra.mxu0 %v91
  %157 = vmatprep.subr.mxu0 %v94
  %158 = vmatpush1.msra.mxu0 %v93
  %159 = vmatprep.subr.mxu0 %v96
  %160 = vmatpush1.msra.mxu0 %v95
  %161 = vmatprep.subr.mxu0 %v98
  %162 = vmatpush1.msra.mxu0 %v97
  %163 = vmatprep.subr.mxu0 %v100
  %164 = vmatpush1.msra.mxu0 %v99
  %165 = vmatprep.subr.mxu0 %v102
  %166 = vmatpush1.msra.mxu0 %v101
  %167 = vmatprep.subr.mxu0 %v104
  %168 = vmatpush1.msra.mxu0 %v103
  %169 = vmatprep.subr.mxu0 %v106
  %170 = vmatpush1.msra.mxu0 %v105
  %171 = vmatprep.subr.mxu0 %v108
  %172 = vmatpush1.msra.mxu0 %v107
  %173 = vmatprep.subr.mxu0 %v110
  %174 = vmatpush1.msra.mxu0 %v109
  %175 = vmatprep.subr.mxu0 %v112
  %176 = vmatpush1.msra.mxu0 %v111
  %177 = vmatprep.subr.mxu0 %v114
  %178 = vmatpush1.msra.mxu0 %v113
  %179 = vmatprep.mubr.f32.mxu0 %v36
  %180 = vmatmul.mubr.f32.gmra.mrb[0].mxu0 %v35
  %v181 = vpop.f32.mrb[0].mxu0
  %v182 = vadd.f32 0.0, %v181
  %v183 = vpop.f32.mrb[0].mxu0
  %v184 = vadd.f32 0.0, %v183
  %185 = vmatprep.mubr.f32.mxu0 %v38
  %186 = vmatmul.mubr.f32.gmra.mrb[0].mxu0 %v37
  %v187 = vpop.f32.mrb[0].mxu0
  %v188 = vadd.f32 0.0, %v187
  %v189 = vpop.f32.mrb[0].mxu0
  %v190 = vadd.f32 0.0, %v189
  %191 = vmatprep.mubr.f32.mxu0 %v40
  %192 = vmatmul.mubr.f32.gmra.mrb[0].mxu0 %v39
  %v193 = vpop.f32.mrb[0].mxu0
  %v194 = vadd.f32 0.0, %v193
  %v195 = vpop.f32.mrb[0].mxu0
  %v196 = vadd.f32 0.0, %v195
  %197 = vmatprep.mubr.f32.mxu0 %v42
  %198 = vmatmul.mubr.f32.gmra.mrb[0].mxu0 %v41
  %v199 = vpop.f32.mrb[0].mxu0
  %v200 = vadd.f32 0.0, %v199
  %v201 = vpop.f32.mrb[0].mxu0
  %v202 = vadd.f32 0.0, %v201
  %203 = vmatprep.mubr.f32.mxu0 %v44
  %204 = vmatmul.mubr.f32.gmra.mrb[0].mxu0 %v43
  %v205 = vpop.f32.mrb[0].mxu0
  %v206 = vadd.f32 0.0, %v205
  %v207 = vpop.f32.mrb[0].mxu0
  %v208 = vadd.f32 0.0, %v207
  %209 = vmatprep.mubr.f32.mxu0 %v46
  %210 = vmatmul.mubr.f32.gmra.mrb[0].mxu0 %v45
  %v211 = vpop.f32.mrb[0].mxu0
  %v212 = vadd.f32 0.0, %v211
  %v213 = vpop.f32.mrb[0].mxu0
  %v214 = vadd.f32 0.0, %v213
  %215 = vmatprep.mubr.f32.mxu0 %v48
  %216 = vmatmul.mubr.f32.gmra.mrb[0].mxu0 %v47
  %v217 = vpop.f32.mrb[0].mxu0
  %v218 = vadd.f32 0.0, %v217
  %v219 = vpop.f32.mrb[0].mxu0
  %v220 = vadd.f32 0.0, %v219
  %221 = vmatprep.mubr.f32.mxu0 %v50
  %222 = vmatmul.mubr.f32.gmra.mrb[0].mxu0 %v49
  %v223 = vpop.f32.mrb[0].mxu0
  %v224 = vadd.f32 0.0, %v223
  %v225 = vpop.f32.mrb[0].mxu0
  %v226 = vadd.f32 0.0, %v225
  %227 = vdwg.mxu0
  %s228 = scalar_lea.vmem %s0, 512
  %v229 = vld [vmem:[%s228] sm:$0xff]
  %v230 = vld [vmem:[%s228 + $0x8] sm:$0xff]
  %v231 = vld [vmem:[%s228 + $0x10] sm:$0xff]
  %v232 = vld [vmem:[%s228 + $0x18] sm:$0xff]
  %v233 = vld [vmem:[%s228 + $0x20] sm:$0xff]
  %v234 = vld [vmem:[%s228 + $0x28] sm:$0xff]
  %v235 = vld [vmem:[%s228 + $0x30] sm:$0xff]
  %v236 = vld [vmem:[%s228 + $0x38] sm:$0xff]
  %v237 = vld [vmem:[%s228 + $0x40] sm:$0xff]
  %v238 = vld [vmem:[%s228 + $0x48] sm:$0xff]
  %v239 = vld [vmem:[%s228 + $0x50] sm:$0xff]
  %v240 = vld [vmem:[%s228 + $0x58] sm:$0xff]
  %v241 = vld [vmem:[%s228 + $0x60] sm:$0xff]
  %v242 = vld [vmem:[%s228 + $0x68] sm:$0xff]
  %v243 = vld [vmem:[%s228 + $0x70] sm:$0xff]
  %v244 = vld [vmem:[%s228 + $0x78] sm:$0xff]
  %v245 = vld [vmem:[%s228 + $0x80] sm:$0xff]
  %v246 = vld [vmem:[%s228 + $0x88] sm:$0xff]
  %v247 = vld [vmem:[%s228 + $0x90] sm:$0xff]
  %v248 = vld [vmem:[%s228 + $0x98] sm:$0xff]
  %v249 = vld [vmem:[%s228 + $0xa0] sm:$0xff]
  %v250 = vld [vmem:[%s228 + $0xa8] sm:$0xff]
  %v251 = vld [vmem:[%s228 + $0xb0] sm:$0xff]
  %v252 = vld [vmem:[%s228 + $0xb8] sm:$0xff]
  %v253 = vld [vmem:[%s228 + $0xc0] sm:$0xff]
  %v254 = vld [vmem:[%s228 + $0xc8] sm:$0xff]
  %v255 = vld [vmem:[%s228 + $0xd0] sm:$0xff]
  %v256 = vld [vmem:[%s228 + $0xd8] sm:$0xff]
  %v257 = vld [vmem:[%s228 + $0xe0] sm:$0xff]
  %v258 = vld [vmem:[%s228 + $0xe8] sm:$0xff]
  %v259 = vld [vmem:[%s228 + $0xf0] sm:$0xff]
  %v260 = vld [vmem:[%s228 + $0xf8] sm:$0xff]
  %v261 = vld [vmem:[%s228 + $0x100] sm:$0xff]
  %v262 = vld [vmem:[%s228 + $0x108] sm:$0xff]
  %v263 = vld [vmem:[%s228 + $0x110] sm:$0xff]
  %v264 = vld [vmem:[%s228 + $0x118] sm:$0xff]
  %v265 = vld [vmem:[%s228 + $0x120] sm:$0xff]
  %v266 = vld [vmem:[%s228 + $0x128] sm:$0xff]
  %v267 = vld [vmem:[%s228 + $0x130] sm:$0xff]
  %v268 = vld [vmem:[%s228 + $0x138] sm:$0xff]
  %v269 = vld [vmem:[%s228 + $0x140] sm:$0xff]
  %v270 = vld [vmem:[%s228 + $0x148] sm:$0xff]
  %v271 = vld [vmem:[%s228 + $0x150] sm:$0xff]
  %v272 = vld [vmem:[%s228 + $0x158] sm:$0xff]
  %v273 = vld [vmem:[%s228 + $0x160] sm:$0xff]
  %v274 = vld [vmem:[%s228 + $0x168] sm:$0xff]
  %v275 = vld [vmem:[%s228 + $0x170] sm:$0xff]
  %v276 = vld [vmem:[%s228 + $0x178] sm:$0xff]
  %v277 = vld [vmem:[%s228 + $0x180] sm:$0xff]
  %v278 = vld [vmem:[%s228 + $0x188] sm:$0xff]
  %v279 = vld [vmem:[%s228 + $0x190] sm:$0xff]
  %v280 = vld [vmem:[%s228 + $0x198] sm:$0xff]
  %v281 = vld [vmem:[%s228 + $0x1a0] sm:$0xff]
  %v282 = vld [vmem:[%s228 + $0x1a8] sm:$0xff]
  %v283 = vld [vmem:[%s228 + $0x1b0] sm:$0xff]
  %v284 = vld [vmem:[%s228 + $0x1b8] sm:$0xff]
  %v285 = vld [vmem:[%s228 + $0x1c0] sm:$0xff]
  %v286 = vld [vmem:[%s228 + $0x1c8] sm:$0xff]
  %v287 = vld [vmem:[%s228 + $0x1d0] sm:$0xff]
  %v288 = vld [vmem:[%s228 + $0x1d8] sm:$0xff]
  %v289 = vld [vmem:[%s228 + $0x1e0] sm:$0xff]
  %v290 = vld [vmem:[%s228 + $0x1e8] sm:$0xff]
  %v291 = vld [vmem:[%s228 + $0x1f0] sm:$0xff]
  %v292 = vld [vmem:[%s228 + $0x1f8] sm:$0xff]
  %293 = vmatprep.subr.mxu0 %v230
  %294 = vmatpush1.msra.mxu0 %v229
  %295 = vmatprep.subr.mxu0 %v232
  %296 = vmatpush1.msra.mxu0 %v231
  %297 = vmatprep.subr.mxu0 %v234
  %298 = vmatpush1.msra.mxu0 %v233
  %299 = vmatprep.subr.mxu0 %v236
  %300 = vmatpush1.msra.mxu0 %v235
  %301 = vmatprep.subr.mxu0 %v238
  %302 = vmatpush1.msra.mxu0 %v237
  %303 = vmatprep.subr.mxu0 %v240
  %304 = vmatpush1.msra.mxu0 %v239
  %305 = vmatprep.subr.mxu0 %v242
  %306 = vmatpush1.msra.mxu0 %v241
  %307 = vmatprep.subr.mxu0 %v244
  %308 = vmatpush1.msra.mxu0 %v243
  %309 = vmatprep.subr.mxu0 %v246
  %310 = vmatpush1.msra.mxu0 %v245
  %311 = vmatprep.subr.mxu0 %v248
  %312 = vmatpush1.msra.mxu0 %v247
  %313 = vmatprep.subr.mxu0 %v250
  %314 = vmatpush1.msra.mxu0 %v249
  %315 = vmatprep.subr.mxu0 %v252
  %316 = vmatpush1.msra.mxu0 %v251
  %317 = vmatprep.subr.mxu0 %v254
  %318 = vmatpush1.msra.mxu0 %v253
  %319 = vmatprep.subr.mxu0 %v256
  %320 = vmatpush1.msra.mxu0 %v255
  %321 = vmatprep.subr.mxu0 %v258
  %322 = vmatpush1.msra.mxu0 %v257
  %323 = vmatprep.subr.mxu0 %v260
  %324 = vmatpush1.msra.mxu0 %v259
  %325 = vmatprep.subr.mxu0 %v262
  %326 = vmatpush1.msra.mxu0 %v261
  %327 = vmatprep.subr.mxu0 %v264
  %328 = vmatpush1.msra.mxu0 %v263
  %329 = vmatprep.subr.mxu0 %v266
  %330 = vmatpush1.msra.mxu0 %v265
  %331 = vmatprep.subr.mxu0 %v268
  %332 = vmatpush1.msra.mxu0 %v267
  %333 = vmatprep.subr.mxu0 %v270
  %334 = vmatpush1.msra.mxu0 %v269
  %335 = vmatprep.subr.mxu0 %v272
  %336 = vmatpush1.msra.mxu0 %v271
  %337 = vmatprep.subr.mxu0 %v274
  %338 = vmatpush1.msra.mxu0 %v273
  %339 = vmatprep.subr.mxu0 %v276
  %340 = vmatpush1.msra.mxu0 %v275
  %341 = vmatprep.subr.mxu0 %v278
  %342 = vmatpush1.msra.mxu0 %v277
  %343 = vmatprep.subr.mxu0 %v280
  %344 = vmatpush1.msra.mxu0 %v279
  %345 = vmatprep.subr.mxu0 %v282
  %346 = vmatpush1.msra.mxu0 %v281
  %347 = vmatprep.subr.mxu0 %v284
  %348 = vmatpush1.msra.mxu0 %v283
  %349 = vmatprep.subr.mxu0 %v286
  %350 = vmatpush1.msra.mxu0 %v285
  %351 = vmatprep.subr.mxu0 %v288
  %352 = vmatpush1.msra.mxu0 %v287
  %353 = vmatprep.subr.mxu0 %v290
  %354 = vmatpush1.msra.mxu0 %v289
  %355 = vmatprep.subr.mxu0 %v292
  %356 = vmatpush1.msra.mxu0 %v291
  %357 = vmatprep.mubr.f32.mxu0 %v36
  %358 = vmatmul.mubr.f32.gmra.mrb[0].mxu0 %v35
  %v359 = vpop.f32.mrb[0].mxu0
  %v360 = vadd.f32 0.0, %v359
  %v361 = vpop.f32.mrb[0].mxu0
  %v362 = vadd.f32 0.0, %v361
  %363 = vmatprep.mubr.f32.mxu0 %v38
  %364 = vmatmul.mubr.f32.gmra.mrb[0].mxu0 %v37
  %v365 = vpop.f32.mrb[0].mxu0
  %v366 = vadd.f32 0.0, %v365
  %v367 = vpop.f32.mrb[0].mxu0
  %v368 = vadd.f32 0.0, %v367
  %369 = vmatprep.mubr.f32.mxu0 %v40
  %370 = vmatmul.mubr.f32.gmra.mrb[0].mxu0 %v39
  %v371 = vpop.f32.mrb[0].mxu0
  %v372 = vadd.f32 0.0, %v371
  %v373 = vpop.f32.mrb[0].mxu0
  %v374 = vadd.f32 0.0, %v373
  %375 = vmatprep.mubr.f32.mxu0 %v42
  %376 = vmatmul.mubr.f32.gmra.mrb[0].mxu0 %v41
  %v377 = vpop.f32.mrb[0].mxu0
  %v378 = vadd.f32 0.0, %v377
  %v379 = vpop.f32.mrb[0].mxu0
  %v380 = vadd.f32 0.0, %v379
  %381 = vmatprep.mubr.f32.mxu0 %v44
  %382 = vmatmul.mubr.f32.gmra.mrb[0].mxu0 %v43
  %v383 = vpop.f32.mrb[0].mxu0
  %v384 = vadd.f32 0.0, %v383
  %v385 = vpop.f32.mrb[0].mxu0
  %v386 = vadd.f32 0.0, %v385
  %387 = vmatprep.mubr.f32.mxu0 %v46
  %388 = vmatmul.mubr.f32.gmra.mrb[0].mxu0 %v45
  %v389 = vpop.f32.mrb[0].mxu0
  %v390 = vadd.f32 0.0, %v389
  %v391 = vpop.f32.mrb[0].mxu0
  %v392 = vadd.f32 0.0, %v391
  %393 = vmatprep.mubr.f32.mxu0 %v48
  %394 = vmatmul.mubr.f32.gmra.mrb[0].mxu0 %v47
  %v395 = vpop.f32.mrb[0].mxu0
  %v396 = vadd.f32 0.0, %v395
  %v397 = vpop.f32.mrb[0].mxu0
  %v398 = vadd.f32 0.0, %v397
  %399 = vmatprep.mubr.f32.mxu0 %v50
  %400 = vmatmul.mubr.f32.gmra.mrb[0].mxu0 %v49
  %v401 = vpop.f32.mrb[0].mxu0
  %v402 = vadd.f32 0.0, %v401
  %v403 = vpop.f32.mrb[0].mxu0
  %v404 = vadd.f32 0.0, %v403
  %405 = vdwg.mxu0
  %v406 = vadd.f32 %v182, %v184
  %v407 = vadd.f32 %v406, %v360
  %v408 = vadd.f32 %v407, %v362
  %409 = vadd.xlane.f32.xlu0 %v408
  %v410 = vpop.xlane.xlu0 %409
  %v411 = vadd.f32 %v188, %v190
  %v412 = vadd.f32 %v411, %v366
  %v413 = vadd.f32 %v412, %v368
  %414 = vadd.xlane.f32.xlu0 %v413
  %v415 = vpop.xlane.xlu0 %414
  %v416 = vadd.f32 %v194, %v196
  %v417 = vadd.f32 %v416, %v372
  %v418 = vadd.f32 %v417, %v374
  %419 = vadd.xlane.f32.xlu0 %v418
  %v420 = vpop.xlane.xlu0 %419
  %v421 = vadd.f32 %v200, %v202
  %v422 = vadd.f32 %v421, %v378
  %v423 = vadd.f32 %v422, %v380
  %424 = vadd.xlane.f32.xlu0 %v423
  %v425 = vpop.xlane.xlu0 %424
  %v426 = vadd.f32 %v206, %v208
  %v427 = vadd.f32 %v426, %v384
  %v428 = vadd.f32 %v427, %v386
  %429 = vadd.xlane.f32.xlu0 %v428
  %v430 = vpop.xlane.xlu0 %429
  %v431 = vadd.f32 %v212, %v214
  %v432 = vadd.f32 %v431, %v390
  %v433 = vadd.f32 %v432, %v392
  %434 = vadd.xlane.f32.xlu0 %v433
  %v435 = vpop.xlane.xlu0 %434
  %v436 = vadd.f32 %v218, %v220
  %v437 = vadd.f32 %v436, %v396
  %v438 = vadd.f32 %v437, %v398
  %439 = vadd.xlane.f32.xlu0 %v438
  %v440 = vpop.xlane.xlu0 %439
  %v441 = vadd.f32 %v224, %v226
  %v442 = vadd.f32 %v441, %v402
  %v443 = vadd.f32 %v442, %v404
  %444 = vadd.xlane.f32.xlu0 %v443
  %v445 = vpop.xlane.xlu0 %444
  %v446 = vmul.f32 %v410, 0.001953125
  %v447 = vmul.f32 %v415, 0.001953125
  %v448 = vmul.f32 %v420, 0.001953125
  %v449 = vmul.f32 %v425, 0.001953125
  %v450 = vmul.f32 %v430, 0.001953125
  %v451 = vmul.f32 %v435, 0.001953125
  %v452 = vmul.f32 %v440, 0.001953125
  %v453 = vmul.f32 %v445, 0.001953125
  %v454 = vmul.f32 %v182, %v182
  %v455 = vmul.f32 %v184, %v184
  %v456 = vmul.f32 %v360, %v360
  %v457 = vmul.f32 %v362, %v362
  %v458 = vmul.f32 %v188, %v188
  %v459 = vmul.f32 %v190, %v190
  %v460 = vmul.f32 %v366, %v366
  %v461 = vmul.f32 %v368, %v368
  %v462 = vmul.f32 %v194, %v194
  %v463 = vmul.f32 %v196, %v196
  %v464 = vmul.f32 %v372, %v372
  %v465 = vmul.f32 %v374, %v374
  %v466 = vmul.f32 %v200, %v200
  %v467 = vmul.f32 %v202, %v202
  %v468 = vmul.f32 %v378, %v378
  %v469 = vmul.f32 %v380, %v380
  %v470 = vmul.f32 %v206, %v206
  %v471 = vmul.f32 %v208, %v208
  %v472 = vmul.f32 %v384, %v384
  %v473 = vmul.f32 %v386, %v386
  %v474 = vmul.f32 %v212, %v212
  %v475 = vmul.f32 %v214, %v214
  %v476 = vmul.f32 %v390, %v390
  %v477 = vmul.f32 %v392, %v392
  %v478 = vmul.f32 %v218, %v218
  %v479 = vmul.f32 %v220, %v220
  %v480 = vmul.f32 %v396, %v396
  %v481 = vmul.f32 %v398, %v398
  %v482 = vmul.f32 %v224, %v224
  %v483 = vmul.f32 %v226, %v226
  %v484 = vmul.f32 %v402, %v402
  %v485 = vmul.f32 %v404, %v404
  %v486 = vadd.f32 %v454, %v455
  %v487 = vadd.f32 %v486, %v456
  %v488 = vadd.f32 %v487, %v457
  %489 = vadd.xlane.f32.xlu0 %v488
  %v490 = vpop.xlane.xlu0 %489
  %v491 = vadd.f32 %v458, %v459
  %v492 = vadd.f32 %v491, %v460
  %v493 = vadd.f32 %v492, %v461
  %494 = vadd.xlane.f32.xlu0 %v493
  %v495 = vpop.xlane.xlu0 %494
  %v496 = vadd.f32 %v462, %v463
  %v497 = vadd.f32 %v496, %v464
  %v498 = vadd.f32 %v497, %v465
  %499 = vadd.xlane.f32.xlu0 %v498
  %v500 = vpop.xlane.xlu0 %499
  %v501 = vadd.f32 %v466, %v467
  %v502 = vadd.f32 %v501, %v468
  %v503 = vadd.f32 %v502, %v469
  %504 = vadd.xlane.f32.xlu0 %v503
  %v505 = vpop.xlane.xlu0 %504
  %v506 = vadd.f32 %v470, %v471
  %v507 = vadd.f32 %v506, %v472
  %v508 = vadd.f32 %v507, %v473
  %509 = vadd.xlane.f32.xlu0 %v508
  %v510 = vpop.xlane.xlu0 %509
  %v511 = vadd.f32 %v474, %v475
  %v512 = vadd.f32 %v511, %v476
  %v513 = vadd.f32 %v512, %v477
  %514 = vadd.xlane.f32.xlu0 %v513
  %v515 = vpop.xlane.xlu0 %514
  %v516 = vadd.f32 %v478, %v479
  %v517 = vadd.f32 %v516, %v480
  %v518 = vadd.f32 %v517, %v481
  %519 = vadd.xlane.f32.xlu0 %v518
  %v520 = vpop.xlane.xlu0 %519
  %v521 = vadd.f32 %v482, %v483
  %v522 = vadd.f32 %v521, %v484
  %v523 = vadd.f32 %v522, %v485
  %524 = vadd.xlane.f32.xlu0 %v523
  %v525 = vpop.xlane.xlu0 %524
  %v526 = vmul.f32 %v490, 0.001953125
  %v527 = vmul.f32 %v495, 0.001953125
  %v528 = vmul.f32 %v500, 0.001953125
  %v529 = vmul.f32 %v505, 0.001953125
  %v530 = vmul.f32 %v510, 0.001953125
  %v531 = vmul.f32 %v515, 0.001953125
  %v532 = vmul.f32 %v520, 0.001953125
  %v533 = vmul.f32 %v525, 0.001953125
  %v534 = vmul.f32 %v446, %v446
  %v535 = vmul.f32 %v447, %v447
  %v536 = vmul.f32 %v448, %v448
  %v537 = vmul.f32 %v449, %v449
  %v538 = vmul.f32 %v450, %v450
  %v539 = vmul.f32 %v451, %v451
  %v540 = vmul.f32 %v452, %v452
  %v541 = vmul.f32 %v453, %v453
  %v542 = vsub.f32 %v526, %v534
  %v543 = vsub.f32 %v527, %v535
  %v544 = vsub.f32 %v528, %v536
  %v545 = vsub.f32 %v529, %v537
  %v546 = vsub.f32 %v530, %v538
  %v547 = vsub.f32 %v531, %v539
  %v548 = vsub.f32 %v532, %v540
  %v549 = vsub.f32 %v533, %v541
  %v550 = vld [vmem:[%s2] sm:$0xff]
  %v551 = vld [vmem:[%s2 + $0x8] sm:$0xff]
  %v552 = vld [vmem:[%s2 + $0x10] sm:$0xff]
  %v553 = vld [vmem:[%s2 + $0x18] sm:$0xff]
  %v554 = vld [vmem:[%s2 + $0x20] sm:$0xff]
  %v555 = vld [vmem:[%s2 + $0x28] sm:$0xff]
  %v556 = vld [vmem:[%s2 + $0x30] sm:$0xff]
  %v557 = vld [vmem:[%s2 + $0x38] sm:$0xff]
  %v558 = vadd.f32 %v542, 1e-05
  %v559 = vadd.f32 %v543, 1e-05
  %v560 = vadd.f32 %v544, 1e-05
  %v561 = vadd.f32 %v545, 1e-05
  %v562 = vadd.f32 %v546, 1e-05
  %v563 = vadd.f32 %v547, 1e-05
  %v564 = vadd.f32 %v548, 1e-05
  %v565 = vadd.f32 %v549, 1e-05
  %v566 = vrsqrt.pop %v558
  %v567 = vrsqrt.pop %v559
  %v568 = vrsqrt.pop %v560
  %v569 = vrsqrt.pop %v561
  %v570 = vrsqrt.pop %v562
  %v571 = vrsqrt.pop %v563
  %v572 = vrsqrt.pop %v564
  %v573 = vrsqrt.pop %v565
  %v574 = vmul.f32 %v550, %v566
  %v575 = vmul.f32 %v551, %v567
  %v576 = vmul.f32 %v552, %v568
  %v577 = vmul.f32 %v553, %v569
  %v578 = vmul.f32 %v554, %v570
  %v579 = vmul.f32 %v555, %v571
  %v580 = vmul.f32 %v556, %v572
  %v581 = vmul.f32 %v557, %v573
  %v582 = vld [vmem:[%s3] sm:$0xff]
  %v583 = vld [vmem:[%s3 + $0x8] sm:$0xff]
  %v584 = vld [vmem:[%s3 + $0x10] sm:$0xff]
  %v585 = vld [vmem:[%s3 + $0x18] sm:$0xff]
  %v586 = vld [vmem:[%s3 + $0x20] sm:$0xff]
  %v587 = vld [vmem:[%s3 + $0x28] sm:$0xff]
  %v588 = vld [vmem:[%s3 + $0x30] sm:$0xff]
  %v589 = vld [vmem:[%s3 + $0x38] sm:$0xff]
  %v590 = vmul.f32 %v446, %v574
  %v591 = vmul.f32 %v447, %v575
  %v592 = vmul.f32 %v448, %v576
  %v593 = vmul.f32 %v449, %v577
  %v594 = vmul.f32 %v450, %v578
  %v595 = vmul.f32 %v451, %v579
  %v596 = vmul.f32 %v452, %v580
  %v597 = vmul.f32 %v453, %v581
  %v598 = vsub.f32 %v582, %v590
  %v599 = vsub.f32 %v583, %v591
  %v600 = vsub.f32 %v584, %v592
  %v601 = vsub.f32 %v585, %v593
  %v602 = vsub.f32 %v586, %v594
  %v603 = vsub.f32 %v587, %v595
  %v604 = vsub.f32 %v588, %v596
  %v605 = vsub.f32 %v589, %v597
  %607 = vset.pattern.permute.xlu0 0
  %608 = vperm.xlu0 %607, %v574
  %v609 = vpop.permute.xlu0 %608
  %612 = vset.pattern.permute.xlu0 0
  %613 = vperm.xlu0 %612, %v575
  %v614 = vpop.permute.xlu0 %613
  %617 = vset.pattern.permute.xlu0 0
  %618 = vperm.xlu0 %617, %v576
  %v619 = vpop.permute.xlu0 %618
  %622 = vset.pattern.permute.xlu0 0
  %623 = vperm.xlu0 %622, %v577
  %v624 = vpop.permute.xlu0 %623
  %627 = vset.pattern.permute.xlu0 0
  %628 = vperm.xlu0 %627, %v578
  %v629 = vpop.permute.xlu0 %628
  %632 = vset.pattern.permute.xlu0 0
  %633 = vperm.xlu0 %632, %v579
  %v634 = vpop.permute.xlu0 %633
  %637 = vset.pattern.permute.xlu0 0
  %638 = vperm.xlu0 %637, %v580
  %v639 = vpop.permute.xlu0 %638
  %642 = vset.pattern.permute.xlu0 0
  %643 = vperm.xlu0 %642, %v581
  %v644 = vpop.permute.xlu0 %643
  %v646 = vmul.f32 %v182, %v609
  %v647 = vmul.f32 %v184, %v609
  %v648 = vmul.f32 %v360, %v609
  %v649 = vmul.f32 %v362, %v609
  %v650 = vmul.f32 %v188, %v614
  %v651 = vmul.f32 %v190, %v614
  %v652 = vmul.f32 %v366, %v614
  %v653 = vmul.f32 %v368, %v614
  %v654 = vmul.f32 %v194, %v619
  %v655 = vmul.f32 %v196, %v619
  %v656 = vmul.f32 %v372, %v619
  %v657 = vmul.f32 %v374, %v619
  %v658 = vmul.f32 %v200, %v624
  %v659 = vmul.f32 %v202, %v624
  %v660 = vmul.f32 %v378, %v624
  %v661 = vmul.f32 %v380, %v624
  %v662 = vmul.f32 %v206, %v629
  %v663 = vmul.f32 %v208, %v629
  %v664 = vmul.f32 %v384, %v629
  %v665 = vmul.f32 %v386, %v629
  %v666 = vmul.f32 %v212, %v634
  %v667 = vmul.f32 %v214, %v634
  %v668 = vmul.f32 %v390, %v634
  %v669 = vmul.f32 %v392, %v634
  %v670 = vmul.f32 %v218, %v639
  %v671 = vmul.f32 %v220, %v639
  %v672 = vmul.f32 %v396, %v639
  %v673 = vmul.f32 %v398, %v639
  %v674 = vmul.f32 %v224, %v644
  %v675 = vmul.f32 %v226, %v644
  %v676 = vmul.f32 %v402, %v644
  %v677 = vmul.f32 %v404, %v644
  %679 = vset.pattern.permute.xlu0 0
  %680 = vperm.xlu0 %679, %v598
  %v681 = vpop.permute.xlu0 %680
  %684 = vset.pattern.permute.xlu0 0
  %685 = vperm.xlu0 %684, %v599
  %v686 = vpop.permute.xlu0 %685
  %689 = vset.pattern.permute.xlu0 0
  %690 = vperm.xlu0 %689, %v600
  %v691 = vpop.permute.xlu0 %690
  %694 = vset.pattern.permute.xlu0 0
  %695 = vperm.xlu0 %694, %v601
  %v696 = vpop.permute.xlu0 %695
  %699 = vset.pattern.permute.xlu0 0
  %700 = vperm.xlu0 %699, %v602
  %v701 = vpop.permute.xlu0 %700
  %704 = vset.pattern.permute.xlu0 0
  %705 = vperm.xlu0 %704, %v603
  %v706 = vpop.permute.xlu0 %705
  %709 = vset.pattern.permute.xlu0 0
  %710 = vperm.xlu0 %709, %v604
  %v711 = vpop.permute.xlu0 %710
  %714 = vset.pattern.permute.xlu0 0
  %715 = vperm.xlu0 %714, %v605
  %v716 = vpop.permute.xlu0 %715
  %v718 = vadd.f32 %v646, %v681
  %v719 = vadd.f32 %v647, %v681
  %v720 = vadd.f32 %v648, %v681
  %v721 = vadd.f32 %v649, %v681
  %v722 = vadd.f32 %v650, %v686
  %v723 = vadd.f32 %v651, %v686
  %v724 = vadd.f32 %v652, %v686
  %v725 = vadd.f32 %v653, %v686
  %v726 = vadd.f32 %v654, %v691
  %v727 = vadd.f32 %v655, %v691
  %v728 = vadd.f32 %v656, %v691
  %v729 = vadd.f32 %v657, %v691
  %v730 = vadd.f32 %v658, %v696
  %v731 = vadd.f32 %v659, %v696
  %v732 = vadd.f32 %v660, %v696
  %v733 = vadd.f32 %v661, %v696
  %v734 = vadd.f32 %v662, %v701
  %v735 = vadd.f32 %v663, %v701
  %v736 = vadd.f32 %v664, %v701
  %v737 = vadd.f32 %v665, %v701
  %v738 = vadd.f32 %v666, %v706
  %v739 = vadd.f32 %v667, %v706
  %v740 = vadd.f32 %v668, %v706
  %v741 = vadd.f32 %v669, %v706
  %v742 = vadd.f32 %v670, %v711
  %v743 = vadd.f32 %v671, %v711
  %v744 = vadd.f32 %v672, %v711
  %v745 = vadd.f32 %v673, %v711
  %v746 = vadd.f32 %v674, %v716
  %v747 = vadd.f32 %v675, %v716
  %v748 = vadd.f32 %v676, %v716
  %v749 = vadd.f32 %v677, %v716
  %v750 = vmax.f32 %v718, 0.0
  %v751 = vmax.f32 %v719, 0.0
  %v752 = vmax.f32 %v720, 0.0
  %v753 = vmax.f32 %v721, 0.0
  %v754 = vmax.f32 %v722, 0.0
  %v755 = vmax.f32 %v723, 0.0
  %v756 = vmax.f32 %v724, 0.0
  %v757 = vmax.f32 %v725, 0.0
  %v758 = vmax.f32 %v726, 0.0
  %v759 = vmax.f32 %v727, 0.0
  %v760 = vmax.f32 %v728, 0.0
  %v761 = vmax.f32 %v729, 0.0
  %v762 = vmax.f32 %v730, 0.0
  %v763 = vmax.f32 %v731, 0.0
  %v764 = vmax.f32 %v732, 0.0
  %v765 = vmax.f32 %v733, 0.0
  %v766 = vmax.f32 %v734, 0.0
  %v767 = vmax.f32 %v735, 0.0
  %v768 = vmax.f32 %v736, 0.0
  %v769 = vmax.f32 %v737, 0.0
  %v770 = vmax.f32 %v738, 0.0
  %v771 = vmax.f32 %v739, 0.0
  %v772 = vmax.f32 %v740, 0.0
  %v773 = vmax.f32 %v741, 0.0
  %v774 = vmax.f32 %v742, 0.0
  %v775 = vmax.f32 %v743, 0.0
  %v776 = vmax.f32 %v744, 0.0
  %v777 = vmax.f32 %v745, 0.0
  %v778 = vmax.f32 %v746, 0.0
  %v779 = vmax.f32 %v747, 0.0
  %v780 = vmax.f32 %v748, 0.0
  %v781 = vmax.f32 %v749, 0.0
  %v782 = vlaneseq
  %v783 = vand.u32 %v782, 127
  %v784 = vadd.s32 %v783, 128
  %v785 = vadd.s32 %v783, 256
  %v786 = vadd.s32 %v783, 384
  %v787 = vand.u32 %v783, 15
  %v788 = vand.u32 %v784, 15
  %v789 = vand.u32 %v785, 15
  %v790 = vand.u32 %v786, 15
  %v791 = vshra.s32 %v783, 4
  %v792 = vshra.s32 %v784, 4
  %v793 = vshra.s32 %v785, 4
  %v794 = vshra.s32 %v786, 4
  %v795 = vand.u32 %v791, 15
  %v796 = vand.u32 %v792, 15
  %v797 = vand.u32 %v793, 15
  %v798 = vand.u32 %v794, 15
  %vm799 = vcmp.ge.s32.totalorder %v795, 1
  %vm800 = vcmp.ge.s32.totalorder %v796, 1
  %vm801 = vcmp.ge.s32.totalorder %v797, 1
  %vm802 = vcmp.ge.s32.totalorder %v798, 1
  %vm803 = vcmp.le.s32.totalorder %v795, 14
  %vm804 = vcmp.le.s32.totalorder %v796, 14
  %vm805 = vcmp.le.s32.totalorder %v797, 14
  %vm806 = vcmp.le.s32.totalorder %v798, 14
  %vm807 = vcmp.ge.s32.totalorder %v787, 1
  %vm808 = vcmp.ge.s32.totalorder %v788, 1
  %vm809 = vcmp.ge.s32.totalorder %v789, 1
  %vm810 = vcmp.ge.s32.totalorder %v790, 1
  %vm811 = vcmp.le.s32.totalorder %v787, 14
  %vm812 = vcmp.le.s32.totalorder %v788, 14
  %vm813 = vcmp.le.s32.totalorder %v789, 14
  %vm814 = vcmp.le.s32.totalorder %v790, 14
  %s815 = scalar_lea.vmem %s4, 256
  %v816 = vld [vmem:[%s815] sm:$0xff]
  %v817 = vld [vmem:[%s815 + $0x8] sm:$0xff]
  %v818 = vld [vmem:[%s815 + $0x10] sm:$0xff]
  %v819 = vld [vmem:[%s815 + $0x18] sm:$0xff]
  %v820 = vld [vmem:[%s815 + $0x20] sm:$0xff]
  %v821 = vld [vmem:[%s815 + $0x28] sm:$0xff]
  %v822 = vld [vmem:[%s815 + $0x30] sm:$0xff]
  %v823 = vld [vmem:[%s815 + $0x38] sm:$0xff]
  %vm824 = vmand %vm799, %vm807
  %vm825 = vmand %vm800, %vm808
  %vm826 = vmand %vm801, %vm809
  %vm827 = vmand %vm802, %vm810
  %828 = vrot.lane.b32.xlu0 %v750, 17
  %v829 = vpop.permute.xlu0 %828
  %830 = vrot.lane.b32.xlu0 %v754, 17
  %v831 = vpop.permute.xlu0 %830
  %832 = vrot.lane.b32.xlu0 %v758, 17
  %v833 = vpop.permute.xlu0 %832
  %834 = vrot.lane.b32.xlu0 %v762, 17
  %v835 = vpop.permute.xlu0 %834
  %836 = vrot.lane.b32.xlu0 %v766, 17
  %v837 = vpop.permute.xlu0 %836
  %838 = vrot.lane.b32.xlu0 %v770, 17
  %v839 = vpop.permute.xlu0 %838
  %840 = vrot.lane.b32.xlu0 %v774, 17
  %v841 = vpop.permute.xlu0 %840
  %842 = vrot.lane.b32.xlu0 %v778, 17
  %v843 = vpop.permute.xlu0 %842
  %844 = vrot.lane.b32.xlu0 %v751, 17
  %v845 = vpop.permute.xlu0 %844
  %846 = vrot.lane.b32.xlu0 %v755, 17
  %v847 = vpop.permute.xlu0 %846
  %848 = vrot.lane.b32.xlu0 %v759, 17
  %v849 = vpop.permute.xlu0 %848
  %850 = vrot.lane.b32.xlu0 %v763, 17
  %v851 = vpop.permute.xlu0 %850
  %852 = vrot.lane.b32.xlu0 %v767, 17
  %v853 = vpop.permute.xlu0 %852
  %854 = vrot.lane.b32.xlu0 %v771, 17
  %v855 = vpop.permute.xlu0 %854
  %856 = vrot.lane.b32.xlu0 %v775, 17
  %v857 = vpop.permute.xlu0 %856
  %858 = vrot.lane.b32.xlu0 %v779, 17
  %v859 = vpop.permute.xlu0 %858
  %860 = vrot.lane.b32.xlu0 %v752, 17
  %v861 = vpop.permute.xlu0 %860
  %862 = vrot.lane.b32.xlu0 %v756, 17
  %v863 = vpop.permute.xlu0 %862
  %864 = vrot.lane.b32.xlu0 %v760, 17
  %v865 = vpop.permute.xlu0 %864
  %866 = vrot.lane.b32.xlu0 %v764, 17
  %v867 = vpop.permute.xlu0 %866
  %868 = vrot.lane.b32.xlu0 %v768, 17
  %v869 = vpop.permute.xlu0 %868
  %870 = vrot.lane.b32.xlu0 %v772, 17
  %v871 = vpop.permute.xlu0 %870
  %872 = vrot.lane.b32.xlu0 %v776, 17
  %v873 = vpop.permute.xlu0 %872
  %874 = vrot.lane.b32.xlu0 %v780, 17
  %v875 = vpop.permute.xlu0 %874
  %876 = vrot.lane.b32.xlu0 %v753, 17
  %v877 = vpop.permute.xlu0 %876
  %878 = vrot.lane.b32.xlu0 %v757, 17
  %v879 = vpop.permute.xlu0 %878
  %880 = vrot.lane.b32.xlu0 %v761, 17
  %v881 = vpop.permute.xlu0 %880
  %882 = vrot.lane.b32.xlu0 %v765, 17
  %v883 = vpop.permute.xlu0 %882
  %884 = vrot.lane.b32.xlu0 %v769, 17
  %v885 = vpop.permute.xlu0 %884
  %886 = vrot.lane.b32.xlu0 %v773, 17
  %v887 = vpop.permute.xlu0 %886
  %888 = vrot.lane.b32.xlu0 %v777, 17
  %v889 = vpop.permute.xlu0 %888
  %890 = vrot.lane.b32.xlu0 %v781, 17
  %v891 = vpop.permute.xlu0 %890
  %vm892 = vcmp.lt.s32.totalorder %v783, 17
  %v893 = vsel %vm892, %v861, %v877
  %v894 = vsel %vm892, %v863, %v879
  %v895 = vsel %vm892, %v865, %v881
  %v896 = vsel %vm892, %v867, %v883
  %v897 = vsel %vm892, %v869, %v885
  %v898 = vsel %vm892, %v871, %v887
  %v899 = vsel %vm892, %v873, %v889
  %v900 = vsel %vm892, %v875, %v891
  %v901 = vsel %vm892, %v845, %v861
  %v902 = vsel %vm892, %v847, %v863
  %v903 = vsel %vm892, %v849, %v865
  %v904 = vsel %vm892, %v851, %v867
  %v905 = vsel %vm892, %v853, %v869
  %v906 = vsel %vm892, %v855, %v871
  %v907 = vsel %vm892, %v857, %v873
  %v908 = vsel %vm892, %v859, %v875
  %v909 = vsel %vm892, %v829, %v845
  %v910 = vsel %vm892, %v831, %v847
  %v911 = vsel %vm892, %v833, %v849
  %v912 = vsel %vm892, %v835, %v851
  %v913 = vsel %vm892, %v837, %v853
  %v914 = vsel %vm892, %v839, %v855
  %v915 = vsel %vm892, %v841, %v857
  %v916 = vsel %vm892, %v843, %v859
  %v917 = vsel %vm892, %v877, %v829
  %v918 = vsel %vm892, %v879, %v831
  %v919 = vsel %vm892, %v881, %v833
  %v920 = vsel %vm892, %v883, %v835
  %v921 = vsel %vm892, %v885, %v837
  %v922 = vsel %vm892, %v887, %v839
  %v923 = vsel %vm892, %v889, %v841
  %v924 = vsel %vm892, %v891, %v843
  %v925 = vsel %vm824, 1, 0
  %v926 = vsel %vm825, 1, 0
  %v927 = vsel %vm826, 1, 0
  %v928 = vsel %vm827, 1, 0
  %vm929 = vcmp.eq.s32.totalorder %v925, 1
  %vm930 = vcmp.eq.s32.totalorder %v926, 1
  %vm931 = vcmp.eq.s32.totalorder %v927, 1
  %vm932 = vcmp.eq.s32.totalorder %v928, 1
  %v933 = vsel %vm929, %v917, 0.0
  %v934 = vsel %vm930, %v909, 0.0
  %v935 = vsel %vm931, %v901, 0.0
  %v936 = vsel %vm932, %v893, 0.0
  %v937 = vsel %vm929, %v918, 0.0
  %v938 = vsel %vm930, %v910, 0.0
  %v939 = vsel %vm931, %v902, 0.0
  %v940 = vsel %vm932, %v894, 0.0
  %v941 = vsel %vm929, %v919, 0.0
  %v942 = vsel %vm930, %v911, 0.0
  %v943 = vsel %vm931, %v903, 0.0
  %v944 = vsel %vm932, %v895, 0.0
  %v945 = vsel %vm929, %v920, 0.0
  %v946 = vsel %vm930, %v912, 0.0
  %v947 = vsel %vm931, %v904, 0.0
  %v948 = vsel %vm932, %v896, 0.0
  %v949 = vsel %vm929, %v921, 0.0
  %v950 = vsel %vm930, %v913, 0.0
  %v951 = vsel %vm931, %v905, 0.0
  %v952 = vsel %vm932, %v897, 0.0
  %v953 = vsel %vm929, %v922, 0.0
  %v954 = vsel %vm930, %v914, 0.0
  %v955 = vsel %vm931, %v906, 0.0
  %v956 = vsel %vm932, %v898, 0.0
  %v957 = vsel %vm929, %v923, 0.0
  %v958 = vsel %vm930, %v915, 0.0
  %v959 = vsel %vm931, %v907, 0.0
  %v960 = vsel %vm932, %v899, 0.0
  %v961 = vsel %vm929, %v924, 0.0
  %v962 = vsel %vm930, %v916, 0.0
  %v963 = vsel %vm931, %v908, 0.0
  %v964 = vsel %vm932, %v900, 0.0
  %v965 = vld [vmem:[%s4] sm:$0xff]
  %v966 = vld [vmem:[%s4 + $0x8] sm:$0xff]
  %v967 = vld [vmem:[%s4 + $0x10] sm:$0xff]
  %v968 = vld [vmem:[%s4 + $0x18] sm:$0xff]
  %v969 = vld [vmem:[%s4 + $0x20] sm:$0xff]
  %v970 = vld [vmem:[%s4 + $0x28] sm:$0xff]
  %v971 = vld [vmem:[%s4 + $0x30] sm:$0xff]
  %v972 = vld [vmem:[%s4 + $0x38] sm:$0xff]
  %vm973 = vcmask 523264
  %v975 = vsel %vm973, %v965, 0
  %v978 = vsel %vm973, %v966, 0
  %v981 = vsel %vm973, %v967, 0
  %v984 = vsel %vm973, %v968, 0
  %v987 = vsel %vm973, %v969, 0
  %v990 = vsel %vm973, %v970, 0
  %v993 = vsel %vm973, %v971, 0
  %v996 = vsel %vm973, %v972, 0
  %998 = vmatprep.subr.mxu0 %v934
  %999 = vmatpush1.msra.mxu0 %v933
  %1000 = vmatprep.subr.mxu0 %v938
  %1001 = vmatpush1.msra.mxu0 %v937
  %1002 = vmatprep.subr.mxu0 %v942
  %1003 = vmatpush1.msra.mxu0 %v941
  %1004 = vmatprep.subr.mxu0 %v946
  %1005 = vmatpush1.msra.mxu0 %v945
  %1006 = vmatprep.subr.mxu0 %v950
  %1007 = vmatpush1.msra.mxu0 %v949
  %1008 = vmatprep.subr.mxu0 %v954
  %1009 = vmatpush1.msra.mxu0 %v953
  %1010 = vmatprep.subr.mxu0 %v958
  %1011 = vmatpush1.msra.mxu0 %v957
  %1012 = vmatprep.subr.mxu0 %v962
  %1013 = vmatpush1.msra.mxu0 %v961
  %1014 = vmatprep.subr.mxu0 0.0
  %1015 = vmatpush1.msra.mxu0 0.0
  %1016 = vmatprep.subr.mxu0 0.0
  %1017 = vmatpush1.msra.mxu0 0.0
  %1018 = vmatprep.subr.mxu0 0.0
  %1019 = vmatpush1.msra.mxu0 0.0
  %1020 = vmatprep.subr.mxu0 0.0
  %1021 = vmatpush1.msra.mxu0 0.0
  %1022 = vmatprep.subr.mxu0 0.0
  %1023 = vmatpush1.msra.mxu0 0.0
  %1024 = vmatprep.subr.mxu0 0.0
  %1025 = vmatpush1.msra.mxu0 0.0
  %1026 = vmatprep.subr.mxu0 0.0
  %1027 = vmatpush1.msra.mxu0 0.0
  %1028 = vmatprep.subr.mxu0 0.0
  %1029 = vmatpush1.msra.mxu0 0.0
  %1030 = vmatprep.subr.mxu0 0.0
  %1031 = vmatpush1.msra.mxu0 0.0
  %1032 = vmatprep.subr.mxu0 0.0
  %1033 = vmatpush1.msra.mxu0 0.0
  %1034 = vmatprep.subr.mxu0 0.0
  %1035 = vmatpush1.msra.mxu0 0.0
  %1036 = vmatprep.subr.mxu0 0.0
  %1037 = vmatpush1.msra.mxu0 0.0
  %1038 = vmatprep.subr.mxu0 0.0
  %1039 = vmatpush1.msra.mxu0 0.0
  %1040 = vmatprep.subr.mxu0 0.0
  %1041 = vmatpush1.msra.mxu0 0.0
  %1042 = vmatprep.subr.mxu0 0.0
  %1043 = vmatpush1.msra.mxu0 0.0
  %1044 = vmatprep.subr.mxu0 0.0
  %1045 = vmatpush1.msra.mxu0 0.0
  %1046 = vmatprep.subr.mxu0 0.0
  %1047 = vmatpush1.msra.mxu0 0.0
  %1048 = vmatprep.subr.mxu0 0.0
  %1049 = vmatpush1.msra.mxu0 0.0
  %1050 = vmatprep.subr.mxu0 0.0
  %1051 = vmatpush1.msra.mxu0 0.0
  %1052 = vmatprep.subr.mxu0 0.0
  %1053 = vmatpush1.msra.mxu0 0.0
  %1054 = vmatprep.subr.mxu0 0.0
  %1055 = vmatpush1.msra.mxu0 0.0
  %1056 = vmatprep.subr.mxu0 0.0
  %1057 = vmatpush1.msra.mxu0 0.0
  %1058 = vmatprep.subr.mxu0 0.0
  %1059 = vmatpush1.msra.mxu0 0.0
  %1060 = vmatprep.subr.mxu0 0.0
  %1061 = vmatpush1.msra.mxu0 0.0
  %1062 = vmatprep.mubr.f32.mxu0 0.0
  %1063 = vmatmul.mubr.f32.gmra.mrb[0].mxu0 %v975
  %v1064 = vpop.f32.mrb[0].mxu0
  %v1065 = vadd.f32 0.0, %v1064
  %v1066 = vpop.f32.mrb[0].mxu0
  %v1067 = vadd.f32 0.0, %v1066
  %1068 = vmatprep.mubr.f32.mxu0 0.0
  %1069 = vmatmul.mubr.f32.gmra.mrb[0].mxu0 %v978
  %v1070 = vpop.f32.mrb[0].mxu0
  %v1071 = vadd.f32 0.0, %v1070
  %v1072 = vpop.f32.mrb[0].mxu0
  %v1073 = vadd.f32 0.0, %v1072
  %1074 = vmatprep.mubr.f32.mxu0 0.0
  %1075 = vmatmul.mubr.f32.gmra.mrb[0].mxu0 %v981
  %v1076 = vpop.f32.mrb[0].mxu0
  %v1077 = vadd.f32 0.0, %v1076
  %v1078 = vpop.f32.mrb[0].mxu0
  %v1079 = vadd.f32 0.0, %v1078
  %1080 = vmatprep.mubr.f32.mxu0 0.0
  %1081 = vmatmul.mubr.f32.gmra.mrb[0].mxu0 %v984
  %v1082 = vpop.f32.mrb[0].mxu0
  %v1083 = vadd.f32 0.0, %v1082
  %v1084 = vpop.f32.mrb[0].mxu0
  %v1085 = vadd.f32 0.0, %v1084
  %1086 = vmatprep.mubr.f32.mxu0 0.0
  %1087 = vmatmul.mubr.f32.gmra.mrb[0].mxu0 %v987
  %v1088 = vpop.f32.mrb[0].mxu0
  %v1089 = vadd.f32 0.0, %v1088
  %v1090 = vpop.f32.mrb[0].mxu0
  %v1091 = vadd.f32 0.0, %v1090
  %1092 = vmatprep.mubr.f32.mxu0 0.0
  %1093 = vmatmul.mubr.f32.gmra.mrb[0].mxu0 %v990
  %v1094 = vpop.f32.mrb[0].mxu0
  %v1095 = vadd.f32 0.0, %v1094
  %v1096 = vpop.f32.mrb[0].mxu0
  %v1097 = vadd.f32 0.0, %v1096
  %1098 = vmatprep.mubr.f32.mxu0 0.0
  %1099 = vmatmul.mubr.f32.gmra.mrb[0].mxu0 %v993
  %v1100 = vpop.f32.mrb[0].mxu0
  %v1101 = vadd.f32 0.0, %v1100
  %v1102 = vpop.f32.mrb[0].mxu0
  %v1103 = vadd.f32 0.0, %v1102
  %1104 = vmatprep.mubr.f32.mxu0 0.0
  %1105 = vmatmul.mubr.f32.gmra.mrb[0].mxu0 %v996
  %v1106 = vpop.f32.mrb[0].mxu0
  %v1107 = vadd.f32 0.0, %v1106
  %v1108 = vpop.f32.mrb[0].mxu0
  %v1109 = vadd.f32 0.0, %v1108
  %1110 = vdwg.mxu0
  %1111 = vmatprep.subr.mxu0 %v936
  %1112 = vmatpush1.msra.mxu0 %v935
  %1113 = vmatprep.subr.mxu0 %v940
  %1114 = vmatpush1.msra.mxu0 %v939
  %1115 = vmatprep.subr.mxu0 %v944
  %1116 = vmatpush1.msra.mxu0 %v943
  %1117 = vmatprep.subr.mxu0 %v948
  %1118 = vmatpush1.msra.mxu0 %v947
  %1119 = vmatprep.subr.mxu0 %v952
  %1120 = vmatpush1.msra.mxu0 %v951
  %1121 = vmatprep.subr.mxu0 %v956
  %1122 = vmatpush1.msra.mxu0 %v955
  %1123 = vmatprep.subr.mxu0 %v960
  %1124 = vmatpush1.msra.mxu0 %v959
  %1125 = vmatprep.subr.mxu0 %v964
  %1126 = vmatpush1.msra.mxu0 %v963
  %1127 = vmatprep.subr.mxu0 0.0
  %1128 = vmatpush1.msra.mxu0 0.0
  %1129 = vmatprep.subr.mxu0 0.0
  %1130 = vmatpush1.msra.mxu0 0.0
  %1131 = vmatprep.subr.mxu0 0.0
  %1132 = vmatpush1.msra.mxu0 0.0
  %1133 = vmatprep.subr.mxu0 0.0
  %1134 = vmatpush1.msra.mxu0 0.0
  %1135 = vmatprep.subr.mxu0 0.0
  %1136 = vmatpush1.msra.mxu0 0.0
  %1137 = vmatprep.subr.mxu0 0.0
  %1138 = vmatpush1.msra.mxu0 0.0
  %1139 = vmatprep.subr.mxu0 0.0
  %1140 = vmatpush1.msra.mxu0 0.0
  %1141 = vmatprep.subr.mxu0 0.0
  %1142 = vmatpush1.msra.mxu0 0.0
  %1143 = vmatprep.subr.mxu0 0.0
  %1144 = vmatpush1.msra.mxu0 0.0
  %1145 = vmatprep.subr.mxu0 0.0
  %1146 = vmatpush1.msra.mxu0 0.0
  %1147 = vmatprep.subr.mxu0 0.0
  %1148 = vmatpush1.msra.mxu0 0.0
  %1149 = vmatprep.subr.mxu0 0.0
  %1150 = vmatpush1.msra.mxu0 0.0
  %1151 = vmatprep.subr.mxu0 0.0
  %1152 = vmatpush1.msra.mxu0 0.0
  %1153 = vmatprep.subr.mxu0 0.0
  %1154 = vmatpush1.msra.mxu0 0.0
  %1155 = vmatprep.subr.mxu0 0.0
  %1156 = vmatpush1.msra.mxu0 0.0
  %1157 = vmatprep.subr.mxu0 0.0
  %1158 = vmatpush1.msra.mxu0 0.0
  %1159 = vmatprep.subr.mxu0 0.0
  %1160 = vmatpush1.msra.mxu0 0.0
  %1161 = vmatprep.subr.mxu0 0.0
  %1162 = vmatpush1.msra.mxu0 0.0
  %1163 = vmatprep.subr.mxu0 0.0
  %1164 = vmatpush1.msra.mxu0 0.0
  %1165 = vmatprep.subr.mxu0 0.0
  %1166 = vmatpush1.msra.mxu0 0.0
  %1167 = vmatprep.subr.mxu0 0.0
  %1168 = vmatpush1.msra.mxu0 0.0
  %1169 = vmatprep.subr.mxu0 0.0
  %1170 = vmatpush1.msra.mxu0 0.0
  %1171 = vmatprep.subr.mxu0 0.0
  %1172 = vmatpush1.msra.mxu0 0.0
  %1173 = vmatprep.subr.mxu0 0.0
  %1174 = vmatpush1.msra.mxu0 0.0
  %1175 = vmatprep.mubr.f32.mxu0 0.0
  %1176 = vmatmul.mubr.f32.gmra.mrb[0].mxu0 %v975
  %v1177 = vpop.f32.mrb[0].mxu0
  %v1178 = vadd.f32 0.0, %v1177
  %v1179 = vpop.f32.mrb[0].mxu0
  %v1180 = vadd.f32 0.0, %v1179
  %1181 = vmatprep.mubr.f32.mxu0 0.0
  %1182 = vmatmul.mubr.f32.gmra.mrb[0].mxu0 %v978
  %v1183 = vpop.f32.mrb[0].mxu0
  %v1184 = vadd.f32 0.0, %v1183
  %v1185 = vpop.f32.mrb[0].mxu0
  %v1186 = vadd.f32 0.0, %v1185
  %1187 = vmatprep.mubr.f32.mxu0 0.0
  %1188 = vmatmul.mubr.f32.gmra.mrb[0].mxu0 %v981
  %v1189 = vpop.f32.mrb[0].mxu0
  %v1190 = vadd.f32 0.0, %v1189
  %v1191 = vpop.f32.mrb[0].mxu0
  %v1192 = vadd.f32 0.0, %v1191
  %1193 = vmatprep.mubr.f32.mxu0 0.0
  %1194 = vmatmul.mubr.f32.gmra.mrb[0].mxu0 %v984
  %v1195 = vpop.f32.mrb[0].mxu0
  %v1196 = vadd.f32 0.0, %v1195
  %v1197 = vpop.f32.mrb[0].mxu0
  %v1198 = vadd.f32 0.0, %v1197
  %1199 = vmatprep.mubr.f32.mxu0 0.0
  %1200 = vmatmul.mubr.f32.gmra.mrb[0].mxu0 %v987
  %v1201 = vpop.f32.mrb[0].mxu0
  %v1202 = vadd.f32 0.0, %v1201
  %v1203 = vpop.f32.mrb[0].mxu0
  %v1204 = vadd.f32 0.0, %v1203
  %1205 = vmatprep.mubr.f32.mxu0 0.0
  %1206 = vmatmul.mubr.f32.gmra.mrb[0].mxu0 %v990
  %v1207 = vpop.f32.mrb[0].mxu0
  %v1208 = vadd.f32 0.0, %v1207
  %v1209 = vpop.f32.mrb[0].mxu0
  %v1210 = vadd.f32 0.0, %v1209
  %1211 = vmatprep.mubr.f32.mxu0 0.0
  %1212 = vmatmul.mubr.f32.gmra.mrb[0].mxu0 %v993
  %v1213 = vpop.f32.mrb[0].mxu0
  %v1214 = vadd.f32 0.0, %v1213
  %v1215 = vpop.f32.mrb[0].mxu0
  %v1216 = vadd.f32 0.0, %v1215
  %1217 = vmatprep.mubr.f32.mxu0 0.0
  %1218 = vmatmul.mubr.f32.gmra.mrb[0].mxu0 %v996
  %v1219 = vpop.f32.mrb[0].mxu0
  %v1220 = vadd.f32 0.0, %v1219
  %v1221 = vpop.f32.mrb[0].mxu0
  %v1222 = vadd.f32 0.0, %v1221
  %1223 = vdwg.mxu0
  %v1225 = vsel %vm973, %v816, 0
  %v1228 = vsel %vm973, %v817, 0
  %v1231 = vsel %vm973, %v818, 0
  %v1234 = vsel %vm973, %v819, 0
  %v1237 = vsel %vm973, %v820, 0
  %v1240 = vsel %vm973, %v821, 0
  %v1243 = vsel %vm973, %v822, 0
  %v1246 = vsel %vm973, %v823, 0
  %1248 = vmatprep.subr.mxu0 %v751
  %1249 = vmatpush1.msra.mxu0 %v750
  %1250 = vmatprep.subr.mxu0 %v755
  %1251 = vmatpush1.msra.mxu0 %v754
  %1252 = vmatprep.subr.mxu0 %v759
  %1253 = vmatpush1.msra.mxu0 %v758
  %1254 = vmatprep.subr.mxu0 %v763
  %1255 = vmatpush1.msra.mxu0 %v762
  %1256 = vmatprep.subr.mxu0 %v767
  %1257 = vmatpush1.msra.mxu0 %v766
  %1258 = vmatprep.subr.mxu0 %v771
  %1259 = vmatpush1.msra.mxu0 %v770
  %1260 = vmatprep.subr.mxu0 %v775
  %1261 = vmatpush1.msra.mxu0 %v774
  %1262 = vmatprep.subr.mxu0 %v779
  %1263 = vmatpush1.msra.mxu0 %v778
  %1264 = vmatprep.subr.mxu0 0.0
  %1265 = vmatpush1.msra.mxu0 0.0
  %1266 = vmatprep.subr.mxu0 0.0
  %1267 = vmatpush1.msra.mxu0 0.0
  %1268 = vmatprep.subr.mxu0 0.0
  %1269 = vmatpush1.msra.mxu0 0.0
  %1270 = vmatprep.subr.mxu0 0.0
  %1271 = vmatpush1.msra.mxu0 0.0
  %1272 = vmatprep.subr.mxu0 0.0
  %1273 = vmatpush1.msra.mxu0 0.0
  %1274 = vmatprep.subr.mxu0 0.0
  %1275 = vmatpush1.msra.mxu0 0.0
  %1276 = vmatprep.subr.mxu0 0.0
  %1277 = vmatpush1.msra.mxu0 0.0
  %1278 = vmatprep.subr.mxu0 0.0
  %1279 = vmatpush1.msra.mxu0 0.0
  %1280 = vmatprep.subr.mxu0 0.0
  %1281 = vmatpush1.msra.mxu0 0.0
  %1282 = vmatprep.subr.mxu0 0.0
  %1283 = vmatpush1.msra.mxu0 0.0
  %1284 = vmatprep.subr.mxu0 0.0
  %1285 = vmatpush1.msra.mxu0 0.0
  %1286 = vmatprep.subr.mxu0 0.0
  %1287 = vmatpush1.msra.mxu0 0.0
  %1288 = vmatprep.subr.mxu0 0.0
  %1289 = vmatpush1.msra.mxu0 0.0
  %1290 = vmatprep.subr.mxu0 0.0
  %1291 = vmatpush1.msra.mxu0 0.0
  %1292 = vmatprep.subr.mxu0 0.0
  %1293 = vmatpush1.msra.mxu0 0.0
  %1294 = vmatprep.subr.mxu0 0.0
  %1295 = vmatpush1.msra.mxu0 0.0
  %1296 = vmatprep.subr.mxu0 0.0
  %1297 = vmatpush1.msra.mxu0 0.0
  %1298 = vmatprep.subr.mxu0 0.0
  %1299 = vmatpush1.msra.mxu0 0.0
  %1300 = vmatprep.subr.mxu0 0.0
  %1301 = vmatpush1.msra.mxu0 0.0
  %1302 = vmatprep.subr.mxu0 0.0
  %1303 = vmatpush1.msra.mxu0 0.0
  %1304 = vmatprep.subr.mxu0 0.0
  %1305 = vmatpush1.msra.mxu0 0.0
  %1306 = vmatprep.subr.mxu0 0.0
  %1307 = vmatpush1.msra.mxu0 0.0
  %1308 = vmatprep.subr.mxu0 0.0
  %1309 = vmatpush1.msra.mxu0 0.0
  %1310 = vmatprep.subr.mxu0 0.0
  %1311 = vmatpush1.msra.mxu0 0.0
  %1312 = vmatprep.mubr.f32.mxu0 0.0
  %1313 = vmatmul.mubr.f32.gmra.mrb[0].mxu0 %v1225
  %v1314 = vpop.f32.mrb[0].mxu0
  %v1315 = vadd.f32 %v1065, %v1314
  %v1316 = vpop.f32.mrb[0].mxu0
  %v1317 = vadd.f32 %v1067, %v1316
  %1318 = vmatprep.mubr.f32.mxu0 0.0
  %1319 = vmatmul.mubr.f32.gmra.mrb[0].mxu0 %v1228
  %v1320 = vpop.f32.mrb[0].mxu0
  %v1321 = vadd.f32 %v1071, %v1320
  %v1322 = vpop.f32.mrb[0].mxu0
  %v1323 = vadd.f32 %v1073, %v1322
  %1324 = vmatprep.mubr.f32.mxu0 0.0
  %1325 = vmatmul.mubr.f32.gmra.mrb[0].mxu0 %v1231
  %v1326 = vpop.f32.mrb[0].mxu0
  %v1327 = vadd.f32 %v1077, %v1326
  %v1328 = vpop.f32.mrb[0].mxu0
  %v1329 = vadd.f32 %v1079, %v1328
  %1330 = vmatprep.mubr.f32.mxu0 0.0
  %1331 = vmatmul.mubr.f32.gmra.mrb[0].mxu0 %v1234
  %v1332 = vpop.f32.mrb[0].mxu0
  %v1333 = vadd.f32 %v1083, %v1332
  %v1334 = vpop.f32.mrb[0].mxu0
  %v1335 = vadd.f32 %v1085, %v1334
  %1336 = vmatprep.mubr.f32.mxu0 0.0
  %1337 = vmatmul.mubr.f32.gmra.mrb[0].mxu0 %v1237
  %v1338 = vpop.f32.mrb[0].mxu0
  %v1339 = vadd.f32 %v1089, %v1338
  %v1340 = vpop.f32.mrb[0].mxu0
  %v1341 = vadd.f32 %v1091, %v1340
  %1342 = vmatprep.mubr.f32.mxu0 0.0
  %1343 = vmatmul.mubr.f32.gmra.mrb[0].mxu0 %v1240
  %v1344 = vpop.f32.mrb[0].mxu0
  %v1345 = vadd.f32 %v1095, %v1344
  %v1346 = vpop.f32.mrb[0].mxu0
  %v1347 = vadd.f32 %v1097, %v1346
  %1348 = vmatprep.mubr.f32.mxu0 0.0
  %1349 = vmatmul.mubr.f32.gmra.mrb[0].mxu0 %v1243
  %v1350 = vpop.f32.mrb[0].mxu0
  %v1351 = vadd.f32 %v1101, %v1350
  %v1352 = vpop.f32.mrb[0].mxu0
  %v1353 = vadd.f32 %v1103, %v1352
  %1354 = vmatprep.mubr.f32.mxu0 0.0
  %1355 = vmatmul.mubr.f32.gmra.mrb[0].mxu0 %v1246
  %v1356 = vpop.f32.mrb[0].mxu0
  %v1357 = vadd.f32 %v1107, %v1356
  %v1358 = vpop.f32.mrb[0].mxu0
  %v1359 = vadd.f32 %v1109, %v1358
  %1360 = vdwg.mxu0
  %1361 = vmatprep.subr.mxu0 %v753
  %1362 = vmatpush1.msra.mxu0 %v752
  %1363 = vmatprep.subr.mxu0 %v757
  %1364 = vmatpush1.msra.mxu0 %v756
  %1365 = vmatprep.subr.mxu0 %v761
  %1366 = vmatpush1.msra.mxu0 %v760
  %1367 = vmatprep.subr.mxu0 %v765
  %1368 = vmatpush1.msra.mxu0 %v764
  %1369 = vmatprep.subr.mxu0 %v769
  %1370 = vmatpush1.msra.mxu0 %v768
  %1371 = vmatprep.subr.mxu0 %v773
  %1372 = vmatpush1.msra.mxu0 %v772
  %1373 = vmatprep.subr.mxu0 %v777
  %1374 = vmatpush1.msra.mxu0 %v776
  %1375 = vmatprep.subr.mxu0 %v781
  %1376 = vmatpush1.msra.mxu0 %v780
  %1377 = vmatprep.subr.mxu0 0.0
  %1378 = vmatpush1.msra.mxu0 0.0
  %1379 = vmatprep.subr.mxu0 0.0
  %1380 = vmatpush1.msra.mxu0 0.0
  %1381 = vmatprep.subr.mxu0 0.0
  %1382 = vmatpush1.msra.mxu0 0.0
  %1383 = vmatprep.subr.mxu0 0.0
  %1384 = vmatpush1.msra.mxu0 0.0
  %1385 = vmatprep.subr.mxu0 0.0
  %1386 = vmatpush1.msra.mxu0 0.0
  %1387 = vmatprep.subr.mxu0 0.0
  %1388 = vmatpush1.msra.mxu0 0.0
  %1389 = vmatprep.subr.mxu0 0.0
  %1390 = vmatpush1.msra.mxu0 0.0
  %1391 = vmatprep.subr.mxu0 0.0
  %1392 = vmatpush1.msra.mxu0 0.0
  %1393 = vmatprep.subr.mxu0 0.0
  %1394 = vmatpush1.msra.mxu0 0.0
  %1395 = vmatprep.subr.mxu0 0.0
  %1396 = vmatpush1.msra.mxu0 0.0
  %1397 = vmatprep.subr.mxu0 0.0
  %1398 = vmatpush1.msra.mxu0 0.0
  %1399 = vmatprep.subr.mxu0 0.0
  %1400 = vmatpush1.msra.mxu0 0.0
  %1401 = vmatprep.subr.mxu0 0.0
  %1402 = vmatpush1.msra.mxu0 0.0
  %1403 = vmatprep.subr.mxu0 0.0
  %1404 = vmatpush1.msra.mxu0 0.0
  %1405 = vmatprep.subr.mxu0 0.0
  %1406 = vmatpush1.msra.mxu0 0.0
  %1407 = vmatprep.subr.mxu0 0.0
  %1408 = vmatpush1.msra.mxu0 0.0
  %1409 = vmatprep.subr.mxu0 0.0
  %1410 = vmatpush1.msra.mxu0 0.0
  %1411 = vmatprep.subr.mxu0 0.0
  %1412 = vmatpush1.msra.mxu0 0.0
  %1413 = vmatprep.subr.mxu0 0.0
  %1414 = vmatpush1.msra.mxu0 0.0
  %1415 = vmatprep.subr.mxu0 0.0
  %1416 = vmatpush1.msra.mxu0 0.0
  %1417 = vmatprep.subr.mxu0 0.0
  %1418 = vmatpush1.msra.mxu0 0.0
  %1419 = vmatprep.subr.mxu0 0.0
  %1420 = vmatpush1.msra.mxu0 0.0
  %1421 = vmatprep.subr.mxu0 0.0
  %1422 = vmatpush1.msra.mxu0 0.0
  %1423 = vmatprep.subr.mxu0 0.0
  %1424 = vmatpush1.msra.mxu0 0.0
  %1425 = vmatprep.mubr.f32.mxu0 0.0
  %1426 = vmatmul.mubr.f32.gmra.mrb[0].mxu0 %v1225
  %v1427 = vpop.f32.mrb[0].mxu0
  %v1428 = vadd.f32 %v1178, %v1427
  %v1429 = vpop.f32.mrb[0].mxu0
  %v1430 = vadd.f32 %v1180, %v1429
  %1431 = vmatprep.mubr.f32.mxu0 0.0
  %1432 = vmatmul.mubr.f32.gmra.mrb[0].mxu0 %v1228
  %v1433 = vpop.f32.mrb[0].mxu0
  %v1434 = vadd.f32 %v1184, %v1433
  %v1435 = vpop.f32.mrb[0].mxu0
  %v1436 = vadd.f32 %v1186, %v1435
  %1437 = vmatprep.mubr.f32.mxu0 0.0
  %1438 = vmatmul.mubr.f32.gmra.mrb[0].mxu0 %v1231
  %v1439 = vpop.f32.mrb[0].mxu0
  %v1440 = vadd.f32 %v1190, %v1439
  %v1441 = vpop.f32.mrb[0].mxu0
  %v1442 = vadd.f32 %v1192, %v1441
  %1443 = vmatprep.mubr.f32.mxu0 0.0
  %1444 = vmatmul.mubr.f32.gmra.mrb[0].mxu0 %v1234
  %v1445 = vpop.f32.mrb[0].mxu0
  %v1446 = vadd.f32 %v1196, %v1445
  %v1447 = vpop.f32.mrb[0].mxu0
  %v1448 = vadd.f32 %v1198, %v1447
  %1449 = vmatprep.mubr.f32.mxu0 0.0
  %1450 = vmatmul.mubr.f32.gmra.mrb[0].mxu0 %v1237
  %v1451 = vpop.f32.mrb[0].mxu0
  %v1452 = vadd.f32 %v1202, %v1451
  %v1453 = vpop.f32.mrb[0].mxu0
  %v1454 = vadd.f32 %v1204, %v1453
  %1455 = vmatprep.mubr.f32.mxu0 0.0
  %1456 = vmatmul.mubr.f32.gmra.mrb[0].mxu0 %v1240
  %v1457 = vpop.f32.mrb[0].mxu0
  %v1458 = vadd.f32 %v1208, %v1457
  %v1459 = vpop.f32.mrb[0].mxu0
  %v1460 = vadd.f32 %v1210, %v1459
  %1461 = vmatprep.mubr.f32.mxu0 0.0
  %1462 = vmatmul.mubr.f32.gmra.mrb[0].mxu0 %v1243
  %v1463 = vpop.f32.mrb[0].mxu0
  %v1464 = vadd.f32 %v1214, %v1463
  %v1465 = vpop.f32.mrb[0].mxu0
  %v1466 = vadd.f32 %v1216, %v1465
  %1467 = vmatprep.mubr.f32.mxu0 0.0
  %1468 = vmatmul.mubr.f32.gmra.mrb[0].mxu0 %v1246
  %v1469 = vpop.f32.mrb[0].mxu0
  %v1470 = vadd.f32 %v1220, %v1469
  %v1471 = vpop.f32.mrb[0].mxu0
  %v1472 = vadd.f32 %v1222, %v1471
  %1473 = vdwg.mxu0
  %1474 = vrot.lane.b32.xlu0 %v750, 16
  %v1475 = vpop.permute.xlu0 %1474
  %1476 = vrot.lane.b32.xlu0 %v754, 16
  %v1477 = vpop.permute.xlu0 %1476
  %1478 = vrot.lane.b32.xlu0 %v758, 16
  %v1479 = vpop.permute.xlu0 %1478
  %1480 = vrot.lane.b32.xlu0 %v762, 16
  %v1481 = vpop.permute.xlu0 %1480
  %1482 = vrot.lane.b32.xlu0 %v766, 16
  %v1483 = vpop.permute.xlu0 %1482
  %1484 = vrot.lane.b32.xlu0 %v770, 16
  %v1485 = vpop.permute.xlu0 %1484
  %1486 = vrot.lane.b32.xlu0 %v774, 16
  %v1487 = vpop.permute.xlu0 %1486
  %1488 = vrot.lane.b32.xlu0 %v778, 16
  %v1489 = vpop.permute.xlu0 %1488
  %1490 = vrot.lane.b32.xlu0 %v751, 16
  %v1491 = vpop.permute.xlu0 %1490
  %1492 = vrot.lane.b32.xlu0 %v755, 16
  %v1493 = vpop.permute.xlu0 %1492
  %1494 = vrot.lane.b32.xlu0 %v759, 16
  %v1495 = vpop.permute.xlu0 %1494
  %1496 = vrot.lane.b32.xlu0 %v763, 16
  %v1497 = vpop.permute.xlu0 %1496
  %1498 = vrot.lane.b32.xlu0 %v767, 16
  %v1499 = vpop.permute.xlu0 %1498
  %1500 = vrot.lane.b32.xlu0 %v771, 16
  %v1501 = vpop.permute.xlu0 %1500
  %1502 = vrot.lane.b32.xlu0 %v775, 16
  %v1503 = vpop.permute.xlu0 %1502
  %1504 = vrot.lane.b32.xlu0 %v779, 16
  %v1505 = vpop.permute.xlu0 %1504
  %1506 = vrot.lane.b32.xlu0 %v752, 16
  %v1507 = vpop.permute.xlu0 %1506
  %1508 = vrot.lane.b32.xlu0 %v756, 16
  %v1509 = vpop.permute.xlu0 %1508
  %1510 = vrot.lane.b32.xlu0 %v760, 16
  %v1511 = vpop.permute.xlu0 %1510
  %1512 = vrot.lane.b32.xlu0 %v764, 16
  %v1513 = vpop.permute.xlu0 %1512
  %1514 = vrot.lane.b32.xlu0 %v768, 16
  %v1515 = vpop.permute.xlu0 %1514
  %1516 = vrot.lane.b32.xlu0 %v772, 16
  %v1517 = vpop.permute.xlu0 %1516
  %1518 = vrot.lane.b32.xlu0 %v776, 16
  %v1519 = vpop.permute.xlu0 %1518
  %1520 = vrot.lane.b32.xlu0 %v780, 16
  %v1521 = vpop.permute.xlu0 %1520
  %1522 = vrot.lane.b32.xlu0 %v753, 16
  %v1523 = vpop.permute.xlu0 %1522
  %1524 = vrot.lane.b32.xlu0 %v757, 16
  %v1525 = vpop.permute.xlu0 %1524
  %1526 = vrot.lane.b32.xlu0 %v761, 16
  %v1527 = vpop.permute.xlu0 %1526
  %1528 = vrot.lane.b32.xlu0 %v765, 16
  %v1529 = vpop.permute.xlu0 %1528
  %1530 = vrot.lane.b32.xlu0 %v769, 16
  %v1531 = vpop.permute.xlu0 %1530
  %1532 = vrot.lane.b32.xlu0 %v773, 16
  %v1533 = vpop.permute.xlu0 %1532
  %1534 = vrot.lane.b32.xlu0 %v777, 16
  %v1535 = vpop.permute.xlu0 %1534
  %1536 = vrot.lane.b32.xlu0 %v781, 16
  %v1537 = vpop.permute.xlu0 %1536
  %vm1538 = vcmp.lt.s32.totalorder %v783, 16
  %v1539 = vsel %vm1538, %v1507, %v1523
  %v1540 = vsel %vm1538, %v1509, %v1525
  %v1541 = vsel %vm1538, %v1511, %v1527
  %v1542 = vsel %vm1538, %v1513, %v1529
  %v1543 = vsel %vm1538, %v1515, %v1531
  %v1544 = vsel %vm1538, %v1517, %v1533
  %v1545 = vsel %vm1538, %v1519, %v1535
  %v1546 = vsel %vm1538, %v1521, %v1537
  %v1547 = vsel %vm1538, %v1491, %v1507
  %v1548 = vsel %vm1538, %v1493, %v1509
  %v1549 = vsel %vm1538, %v1495, %v1511
  %v1550 = vsel %vm1538, %v1497, %v1513
  %v1551 = vsel %vm1538, %v1499, %v1515
  %v1552 = vsel %vm1538, %v1501, %v1517
  %v1553 = vsel %vm1538, %v1503, %v1519
  %v1554 = vsel %vm1538, %v1505, %v1521
  %v1555 = vsel %vm1538, %v1475, %v1491
  %v1556 = vsel %vm1538, %v1477, %v1493
  %v1557 = vsel %vm1538, %v1479, %v1495
  %v1558 = vsel %vm1538, %v1481, %v1497
  %v1559 = vsel %vm1538, %v1483, %v1499
  %v1560 = vsel %vm1538, %v1485, %v1501
  %v1561 = vsel %vm1538, %v1487, %v1503
  %v1562 = vsel %vm1538, %v1489, %v1505
  %v1563 = vsel %vm1538, %v1523, %v1475
  %v1564 = vsel %vm1538, %v1525, %v1477
  %v1565 = vsel %vm1538, %v1527, %v1479
  %v1566 = vsel %vm1538, %v1529, %v1481
  %v1567 = vsel %vm1538, %v1531, %v1483
  %v1568 = vsel %vm1538, %v1533, %v1485
  %v1569 = vsel %vm1538, %v1535, %v1487
  %v1570 = vsel %vm1538, %v1537, %v1489
  %v1571 = vsel %vm799, 1, 0
  %v1572 = vsel %vm800, 1, 0
  %v1573 = vsel %vm801, 1, 0
  %v1574 = vsel %vm802, 1, 0
  %vm1575 = vcmp.eq.s32.totalorder %v1571, 1
  %vm1576 = vcmp.eq.s32.totalorder %v1572, 1
  %vm1577 = vcmp.eq.s32.totalorder %v1573, 1
  %vm1578 = vcmp.eq.s32.totalorder %v1574, 1
  %v1579 = vsel %vm1575, %v1563, 0.0
  %v1580 = vsel %vm1576, %v1555, 0.0
  %v1581 = vsel %vm1577, %v1547, 0.0
  %v1582 = vsel %vm1578, %v1539, 0.0
  %v1583 = vsel %vm1575, %v1564, 0.0
  %v1584 = vsel %vm1576, %v1556, 0.0
  %v1585 = vsel %vm1577, %v1548, 0.0
  %v1586 = vsel %vm1578, %v1540, 0.0
  %v1587 = vsel %vm1575, %v1565, 0.0
  %v1588 = vsel %vm1576, %v1557, 0.0
  %v1589 = vsel %vm1577, %v1549, 0.0
  %v1590 = vsel %vm1578, %v1541, 0.0
  %v1591 = vsel %vm1575, %v1566, 0.0
  %v1592 = vsel %vm1576, %v1558, 0.0
  %v1593 = vsel %vm1577, %v1550, 0.0
  %v1594 = vsel %vm1578, %v1542, 0.0
  %v1595 = vsel %vm1575, %v1567, 0.0
  %v1596 = vsel %vm1576, %v1559, 0.0
  %v1597 = vsel %vm1577, %v1551, 0.0
  %v1598 = vsel %vm1578, %v1543, 0.0
  %v1599 = vsel %vm1575, %v1568, 0.0
  %v1600 = vsel %vm1576, %v1560, 0.0
  %v1601 = vsel %vm1577, %v1552, 0.0
  %v1602 = vsel %vm1578, %v1544, 0.0
  %v1603 = vsel %vm1575, %v1569, 0.0
  %v1604 = vsel %vm1576, %v1561, 0.0
  %v1605 = vsel %vm1577, %v1553, 0.0
  %v1606 = vsel %vm1578, %v1545, 0.0
  %v1607 = vsel %vm1575, %v1570, 0.0
  %v1608 = vsel %vm1576, %v1562, 0.0
  %v1609 = vsel %vm1577, %v1554, 0.0
  %v1610 = vsel %vm1578, %v1546, 0.0
  %s1611 = scalar_lea.vmem %s4, 64
  %v1612 = vld [vmem:[%s1611] sm:$0xff]
  %v1613 = vld [vmem:[%s1611 + $0x8] sm:$0xff]
  %v1614 = vld [vmem:[%s1611 + $0x10] sm:$0xff]
  %v1615 = vld [vmem:[%s1611 + $0x18] sm:$0xff]
  %v1616 = vld [vmem:[%s1611 + $0x20] sm:$0xff]
  %v1617 = vld [vmem:[%s1611 + $0x28] sm:$0xff]
  %v1618 = vld [vmem:[%s1611 + $0x30] sm:$0xff]
  %v1619 = vld [vmem:[%s1611 + $0x38] sm:$0xff]
  %v1621 = vsel %vm973, %v1612, 0
  %v1624 = vsel %vm973, %v1613, 0
  %v1627 = vsel %vm973, %v1614, 0
  %v1630 = vsel %vm973, %v1615, 0
  %v1633 = vsel %vm973, %v1616, 0
  %v1636 = vsel %vm973, %v1617, 0
  %v1639 = vsel %vm973, %v1618, 0
  %v1642 = vsel %vm973, %v1619, 0
  %1644 = vmatprep.subr.mxu0 %v1580
  %1645 = vmatpush1.msra.mxu0 %v1579
  %1646 = vmatprep.subr.mxu0 %v1584
  %1647 = vmatpush1.msra.mxu0 %v1583
  %1648 = vmatprep.subr.mxu0 %v1588
  %1649 = vmatpush1.msra.mxu0 %v1587
  %1650 = vmatprep.subr.mxu0 %v1592
  %1651 = vmatpush1.msra.mxu0 %v1591
  %1652 = vmatprep.subr.mxu0 %v1596
  %1653 = vmatpush1.msra.mxu0 %v1595
  %1654 = vmatprep.subr.mxu0 %v1600
  %1655 = vmatpush1.msra.mxu0 %v1599
  %1656 = vmatprep.subr.mxu0 %v1604
  %1657 = vmatpush1.msra.mxu0 %v1603
  %1658 = vmatprep.subr.mxu0 %v1608
  %1659 = vmatpush1.msra.mxu0 %v1607
  %1660 = vmatprep.subr.mxu0 0.0
  %1661 = vmatpush1.msra.mxu0 0.0
  %1662 = vmatprep.subr.mxu0 0.0
  %1663 = vmatpush1.msra.mxu0 0.0
  %1664 = vmatprep.subr.mxu0 0.0
  %1665 = vmatpush1.msra.mxu0 0.0
  %1666 = vmatprep.subr.mxu0 0.0
  %1667 = vmatpush1.msra.mxu0 0.0
  %1668 = vmatprep.subr.mxu0 0.0
  %1669 = vmatpush1.msra.mxu0 0.0
  %1670 = vmatprep.subr.mxu0 0.0
  %1671 = vmatpush1.msra.mxu0 0.0
  %1672 = vmatprep.subr.mxu0 0.0
  %1673 = vmatpush1.msra.mxu0 0.0
  %1674 = vmatprep.subr.mxu0 0.0
  %1675 = vmatpush1.msra.mxu0 0.0
  %1676 = vmatprep.subr.mxu0 0.0
  %1677 = vmatpush1.msra.mxu0 0.0
  %1678 = vmatprep.subr.mxu0 0.0
  %1679 = vmatpush1.msra.mxu0 0.0
  %1680 = vmatprep.subr.mxu0 0.0
  %1681 = vmatpush1.msra.mxu0 0.0
  %1682 = vmatprep.subr.mxu0 0.0
  %1683 = vmatpush1.msra.mxu0 0.0
  %1684 = vmatprep.subr.mxu0 0.0
  %1685 = vmatpush1.msra.mxu0 0.0
  %1686 = vmatprep.subr.mxu0 0.0
  %1687 = vmatpush1.msra.mxu0 0.0
  %1688 = vmatprep.subr.mxu0 0.0
  %1689 = vmatpush1.msra.mxu0 0.0
  %1690 = vmatprep.subr.mxu0 0.0
  %1691 = vmatpush1.msra.mxu0 0.0
  %1692 = vmatprep.subr.mxu0 0.0
  %1693 = vmatpush1.msra.mxu0 0.0
  %1694 = vmatprep.subr.mxu0 0.0
  %1695 = vmatpush1.msra.mxu0 0.0
  %1696 = vmatprep.subr.mxu0 0.0
  %1697 = vmatpush1.msra.mxu0 0.0
  %1698 = vmatprep.subr.mxu0 0.0
  %1699 = vmatpush1.msra.mxu0 0.0
  %1700 = vmatprep.subr.mxu0 0.0
  %1701 = vmatpush1.msra.mxu0 0.0
  %1702 = vmatprep.subr.mxu0 0.0
  %1703 = vmatpush1.msra.mxu0 0.0
  %1704 = vmatprep.subr.mxu0 0.0
  %1705 = vmatpush1.msra.mxu0 0.0
  %1706 = vmatprep.subr.mxu0 0.0
  %1707 = vmatpush1.msra.mxu0 0.0
  %1708 = vmatprep.mubr.f32.mxu0 0.0
  %1709 = vmatmul.mubr.f32.gmra.mrb[0].mxu0 %v1621
  %v1710 = vpop.f32.mrb[0].mxu0
  %v1711 = vadd.f32 0.0, %v1710
  %v1712 = vpop.f32.mrb[0].mxu0
  %v1713 = vadd.f32 0.0, %v1712
  %1714 = vmatprep.mubr.f32.mxu0 0.0
  %1715 = vmatmul.mubr.f32.gmra.mrb[0].mxu0 %v1624
  %v1716 = vpop.f32.mrb[0].mxu0
  %v1717 = vadd.f32 0.0, %v1716
  %v1718 = vpop.f32.mrb[0].mxu0
  %v1719 = vadd.f32 0.0, %v1718
  %1720 = vmatprep.mubr.f32.mxu0 0.0
  %1721 = vmatmul.mubr.f32.gmra.mrb[0].mxu0 %v1627
  %v1722 = vpop.f32.mrb[0].mxu0
  %v1723 = vadd.f32 0.0, %v1722
  %v1724 = vpop.f32.mrb[0].mxu0
  %v1725 = vadd.f32 0.0, %v1724
  %1726 = vmatprep.mubr.f32.mxu0 0.0
  %1727 = vmatmul.mubr.f32.gmra.mrb[0].mxu0 %v1630
  %v1728 = vpop.f32.mrb[0].mxu0
  %v1729 = vadd.f32 0.0, %v1728
  %v1730 = vpop.f32.mrb[0].mxu0
  %v1731 = vadd.f32 0.0, %v1730
  %1732 = vmatprep.mubr.f32.mxu0 0.0
  %1733 = vmatmul.mubr.f32.gmra.mrb[0].mxu0 %v1633
  %v1734 = vpop.f32.mrb[0].mxu0
  %v1735 = vadd.f32 0.0, %v1734
  %v1736 = vpop.f32.mrb[0].mxu0
  %v1737 = vadd.f32 0.0, %v1736
  %1738 = vmatprep.mubr.f32.mxu0 0.0
  %1739 = vmatmul.mubr.f32.gmra.mrb[0].mxu0 %v1636
  %v1740 = vpop.f32.mrb[0].mxu0
  %v1741 = vadd.f32 0.0, %v1740
  %v1742 = vpop.f32.mrb[0].mxu0
  %v1743 = vadd.f32 0.0, %v1742
  %1744 = vmatprep.mubr.f32.mxu0 0.0
  %1745 = vmatmul.mubr.f32.gmra.mrb[0].mxu0 %v1639
  %v1746 = vpop.f32.mrb[0].mxu0
  %v1747 = vadd.f32 0.0, %v1746
  %v1748 = vpop.f32.mrb[0].mxu0
  %v1749 = vadd.f32 0.0, %v1748
  %1750 = vmatprep.mubr.f32.mxu0 0.0
  %1751 = vmatmul.mubr.f32.gmra.mrb[0].mxu0 %v1642
  %v1752 = vpop.f32.mrb[0].mxu0
  %v1753 = vadd.f32 0.0, %v1752
  %v1754 = vpop.f32.mrb[0].mxu0
  %v1755 = vadd.f32 0.0, %v1754
  %1756 = vdwg.mxu0
  %1757 = vmatprep.subr.mxu0 %v1582
  %1758 = vmatpush1.msra.mxu0 %v1581
  %1759 = vmatprep.subr.mxu0 %v1586
  %1760 = vmatpush1.msra.mxu0 %v1585
  %1761 = vmatprep.subr.mxu0 %v1590
  %1762 = vmatpush1.msra.mxu0 %v1589
  %1763 = vmatprep.subr.mxu0 %v1594
  %1764 = vmatpush1.msra.mxu0 %v1593
  %1765 = vmatprep.subr.mxu0 %v1598
  %1766 = vmatpush1.msra.mxu0 %v1597
  %1767 = vmatprep.subr.mxu0 %v1602
  %1768 = vmatpush1.msra.mxu0 %v1601
  %1769 = vmatprep.subr.mxu0 %v1606
  %1770 = vmatpush1.msra.mxu0 %v1605
  %1771 = vmatprep.subr.mxu0 %v1610
  %1772 = vmatpush1.msra.mxu0 %v1609
  %1773 = vmatprep.subr.mxu0 0.0
  %1774 = vmatpush1.msra.mxu0 0.0
  %1775 = vmatprep.subr.mxu0 0.0
  %1776 = vmatpush1.msra.mxu0 0.0
  %1777 = vmatprep.subr.mxu0 0.0
  %1778 = vmatpush1.msra.mxu0 0.0
  %1779 = vmatprep.subr.mxu0 0.0
  %1780 = vmatpush1.msra.mxu0 0.0
  %1781 = vmatprep.subr.mxu0 0.0
  %1782 = vmatpush1.msra.mxu0 0.0
  %1783 = vmatprep.subr.mxu0 0.0
  %1784 = vmatpush1.msra.mxu0 0.0
  %1785 = vmatprep.subr.mxu0 0.0
  %1786 = vmatpush1.msra.mxu0 0.0
  %1787 = vmatprep.subr.mxu0 0.0
  %1788 = vmatpush1.msra.mxu0 0.0
  %1789 = vmatprep.subr.mxu0 0.0
  %1790 = vmatpush1.msra.mxu0 0.0
  %1791 = vmatprep.subr.mxu0 0.0
  %1792 = vmatpush1.msra.mxu0 0.0
  %1793 = vmatprep.subr.mxu0 0.0
  %1794 = vmatpush1.msra.mxu0 0.0
  %1795 = vmatprep.subr.mxu0 0.0
  %1796 = vmatpush1.msra.mxu0 0.0
  %1797 = vmatprep.subr.mxu0 0.0
  %1798 = vmatpush1.msra.mxu0 0.0
  %1799 = vmatprep.subr.mxu0 0.0
  %1800 = vmatpush1.msra.mxu0 0.0
  %1801 = vmatprep.subr.mxu0 0.0
  %1802 = vmatpush1.msra.mxu0 0.0
  %1803 = vmatprep.subr.mxu0 0.0
  %1804 = vmatpush1.msra.mxu0 0.0
  %1805 = vmatprep.subr.mxu0 0.0
  %1806 = vmatpush1.msra.mxu0 0.0
  %1807 = vmatprep.subr.mxu0 0.0
  %1808 = vmatpush1.msra.mxu0 0.0
  %1809 = vmatprep.subr.mxu0 0.0
  %1810 = vmatpush1.msra.mxu0 0.0
  %1811 = vmatprep.subr.mxu0 0.0
  %1812 = vmatpush1.msra.mxu0 0.0
  %1813 = vmatprep.subr.mxu0 0.0
  %1814 = vmatpush1.msra.mxu0 0.0
  %1815 = vmatprep.subr.mxu0 0.0
  %1816 = vmatpush1.msra.mxu0 0.0
  %1817 = vmatprep.subr.mxu0 0.0
  %1818 = vmatpush1.msra.mxu0 0.0
  %1819 = vmatprep.subr.mxu0 0.0
  %1820 = vmatpush1.msra.mxu0 0.0
  %1821 = vmatprep.mubr.f32.mxu0 0.0
  %1822 = vmatmul.mubr.f32.gmra.mrb[0].mxu0 %v1621
  %v1823 = vpop.f32.mrb[0].mxu0
  %v1824 = vadd.f32 0.0, %v1823
  %v1825 = vpop.f32.mrb[0].mxu0
  %v1826 = vadd.f32 0.0, %v1825
  %1827 = vmatprep.mubr.f32.mxu0 0.0
  %1828 = vmatmul.mubr.f32.gmra.mrb[0].mxu0 %v1624
  %v1829 = vpop.f32.mrb[0].mxu0
  %v1830 = vadd.f32 0.0, %v1829
  %v1831 = vpop.f32.mrb[0].mxu0
  %v1832 = vadd.f32 0.0, %v1831
  %1833 = vmatprep.mubr.f32.mxu0 0.0
  %1834 = vmatmul.mubr.f32.gmra.mrb[0].mxu0 %v1627
  %v1835 = vpop.f32.mrb[0].mxu0
  %v1836 = vadd.f32 0.0, %v1835
  %v1837 = vpop.f32.mrb[0].mxu0
  %v1838 = vadd.f32 0.0, %v1837
  %1839 = vmatprep.mubr.f32.mxu0 0.0
  %1840 = vmatmul.mubr.f32.gmra.mrb[0].mxu0 %v1630
  %v1841 = vpop.f32.mrb[0].mxu0
  %v1842 = vadd.f32 0.0, %v1841
  %v1843 = vpop.f32.mrb[0].mxu0
  %v1844 = vadd.f32 0.0, %v1843
  %1845 = vmatprep.mubr.f32.mxu0 0.0
  %1846 = vmatmul.mubr.f32.gmra.mrb[0].mxu0 %v1633
  %v1847 = vpop.f32.mrb[0].mxu0
  %v1848 = vadd.f32 0.0, %v1847
  %v1849 = vpop.f32.mrb[0].mxu0
  %v1850 = vadd.f32 0.0, %v1849
  %1851 = vmatprep.mubr.f32.mxu0 0.0
  %1852 = vmatmul.mubr.f32.gmra.mrb[0].mxu0 %v1636
  %v1853 = vpop.f32.mrb[0].mxu0
  %v1854 = vadd.f32 0.0, %v1853
  %v1855 = vpop.f32.mrb[0].mxu0
  %v1856 = vadd.f32 0.0, %v1855
  %1857 = vmatprep.mubr.f32.mxu0 0.0
  %1858 = vmatmul.mubr.f32.gmra.mrb[0].mxu0 %v1639
  %v1859 = vpop.f32.mrb[0].mxu0
  %v1860 = vadd.f32 0.0, %v1859
  %v1861 = vpop.f32.mrb[0].mxu0
  %v1862 = vadd.f32 0.0, %v1861
  %1863 = vmatprep.mubr.f32.mxu0 0.0
  %1864 = vmatmul.mubr.f32.gmra.mrb[0].mxu0 %v1642
  %v1865 = vpop.f32.mrb[0].mxu0
  %v1866 = vadd.f32 0.0, %v1865
  %v1867 = vpop.f32.mrb[0].mxu0
  %v1868 = vadd.f32 0.0, %v1867
  %1869 = vdwg.mxu0
  %v1870 = vadd.f32 %v1315, %v1711
  %v1871 = vadd.f32 %v1317, %v1713
  %v1872 = vadd.f32 %v1428, %v1824
  %v1873 = vadd.f32 %v1430, %v1826
  %v1874 = vadd.f32 %v1321, %v1717
  %v1875 = vadd.f32 %v1323, %v1719
  %v1876 = vadd.f32 %v1434, %v1830
  %v1877 = vadd.f32 %v1436, %v1832
  %v1878 = vadd.f32 %v1327, %v1723
  %v1879 = vadd.f32 %v1329, %v1725
  %v1880 = vadd.f32 %v1440, %v1836
  %v1881 = vadd.f32 %v1442, %v1838
  %v1882 = vadd.f32 %v1333, %v1729
  %v1883 = vadd.f32 %v1335, %v1731
  %v1884 = vadd.f32 %v1446, %v1842
  %v1885 = vadd.f32 %v1448, %v1844
  %v1886 = vadd.f32 %v1339, %v1735
  %v1887 = vadd.f32 %v1341, %v1737
  %v1888 = vadd.f32 %v1452, %v1848
  %v1889 = vadd.f32 %v1454, %v1850
  %v1890 = vadd.f32 %v1345, %v1741
  %v1891 = vadd.f32 %v1347, %v1743
  %v1892 = vadd.f32 %v1458, %v1854
  %v1893 = vadd.f32 %v1460, %v1856
  %v1894 = vadd.f32 %v1351, %v1747
  %v1895 = vadd.f32 %v1353, %v1749
  %v1896 = vadd.f32 %v1464, %v1860
  %v1897 = vadd.f32 %v1466, %v1862
  %v1898 = vadd.f32 %v1357, %v1753
  %v1899 = vadd.f32 %v1359, %v1755
  %v1900 = vadd.f32 %v1470, %v1866
  %v1901 = vadd.f32 %v1472, %v1868
  %vm1902 = vmand %vm799, %vm811
  %vm1903 = vmand %vm800, %vm812
  %vm1904 = vmand %vm801, %vm813
  %vm1905 = vmand %vm802, %vm814
  %1906 = vrot.lane.b32.xlu0 %v750, 15
  %v1907 = vpop.permute.xlu0 %1906
  %1908 = vrot.lane.b32.xlu0 %v754, 15
  %v1909 = vpop.permute.xlu0 %1908
  %1910 = vrot.lane.b32.xlu0 %v758, 15
  %v1911 = vpop.permute.xlu0 %1910
  %1912 = vrot.lane.b32.xlu0 %v762, 15
  %v1913 = vpop.permute.xlu0 %1912
  %1914 = vrot.lane.b32.xlu0 %v766, 15
  %v1915 = vpop.permute.xlu0 %1914
  %1916 = vrot.lane.b32.xlu0 %v770, 15
  %v1917 = vpop.permute.xlu0 %1916
  %1918 = vrot.lane.b32.xlu0 %v774, 15
  %v1919 = vpop.permute.xlu0 %1918
  %1920 = vrot.lane.b32.xlu0 %v778, 15
  %v1921 = vpop.permute.xlu0 %1920
  %1922 = vrot.lane.b32.xlu0 %v751, 15
  %v1923 = vpop.permute.xlu0 %1922
  %1924 = vrot.lane.b32.xlu0 %v755, 15
  %v1925 = vpop.permute.xlu0 %1924
  %1926 = vrot.lane.b32.xlu0 %v759, 15
  %v1927 = vpop.permute.xlu0 %1926
  %1928 = vrot.lane.b32.xlu0 %v763, 15
  %v1929 = vpop.permute.xlu0 %1928
  %1930 = vrot.lane.b32.xlu0 %v767, 15
  %v1931 = vpop.permute.xlu0 %1930
  %1932 = vrot.lane.b32.xlu0 %v771, 15
  %v1933 = vpop.permute.xlu0 %1932
  %1934 = vrot.lane.b32.xlu0 %v775, 15
  %v1935 = vpop.permute.xlu0 %1934
  %1936 = vrot.lane.b32.xlu0 %v779, 15
  %v1937 = vpop.permute.xlu0 %1936
  %1938 = vrot.lane.b32.xlu0 %v752, 15
  %v1939 = vpop.permute.xlu0 %1938
  %1940 = vrot.lane.b32.xlu0 %v756, 15
  %v1941 = vpop.permute.xlu0 %1940
  %1942 = vrot.lane.b32.xlu0 %v760, 15
  %v1943 = vpop.permute.xlu0 %1942
  %1944 = vrot.lane.b32.xlu0 %v764, 15
  %v1945 = vpop.permute.xlu0 %1944
  %1946 = vrot.lane.b32.xlu0 %v768, 15
  %v1947 = vpop.permute.xlu0 %1946
  %1948 = vrot.lane.b32.xlu0 %v772, 15
  %v1949 = vpop.permute.xlu0 %1948
  %1950 = vrot.lane.b32.xlu0 %v776, 15
  %v1951 = vpop.permute.xlu0 %1950
  %1952 = vrot.lane.b32.xlu0 %v780, 15
  %v1953 = vpop.permute.xlu0 %1952
  %1954 = vrot.lane.b32.xlu0 %v753, 15
  %v1955 = vpop.permute.xlu0 %1954
  %1956 = vrot.lane.b32.xlu0 %v757, 15
  %v1957 = vpop.permute.xlu0 %1956
  %1958 = vrot.lane.b32.xlu0 %v761, 15
  %v1959 = vpop.permute.xlu0 %1958
  %1960 = vrot.lane.b32.xlu0 %v765, 15
  %v1961 = vpop.permute.xlu0 %1960
  %1962 = vrot.lane.b32.xlu0 %v769, 15
  %v1963 = vpop.permute.xlu0 %1962
  %1964 = vrot.lane.b32.xlu0 %v773, 15
  %v1965 = vpop.permute.xlu0 %1964
  %1966 = vrot.lane.b32.xlu0 %v777, 15
  %v1967 = vpop.permute.xlu0 %1966
  %1968 = vrot.lane.b32.xlu0 %v781, 15
  %v1969 = vpop.permute.xlu0 %1968
  %vm1970 = vcmp.lt.s32.totalorder %v783, 15
  %v1971 = vsel %vm1970, %v1939, %v1955
  %v1972 = vsel %vm1970, %v1941, %v1957
  %v1973 = vsel %vm1970, %v1943, %v1959
  %v1974 = vsel %vm1970, %v1945, %v1961
  %v1975 = vsel %vm1970, %v1947, %v1963
  %v1976 = vsel %vm1970, %v1949, %v1965
  %v1977 = vsel %vm1970, %v1951, %v1967
  %v1978 = vsel %vm1970, %v1953, %v1969
  %v1979 = vsel %vm1970, %v1923, %v1939
  %v1980 = vsel %vm1970, %v1925, %v1941
  %v1981 = vsel %vm1970, %v1927, %v1943
  %v1982 = vsel %vm1970, %v1929, %v1945
  %v1983 = vsel %vm1970, %v1931, %v1947
  %v1984 = vsel %vm1970, %v1933, %v1949
  %v1985 = vsel %vm1970, %v1935, %v1951
  %v1986 = vsel %vm1970, %v1937, %v1953
  %v1987 = vsel %vm1970, %v1907, %v1923
  %v1988 = vsel %vm1970, %v1909, %v1925
  %v1989 = vsel %vm1970, %v1911, %v1927
  %v1990 = vsel %vm1970, %v1913, %v1929
  %v1991 = vsel %vm1970, %v1915, %v1931
  %v1992 = vsel %vm1970, %v1917, %v1933
  %v1993 = vsel %vm1970, %v1919, %v1935
  %v1994 = vsel %vm1970, %v1921, %v1937
  %v1995 = vsel %vm1970, %v1955, %v1907
  %v1996 = vsel %vm1970, %v1957, %v1909
  %v1997 = vsel %vm1970, %v1959, %v1911
  %v1998 = vsel %vm1970, %v1961, %v1913
  %v1999 = vsel %vm1970, %v1963, %v1915
  %v2000 = vsel %vm1970, %v1965, %v1917
  %v2001 = vsel %vm1970, %v1967, %v1919
  %v2002 = vsel %vm1970, %v1969, %v1921
  %v2003 = vsel %vm1902, 1, 0
  %v2004 = vsel %vm1903, 1, 0
  %v2005 = vsel %vm1904, 1, 0
  %v2006 = vsel %vm1905, 1, 0
  %vm2007 = vcmp.eq.s32.totalorder %v2003, 1
  %vm2008 = vcmp.eq.s32.totalorder %v2004, 1
  %vm2009 = vcmp.eq.s32.totalorder %v2005, 1
  %vm2010 = vcmp.eq.s32.totalorder %v2006, 1
  %v2011 = vsel %vm2007, %v1995, 0.0
  %v2012 = vsel %vm2008, %v1987, 0.0
  %v2013 = vsel %vm2009, %v1979, 0.0
  %v2014 = vsel %vm2010, %v1971, 0.0
  %v2015 = vsel %vm2007, %v1996, 0.0
  %v2016 = vsel %vm2008, %v1988, 0.0
  %v2017 = vsel %vm2009, %v1980, 0.0
  %v2018 = vsel %vm2010, %v1972, 0.0
  %v2019 = vsel %vm2007, %v1997, 0.0
  %v2020 = vsel %vm2008, %v1989, 0.0
  %v2021 = vsel %vm2009, %v1981, 0.0
  %v2022 = vsel %vm2010, %v1973, 0.0
  %v2023 = vsel %vm2007, %v1998, 0.0
  %v2024 = vsel %vm2008, %v1990, 0.0
  %v2025 = vsel %vm2009, %v1982, 0.0
  %v2026 = vsel %vm2010, %v1974, 0.0
  %v2027 = vsel %vm2007, %v1999, 0.0
  %v2028 = vsel %vm2008, %v1991, 0.0
  %v2029 = vsel %vm2009, %v1983, 0.0
  %v2030 = vsel %vm2010, %v1975, 0.0
  %v2031 = vsel %vm2007, %v2000, 0.0
  %v2032 = vsel %vm2008, %v1992, 0.0
  %v2033 = vsel %vm2009, %v1984, 0.0
  %v2034 = vsel %vm2010, %v1976, 0.0
  %v2035 = vsel %vm2007, %v2001, 0.0
  %v2036 = vsel %vm2008, %v1993, 0.0
  %v2037 = vsel %vm2009, %v1985, 0.0
  %v2038 = vsel %vm2010, %v1977, 0.0
  %v2039 = vsel %vm2007, %v2002, 0.0
  %v2040 = vsel %vm2008, %v1994, 0.0
  %v2041 = vsel %vm2009, %v1986, 0.0
  %v2042 = vsel %vm2010, %v1978, 0.0
  %s2043 = scalar_lea.vmem %s4, 128
  %v2044 = vld [vmem:[%s2043] sm:$0xff]
  %v2045 = vld [vmem:[%s2043 + $0x8] sm:$0xff]
  %v2046 = vld [vmem:[%s2043 + $0x10] sm:$0xff]
  %v2047 = vld [vmem:[%s2043 + $0x18] sm:$0xff]
  %v2048 = vld [vmem:[%s2043 + $0x20] sm:$0xff]
  %v2049 = vld [vmem:[%s2043 + $0x28] sm:$0xff]
  %v2050 = vld [vmem:[%s2043 + $0x30] sm:$0xff]
  %v2051 = vld [vmem:[%s2043 + $0x38] sm:$0xff]
  %v2053 = vsel %vm973, %v2044, 0
  %v2056 = vsel %vm973, %v2045, 0
  %v2059 = vsel %vm973, %v2046, 0
  %v2062 = vsel %vm973, %v2047, 0
  %v2065 = vsel %vm973, %v2048, 0
  %v2068 = vsel %vm973, %v2049, 0
  %v2071 = vsel %vm973, %v2050, 0
  %v2074 = vsel %vm973, %v2051, 0
  %2076 = vmatprep.subr.mxu0 %v2012
  %2077 = vmatpush1.msra.mxu0 %v2011
  %2078 = vmatprep.subr.mxu0 %v2016
  %2079 = vmatpush1.msra.mxu0 %v2015
  %2080 = vmatprep.subr.mxu0 %v2020
  %2081 = vmatpush1.msra.mxu0 %v2019
  %2082 = vmatprep.subr.mxu0 %v2024
  %2083 = vmatpush1.msra.mxu0 %v2023
  %2084 = vmatprep.subr.mxu0 %v2028
  %2085 = vmatpush1.msra.mxu0 %v2027
  %2086 = vmatprep.subr.mxu0 %v2032
  %2087 = vmatpush1.msra.mxu0 %v2031
  %2088 = vmatprep.subr.mxu0 %v2036
  %2089 = vmatpush1.msra.mxu0 %v2035
  %2090 = vmatprep.subr.mxu0 %v2040
  %2091 = vmatpush1.msra.mxu0 %v2039
  %2092 = vmatprep.subr.mxu0 0.0
  %2093 = vmatpush1.msra.mxu0 0.0
  %2094 = vmatprep.subr.mxu0 0.0
  %2095 = vmatpush1.msra.mxu0 0.0
  %2096 = vmatprep.subr.mxu0 0.0
  %2097 = vmatpush1.msra.mxu0 0.0
  %2098 = vmatprep.subr.mxu0 0.0
  %2099 = vmatpush1.msra.mxu0 0.0
  %2100 = vmatprep.subr.mxu0 0.0
  %2101 = vmatpush1.msra.mxu0 0.0
  %2102 = vmatprep.subr.mxu0 0.0
  %2103 = vmatpush1.msra.mxu0 0.0
  %2104 = vmatprep.subr.mxu0 0.0
  %2105 = vmatpush1.msra.mxu0 0.0
  %2106 = vmatprep.subr.mxu0 0.0
  %2107 = vmatpush1.msra.mxu0 0.0
  %2108 = vmatprep.subr.mxu0 0.0
  %2109 = vmatpush1.msra.mxu0 0.0
  %2110 = vmatprep.subr.mxu0 0.0
  %2111 = vmatpush1.msra.mxu0 0.0
  %2112 = vmatprep.subr.mxu0 0.0
  %2113 = vmatpush1.msra.mxu0 0.0
  %2114 = vmatprep.subr.mxu0 0.0
  %2115 = vmatpush1.msra.mxu0 0.0
  %2116 = vmatprep.subr.mxu0 0.0
  %2117 = vmatpush1.msra.mxu0 0.0
  %2118 = vmatprep.subr.mxu0 0.0
  %2119 = vmatpush1.msra.mxu0 0.0
  %2120 = vmatprep.subr.mxu0 0.0
  %2121 = vmatpush1.msra.mxu0 0.0
  %2122 = vmatprep.subr.mxu0 0.0
  %2123 = vmatpush1.msra.mxu0 0.0
  %2124 = vmatprep.subr.mxu0 0.0
  %2125 = vmatpush1.msra.mxu0 0.0
  %2126 = vmatprep.subr.mxu0 0.0
  %2127 = vmatpush1.msra.mxu0 0.0
  %2128 = vmatprep.subr.mxu0 0.0
  %2129 = vmatpush1.msra.mxu0 0.0
  %2130 = vmatprep.subr.mxu0 0.0
  %2131 = vmatpush1.msra.mxu0 0.0
  %2132 = vmatprep.subr.mxu0 0.0
  %2133 = vmatpush1.msra.mxu0 0.0
  %2134 = vmatprep.subr.mxu0 0.0
  %2135 = vmatpush1.msra.mxu0 0.0
  %2136 = vmatprep.subr.mxu0 0.0
  %2137 = vmatpush1.msra.mxu0 0.0
  %2138 = vmatprep.subr.mxu0 0.0
  %2139 = vmatpush1.msra.mxu0 0.0
  %2140 = vmatprep.mubr.f32.mxu0 0.0
  %2141 = vmatmul.mubr.f32.gmra.mrb[0].mxu0 %v2053
  %v2142 = vpop.f32.mrb[0].mxu0
  %v2143 = vadd.f32 0.0, %v2142
  %v2144 = vpop.f32.mrb[0].mxu0
  %v2145 = vadd.f32 0.0, %v2144
  %2146 = vmatprep.mubr.f32.mxu0 0.0
  %2147 = vmatmul.mubr.f32.gmra.mrb[0].mxu0 %v2056
  %v2148 = vpop.f32.mrb[0].mxu0
  %v2149 = vadd.f32 0.0, %v2148
  %v2150 = vpop.f32.mrb[0].mxu0
  %v2151 = vadd.f32 0.0, %v2150
  %2152 = vmatprep.mubr.f32.mxu0 0.0
  %2153 = vmatmul.mubr.f32.gmra.mrb[0].mxu0 %v2059
  %v2154 = vpop.f32.mrb[0].mxu0
  %v2155 = vadd.f32 0.0, %v2154
  %v2156 = vpop.f32.mrb[0].mxu0
  %v2157 = vadd.f32 0.0, %v2156
  %2158 = vmatprep.mubr.f32.mxu0 0.0
  %2159 = vmatmul.mubr.f32.gmra.mrb[0].mxu0 %v2062
  %v2160 = vpop.f32.mrb[0].mxu0
  %v2161 = vadd.f32 0.0, %v2160
  %v2162 = vpop.f32.mrb[0].mxu0
  %v2163 = vadd.f32 0.0, %v2162
  %2164 = vmatprep.mubr.f32.mxu0 0.0
  %2165 = vmatmul.mubr.f32.gmra.mrb[0].mxu0 %v2065
  %v2166 = vpop.f32.mrb[0].mxu0
  %v2167 = vadd.f32 0.0, %v2166
  %v2168 = vpop.f32.mrb[0].mxu0
  %v2169 = vadd.f32 0.0, %v2168
  %2170 = vmatprep.mubr.f32.mxu0 0.0
  %2171 = vmatmul.mubr.f32.gmra.mrb[0].mxu0 %v2068
  %v2172 = vpop.f32.mrb[0].mxu0
  %v2173 = vadd.f32 0.0, %v2172
  %v2174 = vpop.f32.mrb[0].mxu0
  %v2175 = vadd.f32 0.0, %v2174
  %2176 = vmatprep.mubr.f32.mxu0 0.0
  %2177 = vmatmul.mubr.f32.gmra.mrb[0].mxu0 %v2071
  %v2178 = vpop.f32.mrb[0].mxu0
  %v2179 = vadd.f32 0.0, %v2178
  %v2180 = vpop.f32.mrb[0].mxu0
  %v2181 = vadd.f32 0.0, %v2180
  %2182 = vmatprep.mubr.f32.mxu0 0.0
  %2183 = vmatmul.mubr.f32.gmra.mrb[0].mxu0 %v2074
  %v2184 = vpop.f32.mrb[0].mxu0
  %v2185 = vadd.f32 0.0, %v2184
  %v2186 = vpop.f32.mrb[0].mxu0
  %v2187 = vadd.f32 0.0, %v2186
  %2188 = vdwg.mxu0
  %2189 = vmatprep.subr.mxu0 %v2014
  %2190 = vmatpush1.msra.mxu0 %v2013
  %2191 = vmatprep.subr.mxu0 %v2018
  %2192 = vmatpush1.msra.mxu0 %v2017
  %2193 = vmatprep.subr.mxu0 %v2022
  %2194 = vmatpush1.msra.mxu0 %v2021
  %2195 = vmatprep.subr.mxu0 %v2026
  %2196 = vmatpush1.msra.mxu0 %v2025
  %2197 = vmatprep.subr.mxu0 %v2030
  %2198 = vmatpush1.msra.mxu0 %v2029
  %2199 = vmatprep.subr.mxu0 %v2034
  %2200 = vmatpush1.msra.mxu0 %v2033
  %2201 = vmatprep.subr.mxu0 %v2038
  %2202 = vmatpush1.msra.mxu0 %v2037
  %2203 = vmatprep.subr.mxu0 %v2042
  %2204 = vmatpush1.msra.mxu0 %v2041
  %2205 = vmatprep.subr.mxu0 0.0
  %2206 = vmatpush1.msra.mxu0 0.0
  %2207 = vmatprep.subr.mxu0 0.0
  %2208 = vmatpush1.msra.mxu0 0.0
  %2209 = vmatprep.subr.mxu0 0.0
  %2210 = vmatpush1.msra.mxu0 0.0
  %2211 = vmatprep.subr.mxu0 0.0
  %2212 = vmatpush1.msra.mxu0 0.0
  %2213 = vmatprep.subr.mxu0 0.0
  %2214 = vmatpush1.msra.mxu0 0.0
  %2215 = vmatprep.subr.mxu0 0.0
  %2216 = vmatpush1.msra.mxu0 0.0
  %2217 = vmatprep.subr.mxu0 0.0
  %2218 = vmatpush1.msra.mxu0 0.0
  %2219 = vmatprep.subr.mxu0 0.0
  %2220 = vmatpush1.msra.mxu0 0.0
  %2221 = vmatprep.subr.mxu0 0.0
  %2222 = vmatpush1.msra.mxu0 0.0
  %2223 = vmatprep.subr.mxu0 0.0
  %2224 = vmatpush1.msra.mxu0 0.0
  %2225 = vmatprep.subr.mxu0 0.0
  %2226 = vmatpush1.msra.mxu0 0.0
  %2227 = vmatprep.subr.mxu0 0.0
  %2228 = vmatpush1.msra.mxu0 0.0
  %2229 = vmatprep.subr.mxu0 0.0
  %2230 = vmatpush1.msra.mxu0 0.0
  %2231 = vmatprep.subr.mxu0 0.0
  %2232 = vmatpush1.msra.mxu0 0.0
  %2233 = vmatprep.subr.mxu0 0.0
  %2234 = vmatpush1.msra.mxu0 0.0
  %2235 = vmatprep.subr.mxu0 0.0
  %2236 = vmatpush1.msra.mxu0 0.0
  %2237 = vmatprep.subr.mxu0 0.0
  %2238 = vmatpush1.msra.mxu0 0.0
  %2239 = vmatprep.subr.mxu0 0.0
  %2240 = vmatpush1.msra.mxu0 0.0
  %2241 = vmatprep.subr.mxu0 0.0
  %2242 = vmatpush1.msra.mxu0 0.0
  %2243 = vmatprep.subr.mxu0 0.0
  %2244 = vmatpush1.msra.mxu0 0.0
  %2245 = vmatprep.subr.mxu0 0.0
  %2246 = vmatpush1.msra.mxu0 0.0
  %2247 = vmatprep.subr.mxu0 0.0
  %2248 = vmatpush1.msra.mxu0 0.0
  %2249 = vmatprep.subr.mxu0 0.0
  %2250 = vmatpush1.msra.mxu0 0.0
  %2251 = vmatprep.subr.mxu0 0.0
  %2252 = vmatpush1.msra.mxu0 0.0
  %2253 = vmatprep.mubr.f32.mxu0 0.0
  %2254 = vmatmul.mubr.f32.gmra.mrb[0].mxu0 %v2053
  %v2255 = vpop.f32.mrb[0].mxu0
  %v2256 = vadd.f32 0.0, %v2255
  %v2257 = vpop.f32.mrb[0].mxu0
  %v2258 = vadd.f32 0.0, %v2257
  %2259 = vmatprep.mubr.f32.mxu0 0.0
  %2260 = vmatmul.mubr.f32.gmra.mrb[0].mxu0 %v2056
  %v2261 = vpop.f32.mrb[0].mxu0
  %v2262 = vadd.f32 0.0, %v2261
  %v2263 = vpop.f32.mrb[0].mxu0
  %v2264 = vadd.f32 0.0, %v2263
  %2265 = vmatprep.mubr.f32.mxu0 0.0
  %2266 = vmatmul.mubr.f32.gmra.mrb[0].mxu0 %v2059
  %v2267 = vpop.f32.mrb[0].mxu0
  %v2268 = vadd.f32 0.0, %v2267
  %v2269 = vpop.f32.mrb[0].mxu0
  %v2270 = vadd.f32 0.0, %v2269
  %2271 = vmatprep.mubr.f32.mxu0 0.0
  %2272 = vmatmul.mubr.f32.gmra.mrb[0].mxu0 %v2062
  %v2273 = vpop.f32.mrb[0].mxu0
  %v2274 = vadd.f32 0.0, %v2273
  %v2275 = vpop.f32.mrb[0].mxu0
  %v2276 = vadd.f32 0.0, %v2275
  %2277 = vmatprep.mubr.f32.mxu0 0.0
  %2278 = vmatmul.mubr.f32.gmra.mrb[0].mxu0 %v2065
  %v2279 = vpop.f32.mrb[0].mxu0
  %v2280 = vadd.f32 0.0, %v2279
  %v2281 = vpop.f32.mrb[0].mxu0
  %v2282 = vadd.f32 0.0, %v2281
  %2283 = vmatprep.mubr.f32.mxu0 0.0
  %2284 = vmatmul.mubr.f32.gmra.mrb[0].mxu0 %v2068
  %v2285 = vpop.f32.mrb[0].mxu0
  %v2286 = vadd.f32 0.0, %v2285
  %v2287 = vpop.f32.mrb[0].mxu0
  %v2288 = vadd.f32 0.0, %v2287
  %2289 = vmatprep.mubr.f32.mxu0 0.0
  %2290 = vmatmul.mubr.f32.gmra.mrb[0].mxu0 %v2071
  %v2291 = vpop.f32.mrb[0].mxu0
  %v2292 = vadd.f32 0.0, %v2291
  %v2293 = vpop.f32.mrb[0].mxu0
  %v2294 = vadd.f32 0.0, %v2293
  %2295 = vmatprep.mubr.f32.mxu0 0.0
  %2296 = vmatmul.mubr.f32.gmra.mrb[0].mxu0 %v2074
  %v2297 = vpop.f32.mrb[0].mxu0
  %v2298 = vadd.f32 0.0, %v2297
  %v2299 = vpop.f32.mrb[0].mxu0
  %v2300 = vadd.f32 0.0, %v2299
  %2301 = vdwg.mxu0
  %v2302 = vadd.f32 %v1870, %v2143
  %v2303 = vadd.f32 %v1871, %v2145
  %v2304 = vadd.f32 %v1872, %v2256
  %v2305 = vadd.f32 %v1873, %v2258
  %v2306 = vadd.f32 %v1874, %v2149
  %v2307 = vadd.f32 %v1875, %v2151
  %v2308 = vadd.f32 %v1876, %v2262
  %v2309 = vadd.f32 %v1877, %v2264
  %v2310 = vadd.f32 %v1878, %v2155
  %v2311 = vadd.f32 %v1879, %v2157
  %v2312 = vadd.f32 %v1880, %v2268
  %v2313 = vadd.f32 %v1881, %v2270
  %v2314 = vadd.f32 %v1882, %v2161
  %v2315 = vadd.f32 %v1883, %v2163
  %v2316 = vadd.f32 %v1884, %v2274
  %v2317 = vadd.f32 %v1885, %v2276
  %v2318 = vadd.f32 %v1886, %v2167
  %v2319 = vadd.f32 %v1887, %v2169
  %v2320 = vadd.f32 %v1888, %v2280
  %v2321 = vadd.f32 %v1889, %v2282
  %v2322 = vadd.f32 %v1890, %v2173
  %v2323 = vadd.f32 %v1891, %v2175
  %v2324 = vadd.f32 %v1892, %v2286
  %v2325 = vadd.f32 %v1893, %v2288
  %v2326 = vadd.f32 %v1894, %v2179
  %v2327 = vadd.f32 %v1895, %v2181
  %v2328 = vadd.f32 %v1896, %v2292
  %v2329 = vadd.f32 %v1897, %v2294
  %v2330 = vadd.f32 %v1898, %v2185
  %v2331 = vadd.f32 %v1899, %v2187
  %v2332 = vadd.f32 %v1900, %v2298
  %v2333 = vadd.f32 %v1901, %v2300
  %2334 = vrot.lane.b32.xlu0 %v750, 1
  %v2335 = vpop.permute.xlu0 %2334
  %2336 = vrot.lane.b32.xlu0 %v754, 1
  %v2337 = vpop.permute.xlu0 %2336
  %2338 = vrot.lane.b32.xlu0 %v758, 1
  %v2339 = vpop.permute.xlu0 %2338
  %2340 = vrot.lane.b32.xlu0 %v762, 1
  %v2341 = vpop.permute.xlu0 %2340
  %2342 = vrot.lane.b32.xlu0 %v766, 1
  %v2343 = vpop.permute.xlu0 %2342
  %2344 = vrot.lane.b32.xlu0 %v770, 1
  %v2345 = vpop.permute.xlu0 %2344
  %2346 = vrot.lane.b32.xlu0 %v774, 1
  %v2347 = vpop.permute.xlu0 %2346
  %2348 = vrot.lane.b32.xlu0 %v778, 1
  %v2349 = vpop.permute.xlu0 %2348
  %2350 = vrot.lane.b32.xlu0 %v751, 1
  %v2351 = vpop.permute.xlu0 %2350
  %2352 = vrot.lane.b32.xlu0 %v755, 1
  %v2353 = vpop.permute.xlu0 %2352
  %2354 = vrot.lane.b32.xlu0 %v759, 1
  %v2355 = vpop.permute.xlu0 %2354
  %2356 = vrot.lane.b32.xlu0 %v763, 1
  %v2357 = vpop.permute.xlu0 %2356
  %2358 = vrot.lane.b32.xlu0 %v767, 1
  %v2359 = vpop.permute.xlu0 %2358
  %2360 = vrot.lane.b32.xlu0 %v771, 1
  %v2361 = vpop.permute.xlu0 %2360
  %2362 = vrot.lane.b32.xlu0 %v775, 1
  %v2363 = vpop.permute.xlu0 %2362
  %2364 = vrot.lane.b32.xlu0 %v779, 1
  %v2365 = vpop.permute.xlu0 %2364
  %2366 = vrot.lane.b32.xlu0 %v752, 1
  %v2367 = vpop.permute.xlu0 %2366
  %2368 = vrot.lane.b32.xlu0 %v756, 1
  %v2369 = vpop.permute.xlu0 %2368
  %2370 = vrot.lane.b32.xlu0 %v760, 1
  %v2371 = vpop.permute.xlu0 %2370
  %2372 = vrot.lane.b32.xlu0 %v764, 1
  %v2373 = vpop.permute.xlu0 %2372
  %2374 = vrot.lane.b32.xlu0 %v768, 1
  %v2375 = vpop.permute.xlu0 %2374
  %2376 = vrot.lane.b32.xlu0 %v772, 1
  %v2377 = vpop.permute.xlu0 %2376
  %2378 = vrot.lane.b32.xlu0 %v776, 1
  %v2379 = vpop.permute.xlu0 %2378
  %2380 = vrot.lane.b32.xlu0 %v780, 1
  %v2381 = vpop.permute.xlu0 %2380
  %2382 = vrot.lane.b32.xlu0 %v753, 1
  %v2383 = vpop.permute.xlu0 %2382
  %2384 = vrot.lane.b32.xlu0 %v757, 1
  %v2385 = vpop.permute.xlu0 %2384
  %2386 = vrot.lane.b32.xlu0 %v761, 1
  %v2387 = vpop.permute.xlu0 %2386
  %2388 = vrot.lane.b32.xlu0 %v765, 1
  %v2389 = vpop.permute.xlu0 %2388
  %2390 = vrot.lane.b32.xlu0 %v769, 1
  %v2391 = vpop.permute.xlu0 %2390
  %2392 = vrot.lane.b32.xlu0 %v773, 1
  %v2393 = vpop.permute.xlu0 %2392
  %2394 = vrot.lane.b32.xlu0 %v777, 1
  %v2395 = vpop.permute.xlu0 %2394
  %2396 = vrot.lane.b32.xlu0 %v781, 1
  %v2397 = vpop.permute.xlu0 %2396
  %vm2398 = vcmp.lt.s32.totalorder %v783, 1
  %v2399 = vsel %vm2398, %v2367, %v2383
  %v2400 = vsel %vm2398, %v2369, %v2385
  %v2401 = vsel %vm2398, %v2371, %v2387
  %v2402 = vsel %vm2398, %v2373, %v2389
  %v2403 = vsel %vm2398, %v2375, %v2391
  %v2404 = vsel %vm2398, %v2377, %v2393
  %v2405 = vsel %vm2398, %v2379, %v2395
  %v2406 = vsel %vm2398, %v2381, %v2397
  %v2407 = vsel %vm2398, %v2351, %v2367
  %v2408 = vsel %vm2398, %v2353, %v2369
  %v2409 = vsel %vm2398, %v2355, %v2371
  %v2410 = vsel %vm2398, %v2357, %v2373
  %v2411 = vsel %vm2398, %v2359, %v2375
  %v2412 = vsel %vm2398, %v2361, %v2377
  %v2413 = vsel %vm2398, %v2363, %v2379
  %v2414 = vsel %vm2398, %v2365, %v2381
  %v2415 = vsel %vm2398, %v2335, %v2351
  %v2416 = vsel %vm2398, %v2337, %v2353
  %v2417 = vsel %vm2398, %v2339, %v2355
  %v2418 = vsel %vm2398, %v2341, %v2357
  %v2419 = vsel %vm2398, %v2343, %v2359
  %v2420 = vsel %vm2398, %v2345, %v2361
  %v2421 = vsel %vm2398, %v2347, %v2363
  %v2422 = vsel %vm2398, %v2349, %v2365
  %v2423 = vsel %vm2398, %v2383, %v2335
  %v2424 = vsel %vm2398, %v2385, %v2337
  %v2425 = vsel %vm2398, %v2387, %v2339
  %v2426 = vsel %vm2398, %v2389, %v2341
  %v2427 = vsel %vm2398, %v2391, %v2343
  %v2428 = vsel %vm2398, %v2393, %v2345
  %v2429 = vsel %vm2398, %v2395, %v2347
  %v2430 = vsel %vm2398, %v2397, %v2349
  %v2431 = vsel %vm807, 1, 0
  %v2432 = vsel %vm808, 1, 0
  %v2433 = vsel %vm809, 1, 0
  %v2434 = vsel %vm810, 1, 0
  %vm2435 = vcmp.eq.s32.totalorder %v2431, 1
  %vm2436 = vcmp.eq.s32.totalorder %v2432, 1
  %vm2437 = vcmp.eq.s32.totalorder %v2433, 1
  %vm2438 = vcmp.eq.s32.totalorder %v2434, 1
  %v2439 = vsel %vm2435, %v2423, 0.0
  %v2440 = vsel %vm2436, %v2415, 0.0
  %v2441 = vsel %vm2437, %v2407, 0.0
  %v2442 = vsel %vm2438, %v2399, 0.0
  %v2443 = vsel %vm2435, %v2424, 0.0
  %v2444 = vsel %vm2436, %v2416, 0.0
  %v2445 = vsel %vm2437, %v2408, 0.0
  %v2446 = vsel %vm2438, %v2400, 0.0
  %v2447 = vsel %vm2435, %v2425, 0.0
  %v2448 = vsel %vm2436, %v2417, 0.0
  %v2449 = vsel %vm2437, %v2409, 0.0
  %v2450 = vsel %vm2438, %v2401, 0.0
  %v2451 = vsel %vm2435, %v2426, 0.0
  %v2452 = vsel %vm2436, %v2418, 0.0
  %v2453 = vsel %vm2437, %v2410, 0.0
  %v2454 = vsel %vm2438, %v2402, 0.0
  %v2455 = vsel %vm2435, %v2427, 0.0
  %v2456 = vsel %vm2436, %v2419, 0.0
  %v2457 = vsel %vm2437, %v2411, 0.0
  %v2458 = vsel %vm2438, %v2403, 0.0
  %v2459 = vsel %vm2435, %v2428, 0.0
  %v2460 = vsel %vm2436, %v2420, 0.0
  %v2461 = vsel %vm2437, %v2412, 0.0
  %v2462 = vsel %vm2438, %v2404, 0.0
  %v2463 = vsel %vm2435, %v2429, 0.0
  %v2464 = vsel %vm2436, %v2421, 0.0
  %v2465 = vsel %vm2437, %v2413, 0.0
  %v2466 = vsel %vm2438, %v2405, 0.0
  %v2467 = vsel %vm2435, %v2430, 0.0
  %v2468 = vsel %vm2436, %v2422, 0.0
  %v2469 = vsel %vm2437, %v2414, 0.0
  %v2470 = vsel %vm2438, %v2406, 0.0
  %s2471 = scalar_lea.vmem %s4, 192
  %v2472 = vld [vmem:[%s2471] sm:$0xff]
  %v2473 = vld [vmem:[%s2471 + $0x8] sm:$0xff]
  %v2474 = vld [vmem:[%s2471 + $0x10] sm:$0xff]
  %v2475 = vld [vmem:[%s2471 + $0x18] sm:$0xff]
  %v2476 = vld [vmem:[%s2471 + $0x20] sm:$0xff]
  %v2477 = vld [vmem:[%s2471 + $0x28] sm:$0xff]
  %v2478 = vld [vmem:[%s2471 + $0x30] sm:$0xff]
  %v2479 = vld [vmem:[%s2471 + $0x38] sm:$0xff]
  %v2481 = vsel %vm973, %v2472, 0
  %v2484 = vsel %vm973, %v2473, 0
  %v2487 = vsel %vm973, %v2474, 0
  %v2490 = vsel %vm973, %v2475, 0
  %v2493 = vsel %vm973, %v2476, 0
  %v2496 = vsel %vm973, %v2477, 0
  %v2499 = vsel %vm973, %v2478, 0
  %v2502 = vsel %vm973, %v2479, 0
  %2504 = vmatprep.subr.mxu0 %v2440
  %2505 = vmatpush1.msra.mxu0 %v2439
  %2506 = vmatprep.subr.mxu0 %v2444
  %2507 = vmatpush1.msra.mxu0 %v2443
  %2508 = vmatprep.subr.mxu0 %v2448
  %2509 = vmatpush1.msra.mxu0 %v2447
  %2510 = vmatprep.subr.mxu0 %v2452
  %2511 = vmatpush1.msra.mxu0 %v2451
  %2512 = vmatprep.subr.mxu0 %v2456
  %2513 = vmatpush1.msra.mxu0 %v2455
  %2514 = vmatprep.subr.mxu0 %v2460
  %2515 = vmatpush1.msra.mxu0 %v2459
  %2516 = vmatprep.subr.mxu0 %v2464
  %2517 = vmatpush1.msra.mxu0 %v2463
  %2518 = vmatprep.subr.mxu0 %v2468
  %2519 = vmatpush1.msra.mxu0 %v2467
  %2520 = vmatprep.subr.mxu0 0.0
  %2521 = vmatpush1.msra.mxu0 0.0
  %2522 = vmatprep.subr.mxu0 0.0
  %2523 = vmatpush1.msra.mxu0 0.0
  %2524 = vmatprep.subr.mxu0 0.0
  %2525 = vmatpush1.msra.mxu0 0.0
  %2526 = vmatprep.subr.mxu0 0.0
  %2527 = vmatpush1.msra.mxu0 0.0
  %2528 = vmatprep.subr.mxu0 0.0
  %2529 = vmatpush1.msra.mxu0 0.0
  %2530 = vmatprep.subr.mxu0 0.0
  %2531 = vmatpush1.msra.mxu0 0.0
  %2532 = vmatprep.subr.mxu0 0.0
  %2533 = vmatpush1.msra.mxu0 0.0
  %2534 = vmatprep.subr.mxu0 0.0
  %2535 = vmatpush1.msra.mxu0 0.0
  %2536 = vmatprep.subr.mxu0 0.0
  %2537 = vmatpush1.msra.mxu0 0.0
  %2538 = vmatprep.subr.mxu0 0.0
  %2539 = vmatpush1.msra.mxu0 0.0
  %2540 = vmatprep.subr.mxu0 0.0
  %2541 = vmatpush1.msra.mxu0 0.0
  %2542 = vmatprep.subr.mxu0 0.0
  %2543 = vmatpush1.msra.mxu0 0.0
  %2544 = vmatprep.subr.mxu0 0.0
  %2545 = vmatpush1.msra.mxu0 0.0
  %2546 = vmatprep.subr.mxu0 0.0
  %2547 = vmatpush1.msra.mxu0 0.0
  %2548 = vmatprep.subr.mxu0 0.0
  %2549 = vmatpush1.msra.mxu0 0.0
  %2550 = vmatprep.subr.mxu0 0.0
  %2551 = vmatpush1.msra.mxu0 0.0
  %2552 = vmatprep.subr.mxu0 0.0
  %2553 = vmatpush1.msra.mxu0 0.0
  %2554 = vmatprep.subr.mxu0 0.0
  %2555 = vmatpush1.msra.mxu0 0.0
  %2556 = vmatprep.subr.mxu0 0.0
  %2557 = vmatpush1.msra.mxu0 0.0
  %2558 = vmatprep.subr.mxu0 0.0
  %2559 = vmatpush1.msra.mxu0 0.0
  %2560 = vmatprep.subr.mxu0 0.0
  %2561 = vmatpush1.msra.mxu0 0.0
  %2562 = vmatprep.subr.mxu0 0.0
  %2563 = vmatpush1.msra.mxu0 0.0
  %2564 = vmatprep.subr.mxu0 0.0
  %2565 = vmatpush1.msra.mxu0 0.0
  %2566 = vmatprep.subr.mxu0 0.0
  %2567 = vmatpush1.msra.mxu0 0.0
  %2568 = vmatprep.mubr.f32.mxu0 0.0
  %2569 = vmatmul.mubr.f32.gmra.mrb[0].mxu0 %v2481
  %v2570 = vpop.f32.mrb[0].mxu0
  %v2571 = vadd.f32 0.0, %v2570
  %v2572 = vpop.f32.mrb[0].mxu0
  %v2573 = vadd.f32 0.0, %v2572
  %2574 = vmatprep.mubr.f32.mxu0 0.0
  %2575 = vmatmul.mubr.f32.gmra.mrb[0].mxu0 %v2484
  %v2576 = vpop.f32.mrb[0].mxu0
  %v2577 = vadd.f32 0.0, %v2576
  %v2578 = vpop.f32.mrb[0].mxu0
  %v2579 = vadd.f32 0.0, %v2578
  %2580 = vmatprep.mubr.f32.mxu0 0.0
  %2581 = vmatmul.mubr.f32.gmra.mrb[0].mxu0 %v2487
  %v2582 = vpop.f32.mrb[0].mxu0
  %v2583 = vadd.f32 0.0, %v2582
  %v2584 = vpop.f32.mrb[0].mxu0
  %v2585 = vadd.f32 0.0, %v2584
  %2586 = vmatprep.mubr.f32.mxu0 0.0
  %2587 = vmatmul.mubr.f32.gmra.mrb[0].mxu0 %v2490
  %v2588 = vpop.f32.mrb[0].mxu0
  %v2589 = vadd.f32 0.0, %v2588
  %v2590 = vpop.f32.mrb[0].mxu0
  %v2591 = vadd.f32 0.0, %v2590
  %2592 = vmatprep.mubr.f32.mxu0 0.0
  %2593 = vmatmul.mubr.f32.gmra.mrb[0].mxu0 %v2493
  %v2594 = vpop.f32.mrb[0].mxu0
  %v2595 = vadd.f32 0.0, %v2594
  %v2596 = vpop.f32.mrb[0].mxu0
  %v2597 = vadd.f32 0.0, %v2596
  %2598 = vmatprep.mubr.f32.mxu0 0.0
  %2599 = vmatmul.mubr.f32.gmra.mrb[0].mxu0 %v2496
  %v2600 = vpop.f32.mrb[0].mxu0
  %v2601 = vadd.f32 0.0, %v2600
  %v2602 = vpop.f32.mrb[0].mxu0
  %v2603 = vadd.f32 0.0, %v2602
  %2604 = vmatprep.mubr.f32.mxu0 0.0
  %2605 = vmatmul.mubr.f32.gmra.mrb[0].mxu0 %v2499
  %v2606 = vpop.f32.mrb[0].mxu0
  %v2607 = vadd.f32 0.0, %v2606
  %v2608 = vpop.f32.mrb[0].mxu0
  %v2609 = vadd.f32 0.0, %v2608
  %2610 = vmatprep.mubr.f32.mxu0 0.0
  %2611 = vmatmul.mubr.f32.gmra.mrb[0].mxu0 %v2502
  %v2612 = vpop.f32.mrb[0].mxu0
  %v2613 = vadd.f32 0.0, %v2612
  %v2614 = vpop.f32.mrb[0].mxu0
  %v2615 = vadd.f32 0.0, %v2614
  %2616 = vdwg.mxu0
  %2617 = vmatprep.subr.mxu0 %v2442
  %2618 = vmatpush1.msra.mxu0 %v2441
  %2619 = vmatprep.subr.mxu0 %v2446
  %2620 = vmatpush1.msra.mxu0 %v2445
  %2621 = vmatprep.subr.mxu0 %v2450
  %2622 = vmatpush1.msra.mxu0 %v2449
  %2623 = vmatprep.subr.mxu0 %v2454
  %2624 = vmatpush1.msra.mxu0 %v2453
  %2625 = vmatprep.subr.mxu0 %v2458
  %2626 = vmatpush1.msra.mxu0 %v2457
  %2627 = vmatprep.subr.mxu0 %v2462
  %2628 = vmatpush1.msra.mxu0 %v2461
  %2629 = vmatprep.subr.mxu0 %v2466
  %2630 = vmatpush1.msra.mxu0 %v2465
  %2631 = vmatprep.subr.mxu0 %v2470
  %2632 = vmatpush1.msra.mxu0 %v2469
  %2633 = vmatprep.subr.mxu0 0.0
  %2634 = vmatpush1.msra.mxu0 0.0
  %2635 = vmatprep.subr.mxu0 0.0
  %2636 = vmatpush1.msra.mxu0 0.0
  %2637 = vmatprep.subr.mxu0 0.0
  %2638 = vmatpush1.msra.mxu0 0.0
  %2639 = vmatprep.subr.mxu0 0.0
  %2640 = vmatpush1.msra.mxu0 0.0
  %2641 = vmatprep.subr.mxu0 0.0
  %2642 = vmatpush1.msra.mxu0 0.0
  %2643 = vmatprep.subr.mxu0 0.0
  %2644 = vmatpush1.msra.mxu0 0.0
  %2645 = vmatprep.subr.mxu0 0.0
  %2646 = vmatpush1.msra.mxu0 0.0
  %2647 = vmatprep.subr.mxu0 0.0
  %2648 = vmatpush1.msra.mxu0 0.0
  %2649 = vmatprep.subr.mxu0 0.0
  %2650 = vmatpush1.msra.mxu0 0.0
  %2651 = vmatprep.subr.mxu0 0.0
  %2652 = vmatpush1.msra.mxu0 0.0
  %2653 = vmatprep.subr.mxu0 0.0
  %2654 = vmatpush1.msra.mxu0 0.0
  %2655 = vmatprep.subr.mxu0 0.0
  %2656 = vmatpush1.msra.mxu0 0.0
  %2657 = vmatprep.subr.mxu0 0.0
  %2658 = vmatpush1.msra.mxu0 0.0
  %2659 = vmatprep.subr.mxu0 0.0
  %2660 = vmatpush1.msra.mxu0 0.0
  %2661 = vmatprep.subr.mxu0 0.0
  %2662 = vmatpush1.msra.mxu0 0.0
  %2663 = vmatprep.subr.mxu0 0.0
  %2664 = vmatpush1.msra.mxu0 0.0
  %2665 = vmatprep.subr.mxu0 0.0
  %2666 = vmatpush1.msra.mxu0 0.0
  %2667 = vmatprep.subr.mxu0 0.0
  %2668 = vmatpush1.msra.mxu0 0.0
  %2669 = vmatprep.subr.mxu0 0.0
  %2670 = vmatpush1.msra.mxu0 0.0
  %2671 = vmatprep.subr.mxu0 0.0
  %2672 = vmatpush1.msra.mxu0 0.0
  %2673 = vmatprep.subr.mxu0 0.0
  %2674 = vmatpush1.msra.mxu0 0.0
  %2675 = vmatprep.subr.mxu0 0.0
  %2676 = vmatpush1.msra.mxu0 0.0
  %2677 = vmatprep.subr.mxu0 0.0
  %2678 = vmatpush1.msra.mxu0 0.0
  %2679 = vmatprep.subr.mxu0 0.0
  %2680 = vmatpush1.msra.mxu0 0.0
  %2681 = vmatprep.mubr.f32.mxu0 0.0
  %2682 = vmatmul.mubr.f32.gmra.mrb[0].mxu0 %v2481
  %v2683 = vpop.f32.mrb[0].mxu0
  %v2684 = vadd.f32 0.0, %v2683
  %v2685 = vpop.f32.mrb[0].mxu0
  %v2686 = vadd.f32 0.0, %v2685
  %2687 = vmatprep.mubr.f32.mxu0 0.0
  %2688 = vmatmul.mubr.f32.gmra.mrb[0].mxu0 %v2484
  %v2689 = vpop.f32.mrb[0].mxu0
  %v2690 = vadd.f32 0.0, %v2689
  %v2691 = vpop.f32.mrb[0].mxu0
  %v2692 = vadd.f32 0.0, %v2691
  %2693 = vmatprep.mubr.f32.mxu0 0.0
  %2694 = vmatmul.mubr.f32.gmra.mrb[0].mxu0 %v2487
  %v2695 = vpop.f32.mrb[0].mxu0
  %v2696 = vadd.f32 0.0, %v2695
  %v2697 = vpop.f32.mrb[0].mxu0
  %v2698 = vadd.f32 0.0, %v2697
  %2699 = vmatprep.mubr.f32.mxu0 0.0
  %2700 = vmatmul.mubr.f32.gmra.mrb[0].mxu0 %v2490
  %v2701 = vpop.f32.mrb[0].mxu0
  %v2702 = vadd.f32 0.0, %v2701
  %v2703 = vpop.f32.mrb[0].mxu0
  %v2704 = vadd.f32 0.0, %v2703
  %2705 = vmatprep.mubr.f32.mxu0 0.0
  %2706 = vmatmul.mubr.f32.gmra.mrb[0].mxu0 %v2493
  %v2707 = vpop.f32.mrb[0].mxu0
  %v2708 = vadd.f32 0.0, %v2707
  %v2709 = vpop.f32.mrb[0].mxu0
  %v2710 = vadd.f32 0.0, %v2709
  %2711 = vmatprep.mubr.f32.mxu0 0.0
  %2712 = vmatmul.mubr.f32.gmra.mrb[0].mxu0 %v2496
  %v2713 = vpop.f32.mrb[0].mxu0
  %v2714 = vadd.f32 0.0, %v2713
  %v2715 = vpop.f32.mrb[0].mxu0
  %v2716 = vadd.f32 0.0, %v2715
  %2717 = vmatprep.mubr.f32.mxu0 0.0
  %2718 = vmatmul.mubr.f32.gmra.mrb[0].mxu0 %v2499
  %v2719 = vpop.f32.mrb[0].mxu0
  %v2720 = vadd.f32 0.0, %v2719
  %v2721 = vpop.f32.mrb[0].mxu0
  %v2722 = vadd.f32 0.0, %v2721
  %2723 = vmatprep.mubr.f32.mxu0 0.0
  %2724 = vmatmul.mubr.f32.gmra.mrb[0].mxu0 %v2502
  %v2725 = vpop.f32.mrb[0].mxu0
  %v2726 = vadd.f32 0.0, %v2725
  %v2727 = vpop.f32.mrb[0].mxu0
  %v2728 = vadd.f32 0.0, %v2727
  %2729 = vdwg.mxu0
  %v2730 = vadd.f32 %v2302, %v2571
  %v2731 = vadd.f32 %v2303, %v2573
  %v2732 = vadd.f32 %v2304, %v2684
  %v2733 = vadd.f32 %v2305, %v2686
  %v2734 = vadd.f32 %v2306, %v2577
  %v2735 = vadd.f32 %v2307, %v2579
  %v2736 = vadd.f32 %v2308, %v2690
  %v2737 = vadd.f32 %v2309, %v2692
  %v2738 = vadd.f32 %v2310, %v2583
  %v2739 = vadd.f32 %v2311, %v2585
  %v2740 = vadd.f32 %v2312, %v2696
  %v2741 = vadd.f32 %v2313, %v2698
  %v2742 = vadd.f32 %v2314, %v2589
  %v2743 = vadd.f32 %v2315, %v2591
  %v2744 = vadd.f32 %v2316, %v2702
  %v2745 = vadd.f32 %v2317, %v2704
  %v2746 = vadd.f32 %v2318, %v2595
  %v2747 = vadd.f32 %v2319, %v2597
  %v2748 = vadd.f32 %v2320, %v2708
  %v2749 = vadd.f32 %v2321, %v2710
  %v2750 = vadd.f32 %v2322, %v2601
  %v2751 = vadd.f32 %v2323, %v2603
  %v2752 = vadd.f32 %v2324, %v2714
  %v2753 = vadd.f32 %v2325, %v2716
  %v2754 = vadd.f32 %v2326, %v2607
  %v2755 = vadd.f32 %v2327, %v2609
  %v2756 = vadd.f32 %v2328, %v2720
  %v2757 = vadd.f32 %v2329, %v2722
  %v2758 = vadd.f32 %v2330, %v2613
  %v2759 = vadd.f32 %v2331, %v2615
  %v2760 = vadd.f32 %v2332, %v2726
  %v2761 = vadd.f32 %v2333, %v2728
  %2762 = vrot.lane.b32.xlu0 %v750, 127
  %v2763 = vpop.permute.xlu0 %2762
  %2764 = vrot.lane.b32.xlu0 %v754, 127
  %v2765 = vpop.permute.xlu0 %2764
  %2766 = vrot.lane.b32.xlu0 %v758, 127
  %v2767 = vpop.permute.xlu0 %2766
  %2768 = vrot.lane.b32.xlu0 %v762, 127
  %v2769 = vpop.permute.xlu0 %2768
  %2770 = vrot.lane.b32.xlu0 %v766, 127
  %v2771 = vpop.permute.xlu0 %2770
  %2772 = vrot.lane.b32.xlu0 %v770, 127
  %v2773 = vpop.permute.xlu0 %2772
  %2774 = vrot.lane.b32.xlu0 %v774, 127
  %v2775 = vpop.permute.xlu0 %2774
  %2776 = vrot.lane.b32.xlu0 %v778, 127
  %v2777 = vpop.permute.xlu0 %2776
  %2778 = vrot.lane.b32.xlu0 %v751, 127
  %v2779 = vpop.permute.xlu0 %2778
  %2780 = vrot.lane.b32.xlu0 %v755, 127
  %v2781 = vpop.permute.xlu0 %2780
  %2782 = vrot.lane.b32.xlu0 %v759, 127
  %v2783 = vpop.permute.xlu0 %2782
  %2784 = vrot.lane.b32.xlu0 %v763, 127
  %v2785 = vpop.permute.xlu0 %2784
  %2786 = vrot.lane.b32.xlu0 %v767, 127
  %v2787 = vpop.permute.xlu0 %2786
  %2788 = vrot.lane.b32.xlu0 %v771, 127
  %v2789 = vpop.permute.xlu0 %2788
  %2790 = vrot.lane.b32.xlu0 %v775, 127
  %v2791 = vpop.permute.xlu0 %2790
  %2792 = vrot.lane.b32.xlu0 %v779, 127
  %v2793 = vpop.permute.xlu0 %2792
  %2794 = vrot.lane.b32.xlu0 %v752, 127
  %v2795 = vpop.permute.xlu0 %2794
  %2796 = vrot.lane.b32.xlu0 %v756, 127
  %v2797 = vpop.permute.xlu0 %2796
  %2798 = vrot.lane.b32.xlu0 %v760, 127
  %v2799 = vpop.permute.xlu0 %2798
  %2800 = vrot.lane.b32.xlu0 %v764, 127
  %v2801 = vpop.permute.xlu0 %2800
  %2802 = vrot.lane.b32.xlu0 %v768, 127
  %v2803 = vpop.permute.xlu0 %2802
  %2804 = vrot.lane.b32.xlu0 %v772, 127
  %v2805 = vpop.permute.xlu0 %2804
  %2806 = vrot.lane.b32.xlu0 %v776, 127
  %v2807 = vpop.permute.xlu0 %2806
  %2808 = vrot.lane.b32.xlu0 %v780, 127
  %v2809 = vpop.permute.xlu0 %2808
  %2810 = vrot.lane.b32.xlu0 %v753, 127
  %v2811 = vpop.permute.xlu0 %2810
  %2812 = vrot.lane.b32.xlu0 %v757, 127
  %v2813 = vpop.permute.xlu0 %2812
  %2814 = vrot.lane.b32.xlu0 %v761, 127
  %v2815 = vpop.permute.xlu0 %2814
  %2816 = vrot.lane.b32.xlu0 %v765, 127
  %v2817 = vpop.permute.xlu0 %2816
  %2818 = vrot.lane.b32.xlu0 %v769, 127
  %v2819 = vpop.permute.xlu0 %2818
  %2820 = vrot.lane.b32.xlu0 %v773, 127
  %v2821 = vpop.permute.xlu0 %2820
  %2822 = vrot.lane.b32.xlu0 %v777, 127
  %v2823 = vpop.permute.xlu0 %2822
  %2824 = vrot.lane.b32.xlu0 %v781, 127
  %v2825 = vpop.permute.xlu0 %2824
  %vm2826 = vcmp.lt.s32.totalorder %v783, 127
  %v2827 = vsel %vm2826, %v2795, %v2811
  %v2828 = vsel %vm2826, %v2797, %v2813
  %v2829 = vsel %vm2826, %v2799, %v2815
  %v2830 = vsel %vm2826, %v2801, %v2817
  %v2831 = vsel %vm2826, %v2803, %v2819
  %v2832 = vsel %vm2826, %v2805, %v2821
  %v2833 = vsel %vm2826, %v2807, %v2823
  %v2834 = vsel %vm2826, %v2809, %v2825
  %v2835 = vsel %vm2826, %v2779, %v2795
  %v2836 = vsel %vm2826, %v2781, %v2797
  %v2837 = vsel %vm2826, %v2783, %v2799
  %v2838 = vsel %vm2826, %v2785, %v2801
  %v2839 = vsel %vm2826, %v2787, %v2803
  %v2840 = vsel %vm2826, %v2789, %v2805
  %v2841 = vsel %vm2826, %v2791, %v2807
  %v2842 = vsel %vm2826, %v2793, %v2809
  %v2843 = vsel %vm2826, %v2763, %v2779
  %v2844 = vsel %vm2826, %v2765, %v2781
  %v2845 = vsel %vm2826, %v2767, %v2783
  %v2846 = vsel %vm2826, %v2769, %v2785
  %v2847 = vsel %vm2826, %v2771, %v2787
  %v2848 = vsel %vm2826, %v2773, %v2789
  %v2849 = vsel %vm2826, %v2775, %v2791
  %v2850 = vsel %vm2826, %v2777, %v2793
  %v2851 = vsel %vm2826, %v2811, %v2763
  %v2852 = vsel %vm2826, %v2813, %v2765
  %v2853 = vsel %vm2826, %v2815, %v2767
  %v2854 = vsel %vm2826, %v2817, %v2769
  %v2855 = vsel %vm2826, %v2819, %v2771
  %v2856 = vsel %vm2826, %v2821, %v2773
  %v2857 = vsel %vm2826, %v2823, %v2775
  %v2858 = vsel %vm2826, %v2825, %v2777
  %v2859 = vsel %vm811, 1, 0
  %v2860 = vsel %vm812, 1, 0
  %v2861 = vsel %vm813, 1, 0
  %v2862 = vsel %vm814, 1, 0
  %vm2863 = vcmp.eq.s32.totalorder %v2859, 1
  %vm2864 = vcmp.eq.s32.totalorder %v2860, 1
  %vm2865 = vcmp.eq.s32.totalorder %v2861, 1
  %vm2866 = vcmp.eq.s32.totalorder %v2862, 1
  %v2867 = vsel %vm2863, %v2843, 0.0
  %v2868 = vsel %vm2864, %v2835, 0.0
  %v2869 = vsel %vm2865, %v2827, 0.0
  %v2870 = vsel %vm2866, %v2851, 0.0
  %v2871 = vsel %vm2863, %v2844, 0.0
  %v2872 = vsel %vm2864, %v2836, 0.0
  %v2873 = vsel %vm2865, %v2828, 0.0
  %v2874 = vsel %vm2866, %v2852, 0.0
  %v2875 = vsel %vm2863, %v2845, 0.0
  %v2876 = vsel %vm2864, %v2837, 0.0
  %v2877 = vsel %vm2865, %v2829, 0.0
  %v2878 = vsel %vm2866, %v2853, 0.0
  %v2879 = vsel %vm2863, %v2846, 0.0
  %v2880 = vsel %vm2864, %v2838, 0.0
  %v2881 = vsel %vm2865, %v2830, 0.0
  %v2882 = vsel %vm2866, %v2854, 0.0
  %v2883 = vsel %vm2863, %v2847, 0.0
  %v2884 = vsel %vm2864, %v2839, 0.0
  %v2885 = vsel %vm2865, %v2831, 0.0
  %v2886 = vsel %vm2866, %v2855, 0.0
  %v2887 = vsel %vm2863, %v2848, 0.0
  %v2888 = vsel %vm2864, %v2840, 0.0
  %v2889 = vsel %vm2865, %v2832, 0.0
  %v2890 = vsel %vm2866, %v2856, 0.0
  %v2891 = vsel %vm2863, %v2849, 0.0
  %v2892 = vsel %vm2864, %v2841, 0.0
  %v2893 = vsel %vm2865, %v2833, 0.0
  %v2894 = vsel %vm2866, %v2857, 0.0
  %v2895 = vsel %vm2863, %v2850, 0.0
  %v2896 = vsel %vm2864, %v2842, 0.0
  %v2897 = vsel %vm2865, %v2834, 0.0
  %v2898 = vsel %vm2866, %v2858, 0.0
  %s2899 = scalar_lea.vmem %s4, 320
  %v2900 = vld [vmem:[%s2899] sm:$0xff]
  %v2901 = vld [vmem:[%s2899 + $0x8] sm:$0xff]
  %v2902 = vld [vmem:[%s2899 + $0x10] sm:$0xff]
  %v2903 = vld [vmem:[%s2899 + $0x18] sm:$0xff]
  %v2904 = vld [vmem:[%s2899 + $0x20] sm:$0xff]
  %v2905 = vld [vmem:[%s2899 + $0x28] sm:$0xff]
  %v2906 = vld [vmem:[%s2899 + $0x30] sm:$0xff]
  %v2907 = vld [vmem:[%s2899 + $0x38] sm:$0xff]
  %v2909 = vsel %vm973, %v2900, 0
  %v2912 = vsel %vm973, %v2901, 0
  %v2915 = vsel %vm973, %v2902, 0
  %v2918 = vsel %vm973, %v2903, 0
  %v2921 = vsel %vm973, %v2904, 0
  %v2924 = vsel %vm973, %v2905, 0
  %v2927 = vsel %vm973, %v2906, 0
  %v2930 = vsel %vm973, %v2907, 0
  %2932 = vmatprep.subr.mxu0 %v2868
  %2933 = vmatpush1.msra.mxu0 %v2867
  %2934 = vmatprep.subr.mxu0 %v2872
  %2935 = vmatpush1.msra.mxu0 %v2871
  %2936 = vmatprep.subr.mxu0 %v2876
  %2937 = vmatpush1.msra.mxu0 %v2875
  %2938 = vmatprep.subr.mxu0 %v2880
  %2939 = vmatpush1.msra.mxu0 %v2879
  %2940 = vmatprep.subr.mxu0 %v2884
  %2941 = vmatpush1.msra.mxu0 %v2883
  %2942 = vmatprep.subr.mxu0 %v2888
  %2943 = vmatpush1.msra.mxu0 %v2887
  %2944 = vmatprep.subr.mxu0 %v2892
  %2945 = vmatpush1.msra.mxu0 %v2891
  %2946 = vmatprep.subr.mxu0 %v2896
  %2947 = vmatpush1.msra.mxu0 %v2895
  %2948 = vmatprep.subr.mxu0 0.0
  %2949 = vmatpush1.msra.mxu0 0.0
  %2950 = vmatprep.subr.mxu0 0.0
  %2951 = vmatpush1.msra.mxu0 0.0
  %2952 = vmatprep.subr.mxu0 0.0
  %2953 = vmatpush1.msra.mxu0 0.0
  %2954 = vmatprep.subr.mxu0 0.0
  %2955 = vmatpush1.msra.mxu0 0.0
  %2956 = vmatprep.subr.mxu0 0.0
  %2957 = vmatpush1.msra.mxu0 0.0
  %2958 = vmatprep.subr.mxu0 0.0
  %2959 = vmatpush1.msra.mxu0 0.0
  %2960 = vmatprep.subr.mxu0 0.0
  %2961 = vmatpush1.msra.mxu0 0.0
  %2962 = vmatprep.subr.mxu0 0.0
  %2963 = vmatpush1.msra.mxu0 0.0
  %2964 = vmatprep.subr.mxu0 0.0
  %2965 = vmatpush1.msra.mxu0 0.0
  %2966 = vmatprep.subr.mxu0 0.0
  %2967 = vmatpush1.msra.mxu0 0.0
  %2968 = vmatprep.subr.mxu0 0.0
  %2969 = vmatpush1.msra.mxu0 0.0
  %2970 = vmatprep.subr.mxu0 0.0
  %2971 = vmatpush1.msra.mxu0 0.0
  %2972 = vmatprep.subr.mxu0 0.0
  %2973 = vmatpush1.msra.mxu0 0.0
  %2974 = vmatprep.subr.mxu0 0.0
  %2975 = vmatpush1.msra.mxu0 0.0
  %2976 = vmatprep.subr.mxu0 0.0
  %2977 = vmatpush1.msra.mxu0 0.0
  %2978 = vmatprep.subr.mxu0 0.0
  %2979 = vmatpush1.msra.mxu0 0.0
  %2980 = vmatprep.subr.mxu0 0.0
  %2981 = vmatpush1.msra.mxu0 0.0
  %2982 = vmatprep.subr.mxu0 0.0
  %2983 = vmatpush1.msra.mxu0 0.0
  %2984 = vmatprep.subr.mxu0 0.0
  %2985 = vmatpush1.msra.mxu0 0.0
  %2986 = vmatprep.subr.mxu0 0.0
  %2987 = vmatpush1.msra.mxu0 0.0
  %2988 = vmatprep.subr.mxu0 0.0
  %2989 = vmatpush1.msra.mxu0 0.0
  %2990 = vmatprep.subr.mxu0 0.0
  %2991 = vmatpush1.msra.mxu0 0.0
  %2992 = vmatprep.subr.mxu0 0.0
  %2993 = vmatpush1.msra.mxu0 0.0
  %2994 = vmatprep.subr.mxu0 0.0
  %2995 = vmatpush1.msra.mxu0 0.0
  %2996 = vmatprep.mubr.f32.mxu0 0.0
  %2997 = vmatmul.mubr.f32.gmra.mrb[0].mxu0 %v2909
  %v2998 = vpop.f32.mrb[0].mxu0
  %v2999 = vadd.f32 0.0, %v2998
  %v3000 = vpop.f32.mrb[0].mxu0
  %v3001 = vadd.f32 0.0, %v3000
  %3002 = vmatprep.mubr.f32.mxu0 0.0
  %3003 = vmatmul.mubr.f32.gmra.mrb[0].mxu0 %v2912
  %v3004 = vpop.f32.mrb[0].mxu0
  %v3005 = vadd.f32 0.0, %v3004
  %v3006 = vpop.f32.mrb[0].mxu0
  %v3007 = vadd.f32 0.0, %v3006
  %3008 = vmatprep.mubr.f32.mxu0 0.0
  %3009 = vmatmul.mubr.f32.gmra.mrb[0].mxu0 %v2915
  %v3010 = vpop.f32.mrb[0].mxu0
  %v3011 = vadd.f32 0.0, %v3010
  %v3012 = vpop.f32.mrb[0].mxu0
  %v3013 = vadd.f32 0.0, %v3012
  %3014 = vmatprep.mubr.f32.mxu0 0.0
  %3015 = vmatmul.mubr.f32.gmra.mrb[0].mxu0 %v2918
  %v3016 = vpop.f32.mrb[0].mxu0
  %v3017 = vadd.f32 0.0, %v3016
  %v3018 = vpop.f32.mrb[0].mxu0
  %v3019 = vadd.f32 0.0, %v3018
  %3020 = vmatprep.mubr.f32.mxu0 0.0
  %3021 = vmatmul.mubr.f32.gmra.mrb[0].mxu0 %v2921
  %v3022 = vpop.f32.mrb[0].mxu0
  %v3023 = vadd.f32 0.0, %v3022
  %v3024 = vpop.f32.mrb[0].mxu0
  %v3025 = vadd.f32 0.0, %v3024
  %3026 = vmatprep.mubr.f32.mxu0 0.0
  %3027 = vmatmul.mubr.f32.gmra.mrb[0].mxu0 %v2924
  %v3028 = vpop.f32.mrb[0].mxu0
  %v3029 = vadd.f32 0.0, %v3028
  %v3030 = vpop.f32.mrb[0].mxu0
  %v3031 = vadd.f32 0.0, %v3030
  %3032 = vmatprep.mubr.f32.mxu0 0.0
  %3033 = vmatmul.mubr.f32.gmra.mrb[0].mxu0 %v2927
  %v3034 = vpop.f32.mrb[0].mxu0
  %v3035 = vadd.f32 0.0, %v3034
  %v3036 = vpop.f32.mrb[0].mxu0
  %v3037 = vadd.f32 0.0, %v3036
  %3038 = vmatprep.mubr.f32.mxu0 0.0
  %3039 = vmatmul.mubr.f32.gmra.mrb[0].mxu0 %v2930
  %v3040 = vpop.f32.mrb[0].mxu0
  %v3041 = vadd.f32 0.0, %v3040
  %v3042 = vpop.f32.mrb[0].mxu0
  %v3043 = vadd.f32 0.0, %v3042
  %3044 = vdwg.mxu0
  %3045 = vmatprep.subr.mxu0 %v2870
  %3046 = vmatpush1.msra.mxu0 %v2869
  %3047 = vmatprep.subr.mxu0 %v2874
  %3048 = vmatpush1.msra.mxu0 %v2873
  %3049 = vmatprep.subr.mxu0 %v2878
  %3050 = vmatpush1.msra.mxu0 %v2877
  %3051 = vmatprep.subr.mxu0 %v2882
  %3052 = vmatpush1.msra.mxu0 %v2881
  %3053 = vmatprep.subr.mxu0 %v2886
  %3054 = vmatpush1.msra.mxu0 %v2885
  %3055 = vmatprep.subr.mxu0 %v2890
  %3056 = vmatpush1.msra.mxu0 %v2889
  %3057 = vmatprep.subr.mxu0 %v2894
  %3058 = vmatpush1.msra.mxu0 %v2893
  %3059 = vmatprep.subr.mxu0 %v2898
  %3060 = vmatpush1.msra.mxu0 %v2897
  %3061 = vmatprep.subr.mxu0 0.0
  %3062 = vmatpush1.msra.mxu0 0.0
  %3063 = vmatprep.subr.mxu0 0.0
  %3064 = vmatpush1.msra.mxu0 0.0
  %3065 = vmatprep.subr.mxu0 0.0
  %3066 = vmatpush1.msra.mxu0 0.0
  %3067 = vmatprep.subr.mxu0 0.0
  %3068 = vmatpush1.msra.mxu0 0.0
  %3069 = vmatprep.subr.mxu0 0.0
  %3070 = vmatpush1.msra.mxu0 0.0
  %3071 = vmatprep.subr.mxu0 0.0
  %3072 = vmatpush1.msra.mxu0 0.0
  %3073 = vmatprep.subr.mxu0 0.0
  %3074 = vmatpush1.msra.mxu0 0.0
  %3075 = vmatprep.subr.mxu0 0.0
  %3076 = vmatpush1.msra.mxu0 0.0
  %3077 = vmatprep.subr.mxu0 0.0
  %3078 = vmatpush1.msra.mxu0 0.0
  %3079 = vmatprep.subr.mxu0 0.0
  %3080 = vmatpush1.msra.mxu0 0.0
  %3081 = vmatprep.subr.mxu0 0.0
  %3082 = vmatpush1.msra.mxu0 0.0
  %3083 = vmatprep.subr.mxu0 0.0
  %3084 = vmatpush1.msra.mxu0 0.0
  %3085 = vmatprep.subr.mxu0 0.0
  %3086 = vmatpush1.msra.mxu0 0.0
  %3087 = vmatprep.subr.mxu0 0.0
  %3088 = vmatpush1.msra.mxu0 0.0
  %3089 = vmatprep.subr.mxu0 0.0
  %3090 = vmatpush1.msra.mxu0 0.0
  %3091 = vmatprep.subr.mxu0 0.0
  %3092 = vmatpush1.msra.mxu0 0.0
  %3093 = vmatprep.subr.mxu0 0.0
  %3094 = vmatpush1.msra.mxu0 0.0
  %3095 = vmatprep.subr.mxu0 0.0
  %3096 = vmatpush1.msra.mxu0 0.0
  %3097 = vmatprep.subr.mxu0 0.0
  %3098 = vmatpush1.msra.mxu0 0.0
  %3099 = vmatprep.subr.mxu0 0.0
  %3100 = vmatpush1.msra.mxu0 0.0
  %3101 = vmatprep.subr.mxu0 0.0
  %3102 = vmatpush1.msra.mxu0 0.0
  %3103 = vmatprep.subr.mxu0 0.0
  %3104 = vmatpush1.msra.mxu0 0.0
  %3105 = vmatprep.subr.mxu0 0.0
  %3106 = vmatpush1.msra.mxu0 0.0
  %3107 = vmatprep.subr.mxu0 0.0
  %3108 = vmatpush1.msra.mxu0 0.0
  %3109 = vmatprep.mubr.f32.mxu0 0.0
  %3110 = vmatmul.mubr.f32.gmra.mrb[0].mxu0 %v2909
  %v3111 = vpop.f32.mrb[0].mxu0
  %v3112 = vadd.f32 0.0, %v3111
  %v3113 = vpop.f32.mrb[0].mxu0
  %v3114 = vadd.f32 0.0, %v3113
  %3115 = vmatprep.mubr.f32.mxu0 0.0
  %3116 = vmatmul.mubr.f32.gmra.mrb[0].mxu0 %v2912
  %v3117 = vpop.f32.mrb[0].mxu0
  %v3118 = vadd.f32 0.0, %v3117
  %v3119 = vpop.f32.mrb[0].mxu0
  %v3120 = vadd.f32 0.0, %v3119
  %3121 = vmatprep.mubr.f32.mxu0 0.0
  %3122 = vmatmul.mubr.f32.gmra.mrb[0].mxu0 %v2915
  %v3123 = vpop.f32.mrb[0].mxu0
  %v3124 = vadd.f32 0.0, %v3123
  %v3125 = vpop.f32.mrb[0].mxu0
  %v3126 = vadd.f32 0.0, %v3125
  %3127 = vmatprep.mubr.f32.mxu0 0.0
  %3128 = vmatmul.mubr.f32.gmra.mrb[0].mxu0 %v2918
  %v3129 = vpop.f32.mrb[0].mxu0
  %v3130 = vadd.f32 0.0, %v3129
  %v3131 = vpop.f32.mrb[0].mxu0
  %v3132 = vadd.f32 0.0, %v3131
  %3133 = vmatprep.mubr.f32.mxu0 0.0
  %3134 = vmatmul.mubr.f32.gmra.mrb[0].mxu0 %v2921
  %v3135 = vpop.f32.mrb[0].mxu0
  %v3136 = vadd.f32 0.0, %v3135
  %v3137 = vpop.f32.mrb[0].mxu0
  %v3138 = vadd.f32 0.0, %v3137
  %3139 = vmatprep.mubr.f32.mxu0 0.0
  %3140 = vmatmul.mubr.f32.gmra.mrb[0].mxu0 %v2924
  %v3141 = vpop.f32.mrb[0].mxu0
  %v3142 = vadd.f32 0.0, %v3141
  %v3143 = vpop.f32.mrb[0].mxu0
  %v3144 = vadd.f32 0.0, %v3143
  %3145 = vmatprep.mubr.f32.mxu0 0.0
  %3146 = vmatmul.mubr.f32.gmra.mrb[0].mxu0 %v2927
  %v3147 = vpop.f32.mrb[0].mxu0
  %v3148 = vadd.f32 0.0, %v3147
  %v3149 = vpop.f32.mrb[0].mxu0
  %v3150 = vadd.f32 0.0, %v3149
  %3151 = vmatprep.mubr.f32.mxu0 0.0
  %3152 = vmatmul.mubr.f32.gmra.mrb[0].mxu0 %v2930
  %v3153 = vpop.f32.mrb[0].mxu0
  %v3154 = vadd.f32 0.0, %v3153
  %v3155 = vpop.f32.mrb[0].mxu0
  %v3156 = vadd.f32 0.0, %v3155
  %3157 = vdwg.mxu0
  %v3158 = vadd.f32 %v2730, %v2999
  %v3159 = vadd.f32 %v2731, %v3001
  %v3160 = vadd.f32 %v2732, %v3112
  %v3161 = vadd.f32 %v2733, %v3114
  %v3162 = vadd.f32 %v2734, %v3005
  %v3163 = vadd.f32 %v2735, %v3007
  %v3164 = vadd.f32 %v2736, %v3118
  %v3165 = vadd.f32 %v2737, %v3120
  %v3166 = vadd.f32 %v2738, %v3011
  %v3167 = vadd.f32 %v2739, %v3013
  %v3168 = vadd.f32 %v2740, %v3124
  %v3169 = vadd.f32 %v2741, %v3126
  %v3170 = vadd.f32 %v2742, %v3017
  %v3171 = vadd.f32 %v2743, %v3019
  %v3172 = vadd.f32 %v2744, %v3130
  %v3173 = vadd.f32 %v2745, %v3132
  %v3174 = vadd.f32 %v2746, %v3023
  %v3175 = vadd.f32 %v2747, %v3025
  %v3176 = vadd.f32 %v2748, %v3136
  %v3177 = vadd.f32 %v2749, %v3138
  %v3178 = vadd.f32 %v2750, %v3029
  %v3179 = vadd.f32 %v2751, %v3031
  %v3180 = vadd.f32 %v2752, %v3142
  %v3181 = vadd.f32 %v2753, %v3144
  %v3182 = vadd.f32 %v2754, %v3035
  %v3183 = vadd.f32 %v2755, %v3037
  %v3184 = vadd.f32 %v2756, %v3148
  %v3185 = vadd.f32 %v2757, %v3150
  %v3186 = vadd.f32 %v2758, %v3041
  %v3187 = vadd.f32 %v2759, %v3043
  %v3188 = vadd.f32 %v2760, %v3154
  %v3189 = vadd.f32 %v2761, %v3156
  %vm3190 = vmand %vm803, %vm807
  %vm3191 = vmand %vm804, %vm808
  %vm3192 = vmand %vm805, %vm809
  %vm3193 = vmand %vm806, %vm810
  %3194 = vrot.lane.b32.xlu0 %v750, 113
  %v3195 = vpop.permute.xlu0 %3194
  %3196 = vrot.lane.b32.xlu0 %v754, 113
  %v3197 = vpop.permute.xlu0 %3196
  %3198 = vrot.lane.b32.xlu0 %v758, 113
  %v3199 = vpop.permute.xlu0 %3198
  %3200 = vrot.lane.b32.xlu0 %v762, 113
  %v3201 = vpop.permute.xlu0 %3200
  %3202 = vrot.lane.b32.xlu0 %v766, 113
  %v3203 = vpop.permute.xlu0 %3202
  %3204 = vrot.lane.b32.xlu0 %v770, 113
  %v3205 = vpop.permute.xlu0 %3204
  %3206 = vrot.lane.b32.xlu0 %v774, 113
  %v3207 = vpop.permute.xlu0 %3206
  %3208 = vrot.lane.b32.xlu0 %v778, 113
  %v3209 = vpop.permute.xlu0 %3208
  %3210 = vrot.lane.b32.xlu0 %v751, 113
  %v3211 = vpop.permute.xlu0 %3210
  %3212 = vrot.lane.b32.xlu0 %v755, 113
  %v3213 = vpop.permute.xlu0 %3212
  %3214 = vrot.lane.b32.xlu0 %v759, 113
  %v3215 = vpop.permute.xlu0 %3214
  %3216 = vrot.lane.b32.xlu0 %v763, 113
  %v3217 = vpop.permute.xlu0 %3216
  %3218 = vrot.lane.b32.xlu0 %v767, 113
  %v3219 = vpop.permute.xlu0 %3218
  %3220 = vrot.lane.b32.xlu0 %v771, 113
  %v3221 = vpop.permute.xlu0 %3220
  %3222 = vrot.lane.b32.xlu0 %v775, 113
  %v3223 = vpop.permute.xlu0 %3222
  %3224 = vrot.lane.b32.xlu0 %v779, 113
  %v3225 = vpop.permute.xlu0 %3224
  %3226 = vrot.lane.b32.xlu0 %v752, 113
  %v3227 = vpop.permute.xlu0 %3226
  %3228 = vrot.lane.b32.xlu0 %v756, 113
  %v3229 = vpop.permute.xlu0 %3228
  %3230 = vrot.lane.b32.xlu0 %v760, 113
  %v3231 = vpop.permute.xlu0 %3230
  %3232 = vrot.lane.b32.xlu0 %v764, 113
  %v3233 = vpop.permute.xlu0 %3232
  %3234 = vrot.lane.b32.xlu0 %v768, 113
  %v3235 = vpop.permute.xlu0 %3234
  %3236 = vrot.lane.b32.xlu0 %v772, 113
  %v3237 = vpop.permute.xlu0 %3236
  %3238 = vrot.lane.b32.xlu0 %v776, 113
  %v3239 = vpop.permute.xlu0 %3238
  %3240 = vrot.lane.b32.xlu0 %v780, 113
  %v3241 = vpop.permute.xlu0 %3240
  %3242 = vrot.lane.b32.xlu0 %v753, 113
  %v3243 = vpop.permute.xlu0 %3242
  %3244 = vrot.lane.b32.xlu0 %v757, 113
  %v3245 = vpop.permute.xlu0 %3244
  %3246 = vrot.lane.b32.xlu0 %v761, 113
  %v3247 = vpop.permute.xlu0 %3246
  %3248 = vrot.lane.b32.xlu0 %v765, 113
  %v3249 = vpop.permute.xlu0 %3248
  %3250 = vrot.lane.b32.xlu0 %v769, 113
  %v3251 = vpop.permute.xlu0 %3250
  %3252 = vrot.lane.b32.xlu0 %v773, 113
  %v3253 = vpop.permute.xlu0 %3252
  %3254 = vrot.lane.b32.xlu0 %v777, 113
  %v3255 = vpop.permute.xlu0 %3254
  %3256 = vrot.lane.b32.xlu0 %v781, 113
  %v3257 = vpop.permute.xlu0 %3256
  %vm3258 = vcmp.lt.s32.totalorder %v783, 113
  %v3259 = vsel %vm3258, %v3227, %v3243
  %v3260 = vsel %vm3258, %v3229, %v3245
  %v3261 = vsel %vm3258, %v3231, %v3247
  %v3262 = vsel %vm3258, %v3233, %v3249
  %v3263 = vsel %vm3258, %v3235, %v3251
  %v3264 = vsel %vm3258, %v3237, %v3253
  %v3265 = vsel %vm3258, %v3239, %v3255
  %v3266 = vsel %vm3258, %v3241, %v3257
  %v3267 = vsel %vm3258, %v3211, %v3227
  %v3268 = vsel %vm3258, %v3213, %v3229
  %v3269 = vsel %vm3258, %v3215, %v3231
  %v3270 = vsel %vm3258, %v3217, %v3233
  %v3271 = vsel %vm3258, %v3219, %v3235
  %v3272 = vsel %vm3258, %v3221, %v3237
  %v3273 = vsel %vm3258, %v3223, %v3239
  %v3274 = vsel %vm3258, %v3225, %v3241
  %v3275 = vsel %vm3258, %v3195, %v3211
  %v3276 = vsel %vm3258, %v3197, %v3213
  %v3277 = vsel %vm3258, %v3199, %v3215
  %v3278 = vsel %vm3258, %v3201, %v3217
  %v3279 = vsel %vm3258, %v3203, %v3219
  %v3280 = vsel %vm3258, %v3205, %v3221
  %v3281 = vsel %vm3258, %v3207, %v3223
  %v3282 = vsel %vm3258, %v3209, %v3225
  %v3283 = vsel %vm3258, %v3243, %v3195
  %v3284 = vsel %vm3258, %v3245, %v3197
  %v3285 = vsel %vm3258, %v3247, %v3199
  %v3286 = vsel %vm3258, %v3249, %v3201
  %v3287 = vsel %vm3258, %v3251, %v3203
  %v3288 = vsel %vm3258, %v3253, %v3205
  %v3289 = vsel %vm3258, %v3255, %v3207
  %v3290 = vsel %vm3258, %v3257, %v3209
  %v3291 = vsel %vm3190, 1, 0
  %v3292 = vsel %vm3191, 1, 0
  %v3293 = vsel %vm3192, 1, 0
  %v3294 = vsel %vm3193, 1, 0
  %vm3295 = vcmp.eq.s32.totalorder %v3291, 1
  %vm3296 = vcmp.eq.s32.totalorder %v3292, 1
  %vm3297 = vcmp.eq.s32.totalorder %v3293, 1
  %vm3298 = vcmp.eq.s32.totalorder %v3294, 1
  %v3299 = vsel %vm3295, %v3275, 0.0
  %v3300 = vsel %vm3296, %v3267, 0.0
  %v3301 = vsel %vm3297, %v3259, 0.0
  %v3302 = vsel %vm3298, %v3283, 0.0
  %v3303 = vsel %vm3295, %v3276, 0.0
  %v3304 = vsel %vm3296, %v3268, 0.0
  %v3305 = vsel %vm3297, %v3260, 0.0
  %v3306 = vsel %vm3298, %v3284, 0.0
  %v3307 = vsel %vm3295, %v3277, 0.0
  %v3308 = vsel %vm3296, %v3269, 0.0
  %v3309 = vsel %vm3297, %v3261, 0.0
  %v3310 = vsel %vm3298, %v3285, 0.0
  %v3311 = vsel %vm3295, %v3278, 0.0
  %v3312 = vsel %vm3296, %v3270, 0.0
  %v3313 = vsel %vm3297, %v3262, 0.0
  %v3314 = vsel %vm3298, %v3286, 0.0
  %v3315 = vsel %vm3295, %v3279, 0.0
  %v3316 = vsel %vm3296, %v3271, 0.0
  %v3317 = vsel %vm3297, %v3263, 0.0
  %v3318 = vsel %vm3298, %v3287, 0.0
  %v3319 = vsel %vm3295, %v3280, 0.0
  %v3320 = vsel %vm3296, %v3272, 0.0
  %v3321 = vsel %vm3297, %v3264, 0.0
  %v3322 = vsel %vm3298, %v3288, 0.0
  %v3323 = vsel %vm3295, %v3281, 0.0
  %v3324 = vsel %vm3296, %v3273, 0.0
  %v3325 = vsel %vm3297, %v3265, 0.0
  %v3326 = vsel %vm3298, %v3289, 0.0
  %v3327 = vsel %vm3295, %v3282, 0.0
  %v3328 = vsel %vm3296, %v3274, 0.0
  %v3329 = vsel %vm3297, %v3266, 0.0
  %v3330 = vsel %vm3298, %v3290, 0.0
  %s3331 = scalar_lea.vmem %s4, 384
  %v3332 = vld [vmem:[%s3331] sm:$0xff]
  %v3333 = vld [vmem:[%s3331 + $0x8] sm:$0xff]
  %v3334 = vld [vmem:[%s3331 + $0x10] sm:$0xff]
  %v3335 = vld [vmem:[%s3331 + $0x18] sm:$0xff]
  %v3336 = vld [vmem:[%s3331 + $0x20] sm:$0xff]
  %v3337 = vld [vmem:[%s3331 + $0x28] sm:$0xff]
  %v3338 = vld [vmem:[%s3331 + $0x30] sm:$0xff]
  %v3339 = vld [vmem:[%s3331 + $0x38] sm:$0xff]
  %v3341 = vsel %vm973, %v3332, 0
  %v3344 = vsel %vm973, %v3333, 0
  %v3347 = vsel %vm973, %v3334, 0
  %v3350 = vsel %vm973, %v3335, 0
  %v3353 = vsel %vm973, %v3336, 0
  %v3356 = vsel %vm973, %v3337, 0
  %v3359 = vsel %vm973, %v3338, 0
  %v3362 = vsel %vm973, %v3339, 0
  %3364 = vmatprep.subr.mxu0 %v3300
  %3365 = vmatpush1.msra.mxu0 %v3299
  %3366 = vmatprep.subr.mxu0 %v3304
  %3367 = vmatpush1.msra.mxu0 %v3303
  %3368 = vmatprep.subr.mxu0 %v3308
  %3369 = vmatpush1.msra.mxu0 %v3307
  %3370 = vmatprep.subr.mxu0 %v3312
  %3371 = vmatpush1.msra.mxu0 %v3311
  %3372 = vmatprep.subr.mxu0 %v3316
  %3373 = vmatpush1.msra.mxu0 %v3315
  %3374 = vmatprep.subr.mxu0 %v3320
  %3375 = vmatpush1.msra.mxu0 %v3319
  %3376 = vmatprep.subr.mxu0 %v3324
  %3377 = vmatpush1.msra.mxu0 %v3323
  %3378 = vmatprep.subr.mxu0 %v3328
  %3379 = vmatpush1.msra.mxu0 %v3327
  %3380 = vmatprep.subr.mxu0 0.0
  %3381 = vmatpush1.msra.mxu0 0.0
  %3382 = vmatprep.subr.mxu0 0.0
  %3383 = vmatpush1.msra.mxu0 0.0
  %3384 = vmatprep.subr.mxu0 0.0
  %3385 = vmatpush1.msra.mxu0 0.0
  %3386 = vmatprep.subr.mxu0 0.0
  %3387 = vmatpush1.msra.mxu0 0.0
  %3388 = vmatprep.subr.mxu0 0.0
  %3389 = vmatpush1.msra.mxu0 0.0
  %3390 = vmatprep.subr.mxu0 0.0
  %3391 = vmatpush1.msra.mxu0 0.0
  %3392 = vmatprep.subr.mxu0 0.0
  %3393 = vmatpush1.msra.mxu0 0.0
  %3394 = vmatprep.subr.mxu0 0.0
  %3395 = vmatpush1.msra.mxu0 0.0
  %3396 = vmatprep.subr.mxu0 0.0
  %3397 = vmatpush1.msra.mxu0 0.0
  %3398 = vmatprep.subr.mxu0 0.0
  %3399 = vmatpush1.msra.mxu0 0.0
  %3400 = vmatprep.subr.mxu0 0.0
  %3401 = vmatpush1.msra.mxu0 0.0
  %3402 = vmatprep.subr.mxu0 0.0
  %3403 = vmatpush1.msra.mxu0 0.0
  %3404 = vmatprep.subr.mxu0 0.0
  %3405 = vmatpush1.msra.mxu0 0.0
  %3406 = vmatprep.subr.mxu0 0.0
  %3407 = vmatpush1.msra.mxu0 0.0
  %3408 = vmatprep.subr.mxu0 0.0
  %3409 = vmatpush1.msra.mxu0 0.0
  %3410 = vmatprep.subr.mxu0 0.0
  %3411 = vmatpush1.msra.mxu0 0.0
  %3412 = vmatprep.subr.mxu0 0.0
  %3413 = vmatpush1.msra.mxu0 0.0
  %3414 = vmatprep.subr.mxu0 0.0
  %3415 = vmatpush1.msra.mxu0 0.0
  %3416 = vmatprep.subr.mxu0 0.0
  %3417 = vmatpush1.msra.mxu0 0.0
  %3418 = vmatprep.subr.mxu0 0.0
  %3419 = vmatpush1.msra.mxu0 0.0
  %3420 = vmatprep.subr.mxu0 0.0
  %3421 = vmatpush1.msra.mxu0 0.0
  %3422 = vmatprep.subr.mxu0 0.0
  %3423 = vmatpush1.msra.mxu0 0.0
  %3424 = vmatprep.subr.mxu0 0.0
  %3425 = vmatpush1.msra.mxu0 0.0
  %3426 = vmatprep.subr.mxu0 0.0
  %3427 = vmatpush1.msra.mxu0 0.0
  %3428 = vmatprep.mubr.f32.mxu0 0.0
  %3429 = vmatmul.mubr.f32.gmra.mrb[0].mxu0 %v3341
  %v3430 = vpop.f32.mrb[0].mxu0
  %v3431 = vadd.f32 0.0, %v3430
  %v3432 = vpop.f32.mrb[0].mxu0
  %v3433 = vadd.f32 0.0, %v3432
  %3434 = vmatprep.mubr.f32.mxu0 0.0
  %3435 = vmatmul.mubr.f32.gmra.mrb[0].mxu0 %v3344
  %v3436 = vpop.f32.mrb[0].mxu0
  %v3437 = vadd.f32 0.0, %v3436
  %v3438 = vpop.f32.mrb[0].mxu0
  %v3439 = vadd.f32 0.0, %v3438
  %3440 = vmatprep.mubr.f32.mxu0 0.0
  %3441 = vmatmul.mubr.f32.gmra.mrb[0].mxu0 %v3347
  %v3442 = vpop.f32.mrb[0].mxu0
  %v3443 = vadd.f32 0.0, %v3442
  %v3444 = vpop.f32.mrb[0].mxu0
  %v3445 = vadd.f32 0.0, %v3444
  %3446 = vmatprep.mubr.f32.mxu0 0.0
  %3447 = vmatmul.mubr.f32.gmra.mrb[0].mxu0 %v3350
  %v3448 = vpop.f32.mrb[0].mxu0
  %v3449 = vadd.f32 0.0, %v3448
  %v3450 = vpop.f32.mrb[0].mxu0
  %v3451 = vadd.f32 0.0, %v3450
  %3452 = vmatprep.mubr.f32.mxu0 0.0
  %3453 = vmatmul.mubr.f32.gmra.mrb[0].mxu0 %v3353
  %v3454 = vpop.f32.mrb[0].mxu0
  %v3455 = vadd.f32 0.0, %v3454
  %v3456 = vpop.f32.mrb[0].mxu0
  %v3457 = vadd.f32 0.0, %v3456
  %3458 = vmatprep.mubr.f32.mxu0 0.0
  %3459 = vmatmul.mubr.f32.gmra.mrb[0].mxu0 %v3356
  %v3460 = vpop.f32.mrb[0].mxu0
  %v3461 = vadd.f32 0.0, %v3460
  %v3462 = vpop.f32.mrb[0].mxu0
  %v3463 = vadd.f32 0.0, %v3462
  %3464 = vmatprep.mubr.f32.mxu0 0.0
  %3465 = vmatmul.mubr.f32.gmra.mrb[0].mxu0 %v3359
  %v3466 = vpop.f32.mrb[0].mxu0
  %v3467 = vadd.f32 0.0, %v3466
  %v3468 = vpop.f32.mrb[0].mxu0
  %v3469 = vadd.f32 0.0, %v3468
  %3470 = vmatprep.mubr.f32.mxu0 0.0
  %3471 = vmatmul.mubr.f32.gmra.mrb[0].mxu0 %v3362
  %v3472 = vpop.f32.mrb[0].mxu0
  %v3473 = vadd.f32 0.0, %v3472
  %v3474 = vpop.f32.mrb[0].mxu0
  %v3475 = vadd.f32 0.0, %v3474
  %3476 = vdwg.mxu0
  %3477 = vmatprep.subr.mxu0 %v3302
  %3478 = vmatpush1.msra.mxu0 %v3301
  %3479 = vmatprep.subr.mxu0 %v3306
  %3480 = vmatpush1.msra.mxu0 %v3305
  %3481 = vmatprep.subr.mxu0 %v3310
  %3482 = vmatpush1.msra.mxu0 %v3309
  %3483 = vmatprep.subr.mxu0 %v3314
  %3484 = vmatpush1.msra.mxu0 %v3313
  %3485 = vmatprep.subr.mxu0 %v3318
  %3486 = vmatpush1.msra.mxu0 %v3317
  %3487 = vmatprep.subr.mxu0 %v3322
  %3488 = vmatpush1.msra.mxu0 %v3321
  %3489 = vmatprep.subr.mxu0 %v3326
  %3490 = vmatpush1.msra.mxu0 %v3325
  %3491 = vmatprep.subr.mxu0 %v3330
  %3492 = vmatpush1.msra.mxu0 %v3329
  %3493 = vmatprep.subr.mxu0 0.0
  %3494 = vmatpush1.msra.mxu0 0.0
  %3495 = vmatprep.subr.mxu0 0.0
  %3496 = vmatpush1.msra.mxu0 0.0
  %3497 = vmatprep.subr.mxu0 0.0
  %3498 = vmatpush1.msra.mxu0 0.0
  %3499 = vmatprep.subr.mxu0 0.0
  %3500 = vmatpush1.msra.mxu0 0.0
  %3501 = vmatprep.subr.mxu0 0.0
  %3502 = vmatpush1.msra.mxu0 0.0
  %3503 = vmatprep.subr.mxu0 0.0
  %3504 = vmatpush1.msra.mxu0 0.0
  %3505 = vmatprep.subr.mxu0 0.0
  %3506 = vmatpush1.msra.mxu0 0.0
  %3507 = vmatprep.subr.mxu0 0.0
  %3508 = vmatpush1.msra.mxu0 0.0
  %3509 = vmatprep.subr.mxu0 0.0
  %3510 = vmatpush1.msra.mxu0 0.0
  %3511 = vmatprep.subr.mxu0 0.0
  %3512 = vmatpush1.msra.mxu0 0.0
  %3513 = vmatprep.subr.mxu0 0.0
  %3514 = vmatpush1.msra.mxu0 0.0
  %3515 = vmatprep.subr.mxu0 0.0
  %3516 = vmatpush1.msra.mxu0 0.0
  %3517 = vmatprep.subr.mxu0 0.0
  %3518 = vmatpush1.msra.mxu0 0.0
  %3519 = vmatprep.subr.mxu0 0.0
  %3520 = vmatpush1.msra.mxu0 0.0
  %3521 = vmatprep.subr.mxu0 0.0
  %3522 = vmatpush1.msra.mxu0 0.0
  %3523 = vmatprep.subr.mxu0 0.0
  %3524 = vmatpush1.msra.mxu0 0.0
  %3525 = vmatprep.subr.mxu0 0.0
  %3526 = vmatpush1.msra.mxu0 0.0
  %3527 = vmatprep.subr.mxu0 0.0
  %3528 = vmatpush1.msra.mxu0 0.0
  %3529 = vmatprep.subr.mxu0 0.0
  %3530 = vmatpush1.msra.mxu0 0.0
  %3531 = vmatprep.subr.mxu0 0.0
  %3532 = vmatpush1.msra.mxu0 0.0
  %3533 = vmatprep.subr.mxu0 0.0
  %3534 = vmatpush1.msra.mxu0 0.0
  %3535 = vmatprep.subr.mxu0 0.0
  %3536 = vmatpush1.msra.mxu0 0.0
  %3537 = vmatprep.subr.mxu0 0.0
  %3538 = vmatpush1.msra.mxu0 0.0
  %3539 = vmatprep.subr.mxu0 0.0
  %3540 = vmatpush1.msra.mxu0 0.0
  %3541 = vmatprep.mubr.f32.mxu0 0.0
  %3542 = vmatmul.mubr.f32.gmra.mrb[0].mxu0 %v3341
  %v3543 = vpop.f32.mrb[0].mxu0
  %v3544 = vadd.f32 0.0, %v3543
  %v3545 = vpop.f32.mrb[0].mxu0
  %v3546 = vadd.f32 0.0, %v3545
  %3547 = vmatprep.mubr.f32.mxu0 0.0
  %3548 = vmatmul.mubr.f32.gmra.mrb[0].mxu0 %v3344
  %v3549 = vpop.f32.mrb[0].mxu0
  %v3550 = vadd.f32 0.0, %v3549
  %v3551 = vpop.f32.mrb[0].mxu0
  %v3552 = vadd.f32 0.0, %v3551
  %3553 = vmatprep.mubr.f32.mxu0 0.0
  %3554 = vmatmul.mubr.f32.gmra.mrb[0].mxu0 %v3347
  %v3555 = vpop.f32.mrb[0].mxu0
  %v3556 = vadd.f32 0.0, %v3555
  %v3557 = vpop.f32.mrb[0].mxu0
  %v3558 = vadd.f32 0.0, %v3557
  %3559 = vmatprep.mubr.f32.mxu0 0.0
  %3560 = vmatmul.mubr.f32.gmra.mrb[0].mxu0 %v3350
  %v3561 = vpop.f32.mrb[0].mxu0
  %v3562 = vadd.f32 0.0, %v3561
  %v3563 = vpop.f32.mrb[0].mxu0
  %v3564 = vadd.f32 0.0, %v3563
  %3565 = vmatprep.mubr.f32.mxu0 0.0
  %3566 = vmatmul.mubr.f32.gmra.mrb[0].mxu0 %v3353
  %v3567 = vpop.f32.mrb[0].mxu0
  %v3568 = vadd.f32 0.0, %v3567
  %v3569 = vpop.f32.mrb[0].mxu0
  %v3570 = vadd.f32 0.0, %v3569
  %3571 = vmatprep.mubr.f32.mxu0 0.0
  %3572 = vmatmul.mubr.f32.gmra.mrb[0].mxu0 %v3356
  %v3573 = vpop.f32.mrb[0].mxu0
  %v3574 = vadd.f32 0.0, %v3573
  %v3575 = vpop.f32.mrb[0].mxu0
  %v3576 = vadd.f32 0.0, %v3575
  %3577 = vmatprep.mubr.f32.mxu0 0.0
  %3578 = vmatmul.mubr.f32.gmra.mrb[0].mxu0 %v3359
  %v3579 = vpop.f32.mrb[0].mxu0
  %v3580 = vadd.f32 0.0, %v3579
  %v3581 = vpop.f32.mrb[0].mxu0
  %v3582 = vadd.f32 0.0, %v3581
  %3583 = vmatprep.mubr.f32.mxu0 0.0
  %3584 = vmatmul.mubr.f32.gmra.mrb[0].mxu0 %v3362
  %v3585 = vpop.f32.mrb[0].mxu0
  %v3586 = vadd.f32 0.0, %v3585
  %v3587 = vpop.f32.mrb[0].mxu0
  %v3588 = vadd.f32 0.0, %v3587
  %3589 = vdwg.mxu0
  %v3590 = vadd.f32 %v3158, %v3431
  %v3591 = vadd.f32 %v3159, %v3433
  %v3592 = vadd.f32 %v3160, %v3544
  %v3593 = vadd.f32 %v3161, %v3546
  %v3594 = vadd.f32 %v3162, %v3437
  %v3595 = vadd.f32 %v3163, %v3439
  %v3596 = vadd.f32 %v3164, %v3550
  %v3597 = vadd.f32 %v3165, %v3552
  %v3598 = vadd.f32 %v3166, %v3443
  %v3599 = vadd.f32 %v3167, %v3445
  %v3600 = vadd.f32 %v3168, %v3556
  %v3601 = vadd.f32 %v3169, %v3558
  %v3602 = vadd.f32 %v3170, %v3449
  %v3603 = vadd.f32 %v3171, %v3451
  %v3604 = vadd.f32 %v3172, %v3562
  %v3605 = vadd.f32 %v3173, %v3564
  %v3606 = vadd.f32 %v3174, %v3455
  %v3607 = vadd.f32 %v3175, %v3457
  %v3608 = vadd.f32 %v3176, %v3568
  %v3609 = vadd.f32 %v3177, %v3570
  %v3610 = vadd.f32 %v3178, %v3461
  %v3611 = vadd.f32 %v3179, %v3463
  %v3612 = vadd.f32 %v3180, %v3574
  %v3613 = vadd.f32 %v3181, %v3576
  %v3614 = vadd.f32 %v3182, %v3467
  %v3615 = vadd.f32 %v3183, %v3469
  %v3616 = vadd.f32 %v3184, %v3580
  %v3617 = vadd.f32 %v3185, %v3582
  %v3618 = vadd.f32 %v3186, %v3473
  %v3619 = vadd.f32 %v3187, %v3475
  %v3620 = vadd.f32 %v3188, %v3586
  %v3621 = vadd.f32 %v3189, %v3588
  %3622 = vrot.lane.b32.xlu0 %v750, 112
  %v3623 = vpop.permute.xlu0 %3622
  %3624 = vrot.lane.b32.xlu0 %v754, 112
  %v3625 = vpop.permute.xlu0 %3624
  %3626 = vrot.lane.b32.xlu0 %v758, 112
  %v3627 = vpop.permute.xlu0 %3626
  %3628 = vrot.lane.b32.xlu0 %v762, 112
  %v3629 = vpop.permute.xlu0 %3628
  %3630 = vrot.lane.b32.xlu0 %v766, 112
  %v3631 = vpop.permute.xlu0 %3630
  %3632 = vrot.lane.b32.xlu0 %v770, 112
  %v3633 = vpop.permute.xlu0 %3632
  %3634 = vrot.lane.b32.xlu0 %v774, 112
  %v3635 = vpop.permute.xlu0 %3634
  %3636 = vrot.lane.b32.xlu0 %v778, 112
  %v3637 = vpop.permute.xlu0 %3636
  %3638 = vrot.lane.b32.xlu0 %v751, 112
  %v3639 = vpop.permute.xlu0 %3638
  %3640 = vrot.lane.b32.xlu0 %v755, 112
  %v3641 = vpop.permute.xlu0 %3640
  %3642 = vrot.lane.b32.xlu0 %v759, 112
  %v3643 = vpop.permute.xlu0 %3642
  %3644 = vrot.lane.b32.xlu0 %v763, 112
  %v3645 = vpop.permute.xlu0 %3644
  %3646 = vrot.lane.b32.xlu0 %v767, 112
  %v3647 = vpop.permute.xlu0 %3646
  %3648 = vrot.lane.b32.xlu0 %v771, 112
  %v3649 = vpop.permute.xlu0 %3648
  %3650 = vrot.lane.b32.xlu0 %v775, 112
  %v3651 = vpop.permute.xlu0 %3650
  %3652 = vrot.lane.b32.xlu0 %v779, 112
  %v3653 = vpop.permute.xlu0 %3652
  %3654 = vrot.lane.b32.xlu0 %v752, 112
  %v3655 = vpop.permute.xlu0 %3654
  %3656 = vrot.lane.b32.xlu0 %v756, 112
  %v3657 = vpop.permute.xlu0 %3656
  %3658 = vrot.lane.b32.xlu0 %v760, 112
  %v3659 = vpop.permute.xlu0 %3658
  %3660 = vrot.lane.b32.xlu0 %v764, 112
  %v3661 = vpop.permute.xlu0 %3660
  %3662 = vrot.lane.b32.xlu0 %v768, 112
  %v3663 = vpop.permute.xlu0 %3662
  %3664 = vrot.lane.b32.xlu0 %v772, 112
  %v3665 = vpop.permute.xlu0 %3664
  %3666 = vrot.lane.b32.xlu0 %v776, 112
  %v3667 = vpop.permute.xlu0 %3666
  %3668 = vrot.lane.b32.xlu0 %v780, 112
  %v3669 = vpop.permute.xlu0 %3668
  %3670 = vrot.lane.b32.xlu0 %v753, 112
  %v3671 = vpop.permute.xlu0 %3670
  %3672 = vrot.lane.b32.xlu0 %v757, 112
  %v3673 = vpop.permute.xlu0 %3672
  %3674 = vrot.lane.b32.xlu0 %v761, 112
  %v3675 = vpop.permute.xlu0 %3674
  %3676 = vrot.lane.b32.xlu0 %v765, 112
  %v3677 = vpop.permute.xlu0 %3676
  %3678 = vrot.lane.b32.xlu0 %v769, 112
  %v3679 = vpop.permute.xlu0 %3678
  %3680 = vrot.lane.b32.xlu0 %v773, 112
  %v3681 = vpop.permute.xlu0 %3680
  %3682 = vrot.lane.b32.xlu0 %v777, 112
  %v3683 = vpop.permute.xlu0 %3682
  %3684 = vrot.lane.b32.xlu0 %v781, 112
  %v3685 = vpop.permute.xlu0 %3684
  %vm3686 = vcmp.lt.s32.totalorder %v783, 112
  %v3687 = vsel %vm3686, %v3655, %v3671
  %v3688 = vsel %vm3686, %v3657, %v3673
  %v3689 = vsel %vm3686, %v3659, %v3675
  %v3690 = vsel %vm3686, %v3661, %v3677
  %v3691 = vsel %vm3686, %v3663, %v3679
  %v3692 = vsel %vm3686, %v3665, %v3681
  %v3693 = vsel %vm3686, %v3667, %v3683
  %v3694 = vsel %vm3686, %v3669, %v3685
  %v3695 = vsel %vm3686, %v3639, %v3655
  %v3696 = vsel %vm3686, %v3641, %v3657
  %v3697 = vsel %vm3686, %v3643, %v3659
  %v3698 = vsel %vm3686, %v3645, %v3661
  %v3699 = vsel %vm3686, %v3647, %v3663
  %v3700 = vsel %vm3686, %v3649, %v3665
  %v3701 = vsel %vm3686, %v3651, %v3667
  %v3702 = vsel %vm3686, %v3653, %v3669
  %v3703 = vsel %vm3686, %v3623, %v3639
  %v3704 = vsel %vm3686, %v3625, %v3641
  %v3705 = vsel %vm3686, %v3627, %v3643
  %v3706 = vsel %vm3686, %v3629, %v3645
  %v3707 = vsel %vm3686, %v3631, %v3647
  %v3708 = vsel %vm3686, %v3633, %v3649
  %v3709 = vsel %vm3686, %v3635, %v3651
  %v3710 = vsel %vm3686, %v3637, %v3653
  %v3711 = vsel %vm3686, %v3671, %v3623
  %v3712 = vsel %vm3686, %v3673, %v3625
  %v3713 = vsel %vm3686, %v3675, %v3627
  %v3714 = vsel %vm3686, %v3677, %v3629
  %v3715 = vsel %vm3686, %v3679, %v3631
  %v3716 = vsel %vm3686, %v3681, %v3633
  %v3717 = vsel %vm3686, %v3683, %v3635
  %v3718 = vsel %vm3686, %v3685, %v3637
  %v3719 = vsel %vm803, 1, 0
  %v3720 = vsel %vm804, 1, 0
  %v3721 = vsel %vm805, 1, 0
  %v3722 = vsel %vm806, 1, 0
  %vm3723 = vcmp.eq.s32.totalorder %v3719, 1
  %vm3724 = vcmp.eq.s32.totalorder %v3720, 1
  %vm3725 = vcmp.eq.s32.totalorder %v3721, 1
  %vm3726 = vcmp.eq.s32.totalorder %v3722, 1
  %v3727 = vsel %vm3723, %v3703, 0.0
  %v3728 = vsel %vm3724, %v3695, 0.0
  %v3729 = vsel %vm3725, %v3687, 0.0
  %v3730 = vsel %vm3726, %v3711, 0.0
  %v3731 = vsel %vm3723, %v3704, 0.0
  %v3732 = vsel %vm3724, %v3696, 0.0
  %v3733 = vsel %vm3725, %v3688, 0.0
  %v3734 = vsel %vm3726, %v3712, 0.0
  %v3735 = vsel %vm3723, %v3705, 0.0
  %v3736 = vsel %vm3724, %v3697, 0.0
  %v3737 = vsel %vm3725, %v3689, 0.0
  %v3738 = vsel %vm3726, %v3713, 0.0
  %v3739 = vsel %vm3723, %v3706, 0.0
  %v3740 = vsel %vm3724, %v3698, 0.0
  %v3741 = vsel %vm3725, %v3690, 0.0
  %v3742 = vsel %vm3726, %v3714, 0.0
  %v3743 = vsel %vm3723, %v3707, 0.0
  %v3744 = vsel %vm3724, %v3699, 0.0
  %v3745 = vsel %vm3725, %v3691, 0.0
  %v3746 = vsel %vm3726, %v3715, 0.0
  %v3747 = vsel %vm3723, %v3708, 0.0
  %v3748 = vsel %vm3724, %v3700, 0.0
  %v3749 = vsel %vm3725, %v3692, 0.0
  %v3750 = vsel %vm3726, %v3716, 0.0
  %v3751 = vsel %vm3723, %v3709, 0.0
  %v3752 = vsel %vm3724, %v3701, 0.0
  %v3753 = vsel %vm3725, %v3693, 0.0
  %v3754 = vsel %vm3726, %v3717, 0.0
  %v3755 = vsel %vm3723, %v3710, 0.0
  %v3756 = vsel %vm3724, %v3702, 0.0
  %v3757 = vsel %vm3725, %v3694, 0.0
  %v3758 = vsel %vm3726, %v3718, 0.0
  %s3759 = scalar_lea.vmem %s4, 448
  %v3760 = vld [vmem:[%s3759] sm:$0xff]
  %v3761 = vld [vmem:[%s3759 + $0x8] sm:$0xff]
  %v3762 = vld [vmem:[%s3759 + $0x10] sm:$0xff]
  %v3763 = vld [vmem:[%s3759 + $0x18] sm:$0xff]
  %v3764 = vld [vmem:[%s3759 + $0x20] sm:$0xff]
  %v3765 = vld [vmem:[%s3759 + $0x28] sm:$0xff]
  %v3766 = vld [vmem:[%s3759 + $0x30] sm:$0xff]
  %v3767 = vld [vmem:[%s3759 + $0x38] sm:$0xff]
  %v3769 = vsel %vm973, %v3760, 0
  %v3772 = vsel %vm973, %v3761, 0
  %v3775 = vsel %vm973, %v3762, 0
  %v3778 = vsel %vm973, %v3763, 0
  %v3781 = vsel %vm973, %v3764, 0
  %v3784 = vsel %vm973, %v3765, 0
  %v3787 = vsel %vm973, %v3766, 0
  %v3790 = vsel %vm973, %v3767, 0
  %3792 = vmatprep.subr.mxu0 %v3728
  %3793 = vmatpush1.msra.mxu0 %v3727
  %3794 = vmatprep.subr.mxu0 %v3732
  %3795 = vmatpush1.msra.mxu0 %v3731
  %3796 = vmatprep.subr.mxu0 %v3736
  %3797 = vmatpush1.msra.mxu0 %v3735
  %3798 = vmatprep.subr.mxu0 %v3740
  %3799 = vmatpush1.msra.mxu0 %v3739
  %3800 = vmatprep.subr.mxu0 %v3744
  %3801 = vmatpush1.msra.mxu0 %v3743
  %3802 = vmatprep.subr.mxu0 %v3748
  %3803 = vmatpush1.msra.mxu0 %v3747
  %3804 = vmatprep.subr.mxu0 %v3752
  %3805 = vmatpush1.msra.mxu0 %v3751
  %3806 = vmatprep.subr.mxu0 %v3756
  %3807 = vmatpush1.msra.mxu0 %v3755
  %3808 = vmatprep.subr.mxu0 0.0
  %3809 = vmatpush1.msra.mxu0 0.0
  %3810 = vmatprep.subr.mxu0 0.0
  %3811 = vmatpush1.msra.mxu0 0.0
  %3812 = vmatprep.subr.mxu0 0.0
  %3813 = vmatpush1.msra.mxu0 0.0
  %3814 = vmatprep.subr.mxu0 0.0
  %3815 = vmatpush1.msra.mxu0 0.0
  %3816 = vmatprep.subr.mxu0 0.0
  %3817 = vmatpush1.msra.mxu0 0.0
  %3818 = vmatprep.subr.mxu0 0.0
  %3819 = vmatpush1.msra.mxu0 0.0
  %3820 = vmatprep.subr.mxu0 0.0
  %3821 = vmatpush1.msra.mxu0 0.0
  %3822 = vmatprep.subr.mxu0 0.0
  %3823 = vmatpush1.msra.mxu0 0.0
  %3824 = vmatprep.subr.mxu0 0.0
  %3825 = vmatpush1.msra.mxu0 0.0
  %3826 = vmatprep.subr.mxu0 0.0
  %3827 = vmatpush1.msra.mxu0 0.0
  %3828 = vmatprep.subr.mxu0 0.0
  %3829 = vmatpush1.msra.mxu0 0.0
  %3830 = vmatprep.subr.mxu0 0.0
  %3831 = vmatpush1.msra.mxu0 0.0
  %3832 = vmatprep.subr.mxu0 0.0
  %3833 = vmatpush1.msra.mxu0 0.0
  %3834 = vmatprep.subr.mxu0 0.0
  %3835 = vmatpush1.msra.mxu0 0.0
  %3836 = vmatprep.subr.mxu0 0.0
  %3837 = vmatpush1.msra.mxu0 0.0
  %3838 = vmatprep.subr.mxu0 0.0
  %3839 = vmatpush1.msra.mxu0 0.0
  %3840 = vmatprep.subr.mxu0 0.0
  %3841 = vmatpush1.msra.mxu0 0.0
  %3842 = vmatprep.subr.mxu0 0.0
  %3843 = vmatpush1.msra.mxu0 0.0
  %3844 = vmatprep.subr.mxu0 0.0
  %3845 = vmatpush1.msra.mxu0 0.0
  %3846 = vmatprep.subr.mxu0 0.0
  %3847 = vmatpush1.msra.mxu0 0.0
  %3848 = vmatprep.subr.mxu0 0.0
  %3849 = vmatpush1.msra.mxu0 0.0
  %3850 = vmatprep.subr.mxu0 0.0
  %3851 = vmatpush1.msra.mxu0 0.0
  %3852 = vmatprep.subr.mxu0 0.0
  %3853 = vmatpush1.msra.mxu0 0.0
  %3854 = vmatprep.subr.mxu0 0.0
  %3855 = vmatpush1.msra.mxu0 0.0
  %3856 = vmatprep.mubr.f32.mxu0 0.0
  %3857 = vmatmul.mubr.f32.gmra.mrb[0].mxu0 %v3769
  %v3858 = vpop.f32.mrb[0].mxu0
  %v3859 = vadd.f32 0.0, %v3858
  %v3860 = vpop.f32.mrb[0].mxu0
  %v3861 = vadd.f32 0.0, %v3860
  %3862 = vmatprep.mubr.f32.mxu0 0.0
  %3863 = vmatmul.mubr.f32.gmra.mrb[0].mxu0 %v3772
  %v3864 = vpop.f32.mrb[0].mxu0
  %v3865 = vadd.f32 0.0, %v3864
  %v3866 = vpop.f32.mrb[0].mxu0
  %v3867 = vadd.f32 0.0, %v3866
  %3868 = vmatprep.mubr.f32.mxu0 0.0
  %3869 = vmatmul.mubr.f32.gmra.mrb[0].mxu0 %v3775
  %v3870 = vpop.f32.mrb[0].mxu0
  %v3871 = vadd.f32 0.0, %v3870
  %v3872 = vpop.f32.mrb[0].mxu0
  %v3873 = vadd.f32 0.0, %v3872
  %3874 = vmatprep.mubr.f32.mxu0 0.0
  %3875 = vmatmul.mubr.f32.gmra.mrb[0].mxu0 %v3778
  %v3876 = vpop.f32.mrb[0].mxu0
  %v3877 = vadd.f32 0.0, %v3876
  %v3878 = vpop.f32.mrb[0].mxu0
  %v3879 = vadd.f32 0.0, %v3878
  %3880 = vmatprep.mubr.f32.mxu0 0.0
  %3881 = vmatmul.mubr.f32.gmra.mrb[0].mxu0 %v3781
  %v3882 = vpop.f32.mrb[0].mxu0
  %v3883 = vadd.f32 0.0, %v3882
  %v3884 = vpop.f32.mrb[0].mxu0
  %v3885 = vadd.f32 0.0, %v3884
  %3886 = vmatprep.mubr.f32.mxu0 0.0
  %3887 = vmatmul.mubr.f32.gmra.mrb[0].mxu0 %v3784
  %v3888 = vpop.f32.mrb[0].mxu0
  %v3889 = vadd.f32 0.0, %v3888
  %v3890 = vpop.f32.mrb[0].mxu0
  %v3891 = vadd.f32 0.0, %v3890
  %3892 = vmatprep.mubr.f32.mxu0 0.0
  %3893 = vmatmul.mubr.f32.gmra.mrb[0].mxu0 %v3787
  %v3894 = vpop.f32.mrb[0].mxu0
  %v3895 = vadd.f32 0.0, %v3894
  %v3896 = vpop.f32.mrb[0].mxu0
  %v3897 = vadd.f32 0.0, %v3896
  %3898 = vmatprep.mubr.f32.mxu0 0.0
  %3899 = vmatmul.mubr.f32.gmra.mrb[0].mxu0 %v3790
  %v3900 = vpop.f32.mrb[0].mxu0
  %v3901 = vadd.f32 0.0, %v3900
  %v3902 = vpop.f32.mrb[0].mxu0
  %v3903 = vadd.f32 0.0, %v3902
  %3904 = vdwg.mxu0
  %3905 = vmatprep.subr.mxu0 %v3730
  %3906 = vmatpush1.msra.mxu0 %v3729
  %3907 = vmatprep.subr.mxu0 %v3734
  %3908 = vmatpush1.msra.mxu0 %v3733
  %3909 = vmatprep.subr.mxu0 %v3738
  %3910 = vmatpush1.msra.mxu0 %v3737
  %3911 = vmatprep.subr.mxu0 %v3742
  %3912 = vmatpush1.msra.mxu0 %v3741
  %3913 = vmatprep.subr.mxu0 %v3746
  %3914 = vmatpush1.msra.mxu0 %v3745
  %3915 = vmatprep.subr.mxu0 %v3750
  %3916 = vmatpush1.msra.mxu0 %v3749
  %3917 = vmatprep.subr.mxu0 %v3754
  %3918 = vmatpush1.msra.mxu0 %v3753
  %3919 = vmatprep.subr.mxu0 %v3758
  %3920 = vmatpush1.msra.mxu0 %v3757
  %3921 = vmatprep.subr.mxu0 0.0
  %3922 = vmatpush1.msra.mxu0 0.0
  %3923 = vmatprep.subr.mxu0 0.0
  %3924 = vmatpush1.msra.mxu0 0.0
  %3925 = vmatprep.subr.mxu0 0.0
  %3926 = vmatpush1.msra.mxu0 0.0
  %3927 = vmatprep.subr.mxu0 0.0
  %3928 = vmatpush1.msra.mxu0 0.0
  %3929 = vmatprep.subr.mxu0 0.0
  %3930 = vmatpush1.msra.mxu0 0.0
  %3931 = vmatprep.subr.mxu0 0.0
  %3932 = vmatpush1.msra.mxu0 0.0
  %3933 = vmatprep.subr.mxu0 0.0
  %3934 = vmatpush1.msra.mxu0 0.0
  %3935 = vmatprep.subr.mxu0 0.0
  %3936 = vmatpush1.msra.mxu0 0.0
  %3937 = vmatprep.subr.mxu0 0.0
  %3938 = vmatpush1.msra.mxu0 0.0
  %3939 = vmatprep.subr.mxu0 0.0
  %3940 = vmatpush1.msra.mxu0 0.0
  %3941 = vmatprep.subr.mxu0 0.0
  %3942 = vmatpush1.msra.mxu0 0.0
  %3943 = vmatprep.subr.mxu0 0.0
  %3944 = vmatpush1.msra.mxu0 0.0
  %3945 = vmatprep.subr.mxu0 0.0
  %3946 = vmatpush1.msra.mxu0 0.0
  %3947 = vmatprep.subr.mxu0 0.0
  %3948 = vmatpush1.msra.mxu0 0.0
  %3949 = vmatprep.subr.mxu0 0.0
  %3950 = vmatpush1.msra.mxu0 0.0
  %3951 = vmatprep.subr.mxu0 0.0
  %3952 = vmatpush1.msra.mxu0 0.0
  %3953 = vmatprep.subr.mxu0 0.0
  %3954 = vmatpush1.msra.mxu0 0.0
  %3955 = vmatprep.subr.mxu0 0.0
  %3956 = vmatpush1.msra.mxu0 0.0
  %3957 = vmatprep.subr.mxu0 0.0
  %3958 = vmatpush1.msra.mxu0 0.0
  %3959 = vmatprep.subr.mxu0 0.0
  %3960 = vmatpush1.msra.mxu0 0.0
  %3961 = vmatprep.subr.mxu0 0.0
  %3962 = vmatpush1.msra.mxu0 0.0
  %3963 = vmatprep.subr.mxu0 0.0
  %3964 = vmatpush1.msra.mxu0 0.0
  %3965 = vmatprep.subr.mxu0 0.0
  %3966 = vmatpush1.msra.mxu0 0.0
  %3967 = vmatprep.subr.mxu0 0.0
  %3968 = vmatpush1.msra.mxu0 0.0
  %3969 = vmatprep.mubr.f32.mxu0 0.0
  %3970 = vmatmul.mubr.f32.gmra.mrb[0].mxu0 %v3769
  %v3971 = vpop.f32.mrb[0].mxu0
  %v3972 = vadd.f32 0.0, %v3971
  %v3973 = vpop.f32.mrb[0].mxu0
  %v3974 = vadd.f32 0.0, %v3973
  %3975 = vmatprep.mubr.f32.mxu0 0.0
  %3976 = vmatmul.mubr.f32.gmra.mrb[0].mxu0 %v3772
  %v3977 = vpop.f32.mrb[0].mxu0
  %v3978 = vadd.f32 0.0, %v3977
  %v3979 = vpop.f32.mrb[0].mxu0
  %v3980 = vadd.f32 0.0, %v3979
  %3981 = vmatprep.mubr.f32.mxu0 0.0
  %3982 = vmatmul.mubr.f32.gmra.mrb[0].mxu0 %v3775
  %v3983 = vpop.f32.mrb[0].mxu0
  %v3984 = vadd.f32 0.0, %v3983
  %v3985 = vpop.f32.mrb[0].mxu0
  %v3986 = vadd.f32 0.0, %v3985
  %3987 = vmatprep.mubr.f32.mxu0 0.0
  %3988 = vmatmul.mubr.f32.gmra.mrb[0].mxu0 %v3778
  %v3989 = vpop.f32.mrb[0].mxu0
  %v3990 = vadd.f32 0.0, %v3989
  %v3991 = vpop.f32.mrb[0].mxu0
  %v3992 = vadd.f32 0.0, %v3991
  %3993 = vmatprep.mubr.f32.mxu0 0.0
  %3994 = vmatmul.mubr.f32.gmra.mrb[0].mxu0 %v3781
  %v3995 = vpop.f32.mrb[0].mxu0
  %v3996 = vadd.f32 0.0, %v3995
  %v3997 = vpop.f32.mrb[0].mxu0
  %v3998 = vadd.f32 0.0, %v3997
  %3999 = vmatprep.mubr.f32.mxu0 0.0
  %4000 = vmatmul.mubr.f32.gmra.mrb[0].mxu0 %v3784
  %v4001 = vpop.f32.mrb[0].mxu0
  %v4002 = vadd.f32 0.0, %v4001
  %v4003 = vpop.f32.mrb[0].mxu0
  %v4004 = vadd.f32 0.0, %v4003
  %4005 = vmatprep.mubr.f32.mxu0 0.0
  %4006 = vmatmul.mubr.f32.gmra.mrb[0].mxu0 %v3787
  %v4007 = vpop.f32.mrb[0].mxu0
  %v4008 = vadd.f32 0.0, %v4007
  %v4009 = vpop.f32.mrb[0].mxu0
  %v4010 = vadd.f32 0.0, %v4009
  %4011 = vmatprep.mubr.f32.mxu0 0.0
  %4012 = vmatmul.mubr.f32.gmra.mrb[0].mxu0 %v3790
  %v4013 = vpop.f32.mrb[0].mxu0
  %v4014 = vadd.f32 0.0, %v4013
  %v4015 = vpop.f32.mrb[0].mxu0
  %v4016 = vadd.f32 0.0, %v4015
  %4017 = vdwg.mxu0
  %v4018 = vadd.f32 %v3590, %v3859
  %v4019 = vadd.f32 %v3591, %v3861
  %v4020 = vadd.f32 %v3592, %v3972
  %v4021 = vadd.f32 %v3593, %v3974
  %v4022 = vadd.f32 %v3594, %v3865
  %v4023 = vadd.f32 %v3595, %v3867
  %v4024 = vadd.f32 %v3596, %v3978
  %v4025 = vadd.f32 %v3597, %v3980
  %v4026 = vadd.f32 %v3598, %v3871
  %v4027 = vadd.f32 %v3599, %v3873
  %v4028 = vadd.f32 %v3600, %v3984
  %v4029 = vadd.f32 %v3601, %v3986
  %v4030 = vadd.f32 %v3602, %v3877
  %v4031 = vadd.f32 %v3603, %v3879
  %v4032 = vadd.f32 %v3604, %v3990
  %v4033 = vadd.f32 %v3605, %v3992
  %v4034 = vadd.f32 %v3606, %v3883
  %v4035 = vadd.f32 %v3607, %v3885
  %v4036 = vadd.f32 %v3608, %v3996
  %v4037 = vadd.f32 %v3609, %v3998
  %v4038 = vadd.f32 %v3610, %v3889
  %v4039 = vadd.f32 %v3611, %v3891
  %v4040 = vadd.f32 %v3612, %v4002
  %v4041 = vadd.f32 %v3613, %v4004
  %v4042 = vadd.f32 %v3614, %v3895
  %v4043 = vadd.f32 %v3615, %v3897
  %v4044 = vadd.f32 %v3616, %v4008
  %v4045 = vadd.f32 %v3617, %v4010
  %v4046 = vadd.f32 %v3618, %v3901
  %v4047 = vadd.f32 %v3619, %v3903
  %v4048 = vadd.f32 %v3620, %v4014
  %v4049 = vadd.f32 %v3621, %v4016
  %vm4050 = vmand %vm803, %vm811
  %vm4051 = vmand %vm804, %vm812
  %vm4052 = vmand %vm805, %vm813
  %vm4053 = vmand %vm806, %vm814
  %4054 = vrot.lane.b32.xlu0 %v750, 111
  %v4055 = vpop.permute.xlu0 %4054
  %4056 = vrot.lane.b32.xlu0 %v754, 111
  %v4057 = vpop.permute.xlu0 %4056
  %4058 = vrot.lane.b32.xlu0 %v758, 111
  %v4059 = vpop.permute.xlu0 %4058
  %4060 = vrot.lane.b32.xlu0 %v762, 111
  %v4061 = vpop.permute.xlu0 %4060
  %4062 = vrot.lane.b32.xlu0 %v766, 111
  %v4063 = vpop.permute.xlu0 %4062
  %4064 = vrot.lane.b32.xlu0 %v770, 111
  %v4065 = vpop.permute.xlu0 %4064
  %4066 = vrot.lane.b32.xlu0 %v774, 111
  %v4067 = vpop.permute.xlu0 %4066
  %4068 = vrot.lane.b32.xlu0 %v778, 111
  %v4069 = vpop.permute.xlu0 %4068
  %4070 = vrot.lane.b32.xlu0 %v751, 111
  %v4071 = vpop.permute.xlu0 %4070
  %4072 = vrot.lane.b32.xlu0 %v755, 111
  %v4073 = vpop.permute.xlu0 %4072
  %4074 = vrot.lane.b32.xlu0 %v759, 111
  %v4075 = vpop.permute.xlu0 %4074
  %4076 = vrot.lane.b32.xlu0 %v763, 111
  %v4077 = vpop.permute.xlu0 %4076
  %4078 = vrot.lane.b32.xlu0 %v767, 111
  %v4079 = vpop.permute.xlu0 %4078
  %4080 = vrot.lane.b32.xlu0 %v771, 111
  %v4081 = vpop.permute.xlu0 %4080
  %4082 = vrot.lane.b32.xlu0 %v775, 111
  %v4083 = vpop.permute.xlu0 %4082
  %4084 = vrot.lane.b32.xlu0 %v779, 111
  %v4085 = vpop.permute.xlu0 %4084
  %4086 = vrot.lane.b32.xlu0 %v752, 111
  %v4087 = vpop.permute.xlu0 %4086
  %4088 = vrot.lane.b32.xlu0 %v756, 111
  %v4089 = vpop.permute.xlu0 %4088
  %4090 = vrot.lane.b32.xlu0 %v760, 111
  %v4091 = vpop.permute.xlu0 %4090
  %4092 = vrot.lane.b32.xlu0 %v764, 111
  %v4093 = vpop.permute.xlu0 %4092
  %4094 = vrot.lane.b32.xlu0 %v768, 111
  %v4095 = vpop.permute.xlu0 %4094
  %4096 = vrot.lane.b32.xlu0 %v772, 111
  %v4097 = vpop.permute.xlu0 %4096
  %4098 = vrot.lane.b32.xlu0 %v776, 111
  %v4099 = vpop.permute.xlu0 %4098
  %4100 = vrot.lane.b32.xlu0 %v780, 111
  %v4101 = vpop.permute.xlu0 %4100
  %4102 = vrot.lane.b32.xlu0 %v753, 111
  %v4103 = vpop.permute.xlu0 %4102
  %4104 = vrot.lane.b32.xlu0 %v757, 111
  %v4105 = vpop.permute.xlu0 %4104
  %4106 = vrot.lane.b32.xlu0 %v761, 111
  %v4107 = vpop.permute.xlu0 %4106
  %4108 = vrot.lane.b32.xlu0 %v765, 111
  %v4109 = vpop.permute.xlu0 %4108
  %4110 = vrot.lane.b32.xlu0 %v769, 111
  %v4111 = vpop.permute.xlu0 %4110
  %4112 = vrot.lane.b32.xlu0 %v773, 111
  %v4113 = vpop.permute.xlu0 %4112
  %4114 = vrot.lane.b32.xlu0 %v777, 111
  %v4115 = vpop.permute.xlu0 %4114
  %4116 = vrot.lane.b32.xlu0 %v781, 111
  %v4117 = vpop.permute.xlu0 %4116
  %vm4118 = vcmp.lt.s32.totalorder %v783, 111
  %v4119 = vsel %vm4118, %v4087, %v4103
  %v4120 = vsel %vm4118, %v4089, %v4105
  %v4121 = vsel %vm4118, %v4091, %v4107
  %v4122 = vsel %vm4118, %v4093, %v4109
  %v4123 = vsel %vm4118, %v4095, %v4111
  %v4124 = vsel %vm4118, %v4097, %v4113
  %v4125 = vsel %vm4118, %v4099, %v4115
  %v4126 = vsel %vm4118, %v4101, %v4117
  %v4127 = vsel %vm4118, %v4071, %v4087
  %v4128 = vsel %vm4118, %v4073, %v4089
  %v4129 = vsel %vm4118, %v4075, %v4091
  %v4130 = vsel %vm4118, %v4077, %v4093
  %v4131 = vsel %vm4118, %v4079, %v4095
  %v4132 = vsel %vm4118, %v4081, %v4097
  %v4133 = vsel %vm4118, %v4083, %v4099
  %v4134 = vsel %vm4118, %v4085, %v4101
  %v4135 = vsel %vm4118, %v4055, %v4071
  %v4136 = vsel %vm4118, %v4057, %v4073
  %v4137 = vsel %vm4118, %v4059, %v4075
  %v4138 = vsel %vm4118, %v4061, %v4077
  %v4139 = vsel %vm4118, %v4063, %v4079
  %v4140 = vsel %vm4118, %v4065, %v4081
  %v4141 = vsel %vm4118, %v4067, %v4083
  %v4142 = vsel %vm4118, %v4069, %v4085
  %v4143 = vsel %vm4118, %v4103, %v4055
  %v4144 = vsel %vm4118, %v4105, %v4057
  %v4145 = vsel %vm4118, %v4107, %v4059
  %v4146 = vsel %vm4118, %v4109, %v4061
  %v4147 = vsel %vm4118, %v4111, %v4063
  %v4148 = vsel %vm4118, %v4113, %v4065
  %v4149 = vsel %vm4118, %v4115, %v4067
  %v4150 = vsel %vm4118, %v4117, %v4069
  %v4151 = vsel %vm4050, 1, 0
  %v4152 = vsel %vm4051, 1, 0
  %v4153 = vsel %vm4052, 1, 0
  %v4154 = vsel %vm4053, 1, 0
  %vm4155 = vcmp.eq.s32.totalorder %v4151, 1
  %vm4156 = vcmp.eq.s32.totalorder %v4152, 1
  %vm4157 = vcmp.eq.s32.totalorder %v4153, 1
  %vm4158 = vcmp.eq.s32.totalorder %v4154, 1
  %v4159 = vsel %vm4155, %v4135, 0.0
  %v4160 = vsel %vm4156, %v4127, 0.0
  %v4161 = vsel %vm4157, %v4119, 0.0
  %v4162 = vsel %vm4158, %v4143, 0.0
  %v4163 = vsel %vm4155, %v4136, 0.0
  %v4164 = vsel %vm4156, %v4128, 0.0
  %v4165 = vsel %vm4157, %v4120, 0.0
  %v4166 = vsel %vm4158, %v4144, 0.0
  %v4167 = vsel %vm4155, %v4137, 0.0
  %v4168 = vsel %vm4156, %v4129, 0.0
  %v4169 = vsel %vm4157, %v4121, 0.0
  %v4170 = vsel %vm4158, %v4145, 0.0
  %v4171 = vsel %vm4155, %v4138, 0.0
  %v4172 = vsel %vm4156, %v4130, 0.0
  %v4173 = vsel %vm4157, %v4122, 0.0
  %v4174 = vsel %vm4158, %v4146, 0.0
  %v4175 = vsel %vm4155, %v4139, 0.0
  %v4176 = vsel %vm4156, %v4131, 0.0
  %v4177 = vsel %vm4157, %v4123, 0.0
  %v4178 = vsel %vm4158, %v4147, 0.0
  %v4179 = vsel %vm4155, %v4140, 0.0
  %v4180 = vsel %vm4156, %v4132, 0.0
  %v4181 = vsel %vm4157, %v4124, 0.0
  %v4182 = vsel %vm4158, %v4148, 0.0
  %v4183 = vsel %vm4155, %v4141, 0.0
  %v4184 = vsel %vm4156, %v4133, 0.0
  %v4185 = vsel %vm4157, %v4125, 0.0
  %v4186 = vsel %vm4158, %v4149, 0.0
  %v4187 = vsel %vm4155, %v4142, 0.0
  %v4188 = vsel %vm4156, %v4134, 0.0
  %v4189 = vsel %vm4157, %v4126, 0.0
  %v4190 = vsel %vm4158, %v4150, 0.0
  %s4191 = scalar_lea.vmem %s4, 512
  %v4192 = vld [vmem:[%s4191] sm:$0xff]
  %v4193 = vld [vmem:[%s4191 + $0x8] sm:$0xff]
  %v4194 = vld [vmem:[%s4191 + $0x10] sm:$0xff]
  %v4195 = vld [vmem:[%s4191 + $0x18] sm:$0xff]
  %v4196 = vld [vmem:[%s4191 + $0x20] sm:$0xff]
  %v4197 = vld [vmem:[%s4191 + $0x28] sm:$0xff]
  %v4198 = vld [vmem:[%s4191 + $0x30] sm:$0xff]
  %v4199 = vld [vmem:[%s4191 + $0x38] sm:$0xff]
  %v4201 = vsel %vm973, %v4192, 0
  %v4204 = vsel %vm973, %v4193, 0
  %v4207 = vsel %vm973, %v4194, 0
  %v4210 = vsel %vm973, %v4195, 0
  %v4213 = vsel %vm973, %v4196, 0
  %v4216 = vsel %vm973, %v4197, 0
  %v4219 = vsel %vm973, %v4198, 0
  %v4222 = vsel %vm973, %v4199, 0
  %4224 = vmatprep.subr.mxu0 %v4160
  %4225 = vmatpush1.msra.mxu0 %v4159
  %4226 = vmatprep.subr.mxu0 %v4164
  %4227 = vmatpush1.msra.mxu0 %v4163
  %4228 = vmatprep.subr.mxu0 %v4168
  %4229 = vmatpush1.msra.mxu0 %v4167
  %4230 = vmatprep.subr.mxu0 %v4172
  %4231 = vmatpush1.msra.mxu0 %v4171
  %4232 = vmatprep.subr.mxu0 %v4176
  %4233 = vmatpush1.msra.mxu0 %v4175
  %4234 = vmatprep.subr.mxu0 %v4180
  %4235 = vmatpush1.msra.mxu0 %v4179
  %4236 = vmatprep.subr.mxu0 %v4184
  %4237 = vmatpush1.msra.mxu0 %v4183
  %4238 = vmatprep.subr.mxu0 %v4188
  %4239 = vmatpush1.msra.mxu0 %v4187
  %4240 = vmatprep.subr.mxu0 0.0
  %4241 = vmatpush1.msra.mxu0 0.0
  %4242 = vmatprep.subr.mxu0 0.0
  %4243 = vmatpush1.msra.mxu0 0.0
  %4244 = vmatprep.subr.mxu0 0.0
  %4245 = vmatpush1.msra.mxu0 0.0
  %4246 = vmatprep.subr.mxu0 0.0
  %4247 = vmatpush1.msra.mxu0 0.0
  %4248 = vmatprep.subr.mxu0 0.0
  %4249 = vmatpush1.msra.mxu0 0.0
  %4250 = vmatprep.subr.mxu0 0.0
  %4251 = vmatpush1.msra.mxu0 0.0
  %4252 = vmatprep.subr.mxu0 0.0
  %4253 = vmatpush1.msra.mxu0 0.0
  %4254 = vmatprep.subr.mxu0 0.0
  %4255 = vmatpush1.msra.mxu0 0.0
  %4256 = vmatprep.subr.mxu0 0.0
  %4257 = vmatpush1.msra.mxu0 0.0
  %4258 = vmatprep.subr.mxu0 0.0
  %4259 = vmatpush1.msra.mxu0 0.0
  %4260 = vmatprep.subr.mxu0 0.0
  %4261 = vmatpush1.msra.mxu0 0.0
  %4262 = vmatprep.subr.mxu0 0.0
  %4263 = vmatpush1.msra.mxu0 0.0
  %4264 = vmatprep.subr.mxu0 0.0
  %4265 = vmatpush1.msra.mxu0 0.0
  %4266 = vmatprep.subr.mxu0 0.0
  %4267 = vmatpush1.msra.mxu0 0.0
  %4268 = vmatprep.subr.mxu0 0.0
  %4269 = vmatpush1.msra.mxu0 0.0
  %4270 = vmatprep.subr.mxu0 0.0
  %4271 = vmatpush1.msra.mxu0 0.0
  %4272 = vmatprep.subr.mxu0 0.0
  %4273 = vmatpush1.msra.mxu0 0.0
  %4274 = vmatprep.subr.mxu0 0.0
  %4275 = vmatpush1.msra.mxu0 0.0
  %4276 = vmatprep.subr.mxu0 0.0
  %4277 = vmatpush1.msra.mxu0 0.0
  %4278 = vmatprep.subr.mxu0 0.0
  %4279 = vmatpush1.msra.mxu0 0.0
  %4280 = vmatprep.subr.mxu0 0.0
  %4281 = vmatpush1.msra.mxu0 0.0
  %4282 = vmatprep.subr.mxu0 0.0
  %4283 = vmatpush1.msra.mxu0 0.0
  %4284 = vmatprep.subr.mxu0 0.0
  %4285 = vmatpush1.msra.mxu0 0.0
  %4286 = vmatprep.subr.mxu0 0.0
  %4287 = vmatpush1.msra.mxu0 0.0
  %4288 = vmatprep.mubr.f32.mxu0 0.0
  %4289 = vmatmul.mubr.f32.gmra.mrb[0].mxu0 %v4201
  %v4290 = vpop.f32.mrb[0].mxu0
  %v4291 = vadd.f32 0.0, %v4290
  %v4292 = vpop.f32.mrb[0].mxu0
  %v4293 = vadd.f32 0.0, %v4292
  %4294 = vmatprep.mubr.f32.mxu0 0.0
  %4295 = vmatmul.mubr.f32.gmra.mrb[0].mxu0 %v4204
  %v4296 = vpop.f32.mrb[0].mxu0
  %v4297 = vadd.f32 0.0, %v4296
  %v4298 = vpop.f32.mrb[0].mxu0
  %v4299 = vadd.f32 0.0, %v4298
  %4300 = vmatprep.mubr.f32.mxu0 0.0
  %4301 = vmatmul.mubr.f32.gmra.mrb[0].mxu0 %v4207
  %v4302 = vpop.f32.mrb[0].mxu0
  %v4303 = vadd.f32 0.0, %v4302
  %v4304 = vpop.f32.mrb[0].mxu0
  %v4305 = vadd.f32 0.0, %v4304
  %4306 = vmatprep.mubr.f32.mxu0 0.0
  %4307 = vmatmul.mubr.f32.gmra.mrb[0].mxu0 %v4210
  %v4308 = vpop.f32.mrb[0].mxu0
  %v4309 = vadd.f32 0.0, %v4308
  %v4310 = vpop.f32.mrb[0].mxu0
  %v4311 = vadd.f32 0.0, %v4310
  %4312 = vmatprep.mubr.f32.mxu0 0.0
  %4313 = vmatmul.mubr.f32.gmra.mrb[0].mxu0 %v4213
  %v4314 = vpop.f32.mrb[0].mxu0
  %v4315 = vadd.f32 0.0, %v4314
  %v4316 = vpop.f32.mrb[0].mxu0
  %v4317 = vadd.f32 0.0, %v4316
  %4318 = vmatprep.mubr.f32.mxu0 0.0
  %4319 = vmatmul.mubr.f32.gmra.mrb[0].mxu0 %v4216
  %v4320 = vpop.f32.mrb[0].mxu0
  %v4321 = vadd.f32 0.0, %v4320
  %v4322 = vpop.f32.mrb[0].mxu0
  %v4323 = vadd.f32 0.0, %v4322
  %4324 = vmatprep.mubr.f32.mxu0 0.0
  %4325 = vmatmul.mubr.f32.gmra.mrb[0].mxu0 %v4219
  %v4326 = vpop.f32.mrb[0].mxu0
  %v4327 = vadd.f32 0.0, %v4326
  %v4328 = vpop.f32.mrb[0].mxu0
  %v4329 = vadd.f32 0.0, %v4328
  %4330 = vmatprep.mubr.f32.mxu0 0.0
  %4331 = vmatmul.mubr.f32.gmra.mrb[0].mxu0 %v4222
  %v4332 = vpop.f32.mrb[0].mxu0
  %v4333 = vadd.f32 0.0, %v4332
  %v4334 = vpop.f32.mrb[0].mxu0
  %v4335 = vadd.f32 0.0, %v4334
  %4336 = vdwg.mxu0
  %4337 = vmatprep.subr.mxu0 %v4162
  %4338 = vmatpush1.msra.mxu0 %v4161
  %4339 = vmatprep.subr.mxu0 %v4166
  %4340 = vmatpush1.msra.mxu0 %v4165
  %4341 = vmatprep.subr.mxu0 %v4170
  %4342 = vmatpush1.msra.mxu0 %v4169
  %4343 = vmatprep.subr.mxu0 %v4174
  %4344 = vmatpush1.msra.mxu0 %v4173
  %4345 = vmatprep.subr.mxu0 %v4178
  %4346 = vmatpush1.msra.mxu0 %v4177
  %4347 = vmatprep.subr.mxu0 %v4182
  %4348 = vmatpush1.msra.mxu0 %v4181
  %4349 = vmatprep.subr.mxu0 %v4186
  %4350 = vmatpush1.msra.mxu0 %v4185
  %4351 = vmatprep.subr.mxu0 %v4190
  %4352 = vmatpush1.msra.mxu0 %v4189
  %4353 = vmatprep.subr.mxu0 0.0
  %4354 = vmatpush1.msra.mxu0 0.0
  %4355 = vmatprep.subr.mxu0 0.0
  %4356 = vmatpush1.msra.mxu0 0.0
  %4357 = vmatprep.subr.mxu0 0.0
  %4358 = vmatpush1.msra.mxu0 0.0
  %4359 = vmatprep.subr.mxu0 0.0
  %4360 = vmatpush1.msra.mxu0 0.0
  %4361 = vmatprep.subr.mxu0 0.0
  %4362 = vmatpush1.msra.mxu0 0.0
  %4363 = vmatprep.subr.mxu0 0.0
  %4364 = vmatpush1.msra.mxu0 0.0
  %4365 = vmatprep.subr.mxu0 0.0
  %4366 = vmatpush1.msra.mxu0 0.0
  %4367 = vmatprep.subr.mxu0 0.0
  %4368 = vmatpush1.msra.mxu0 0.0
  %4369 = vmatprep.subr.mxu0 0.0
  %4370 = vmatpush1.msra.mxu0 0.0
  %4371 = vmatprep.subr.mxu0 0.0
  %4372 = vmatpush1.msra.mxu0 0.0
  %4373 = vmatprep.subr.mxu0 0.0
  %4374 = vmatpush1.msra.mxu0 0.0
  %4375 = vmatprep.subr.mxu0 0.0
  %4376 = vmatpush1.msra.mxu0 0.0
  %4377 = vmatprep.subr.mxu0 0.0
  %4378 = vmatpush1.msra.mxu0 0.0
  %4379 = vmatprep.subr.mxu0 0.0
  %4380 = vmatpush1.msra.mxu0 0.0
  %4381 = vmatprep.subr.mxu0 0.0
  %4382 = vmatpush1.msra.mxu0 0.0
  %4383 = vmatprep.subr.mxu0 0.0
  %4384 = vmatpush1.msra.mxu0 0.0
  %4385 = vmatprep.subr.mxu0 0.0
  %4386 = vmatpush1.msra.mxu0 0.0
  %4387 = vmatprep.subr.mxu0 0.0
  %4388 = vmatpush1.msra.mxu0 0.0
  %4389 = vmatprep.subr.mxu0 0.0
  %4390 = vmatpush1.msra.mxu0 0.0
  %4391 = vmatprep.subr.mxu0 0.0
  %4392 = vmatpush1.msra.mxu0 0.0
  %4393 = vmatprep.subr.mxu0 0.0
  %4394 = vmatpush1.msra.mxu0 0.0
  %4395 = vmatprep.subr.mxu0 0.0
  %4396 = vmatpush1.msra.mxu0 0.0
  %4397 = vmatprep.subr.mxu0 0.0
  %4398 = vmatpush1.msra.mxu0 0.0
  %4399 = vmatprep.subr.mxu0 0.0
  %4400 = vmatpush1.msra.mxu0 0.0
  %4401 = vmatprep.mubr.f32.mxu0 0.0
  %4402 = vmatmul.mubr.f32.gmra.mrb[0].mxu0 %v4201
  %v4403 = vpop.f32.mrb[0].mxu0
  %v4404 = vadd.f32 0.0, %v4403
  %v4405 = vpop.f32.mrb[0].mxu0
  %v4406 = vadd.f32 0.0, %v4405
  %4407 = vmatprep.mubr.f32.mxu0 0.0
  %4408 = vmatmul.mubr.f32.gmra.mrb[0].mxu0 %v4204
  %v4409 = vpop.f32.mrb[0].mxu0
  %v4410 = vadd.f32 0.0, %v4409
  %v4411 = vpop.f32.mrb[0].mxu0
  %v4412 = vadd.f32 0.0, %v4411
  %4413 = vmatprep.mubr.f32.mxu0 0.0
  %4414 = vmatmul.mubr.f32.gmra.mrb[0].mxu0 %v4207
  %v4415 = vpop.f32.mrb[0].mxu0
  %v4416 = vadd.f32 0.0, %v4415
  %v4417 = vpop.f32.mrb[0].mxu0
  %v4418 = vadd.f32 0.0, %v4417
  %4419 = vmatprep.mubr.f32.mxu0 0.0
  %4420 = vmatmul.mubr.f32.gmra.mrb[0].mxu0 %v4210
  %v4421 = vpop.f32.mrb[0].mxu0
  %v4422 = vadd.f32 0.0, %v4421
  %v4423 = vpop.f32.mrb[0].mxu0
  %v4424 = vadd.f32 0.0, %v4423
  %4425 = vmatprep.mubr.f32.mxu0 0.0
  %4426 = vmatmul.mubr.f32.gmra.mrb[0].mxu0 %v4213
  %v4427 = vpop.f32.mrb[0].mxu0
  %v4428 = vadd.f32 0.0, %v4427
  %v4429 = vpop.f32.mrb[0].mxu0
  %v4430 = vadd.f32 0.0, %v4429
  %4431 = vmatprep.mubr.f32.mxu0 0.0
  %4432 = vmatmul.mubr.f32.gmra.mrb[0].mxu0 %v4216
  %v4433 = vpop.f32.mrb[0].mxu0
  %v4434 = vadd.f32 0.0, %v4433
  %v4435 = vpop.f32.mrb[0].mxu0
  %v4436 = vadd.f32 0.0, %v4435
  %4437 = vmatprep.mubr.f32.mxu0 0.0
  %4438 = vmatmul.mubr.f32.gmra.mrb[0].mxu0 %v4219
  %v4439 = vpop.f32.mrb[0].mxu0
  %v4440 = vadd.f32 0.0, %v4439
  %v4441 = vpop.f32.mrb[0].mxu0
  %v4442 = vadd.f32 0.0, %v4441
  %4443 = vmatprep.mubr.f32.mxu0 0.0
  %4444 = vmatmul.mubr.f32.gmra.mrb[0].mxu0 %v4222
  %v4445 = vpop.f32.mrb[0].mxu0
  %v4446 = vadd.f32 0.0, %v4445
  %v4447 = vpop.f32.mrb[0].mxu0
  %v4448 = vadd.f32 0.0, %v4447
  %4449 = vdwg.mxu0
  %v4450 = vadd.f32 %v4018, %v4291
  %v4451 = vadd.f32 %v4019, %v4293
  %v4452 = vadd.f32 %v4020, %v4404
  %v4453 = vadd.f32 %v4021, %v4406
  %v4454 = vadd.f32 %v4022, %v4297
  %v4455 = vadd.f32 %v4023, %v4299
  %v4456 = vadd.f32 %v4024, %v4410
  %v4457 = vadd.f32 %v4025, %v4412
  %v4458 = vadd.f32 %v4026, %v4303
  %v4459 = vadd.f32 %v4027, %v4305
  %v4460 = vadd.f32 %v4028, %v4416
  %v4461 = vadd.f32 %v4029, %v4418
  %v4462 = vadd.f32 %v4030, %v4309
  %v4463 = vadd.f32 %v4031, %v4311
  %v4464 = vadd.f32 %v4032, %v4422
  %v4465 = vadd.f32 %v4033, %v4424
  %v4466 = vadd.f32 %v4034, %v4315
  %v4467 = vadd.f32 %v4035, %v4317
  %v4468 = vadd.f32 %v4036, %v4428
  %v4469 = vadd.f32 %v4037, %v4430
  %v4470 = vadd.f32 %v4038, %v4321
  %v4471 = vadd.f32 %v4039, %v4323
  %v4472 = vadd.f32 %v4040, %v4434
  %v4473 = vadd.f32 %v4041, %v4436
  %v4474 = vadd.f32 %v4042, %v4327
  %v4475 = vadd.f32 %v4043, %v4329
  %v4476 = vadd.f32 %v4044, %v4440
  %v4477 = vadd.f32 %v4045, %v4442
  %v4478 = vadd.f32 %v4046, %v4333
  %v4479 = vadd.f32 %v4047, %v4335
  %v4480 = vadd.f32 %v4048, %v4446
  %v4481 = vadd.f32 %v4049, %v4448
  %v4482 = vadd.f32 %v4450, %v4451
  %v4483 = vadd.f32 %v4482, %v4452
  %v4484 = vadd.f32 %v4483, %v4453
  %4485 = vadd.xlane.f32.xlu0 %v4484
  %v4486 = vpop.xlane.xlu0 %4485
  %v4487 = vadd.f32 %v4454, %v4455
  %v4488 = vadd.f32 %v4487, %v4456
  %v4489 = vadd.f32 %v4488, %v4457
  %4490 = vadd.xlane.f32.xlu0 %v4489
  %v4491 = vpop.xlane.xlu0 %4490
  %v4492 = vadd.f32 %v4458, %v4459
  %v4493 = vadd.f32 %v4492, %v4460
  %v4494 = vadd.f32 %v4493, %v4461
  %4495 = vadd.xlane.f32.xlu0 %v4494
  %v4496 = vpop.xlane.xlu0 %4495
  %v4497 = vadd.f32 %v4462, %v4463
  %v4498 = vadd.f32 %v4497, %v4464
  %v4499 = vadd.f32 %v4498, %v4465
  %4500 = vadd.xlane.f32.xlu0 %v4499
  %v4501 = vpop.xlane.xlu0 %4500
  %v4502 = vadd.f32 %v4466, %v4467
  %v4503 = vadd.f32 %v4502, %v4468
  %v4504 = vadd.f32 %v4503, %v4469
  %4505 = vadd.xlane.f32.xlu0 %v4504
  %v4506 = vpop.xlane.xlu0 %4505
  %v4507 = vadd.f32 %v4470, %v4471
  %v4508 = vadd.f32 %v4507, %v4472
  %v4509 = vadd.f32 %v4508, %v4473
  %4510 = vadd.xlane.f32.xlu0 %v4509
  %v4511 = vpop.xlane.xlu0 %4510
  %v4512 = vadd.f32 %v4474, %v4475
  %v4513 = vadd.f32 %v4512, %v4476
  %v4514 = vadd.f32 %v4513, %v4477
  %4515 = vadd.xlane.f32.xlu0 %v4514
  %v4516 = vpop.xlane.xlu0 %4515
  %v4517 = vadd.f32 %v4478, %v4479
  %v4518 = vadd.f32 %v4517, %v4480
  %v4519 = vadd.f32 %v4518, %v4481
  %4520 = vadd.xlane.f32.xlu0 %v4519
  %v4521 = vpop.xlane.xlu0 %4520
  %v4522 = vmul.f32 %v4486, 0.001953125
  %v4523 = vmul.f32 %v4491, 0.001953125
  %v4524 = vmul.f32 %v4496, 0.001953125
  %v4525 = vmul.f32 %v4501, 0.001953125
  %v4526 = vmul.f32 %v4506, 0.001953125
  %v4527 = vmul.f32 %v4511, 0.001953125
  %v4528 = vmul.f32 %v4516, 0.001953125
  %v4529 = vmul.f32 %v4521, 0.001953125
  %v4530 = vmul.f32 %v4450, %v4450
  %v4531 = vmul.f32 %v4451, %v4451
  %v4532 = vmul.f32 %v4452, %v4452
  %v4533 = vmul.f32 %v4453, %v4453
  %v4534 = vmul.f32 %v4454, %v4454
  %v4535 = vmul.f32 %v4455, %v4455
  %v4536 = vmul.f32 %v4456, %v4456
  %v4537 = vmul.f32 %v4457, %v4457
  %v4538 = vmul.f32 %v4458, %v4458
  %v4539 = vmul.f32 %v4459, %v4459
  %v4540 = vmul.f32 %v4460, %v4460
  %v4541 = vmul.f32 %v4461, %v4461
  %v4542 = vmul.f32 %v4462, %v4462
  %v4543 = vmul.f32 %v4463, %v4463
  %v4544 = vmul.f32 %v4464, %v4464
  %v4545 = vmul.f32 %v4465, %v4465
  %v4546 = vmul.f32 %v4466, %v4466
  %v4547 = vmul.f32 %v4467, %v4467
  %v4548 = vmul.f32 %v4468, %v4468
  %v4549 = vmul.f32 %v4469, %v4469
  %v4550 = vmul.f32 %v4470, %v4470
  %v4551 = vmul.f32 %v4471, %v4471
  %v4552 = vmul.f32 %v4472, %v4472
  %v4553 = vmul.f32 %v4473, %v4473
  %v4554 = vmul.f32 %v4474, %v4474
  %v4555 = vmul.f32 %v4475, %v4475
  %v4556 = vmul.f32 %v4476, %v4476
  %v4557 = vmul.f32 %v4477, %v4477
  %v4558 = vmul.f32 %v4478, %v4478
  %v4559 = vmul.f32 %v4479, %v4479
  %v4560 = vmul.f32 %v4480, %v4480
  %v4561 = vmul.f32 %v4481, %v4481
  %v4562 = vadd.f32 %v4530, %v4531
  %v4563 = vadd.f32 %v4562, %v4532
  %v4564 = vadd.f32 %v4563, %v4533
  %4565 = vadd.xlane.f32.xlu0 %v4564
  %v4566 = vpop.xlane.xlu0 %4565
  %v4567 = vadd.f32 %v4534, %v4535
  %v4568 = vadd.f32 %v4567, %v4536
  %v4569 = vadd.f32 %v4568, %v4537
  %4570 = vadd.xlane.f32.xlu0 %v4569
  %v4571 = vpop.xlane.xlu0 %4570
  %v4572 = vadd.f32 %v4538, %v4539
  %v4573 = vadd.f32 %v4572, %v4540
  %v4574 = vadd.f32 %v4573, %v4541
  %4575 = vadd.xlane.f32.xlu0 %v4574
  %v4576 = vpop.xlane.xlu0 %4575
  %v4577 = vadd.f32 %v4542, %v4543
  %v4578 = vadd.f32 %v4577, %v4544
  %v4579 = vadd.f32 %v4578, %v4545
  %4580 = vadd.xlane.f32.xlu0 %v4579
  %v4581 = vpop.xlane.xlu0 %4580
  %v4582 = vadd.f32 %v4546, %v4547
  %v4583 = vadd.f32 %v4582, %v4548
  %v4584 = vadd.f32 %v4583, %v4549
  %4585 = vadd.xlane.f32.xlu0 %v4584
  %v4586 = vpop.xlane.xlu0 %4585
  %v4587 = vadd.f32 %v4550, %v4551
  %v4588 = vadd.f32 %v4587, %v4552
  %v4589 = vadd.f32 %v4588, %v4553
  %4590 = vadd.xlane.f32.xlu0 %v4589
  %v4591 = vpop.xlane.xlu0 %4590
  %v4592 = vadd.f32 %v4554, %v4555
  %v4593 = vadd.f32 %v4592, %v4556
  %v4594 = vadd.f32 %v4593, %v4557
  %4595 = vadd.xlane.f32.xlu0 %v4594
  %v4596 = vpop.xlane.xlu0 %4595
  %v4597 = vadd.f32 %v4558, %v4559
  %v4598 = vadd.f32 %v4597, %v4560
  %v4599 = vadd.f32 %v4598, %v4561
  %4600 = vadd.xlane.f32.xlu0 %v4599
  %v4601 = vpop.xlane.xlu0 %4600
  %v4602 = vmul.f32 %v4566, 0.001953125
  %v4603 = vmul.f32 %v4571, 0.001953125
  %v4604 = vmul.f32 %v4576, 0.001953125
  %v4605 = vmul.f32 %v4581, 0.001953125
  %v4606 = vmul.f32 %v4586, 0.001953125
  %v4607 = vmul.f32 %v4591, 0.001953125
  %v4608 = vmul.f32 %v4596, 0.001953125
  %v4609 = vmul.f32 %v4601, 0.001953125
  %v4610 = vmul.f32 %v4522, %v4522
  %v4611 = vmul.f32 %v4523, %v4523
  %v4612 = vmul.f32 %v4524, %v4524
  %v4613 = vmul.f32 %v4525, %v4525
  %v4614 = vmul.f32 %v4526, %v4526
  %v4615 = vmul.f32 %v4527, %v4527
  %v4616 = vmul.f32 %v4528, %v4528
  %v4617 = vmul.f32 %v4529, %v4529
  %v4618 = vsub.f32 %v4602, %v4610
  %v4619 = vsub.f32 %v4603, %v4611
  %v4620 = vsub.f32 %v4604, %v4612
  %v4621 = vsub.f32 %v4605, %v4613
  %v4622 = vsub.f32 %v4606, %v4614
  %v4623 = vsub.f32 %v4607, %v4615
  %v4624 = vsub.f32 %v4608, %v4616
  %v4625 = vsub.f32 %v4609, %v4617
  %v4626 = vld [vmem:[%s5] sm:$0xff]
  %v4627 = vld [vmem:[%s5 + $0x8] sm:$0xff]
  %v4628 = vld [vmem:[%s5 + $0x10] sm:$0xff]
  %v4629 = vld [vmem:[%s5 + $0x18] sm:$0xff]
  %v4630 = vld [vmem:[%s5 + $0x20] sm:$0xff]
  %v4631 = vld [vmem:[%s5 + $0x28] sm:$0xff]
  %v4632 = vld [vmem:[%s5 + $0x30] sm:$0xff]
  %v4633 = vld [vmem:[%s5 + $0x38] sm:$0xff]
  %v4634 = vadd.f32 %v4618, 1e-05
  %v4635 = vadd.f32 %v4619, 1e-05
  %v4636 = vadd.f32 %v4620, 1e-05
  %v4637 = vadd.f32 %v4621, 1e-05
  %v4638 = vadd.f32 %v4622, 1e-05
  %v4639 = vadd.f32 %v4623, 1e-05
  %v4640 = vadd.f32 %v4624, 1e-05
  %v4641 = vadd.f32 %v4625, 1e-05
  %v4642 = vrsqrt.pop %v4634
  %v4643 = vrsqrt.pop %v4635
  %v4644 = vrsqrt.pop %v4636
  %v4645 = vrsqrt.pop %v4637
  %v4646 = vrsqrt.pop %v4638
  %v4647 = vrsqrt.pop %v4639
  %v4648 = vrsqrt.pop %v4640
  %v4649 = vrsqrt.pop %v4641
  %v4650 = vmul.f32 %v4626, %v4642
  %v4651 = vmul.f32 %v4627, %v4643
  %v4652 = vmul.f32 %v4628, %v4644
  %v4653 = vmul.f32 %v4629, %v4645
  %v4654 = vmul.f32 %v4630, %v4646
  %v4655 = vmul.f32 %v4631, %v4647
  %v4656 = vmul.f32 %v4632, %v4648
  %v4657 = vmul.f32 %v4633, %v4649
  %v4658 = vld [vmem:[%s6] sm:$0xff]
  %v4659 = vld [vmem:[%s6 + $0x8] sm:$0xff]
  %v4660 = vld [vmem:[%s6 + $0x10] sm:$0xff]
  %v4661 = vld [vmem:[%s6 + $0x18] sm:$0xff]
  %v4662 = vld [vmem:[%s6 + $0x20] sm:$0xff]
  %v4663 = vld [vmem:[%s6 + $0x28] sm:$0xff]
  %v4664 = vld [vmem:[%s6 + $0x30] sm:$0xff]
  %v4665 = vld [vmem:[%s6 + $0x38] sm:$0xff]
  %v4666 = vmul.f32 %v4522, %v4650
  %v4667 = vmul.f32 %v4523, %v4651
  %v4668 = vmul.f32 %v4524, %v4652
  %v4669 = vmul.f32 %v4525, %v4653
  %v4670 = vmul.f32 %v4526, %v4654
  %v4671 = vmul.f32 %v4527, %v4655
  %v4672 = vmul.f32 %v4528, %v4656
  %v4673 = vmul.f32 %v4529, %v4657
  %v4674 = vsub.f32 %v4658, %v4666
  %v4675 = vsub.f32 %v4659, %v4667
  %v4676 = vsub.f32 %v4660, %v4668
  %v4677 = vsub.f32 %v4661, %v4669
  %v4678 = vsub.f32 %v4662, %v4670
  %v4679 = vsub.f32 %v4663, %v4671
  %v4680 = vsub.f32 %v4664, %v4672
  %v4681 = vsub.f32 %v4665, %v4673
  %4683 = vset.pattern.permute.xlu0 0
  %4684 = vperm.xlu0 %4683, %v4650
  %v4685 = vpop.permute.xlu0 %4684
  %4688 = vset.pattern.permute.xlu0 0
  %4689 = vperm.xlu0 %4688, %v4651
  %v4690 = vpop.permute.xlu0 %4689
  %4693 = vset.pattern.permute.xlu0 0
  %4694 = vperm.xlu0 %4693, %v4652
  %v4695 = vpop.permute.xlu0 %4694
  %4698 = vset.pattern.permute.xlu0 0
  %4699 = vperm.xlu0 %4698, %v4653
  %v4700 = vpop.permute.xlu0 %4699
  %4703 = vset.pattern.permute.xlu0 0
  %4704 = vperm.xlu0 %4703, %v4654
  %v4705 = vpop.permute.xlu0 %4704
  %4708 = vset.pattern.permute.xlu0 0
  %4709 = vperm.xlu0 %4708, %v4655
  %v4710 = vpop.permute.xlu0 %4709
  %4713 = vset.pattern.permute.xlu0 0
  %4714 = vperm.xlu0 %4713, %v4656
  %v4715 = vpop.permute.xlu0 %4714
  %4718 = vset.pattern.permute.xlu0 0
  %4719 = vperm.xlu0 %4718, %v4657
  %v4720 = vpop.permute.xlu0 %4719
  %v4722 = vmul.f32 %v4450, %v4685
  %v4723 = vmul.f32 %v4451, %v4685
  %v4724 = vmul.f32 %v4452, %v4685
  %v4725 = vmul.f32 %v4453, %v4685
  %v4726 = vmul.f32 %v4454, %v4690
  %v4727 = vmul.f32 %v4455, %v4690
  %v4728 = vmul.f32 %v4456, %v4690
  %v4729 = vmul.f32 %v4457, %v4690
  %v4730 = vmul.f32 %v4458, %v4695
  %v4731 = vmul.f32 %v4459, %v4695
  %v4732 = vmul.f32 %v4460, %v4695
  %v4733 = vmul.f32 %v4461, %v4695
  %v4734 = vmul.f32 %v4462, %v4700
  %v4735 = vmul.f32 %v4463, %v4700
  %v4736 = vmul.f32 %v4464, %v4700
  %v4737 = vmul.f32 %v4465, %v4700
  %v4738 = vmul.f32 %v4466, %v4705
  %v4739 = vmul.f32 %v4467, %v4705
  %v4740 = vmul.f32 %v4468, %v4705
  %v4741 = vmul.f32 %v4469, %v4705
  %v4742 = vmul.f32 %v4470, %v4710
  %v4743 = vmul.f32 %v4471, %v4710
  %v4744 = vmul.f32 %v4472, %v4710
  %v4745 = vmul.f32 %v4473, %v4710
  %v4746 = vmul.f32 %v4474, %v4715
  %v4747 = vmul.f32 %v4475, %v4715
  %v4748 = vmul.f32 %v4476, %v4715
  %v4749 = vmul.f32 %v4477, %v4715
  %v4750 = vmul.f32 %v4478, %v4720
  %v4751 = vmul.f32 %v4479, %v4720
  %v4752 = vmul.f32 %v4480, %v4720
  %v4753 = vmul.f32 %v4481, %v4720
  %4755 = vset.pattern.permute.xlu0 0
  %4756 = vperm.xlu0 %4755, %v4674
  %v4757 = vpop.permute.xlu0 %4756
  %4760 = vset.pattern.permute.xlu0 0
  %4761 = vperm.xlu0 %4760, %v4675
  %v4762 = vpop.permute.xlu0 %4761
  %4765 = vset.pattern.permute.xlu0 0
  %4766 = vperm.xlu0 %4765, %v4676
  %v4767 = vpop.permute.xlu0 %4766
  %4770 = vset.pattern.permute.xlu0 0
  %4771 = vperm.xlu0 %4770, %v4677
  %v4772 = vpop.permute.xlu0 %4771
  %4775 = vset.pattern.permute.xlu0 0
  %4776 = vperm.xlu0 %4775, %v4678
  %v4777 = vpop.permute.xlu0 %4776
  %4780 = vset.pattern.permute.xlu0 0
  %4781 = vperm.xlu0 %4780, %v4679
  %v4782 = vpop.permute.xlu0 %4781
  %4785 = vset.pattern.permute.xlu0 0
  %4786 = vperm.xlu0 %4785, %v4680
  %v4787 = vpop.permute.xlu0 %4786
  %4790 = vset.pattern.permute.xlu0 0
  %4791 = vperm.xlu0 %4790, %v4681
  %v4792 = vpop.permute.xlu0 %4791
  %v4794 = vadd.f32 %v4722, %v4757
  %v4795 = vadd.f32 %v4723, %v4757
  %v4796 = vadd.f32 %v4724, %v4757
  %v4797 = vadd.f32 %v4725, %v4757
  %v4798 = vadd.f32 %v4726, %v4762
  %v4799 = vadd.f32 %v4727, %v4762
  %v4800 = vadd.f32 %v4728, %v4762
  %v4801 = vadd.f32 %v4729, %v4762
  %v4802 = vadd.f32 %v4730, %v4767
  %v4803 = vadd.f32 %v4731, %v4767
  %v4804 = vadd.f32 %v4732, %v4767
  %v4805 = vadd.f32 %v4733, %v4767
  %v4806 = vadd.f32 %v4734, %v4772
  %v4807 = vadd.f32 %v4735, %v4772
  %v4808 = vadd.f32 %v4736, %v4772
  %v4809 = vadd.f32 %v4737, %v4772
  %v4810 = vadd.f32 %v4738, %v4777
  %v4811 = vadd.f32 %v4739, %v4777
  %v4812 = vadd.f32 %v4740, %v4777
  %v4813 = vadd.f32 %v4741, %v4777
  %v4814 = vadd.f32 %v4742, %v4782
  %v4815 = vadd.f32 %v4743, %v4782
  %v4816 = vadd.f32 %v4744, %v4782
  %v4817 = vadd.f32 %v4745, %v4782
  %v4818 = vadd.f32 %v4746, %v4787
  %v4819 = vadd.f32 %v4747, %v4787
  %v4820 = vadd.f32 %v4748, %v4787
  %v4821 = vadd.f32 %v4749, %v4787
  %v4822 = vadd.f32 %v4750, %v4792
  %v4823 = vadd.f32 %v4751, %v4792
  %v4824 = vadd.f32 %v4752, %v4792
  %v4825 = vadd.f32 %v4753, %v4792
  %v4826 = vmax.f32 %v4794, 0.0
  %v4827 = vmax.f32 %v4795, 0.0
  %v4828 = vmax.f32 %v4796, 0.0
  %v4829 = vmax.f32 %v4797, 0.0
  %v4830 = vmax.f32 %v4798, 0.0
  %v4831 = vmax.f32 %v4799, 0.0
  %v4832 = vmax.f32 %v4800, 0.0
  %v4833 = vmax.f32 %v4801, 0.0
  %v4834 = vmax.f32 %v4802, 0.0
  %v4835 = vmax.f32 %v4803, 0.0
  %v4836 = vmax.f32 %v4804, 0.0
  %v4837 = vmax.f32 %v4805, 0.0
  %v4838 = vmax.f32 %v4806, 0.0
  %v4839 = vmax.f32 %v4807, 0.0
  %v4840 = vmax.f32 %v4808, 0.0
  %v4841 = vmax.f32 %v4809, 0.0
  %v4842 = vmax.f32 %v4810, 0.0
  %v4843 = vmax.f32 %v4811, 0.0
  %v4844 = vmax.f32 %v4812, 0.0
  %v4845 = vmax.f32 %v4813, 0.0
  %v4846 = vmax.f32 %v4814, 0.0
  %v4847 = vmax.f32 %v4815, 0.0
  %v4848 = vmax.f32 %v4816, 0.0
  %v4849 = vmax.f32 %v4817, 0.0
  %v4850 = vmax.f32 %v4818, 0.0
  %v4851 = vmax.f32 %v4819, 0.0
  %v4852 = vmax.f32 %v4820, 0.0
  %v4853 = vmax.f32 %v4821, 0.0
  %v4854 = vmax.f32 %v4822, 0.0
  %v4855 = vmax.f32 %v4823, 0.0
  %v4856 = vmax.f32 %v4824, 0.0
  %v4857 = vmax.f32 %v4825, 0.0
  %v4858 = vld [vmem:[%s7] sm:$0xff]
  %v4859 = vld [vmem:[%s7 + $0x8] sm:$0xff]
  %v4860 = vld [vmem:[%s7 + $0x10] sm:$0xff]
  %v4861 = vld [vmem:[%s7 + $0x18] sm:$0xff]
  %v4862 = vld [vmem:[%s7 + $0x20] sm:$0xff]
  %v4863 = vld [vmem:[%s7 + $0x28] sm:$0xff]
  %v4864 = vld [vmem:[%s7 + $0x30] sm:$0xff]
  %v4865 = vld [vmem:[%s7 + $0x38] sm:$0xff]
  %v4866 = vld [vmem:[%s7 + $0x40] sm:$0xff]
  %v4867 = vld [vmem:[%s7 + $0x48] sm:$0xff]
  %v4868 = vld [vmem:[%s7 + $0x50] sm:$0xff]
  %v4869 = vld [vmem:[%s7 + $0x58] sm:$0xff]
  %v4870 = vld [vmem:[%s7 + $0x60] sm:$0xff]
  %v4871 = vld [vmem:[%s7 + $0x68] sm:$0xff]
  %v4872 = vld [vmem:[%s7 + $0x70] sm:$0xff]
  %v4873 = vld [vmem:[%s7 + $0x78] sm:$0xff]
  %v4874 = vld [vmem:[%s7 + $0x80] sm:$0xff]
  %v4875 = vld [vmem:[%s7 + $0x88] sm:$0xff]
  %v4876 = vld [vmem:[%s7 + $0x90] sm:$0xff]
  %v4877 = vld [vmem:[%s7 + $0x98] sm:$0xff]
  %v4878 = vld [vmem:[%s7 + $0xa0] sm:$0xff]
  %v4879 = vld [vmem:[%s7 + $0xa8] sm:$0xff]
  %v4880 = vld [vmem:[%s7 + $0xb0] sm:$0xff]
  %v4881 = vld [vmem:[%s7 + $0xb8] sm:$0xff]
  %v4882 = vld [vmem:[%s7 + $0xc0] sm:$0xff]
  %v4883 = vld [vmem:[%s7 + $0xc8] sm:$0xff]
  %v4884 = vld [vmem:[%s7 + $0xd0] sm:$0xff]
  %v4885 = vld [vmem:[%s7 + $0xd8] sm:$0xff]
  %v4886 = vld [vmem:[%s7 + $0xe0] sm:$0xff]
  %v4887 = vld [vmem:[%s7 + $0xe8] sm:$0xff]
  %v4888 = vld [vmem:[%s7 + $0xf0] sm:$0xff]
  %v4889 = vld [vmem:[%s7 + $0xf8] sm:$0xff]
  %v4891 = vsel %vm973, %v4858, 0
  %v4894 = vsel %vm973, %v4859, 0
  %v4897 = vsel %vm973, %v4860, 0
  %v4900 = vsel %vm973, %v4861, 0
  %v4903 = vsel %vm973, %v4862, 0
  %v4906 = vsel %vm973, %v4863, 0
  %v4909 = vsel %vm973, %v4864, 0
  %v4912 = vsel %vm973, %v4865, 0
  %v4915 = vsel %vm973, %v4866, 0
  %v4918 = vsel %vm973, %v4867, 0
  %v4921 = vsel %vm973, %v4868, 0
  %v4924 = vsel %vm973, %v4869, 0
  %v4927 = vsel %vm973, %v4870, 0
  %v4930 = vsel %vm973, %v4871, 0
  %v4933 = vsel %vm973, %v4872, 0
  %v4936 = vsel %vm973, %v4873, 0
  %v4939 = vsel %vm973, %v4874, 0
  %v4942 = vsel %vm973, %v4875, 0
  %v4945 = vsel %vm973, %v4876, 0
  %v4948 = vsel %vm973, %v4877, 0
  %v4951 = vsel %vm973, %v4878, 0
  %v4954 = vsel %vm973, %v4879, 0
  %v4957 = vsel %vm973, %v4880, 0
  %v4960 = vsel %vm973, %v4881, 0
  %v4963 = vsel %vm973, %v4882, 0
  %v4966 = vsel %vm973, %v4883, 0
  %v4969 = vsel %vm973, %v4884, 0
  %v4972 = vsel %vm973, %v4885, 0
  %v4975 = vsel %vm973, %v4886, 0
  %v4978 = vsel %vm973, %v4887, 0
  %v4981 = vsel %vm973, %v4888, 0
  %v4984 = vsel %vm973, %v4889, 0
  %4986 = vmatprep.subr.mxu0 %v4827
  %4987 = vmatpush1.msra.mxu0 %v4826
  %4988 = vmatprep.subr.mxu0 %v4831
  %4989 = vmatpush1.msra.mxu0 %v4830
  %4990 = vmatprep.subr.mxu0 %v4835
  %4991 = vmatpush1.msra.mxu0 %v4834
  %4992 = vmatprep.subr.mxu0 %v4839
  %4993 = vmatpush1.msra.mxu0 %v4838
  %4994 = vmatprep.subr.mxu0 %v4843
  %4995 = vmatpush1.msra.mxu0 %v4842
  %4996 = vmatprep.subr.mxu0 %v4847
  %4997 = vmatpush1.msra.mxu0 %v4846
  %4998 = vmatprep.subr.mxu0 %v4851
  %4999 = vmatpush1.msra.mxu0 %v4850
  %5000 = vmatprep.subr.mxu0 %v4855
  %5001 = vmatpush1.msra.mxu0 %v4854
  %5002 = vmatprep.subr.mxu0 0.0
  %5003 = vmatpush1.msra.mxu0 0.0
  %5004 = vmatprep.subr.mxu0 0.0
  %5005 = vmatpush1.msra.mxu0 0.0
  %5006 = vmatprep.subr.mxu0 0.0
  %5007 = vmatpush1.msra.mxu0 0.0
  %5008 = vmatprep.subr.mxu0 0.0
  %5009 = vmatpush1.msra.mxu0 0.0
  %5010 = vmatprep.subr.mxu0 0.0
  %5011 = vmatpush1.msra.mxu0 0.0
  %5012 = vmatprep.subr.mxu0 0.0
  %5013 = vmatpush1.msra.mxu0 0.0
  %5014 = vmatprep.subr.mxu0 0.0
  %5015 = vmatpush1.msra.mxu0 0.0
  %5016 = vmatprep.subr.mxu0 0.0
  %5017 = vmatpush1.msra.mxu0 0.0
  %5018 = vmatprep.subr.mxu0 0.0
  %5019 = vmatpush1.msra.mxu0 0.0
  %5020 = vmatprep.subr.mxu0 0.0
  %5021 = vmatpush1.msra.mxu0 0.0
  %5022 = vmatprep.subr.mxu0 0.0
  %5023 = vmatpush1.msra.mxu0 0.0
  %5024 = vmatprep.subr.mxu0 0.0
  %5025 = vmatpush1.msra.mxu0 0.0
  %5026 = vmatprep.subr.mxu0 0.0
  %5027 = vmatpush1.msra.mxu0 0.0
  %5028 = vmatprep.subr.mxu0 0.0
  %5029 = vmatpush1.msra.mxu0 0.0
  %5030 = vmatprep.subr.mxu0 0.0
  %5031 = vmatpush1.msra.mxu0 0.0
  %5032 = vmatprep.subr.mxu0 0.0
  %5033 = vmatpush1.msra.mxu0 0.0
  %5034 = vmatprep.subr.mxu0 0.0
  %5035 = vmatpush1.msra.mxu0 0.0
  %5036 = vmatprep.subr.mxu0 0.0
  %5037 = vmatpush1.msra.mxu0 0.0
  %5038 = vmatprep.subr.mxu0 0.0
  %5039 = vmatpush1.msra.mxu0 0.0
  %5040 = vmatprep.subr.mxu0 0.0
  %5041 = vmatpush1.msra.mxu0 0.0
  %5042 = vmatprep.subr.mxu0 0.0
  %5043 = vmatpush1.msra.mxu0 0.0
  %5044 = vmatprep.subr.mxu0 0.0
  %5045 = vmatpush1.msra.mxu0 0.0
  %5046 = vmatprep.subr.mxu0 0.0
  %5047 = vmatpush1.msra.mxu0 0.0
  %5048 = vmatprep.subr.mxu0 0.0
  %5049 = vmatpush1.msra.mxu0 0.0
  %5050 = vmatprep.mubr.f32.mxu0 0.0
  %5051 = vmatmul.mubr.f32.gmra.mrb[0].mxu0 %v4891
  %v5052 = vpop.f32.mrb[0].mxu0
  %v5053 = vadd.f32 0.0, %v5052
  %v5054 = vpop.f32.mrb[0].mxu0
  %v5055 = vadd.f32 0.0, %v5054
  %5056 = vmatprep.mubr.f32.mxu0 0.0
  %5057 = vmatmul.mubr.f32.gmra.mrb[0].mxu0 %v4894
  %v5058 = vpop.f32.mrb[0].mxu0
  %v5059 = vadd.f32 0.0, %v5058
  %v5060 = vpop.f32.mrb[0].mxu0
  %v5061 = vadd.f32 0.0, %v5060
  %5062 = vmatprep.mubr.f32.mxu0 0.0
  %5063 = vmatmul.mubr.f32.gmra.mrb[0].mxu0 %v4897
  %v5064 = vpop.f32.mrb[0].mxu0
  %v5065 = vadd.f32 0.0, %v5064
  %v5066 = vpop.f32.mrb[0].mxu0
  %v5067 = vadd.f32 0.0, %v5066
  %5068 = vmatprep.mubr.f32.mxu0 0.0
  %5069 = vmatmul.mubr.f32.gmra.mrb[0].mxu0 %v4900
  %v5070 = vpop.f32.mrb[0].mxu0
  %v5071 = vadd.f32 0.0, %v5070
  %v5072 = vpop.f32.mrb[0].mxu0
  %v5073 = vadd.f32 0.0, %v5072
  %5074 = vmatprep.mubr.f32.mxu0 0.0
  %5075 = vmatmul.mubr.f32.gmra.mrb[0].mxu0 %v4903
  %v5076 = vpop.f32.mrb[0].mxu0
  %v5077 = vadd.f32 0.0, %v5076
  %v5078 = vpop.f32.mrb[0].mxu0
  %v5079 = vadd.f32 0.0, %v5078
  %5080 = vmatprep.mubr.f32.mxu0 0.0
  %5081 = vmatmul.mubr.f32.gmra.mrb[0].mxu0 %v4906
  %v5082 = vpop.f32.mrb[0].mxu0
  %v5083 = vadd.f32 0.0, %v5082
  %v5084 = vpop.f32.mrb[0].mxu0
  %v5085 = vadd.f32 0.0, %v5084
  %5086 = vmatprep.mubr.f32.mxu0 0.0
  %5087 = vmatmul.mubr.f32.gmra.mrb[0].mxu0 %v4909
  %v5088 = vpop.f32.mrb[0].mxu0
  %v5089 = vadd.f32 0.0, %v5088
  %v5090 = vpop.f32.mrb[0].mxu0
  %v5091 = vadd.f32 0.0, %v5090
  %5092 = vmatprep.mubr.f32.mxu0 0.0
  %5093 = vmatmul.mubr.f32.gmra.mrb[0].mxu0 %v4912
  %v5094 = vpop.f32.mrb[0].mxu0
  %v5095 = vadd.f32 0.0, %v5094
  %v5096 = vpop.f32.mrb[0].mxu0
  %v5097 = vadd.f32 0.0, %v5096
  %5098 = vmatprep.mubr.f32.mxu0 0.0
  %5099 = vmatmul.mubr.f32.gmra.mrb[0].mxu0 %v4915
  %v5100 = vpop.f32.mrb[0].mxu0
  %v5101 = vadd.f32 0.0, %v5100
  %v5102 = vpop.f32.mrb[0].mxu0
  %v5103 = vadd.f32 0.0, %v5102
  %5104 = vmatprep.mubr.f32.mxu0 0.0
  %5105 = vmatmul.mubr.f32.gmra.mrb[0].mxu0 %v4918
  %v5106 = vpop.f32.mrb[0].mxu0
  %v5107 = vadd.f32 0.0, %v5106
  %v5108 = vpop.f32.mrb[0].mxu0
  %v5109 = vadd.f32 0.0, %v5108
  %5110 = vmatprep.mubr.f32.mxu0 0.0
  %5111 = vmatmul.mubr.f32.gmra.mrb[0].mxu0 %v4921
  %v5112 = vpop.f32.mrb[0].mxu0
  %v5113 = vadd.f32 0.0, %v5112
  %v5114 = vpop.f32.mrb[0].mxu0
  %v5115 = vadd.f32 0.0, %v5114
  %5116 = vmatprep.mubr.f32.mxu0 0.0
  %5117 = vmatmul.mubr.f32.gmra.mrb[0].mxu0 %v4924
  %v5118 = vpop.f32.mrb[0].mxu0
  %v5119 = vadd.f32 0.0, %v5118
  %v5120 = vpop.f32.mrb[0].mxu0
  %v5121 = vadd.f32 0.0, %v5120
  %5122 = vmatprep.mubr.f32.mxu0 0.0
  %5123 = vmatmul.mubr.f32.gmra.mrb[0].mxu0 %v4927
  %v5124 = vpop.f32.mrb[0].mxu0
  %v5125 = vadd.f32 0.0, %v5124
  %v5126 = vpop.f32.mrb[0].mxu0
  %v5127 = vadd.f32 0.0, %v5126
  %5128 = vmatprep.mubr.f32.mxu0 0.0
  %5129 = vmatmul.mubr.f32.gmra.mrb[0].mxu0 %v4930
  %v5130 = vpop.f32.mrb[0].mxu0
  %v5131 = vadd.f32 0.0, %v5130
  %v5132 = vpop.f32.mrb[0].mxu0
  %v5133 = vadd.f32 0.0, %v5132
  %5134 = vmatprep.mubr.f32.mxu0 0.0
  %5135 = vmatmul.mubr.f32.gmra.mrb[0].mxu0 %v4933
  %v5136 = vpop.f32.mrb[0].mxu0
  %v5137 = vadd.f32 0.0, %v5136
  %v5138 = vpop.f32.mrb[0].mxu0
  %v5139 = vadd.f32 0.0, %v5138
  %5140 = vmatprep.mubr.f32.mxu0 0.0
  %5141 = vmatmul.mubr.f32.gmra.mrb[0].mxu0 %v4936
  %v5142 = vpop.f32.mrb[0].mxu0
  %v5143 = vadd.f32 0.0, %v5142
  %v5144 = vpop.f32.mrb[0].mxu0
  %v5145 = vadd.f32 0.0, %v5144
  %5146 = vmatprep.mubr.f32.mxu0 0.0
  %5147 = vmatmul.mubr.f32.gmra.mrb[0].mxu0 %v4939
  %v5148 = vpop.f32.mrb[0].mxu0
  %v5149 = vadd.f32 0.0, %v5148
  %v5150 = vpop.f32.mrb[0].mxu0
  %v5151 = vadd.f32 0.0, %v5150
  %5152 = vmatprep.mubr.f32.mxu0 0.0
  %5153 = vmatmul.mubr.f32.gmra.mrb[0].mxu0 %v4942
  %v5154 = vpop.f32.mrb[0].mxu0
  %v5155 = vadd.f32 0.0, %v5154
  %v5156 = vpop.f32.mrb[0].mxu0
  %v5157 = vadd.f32 0.0, %v5156
  %5158 = vmatprep.mubr.f32.mxu0 0.0
  %5159 = vmatmul.mubr.f32.gmra.mrb[0].mxu0 %v4945
  %v5160 = vpop.f32.mrb[0].mxu0
  %v5161 = vadd.f32 0.0, %v5160
  %v5162 = vpop.f32.mrb[0].mxu0
  %v5163 = vadd.f32 0.0, %v5162
  %5164 = vmatprep.mubr.f32.mxu0 0.0
  %5165 = vmatmul.mubr.f32.gmra.mrb[0].mxu0 %v4948
  %v5166 = vpop.f32.mrb[0].mxu0
  %v5167 = vadd.f32 0.0, %v5166
  %v5168 = vpop.f32.mrb[0].mxu0
  %v5169 = vadd.f32 0.0, %v5168
  %5170 = vmatprep.mubr.f32.mxu0 0.0
  %5171 = vmatmul.mubr.f32.gmra.mrb[0].mxu0 %v4951
  %v5172 = vpop.f32.mrb[0].mxu0
  %v5173 = vadd.f32 0.0, %v5172
  %v5174 = vpop.f32.mrb[0].mxu0
  %v5175 = vadd.f32 0.0, %v5174
  %5176 = vmatprep.mubr.f32.mxu0 0.0
  %5177 = vmatmul.mubr.f32.gmra.mrb[0].mxu0 %v4954
  %v5178 = vpop.f32.mrb[0].mxu0
  %v5179 = vadd.f32 0.0, %v5178
  %v5180 = vpop.f32.mrb[0].mxu0
  %v5181 = vadd.f32 0.0, %v5180
  %5182 = vmatprep.mubr.f32.mxu0 0.0
  %5183 = vmatmul.mubr.f32.gmra.mrb[0].mxu0 %v4957
  %v5184 = vpop.f32.mrb[0].mxu0
  %v5185 = vadd.f32 0.0, %v5184
  %v5186 = vpop.f32.mrb[0].mxu0
  %v5187 = vadd.f32 0.0, %v5186
  %5188 = vmatprep.mubr.f32.mxu0 0.0
  %5189 = vmatmul.mubr.f32.gmra.mrb[0].mxu0 %v4960
  %v5190 = vpop.f32.mrb[0].mxu0
  %v5191 = vadd.f32 0.0, %v5190
  %v5192 = vpop.f32.mrb[0].mxu0
  %v5193 = vadd.f32 0.0, %v5192
  %5194 = vmatprep.mubr.f32.mxu0 0.0
  %5195 = vmatmul.mubr.f32.gmra.mrb[0].mxu0 %v4963
  %v5196 = vpop.f32.mrb[0].mxu0
  %v5197 = vadd.f32 0.0, %v5196
  %v5198 = vpop.f32.mrb[0].mxu0
  %v5199 = vadd.f32 0.0, %v5198
  %5200 = vmatprep.mubr.f32.mxu0 0.0
  %5201 = vmatmul.mubr.f32.gmra.mrb[0].mxu0 %v4966
  %v5202 = vpop.f32.mrb[0].mxu0
  %v5203 = vadd.f32 0.0, %v5202
  %v5204 = vpop.f32.mrb[0].mxu0
  %v5205 = vadd.f32 0.0, %v5204
  %5206 = vmatprep.mubr.f32.mxu0 0.0
  %5207 = vmatmul.mubr.f32.gmra.mrb[0].mxu0 %v4969
  %v5208 = vpop.f32.mrb[0].mxu0
  %v5209 = vadd.f32 0.0, %v5208
  %v5210 = vpop.f32.mrb[0].mxu0
  %v5211 = vadd.f32 0.0, %v5210
  %5212 = vmatprep.mubr.f32.mxu0 0.0
  %5213 = vmatmul.mubr.f32.gmra.mrb[0].mxu0 %v4972
  %v5214 = vpop.f32.mrb[0].mxu0
  %v5215 = vadd.f32 0.0, %v5214
  %v5216 = vpop.f32.mrb[0].mxu0
  %v5217 = vadd.f32 0.0, %v5216
  %5218 = vmatprep.mubr.f32.mxu0 0.0
  %5219 = vmatmul.mubr.f32.gmra.mrb[0].mxu0 %v4975
  %v5220 = vpop.f32.mrb[0].mxu0
  %v5221 = vadd.f32 0.0, %v5220
  %v5222 = vpop.f32.mrb[0].mxu0
  %v5223 = vadd.f32 0.0, %v5222
  %5224 = vmatprep.mubr.f32.mxu0 0.0
  %5225 = vmatmul.mubr.f32.gmra.mrb[0].mxu0 %v4978
  %v5226 = vpop.f32.mrb[0].mxu0
  %v5227 = vadd.f32 0.0, %v5226
  %v5228 = vpop.f32.mrb[0].mxu0
  %v5229 = vadd.f32 0.0, %v5228
  %5230 = vmatprep.mubr.f32.mxu0 0.0
  %5231 = vmatmul.mubr.f32.gmra.mrb[0].mxu0 %v4981
  %v5232 = vpop.f32.mrb[0].mxu0
  %v5233 = vadd.f32 0.0, %v5232
  %v5234 = vpop.f32.mrb[0].mxu0
  %v5235 = vadd.f32 0.0, %v5234
  %5236 = vmatprep.mubr.f32.mxu0 0.0
  %5237 = vmatmul.mubr.f32.gmra.mrb[0].mxu0 %v4984
  %v5238 = vpop.f32.mrb[0].mxu0
  %v5239 = vadd.f32 0.0, %v5238
  %v5240 = vpop.f32.mrb[0].mxu0
  %v5241 = vadd.f32 0.0, %v5240
  %5242 = vdwg.mxu0
  %5243 = vmatprep.subr.mxu0 %v4829
  %5244 = vmatpush1.msra.mxu0 %v4828
  %5245 = vmatprep.subr.mxu0 %v4833
  %5246 = vmatpush1.msra.mxu0 %v4832
  %5247 = vmatprep.subr.mxu0 %v4837
  %5248 = vmatpush1.msra.mxu0 %v4836
  %5249 = vmatprep.subr.mxu0 %v4841
  %5250 = vmatpush1.msra.mxu0 %v4840
  %5251 = vmatprep.subr.mxu0 %v4845
  %5252 = vmatpush1.msra.mxu0 %v4844
  %5253 = vmatprep.subr.mxu0 %v4849
  %5254 = vmatpush1.msra.mxu0 %v4848
  %5255 = vmatprep.subr.mxu0 %v4853
  %5256 = vmatpush1.msra.mxu0 %v4852
  %5257 = vmatprep.subr.mxu0 %v4857
  %5258 = vmatpush1.msra.mxu0 %v4856
  %5259 = vmatprep.subr.mxu0 0.0
  %5260 = vmatpush1.msra.mxu0 0.0
  %5261 = vmatprep.subr.mxu0 0.0
  %5262 = vmatpush1.msra.mxu0 0.0
  %5263 = vmatprep.subr.mxu0 0.0
  %5264 = vmatpush1.msra.mxu0 0.0
  %5265 = vmatprep.subr.mxu0 0.0
  %5266 = vmatpush1.msra.mxu0 0.0
  %5267 = vmatprep.subr.mxu0 0.0
  %5268 = vmatpush1.msra.mxu0 0.0
  %5269 = vmatprep.subr.mxu0 0.0
  %5270 = vmatpush1.msra.mxu0 0.0
  %5271 = vmatprep.subr.mxu0 0.0
  %5272 = vmatpush1.msra.mxu0 0.0
  %5273 = vmatprep.subr.mxu0 0.0
  %5274 = vmatpush1.msra.mxu0 0.0
  %5275 = vmatprep.subr.mxu0 0.0
  %5276 = vmatpush1.msra.mxu0 0.0
  %5277 = vmatprep.subr.mxu0 0.0
  %5278 = vmatpush1.msra.mxu0 0.0
  %5279 = vmatprep.subr.mxu0 0.0
  %5280 = vmatpush1.msra.mxu0 0.0
  %5281 = vmatprep.subr.mxu0 0.0
  %5282 = vmatpush1.msra.mxu0 0.0
  %5283 = vmatprep.subr.mxu0 0.0
  %5284 = vmatpush1.msra.mxu0 0.0
  %5285 = vmatprep.subr.mxu0 0.0
  %5286 = vmatpush1.msra.mxu0 0.0
  %5287 = vmatprep.subr.mxu0 0.0
  %5288 = vmatpush1.msra.mxu0 0.0
  %5289 = vmatprep.subr.mxu0 0.0
  %5290 = vmatpush1.msra.mxu0 0.0
  %5291 = vmatprep.subr.mxu0 0.0
  %5292 = vmatpush1.msra.mxu0 0.0
  %5293 = vmatprep.subr.mxu0 0.0
  %5294 = vmatpush1.msra.mxu0 0.0
  %5295 = vmatprep.subr.mxu0 0.0
  %5296 = vmatpush1.msra.mxu0 0.0
  %5297 = vmatprep.subr.mxu0 0.0
  %5298 = vmatpush1.msra.mxu0 0.0
  %5299 = vmatprep.subr.mxu0 0.0
  %5300 = vmatpush1.msra.mxu0 0.0
  %5301 = vmatprep.subr.mxu0 0.0
  %5302 = vmatpush1.msra.mxu0 0.0
  %5303 = vmatprep.subr.mxu0 0.0
  %5304 = vmatpush1.msra.mxu0 0.0
  %5305 = vmatprep.subr.mxu0 0.0
  %5306 = vmatpush1.msra.mxu0 0.0
  %5307 = vmatprep.mubr.f32.mxu0 0.0
  %5308 = vmatmul.mubr.f32.gmra.mrb[0].mxu0 %v4891
  %v5309 = vpop.f32.mrb[0].mxu0
  %v5310 = vadd.f32 0.0, %v5309
  %v5311 = vpop.f32.mrb[0].mxu0
  %v5312 = vadd.f32 0.0, %v5311
  %5313 = vmatprep.mubr.f32.mxu0 0.0
  %5314 = vmatmul.mubr.f32.gmra.mrb[0].mxu0 %v4894
  %v5315 = vpop.f32.mrb[0].mxu0
  %v5316 = vadd.f32 0.0, %v5315
  %v5317 = vpop.f32.mrb[0].mxu0
  %v5318 = vadd.f32 0.0, %v5317
  %5319 = vmatprep.mubr.f32.mxu0 0.0
  %5320 = vmatmul.mubr.f32.gmra.mrb[0].mxu0 %v4897
  %v5321 = vpop.f32.mrb[0].mxu0
  %v5322 = vadd.f32 0.0, %v5321
  %v5323 = vpop.f32.mrb[0].mxu0
  %v5324 = vadd.f32 0.0, %v5323
  %5325 = vmatprep.mubr.f32.mxu0 0.0
  %5326 = vmatmul.mubr.f32.gmra.mrb[0].mxu0 %v4900
  %v5327 = vpop.f32.mrb[0].mxu0
  %v5328 = vadd.f32 0.0, %v5327
  %v5329 = vpop.f32.mrb[0].mxu0
  %v5330 = vadd.f32 0.0, %v5329
  %5331 = vmatprep.mubr.f32.mxu0 0.0
  %5332 = vmatmul.mubr.f32.gmra.mrb[0].mxu0 %v4903
  %v5333 = vpop.f32.mrb[0].mxu0
  %v5334 = vadd.f32 0.0, %v5333
  %v5335 = vpop.f32.mrb[0].mxu0
  %v5336 = vadd.f32 0.0, %v5335
  %5337 = vmatprep.mubr.f32.mxu0 0.0
  %5338 = vmatmul.mubr.f32.gmra.mrb[0].mxu0 %v4906
  %v5339 = vpop.f32.mrb[0].mxu0
  %v5340 = vadd.f32 0.0, %v5339
  %v5341 = vpop.f32.mrb[0].mxu0
  %v5342 = vadd.f32 0.0, %v5341
  %5343 = vmatprep.mubr.f32.mxu0 0.0
  %5344 = vmatmul.mubr.f32.gmra.mrb[0].mxu0 %v4909
  %v5345 = vpop.f32.mrb[0].mxu0
  %v5346 = vadd.f32 0.0, %v5345
  %v5347 = vpop.f32.mrb[0].mxu0
  %v5348 = vadd.f32 0.0, %v5347
  %5349 = vmatprep.mubr.f32.mxu0 0.0
  %5350 = vmatmul.mubr.f32.gmra.mrb[0].mxu0 %v4912
  %v5351 = vpop.f32.mrb[0].mxu0
  %v5352 = vadd.f32 0.0, %v5351
  %v5353 = vpop.f32.mrb[0].mxu0
  %v5354 = vadd.f32 0.0, %v5353
  %5355 = vmatprep.mubr.f32.mxu0 0.0
  %5356 = vmatmul.mubr.f32.gmra.mrb[0].mxu0 %v4915
  %v5357 = vpop.f32.mrb[0].mxu0
  %v5358 = vadd.f32 0.0, %v5357
  %v5359 = vpop.f32.mrb[0].mxu0
  %v5360 = vadd.f32 0.0, %v5359
  %5361 = vmatprep.mubr.f32.mxu0 0.0
  %5362 = vmatmul.mubr.f32.gmra.mrb[0].mxu0 %v4918
  %v5363 = vpop.f32.mrb[0].mxu0
  %v5364 = vadd.f32 0.0, %v5363
  %v5365 = vpop.f32.mrb[0].mxu0
  %v5366 = vadd.f32 0.0, %v5365
  %5367 = vmatprep.mubr.f32.mxu0 0.0
  %5368 = vmatmul.mubr.f32.gmra.mrb[0].mxu0 %v4921
  %v5369 = vpop.f32.mrb[0].mxu0
  %v5370 = vadd.f32 0.0, %v5369
  %v5371 = vpop.f32.mrb[0].mxu0
  %v5372 = vadd.f32 0.0, %v5371
  %5373 = vmatprep.mubr.f32.mxu0 0.0
  %5374 = vmatmul.mubr.f32.gmra.mrb[0].mxu0 %v4924
  %v5375 = vpop.f32.mrb[0].mxu0
  %v5376 = vadd.f32 0.0, %v5375
  %v5377 = vpop.f32.mrb[0].mxu0
  %v5378 = vadd.f32 0.0, %v5377
  %5379 = vmatprep.mubr.f32.mxu0 0.0
  %5380 = vmatmul.mubr.f32.gmra.mrb[0].mxu0 %v4927
  %v5381 = vpop.f32.mrb[0].mxu0
  %v5382 = vadd.f32 0.0, %v5381
  %v5383 = vpop.f32.mrb[0].mxu0
  %v5384 = vadd.f32 0.0, %v5383
  %5385 = vmatprep.mubr.f32.mxu0 0.0
  %5386 = vmatmul.mubr.f32.gmra.mrb[0].mxu0 %v4930
  %v5387 = vpop.f32.mrb[0].mxu0
  %v5388 = vadd.f32 0.0, %v5387
  %v5389 = vpop.f32.mrb[0].mxu0
  %v5390 = vadd.f32 0.0, %v5389
  %5391 = vmatprep.mubr.f32.mxu0 0.0
  %5392 = vmatmul.mubr.f32.gmra.mrb[0].mxu0 %v4933
  %v5393 = vpop.f32.mrb[0].mxu0
  %v5394 = vadd.f32 0.0, %v5393
  %v5395 = vpop.f32.mrb[0].mxu0
  %v5396 = vadd.f32 0.0, %v5395
  %5397 = vmatprep.mubr.f32.mxu0 0.0
  %5398 = vmatmul.mubr.f32.gmra.mrb[0].mxu0 %v4936
  %v5399 = vpop.f32.mrb[0].mxu0
  %v5400 = vadd.f32 0.0, %v5399
  %v5401 = vpop.f32.mrb[0].mxu0
  %v5402 = vadd.f32 0.0, %v5401
  %5403 = vmatprep.mubr.f32.mxu0 0.0
  %5404 = vmatmul.mubr.f32.gmra.mrb[0].mxu0 %v4939
  %v5405 = vpop.f32.mrb[0].mxu0
  %v5406 = vadd.f32 0.0, %v5405
  %v5407 = vpop.f32.mrb[0].mxu0
  %v5408 = vadd.f32 0.0, %v5407
  %5409 = vmatprep.mubr.f32.mxu0 0.0
  %5410 = vmatmul.mubr.f32.gmra.mrb[0].mxu0 %v4942
  %v5411 = vpop.f32.mrb[0].mxu0
  %v5412 = vadd.f32 0.0, %v5411
  %v5413 = vpop.f32.mrb[0].mxu0
  %v5414 = vadd.f32 0.0, %v5413
  %5415 = vmatprep.mubr.f32.mxu0 0.0
  %5416 = vmatmul.mubr.f32.gmra.mrb[0].mxu0 %v4945
  %v5417 = vpop.f32.mrb[0].mxu0
  %v5418 = vadd.f32 0.0, %v5417
  %v5419 = vpop.f32.mrb[0].mxu0
  %v5420 = vadd.f32 0.0, %v5419
  %5421 = vmatprep.mubr.f32.mxu0 0.0
  %5422 = vmatmul.mubr.f32.gmra.mrb[0].mxu0 %v4948
  %v5423 = vpop.f32.mrb[0].mxu0
  %v5424 = vadd.f32 0.0, %v5423
  %v5425 = vpop.f32.mrb[0].mxu0
  %v5426 = vadd.f32 0.0, %v5425
  %5427 = vmatprep.mubr.f32.mxu0 0.0
  %5428 = vmatmul.mubr.f32.gmra.mrb[0].mxu0 %v4951
  %v5429 = vpop.f32.mrb[0].mxu0
  %v5430 = vadd.f32 0.0, %v5429
  %v5431 = vpop.f32.mrb[0].mxu0
  %v5432 = vadd.f32 0.0, %v5431
  %5433 = vmatprep.mubr.f32.mxu0 0.0
  %5434 = vmatmul.mubr.f32.gmra.mrb[0].mxu0 %v4954
  %v5435 = vpop.f32.mrb[0].mxu0
  %v5436 = vadd.f32 0.0, %v5435
  %v5437 = vpop.f32.mrb[0].mxu0
  %v5438 = vadd.f32 0.0, %v5437
  %5439 = vmatprep.mubr.f32.mxu0 0.0
  %5440 = vmatmul.mubr.f32.gmra.mrb[0].mxu0 %v4957
  %v5441 = vpop.f32.mrb[0].mxu0
  %v5442 = vadd.f32 0.0, %v5441
  %v5443 = vpop.f32.mrb[0].mxu0
  %v5444 = vadd.f32 0.0, %v5443
  %5445 = vmatprep.mubr.f32.mxu0 0.0
  %5446 = vmatmul.mubr.f32.gmra.mrb[0].mxu0 %v4960
  %v5447 = vpop.f32.mrb[0].mxu0
  %v5448 = vadd.f32 0.0, %v5447
  %v5449 = vpop.f32.mrb[0].mxu0
  %v5450 = vadd.f32 0.0, %v5449
  %5451 = vmatprep.mubr.f32.mxu0 0.0
  %5452 = vmatmul.mubr.f32.gmra.mrb[0].mxu0 %v4963
  %v5453 = vpop.f32.mrb[0].mxu0
  %v5454 = vadd.f32 0.0, %v5453
  %v5455 = vpop.f32.mrb[0].mxu0
  %v5456 = vadd.f32 0.0, %v5455
  %5457 = vmatprep.mubr.f32.mxu0 0.0
  %5458 = vmatmul.mubr.f32.gmra.mrb[0].mxu0 %v4966
  %v5459 = vpop.f32.mrb[0].mxu0
  %v5460 = vadd.f32 0.0, %v5459
  %v5461 = vpop.f32.mrb[0].mxu0
  %v5462 = vadd.f32 0.0, %v5461
  %5463 = vmatprep.mubr.f32.mxu0 0.0
  %5464 = vmatmul.mubr.f32.gmra.mrb[0].mxu0 %v4969
  %v5465 = vpop.f32.mrb[0].mxu0
  %v5466 = vadd.f32 0.0, %v5465
  %v5467 = vpop.f32.mrb[0].mxu0
  %v5468 = vadd.f32 0.0, %v5467
  %5469 = vmatprep.mubr.f32.mxu0 0.0
  %5470 = vmatmul.mubr.f32.gmra.mrb[0].mxu0 %v4972
  %v5471 = vpop.f32.mrb[0].mxu0
  %v5472 = vadd.f32 0.0, %v5471
  %v5473 = vpop.f32.mrb[0].mxu0
  %v5474 = vadd.f32 0.0, %v5473
  %5475 = vmatprep.mubr.f32.mxu0 0.0
  %5476 = vmatmul.mubr.f32.gmra.mrb[0].mxu0 %v4975
  %v5477 = vpop.f32.mrb[0].mxu0
  %v5478 = vadd.f32 0.0, %v5477
  %v5479 = vpop.f32.mrb[0].mxu0
  %v5480 = vadd.f32 0.0, %v5479
  %5481 = vmatprep.mubr.f32.mxu0 0.0
  %5482 = vmatmul.mubr.f32.gmra.mrb[0].mxu0 %v4978
  %v5483 = vpop.f32.mrb[0].mxu0
  %v5484 = vadd.f32 0.0, %v5483
  %v5485 = vpop.f32.mrb[0].mxu0
  %v5486 = vadd.f32 0.0, %v5485
  %5487 = vmatprep.mubr.f32.mxu0 0.0
  %5488 = vmatmul.mubr.f32.gmra.mrb[0].mxu0 %v4981
  %v5489 = vpop.f32.mrb[0].mxu0
  %v5490 = vadd.f32 0.0, %v5489
  %v5491 = vpop.f32.mrb[0].mxu0
  %v5492 = vadd.f32 0.0, %v5491
  %5493 = vmatprep.mubr.f32.mxu0 0.0
  %5494 = vmatmul.mubr.f32.gmra.mrb[0].mxu0 %v4984
  %v5495 = vpop.f32.mrb[0].mxu0
  %v5496 = vadd.f32 0.0, %v5495
  %v5497 = vpop.f32.mrb[0].mxu0
  %v5498 = vadd.f32 0.0, %v5497
  %5499 = vdwg.mxu0
  %v5500 = vadd.f32 %v5053, %v5055
  %v5501 = vadd.f32 %v5500, %v5310
  %v5502 = vadd.f32 %v5501, %v5312
  %5503 = vadd.xlane.f32.xlu0 %v5502
  %v5504 = vpop.xlane.xlu0 %5503
  %v5505 = vadd.f32 %v5059, %v5061
  %v5506 = vadd.f32 %v5505, %v5316
  %v5507 = vadd.f32 %v5506, %v5318
  %5508 = vadd.xlane.f32.xlu0 %v5507
  %v5509 = vpop.xlane.xlu0 %5508
  %v5510 = vadd.f32 %v5065, %v5067
  %v5511 = vadd.f32 %v5510, %v5322
  %v5512 = vadd.f32 %v5511, %v5324
  %5513 = vadd.xlane.f32.xlu0 %v5512
  %v5514 = vpop.xlane.xlu0 %5513
  %v5515 = vadd.f32 %v5071, %v5073
  %v5516 = vadd.f32 %v5515, %v5328
  %v5517 = vadd.f32 %v5516, %v5330
  %5518 = vadd.xlane.f32.xlu0 %v5517
  %v5519 = vpop.xlane.xlu0 %5518
  %v5520 = vadd.f32 %v5077, %v5079
  %v5521 = vadd.f32 %v5520, %v5334
  %v5522 = vadd.f32 %v5521, %v5336
  %5523 = vadd.xlane.f32.xlu0 %v5522
  %v5524 = vpop.xlane.xlu0 %5523
  %v5525 = vadd.f32 %v5083, %v5085
  %v5526 = vadd.f32 %v5525, %v5340
  %v5527 = vadd.f32 %v5526, %v5342
  %5528 = vadd.xlane.f32.xlu0 %v5527
  %v5529 = vpop.xlane.xlu0 %5528
  %v5530 = vadd.f32 %v5089, %v5091
  %v5531 = vadd.f32 %v5530, %v5346
  %v5532 = vadd.f32 %v5531, %v5348
  %5533 = vadd.xlane.f32.xlu0 %v5532
  %v5534 = vpop.xlane.xlu0 %5533
  %v5535 = vadd.f32 %v5095, %v5097
  %v5536 = vadd.f32 %v5535, %v5352
  %v5537 = vadd.f32 %v5536, %v5354
  %5538 = vadd.xlane.f32.xlu0 %v5537
  %v5539 = vpop.xlane.xlu0 %5538
  %v5540 = vadd.f32 %v5101, %v5103
  %v5541 = vadd.f32 %v5540, %v5358
  %v5542 = vadd.f32 %v5541, %v5360
  %5543 = vadd.xlane.f32.xlu0 %v5542
  %v5544 = vpop.xlane.xlu0 %5543
  %v5545 = vadd.f32 %v5107, %v5109
  %v5546 = vadd.f32 %v5545, %v5364
  %v5547 = vadd.f32 %v5546, %v5366
  %5548 = vadd.xlane.f32.xlu0 %v5547
  %v5549 = vpop.xlane.xlu0 %5548
  %v5550 = vadd.f32 %v5113, %v5115
  %v5551 = vadd.f32 %v5550, %v5370
  %v5552 = vadd.f32 %v5551, %v5372
  %5553 = vadd.xlane.f32.xlu0 %v5552
  %v5554 = vpop.xlane.xlu0 %5553
  %v5555 = vadd.f32 %v5119, %v5121
  %v5556 = vadd.f32 %v5555, %v5376
  %v5557 = vadd.f32 %v5556, %v5378
  %5558 = vadd.xlane.f32.xlu0 %v5557
  %v5559 = vpop.xlane.xlu0 %5558
  %v5560 = vadd.f32 %v5125, %v5127
  %v5561 = vadd.f32 %v5560, %v5382
  %v5562 = vadd.f32 %v5561, %v5384
  %5563 = vadd.xlane.f32.xlu0 %v5562
  %v5564 = vpop.xlane.xlu0 %5563
  %v5565 = vadd.f32 %v5131, %v5133
  %v5566 = vadd.f32 %v5565, %v5388
  %v5567 = vadd.f32 %v5566, %v5390
  %5568 = vadd.xlane.f32.xlu0 %v5567
  %v5569 = vpop.xlane.xlu0 %5568
  %v5570 = vadd.f32 %v5137, %v5139
  %v5571 = vadd.f32 %v5570, %v5394
  %v5572 = vadd.f32 %v5571, %v5396
  %5573 = vadd.xlane.f32.xlu0 %v5572
  %v5574 = vpop.xlane.xlu0 %5573
  %v5575 = vadd.f32 %v5143, %v5145
  %v5576 = vadd.f32 %v5575, %v5400
  %v5577 = vadd.f32 %v5576, %v5402
  %5578 = vadd.xlane.f32.xlu0 %v5577
  %v5579 = vpop.xlane.xlu0 %5578
  %v5580 = vadd.f32 %v5149, %v5151
  %v5581 = vadd.f32 %v5580, %v5406
  %v5582 = vadd.f32 %v5581, %v5408
  %5583 = vadd.xlane.f32.xlu0 %v5582
  %v5584 = vpop.xlane.xlu0 %5583
  %v5585 = vadd.f32 %v5155, %v5157
  %v5586 = vadd.f32 %v5585, %v5412
  %v5587 = vadd.f32 %v5586, %v5414
  %5588 = vadd.xlane.f32.xlu0 %v5587
  %v5589 = vpop.xlane.xlu0 %5588
  %v5590 = vadd.f32 %v5161, %v5163
  %v5591 = vadd.f32 %v5590, %v5418
  %v5592 = vadd.f32 %v5591, %v5420
  %5593 = vadd.xlane.f32.xlu0 %v5592
  %v5594 = vpop.xlane.xlu0 %5593
  %v5595 = vadd.f32 %v5167, %v5169
  %v5596 = vadd.f32 %v5595, %v5424
  %v5597 = vadd.f32 %v5596, %v5426
  %5598 = vadd.xlane.f32.xlu0 %v5597
  %v5599 = vpop.xlane.xlu0 %5598
  %v5600 = vadd.f32 %v5173, %v5175
  %v5601 = vadd.f32 %v5600, %v5430
  %v5602 = vadd.f32 %v5601, %v5432
  %5603 = vadd.xlane.f32.xlu0 %v5602
  %v5604 = vpop.xlane.xlu0 %5603
  %v5605 = vadd.f32 %v5179, %v5181
  %v5606 = vadd.f32 %v5605, %v5436
  %v5607 = vadd.f32 %v5606, %v5438
  %5608 = vadd.xlane.f32.xlu0 %v5607
  %v5609 = vpop.xlane.xlu0 %5608
  %v5610 = vadd.f32 %v5185, %v5187
  %v5611 = vadd.f32 %v5610, %v5442
  %v5612 = vadd.f32 %v5611, %v5444
  %5613 = vadd.xlane.f32.xlu0 %v5612
  %v5614 = vpop.xlane.xlu0 %5613
  %v5615 = vadd.f32 %v5191, %v5193
  %v5616 = vadd.f32 %v5615, %v5448
  %v5617 = vadd.f32 %v5616, %v5450
  %5618 = vadd.xlane.f32.xlu0 %v5617
  %v5619 = vpop.xlane.xlu0 %5618
  %v5620 = vadd.f32 %v5197, %v5199
  %v5621 = vadd.f32 %v5620, %v5454
  %v5622 = vadd.f32 %v5621, %v5456
  %5623 = vadd.xlane.f32.xlu0 %v5622
  %v5624 = vpop.xlane.xlu0 %5623
  %v5625 = vadd.f32 %v5203, %v5205
  %v5626 = vadd.f32 %v5625, %v5460
  %v5627 = vadd.f32 %v5626, %v5462
  %5628 = vadd.xlane.f32.xlu0 %v5627
  %v5629 = vpop.xlane.xlu0 %5628
  %v5630 = vadd.f32 %v5209, %v5211
  %v5631 = vadd.f32 %v5630, %v5466
  %v5632 = vadd.f32 %v5631, %v5468
  %5633 = vadd.xlane.f32.xlu0 %v5632
  %v5634 = vpop.xlane.xlu0 %5633
  %v5635 = vadd.f32 %v5215, %v5217
  %v5636 = vadd.f32 %v5635, %v5472
  %v5637 = vadd.f32 %v5636, %v5474
  %5638 = vadd.xlane.f32.xlu0 %v5637
  %v5639 = vpop.xlane.xlu0 %5638
  %v5640 = vadd.f32 %v5221, %v5223
  %v5641 = vadd.f32 %v5640, %v5478
  %v5642 = vadd.f32 %v5641, %v5480
  %5643 = vadd.xlane.f32.xlu0 %v5642
  %v5644 = vpop.xlane.xlu0 %5643
  %v5645 = vadd.f32 %v5227, %v5229
  %v5646 = vadd.f32 %v5645, %v5484
  %v5647 = vadd.f32 %v5646, %v5486
  %5648 = vadd.xlane.f32.xlu0 %v5647
  %v5649 = vpop.xlane.xlu0 %5648
  %v5650 = vadd.f32 %v5233, %v5235
  %v5651 = vadd.f32 %v5650, %v5490
  %v5652 = vadd.f32 %v5651, %v5492
  %5653 = vadd.xlane.f32.xlu0 %v5652
  %v5654 = vpop.xlane.xlu0 %5653
  %v5655 = vadd.f32 %v5239, %v5241
  %v5656 = vadd.f32 %v5655, %v5496
  %v5657 = vadd.f32 %v5656, %v5498
  %5658 = vadd.xlane.f32.xlu0 %v5657
  %v5659 = vpop.xlane.xlu0 %5658
  %v5660 = vmul.f32 %v5504, 0.001953125
  %v5661 = vmul.f32 %v5509, 0.001953125
  %v5662 = vmul.f32 %v5514, 0.001953125
  %v5663 = vmul.f32 %v5519, 0.001953125
  %v5664 = vmul.f32 %v5524, 0.001953125
  %v5665 = vmul.f32 %v5529, 0.001953125
  %v5666 = vmul.f32 %v5534, 0.001953125
  %v5667 = vmul.f32 %v5539, 0.001953125
  %v5668 = vmul.f32 %v5544, 0.001953125
  %v5669 = vmul.f32 %v5549, 0.001953125
  %v5670 = vmul.f32 %v5554, 0.001953125
  %v5671 = vmul.f32 %v5559, 0.001953125
  %v5672 = vmul.f32 %v5564, 0.001953125
  %v5673 = vmul.f32 %v5569, 0.001953125
  %v5674 = vmul.f32 %v5574, 0.001953125
  %v5675 = vmul.f32 %v5579, 0.001953125
  %v5676 = vmul.f32 %v5584, 0.001953125
  %v5677 = vmul.f32 %v5589, 0.001953125
  %v5678 = vmul.f32 %v5594, 0.001953125
  %v5679 = vmul.f32 %v5599, 0.001953125
  %v5680 = vmul.f32 %v5604, 0.001953125
  %v5681 = vmul.f32 %v5609, 0.001953125
  %v5682 = vmul.f32 %v5614, 0.001953125
  %v5683 = vmul.f32 %v5619, 0.001953125
  %v5684 = vmul.f32 %v5624, 0.001953125
  %v5685 = vmul.f32 %v5629, 0.001953125
  %v5686 = vmul.f32 %v5634, 0.001953125
  %v5687 = vmul.f32 %v5639, 0.001953125
  %v5688 = vmul.f32 %v5644, 0.001953125
  %v5689 = vmul.f32 %v5649, 0.001953125
  %v5690 = vmul.f32 %v5654, 0.001953125
  %v5691 = vmul.f32 %v5659, 0.001953125
  %v5692 = vmul.f32 %v5053, %v5053
  %v5693 = vmul.f32 %v5055, %v5055
  %v5694 = vmul.f32 %v5310, %v5310
  %v5695 = vmul.f32 %v5312, %v5312
  %v5696 = vmul.f32 %v5059, %v5059
  %v5697 = vmul.f32 %v5061, %v5061
  %v5698 = vmul.f32 %v5316, %v5316
  %v5699 = vmul.f32 %v5318, %v5318
  %v5700 = vmul.f32 %v5065, %v5065
  %v5701 = vmul.f32 %v5067, %v5067
  %v5702 = vmul.f32 %v5322, %v5322
  %v5703 = vmul.f32 %v5324, %v5324
  %v5704 = vmul.f32 %v5071, %v5071
  %v5705 = vmul.f32 %v5073, %v5073
  %v5706 = vmul.f32 %v5328, %v5328
  %v5707 = vmul.f32 %v5330, %v5330
  %v5708 = vmul.f32 %v5077, %v5077
  %v5709 = vmul.f32 %v5079, %v5079
  %v5710 = vmul.f32 %v5334, %v5334
  %v5711 = vmul.f32 %v5336, %v5336
  %v5712 = vmul.f32 %v5083, %v5083
  %v5713 = vmul.f32 %v5085, %v5085
  %v5714 = vmul.f32 %v5340, %v5340
  %v5715 = vmul.f32 %v5342, %v5342
  %v5716 = vmul.f32 %v5089, %v5089
  %v5717 = vmul.f32 %v5091, %v5091
  %v5718 = vmul.f32 %v5346, %v5346
  %v5719 = vmul.f32 %v5348, %v5348
  %v5720 = vmul.f32 %v5095, %v5095
  %v5721 = vmul.f32 %v5097, %v5097
  %v5722 = vmul.f32 %v5352, %v5352
  %v5723 = vmul.f32 %v5354, %v5354
  %v5724 = vmul.f32 %v5101, %v5101
  %v5725 = vmul.f32 %v5103, %v5103
  %v5726 = vmul.f32 %v5358, %v5358
  %v5727 = vmul.f32 %v5360, %v5360
  %v5728 = vmul.f32 %v5107, %v5107
  %v5729 = vmul.f32 %v5109, %v5109
  %v5730 = vmul.f32 %v5364, %v5364
  %v5731 = vmul.f32 %v5366, %v5366
  %v5732 = vmul.f32 %v5113, %v5113
  %v5733 = vmul.f32 %v5115, %v5115
  %v5734 = vmul.f32 %v5370, %v5370
  %v5735 = vmul.f32 %v5372, %v5372
  %v5736 = vmul.f32 %v5119, %v5119
  %v5737 = vmul.f32 %v5121, %v5121
  %v5738 = vmul.f32 %v5376, %v5376
  %v5739 = vmul.f32 %v5378, %v5378
  %v5740 = vmul.f32 %v5125, %v5125
  %v5741 = vmul.f32 %v5127, %v5127
  %v5742 = vmul.f32 %v5382, %v5382
  %v5743 = vmul.f32 %v5384, %v5384
  %v5744 = vmul.f32 %v5131, %v5131
  %v5745 = vmul.f32 %v5133, %v5133
  %v5746 = vmul.f32 %v5388, %v5388
  %v5747 = vmul.f32 %v5390, %v5390
  %v5748 = vmul.f32 %v5137, %v5137
  %v5749 = vmul.f32 %v5139, %v5139
  %v5750 = vmul.f32 %v5394, %v5394
  %v5751 = vmul.f32 %v5396, %v5396
  %v5752 = vmul.f32 %v5143, %v5143
  %v5753 = vmul.f32 %v5145, %v5145
  %v5754 = vmul.f32 %v5400, %v5400
  %v5755 = vmul.f32 %v5402, %v5402
  %v5756 = vmul.f32 %v5149, %v5149
  %v5757 = vmul.f32 %v5151, %v5151
  %v5758 = vmul.f32 %v5406, %v5406
  %v5759 = vmul.f32 %v5408, %v5408
  %v5760 = vmul.f32 %v5155, %v5155
  %v5761 = vmul.f32 %v5157, %v5157
  %v5762 = vmul.f32 %v5412, %v5412
  %v5763 = vmul.f32 %v5414, %v5414
  %v5764 = vmul.f32 %v5161, %v5161
  %v5765 = vmul.f32 %v5163, %v5163
  %v5766 = vmul.f32 %v5418, %v5418
  %v5767 = vmul.f32 %v5420, %v5420
  %v5768 = vmul.f32 %v5167, %v5167
  %v5769 = vmul.f32 %v5169, %v5169
  %v5770 = vmul.f32 %v5424, %v5424
  %v5771 = vmul.f32 %v5426, %v5426
  %v5772 = vmul.f32 %v5173, %v5173
  %v5773 = vmul.f32 %v5175, %v5175
  %v5774 = vmul.f32 %v5430, %v5430
  %v5775 = vmul.f32 %v5432, %v5432
  %v5776 = vmul.f32 %v5179, %v5179
  %v5777 = vmul.f32 %v5181, %v5181
  %v5778 = vmul.f32 %v5436, %v5436
  %v5779 = vmul.f32 %v5438, %v5438
  %v5780 = vmul.f32 %v5185, %v5185
  %v5781 = vmul.f32 %v5187, %v5187
  %v5782 = vmul.f32 %v5442, %v5442
  %v5783 = vmul.f32 %v5444, %v5444
  %v5784 = vmul.f32 %v5191, %v5191
  %v5785 = vmul.f32 %v5193, %v5193
  %v5786 = vmul.f32 %v5448, %v5448
  %v5787 = vmul.f32 %v5450, %v5450
  %v5788 = vmul.f32 %v5197, %v5197
  %v5789 = vmul.f32 %v5199, %v5199
  %v5790 = vmul.f32 %v5454, %v5454
  %v5791 = vmul.f32 %v5456, %v5456
  %v5792 = vmul.f32 %v5203, %v5203
  %v5793 = vmul.f32 %v5205, %v5205
  %v5794 = vmul.f32 %v5460, %v5460
  %v5795 = vmul.f32 %v5462, %v5462
  %v5796 = vmul.f32 %v5209, %v5209
  %v5797 = vmul.f32 %v5211, %v5211
  %v5798 = vmul.f32 %v5466, %v5466
  %v5799 = vmul.f32 %v5468, %v5468
  %v5800 = vmul.f32 %v5215, %v5215
  %v5801 = vmul.f32 %v5217, %v5217
  %v5802 = vmul.f32 %v5472, %v5472
  %v5803 = vmul.f32 %v5474, %v5474
  %v5804 = vmul.f32 %v5221, %v5221
  %v5805 = vmul.f32 %v5223, %v5223
  %v5806 = vmul.f32 %v5478, %v5478
  %v5807 = vmul.f32 %v5480, %v5480
  %v5808 = vmul.f32 %v5227, %v5227
  %v5809 = vmul.f32 %v5229, %v5229
  %v5810 = vmul.f32 %v5484, %v5484
  %v5811 = vmul.f32 %v5486, %v5486
  %v5812 = vmul.f32 %v5233, %v5233
  %v5813 = vmul.f32 %v5235, %v5235
  %v5814 = vmul.f32 %v5490, %v5490
  %v5815 = vmul.f32 %v5492, %v5492
  %v5816 = vmul.f32 %v5239, %v5239
  %v5817 = vmul.f32 %v5241, %v5241
  %v5818 = vmul.f32 %v5496, %v5496
  %v5819 = vmul.f32 %v5498, %v5498
  %v5820 = vadd.f32 %v5692, %v5693
  %v5821 = vadd.f32 %v5820, %v5694
  %v5822 = vadd.f32 %v5821, %v5695
  %5823 = vadd.xlane.f32.xlu0 %v5822
  %v5824 = vpop.xlane.xlu0 %5823
  %v5825 = vadd.f32 %v5696, %v5697
  %v5826 = vadd.f32 %v5825, %v5698
  %v5827 = vadd.f32 %v5826, %v5699
  %5828 = vadd.xlane.f32.xlu0 %v5827
  %v5829 = vpop.xlane.xlu0 %5828
  %v5830 = vadd.f32 %v5700, %v5701
  %v5831 = vadd.f32 %v5830, %v5702
  %v5832 = vadd.f32 %v5831, %v5703
  %5833 = vadd.xlane.f32.xlu0 %v5832
  %v5834 = vpop.xlane.xlu0 %5833
  %v5835 = vadd.f32 %v5704, %v5705
  %v5836 = vadd.f32 %v5835, %v5706
  %v5837 = vadd.f32 %v5836, %v5707
  %5838 = vadd.xlane.f32.xlu0 %v5837
  %v5839 = vpop.xlane.xlu0 %5838
  %v5840 = vadd.f32 %v5708, %v5709
  %v5841 = vadd.f32 %v5840, %v5710
  %v5842 = vadd.f32 %v5841, %v5711
  %5843 = vadd.xlane.f32.xlu0 %v5842
  %v5844 = vpop.xlane.xlu0 %5843
  %v5845 = vadd.f32 %v5712, %v5713
  %v5846 = vadd.f32 %v5845, %v5714
  %v5847 = vadd.f32 %v5846, %v5715
  %5848 = vadd.xlane.f32.xlu0 %v5847
  %v5849 = vpop.xlane.xlu0 %5848
  %v5850 = vadd.f32 %v5716, %v5717
  %v5851 = vadd.f32 %v5850, %v5718
  %v5852 = vadd.f32 %v5851, %v5719
  %5853 = vadd.xlane.f32.xlu0 %v5852
  %v5854 = vpop.xlane.xlu0 %5853
  %v5855 = vadd.f32 %v5720, %v5721
  %v5856 = vadd.f32 %v5855, %v5722
  %v5857 = vadd.f32 %v5856, %v5723
  %5858 = vadd.xlane.f32.xlu0 %v5857
  %v5859 = vpop.xlane.xlu0 %5858
  %v5860 = vadd.f32 %v5724, %v5725
  %v5861 = vadd.f32 %v5860, %v5726
  %v5862 = vadd.f32 %v5861, %v5727
  %5863 = vadd.xlane.f32.xlu0 %v5862
  %v5864 = vpop.xlane.xlu0 %5863
  %v5865 = vadd.f32 %v5728, %v5729
  %v5866 = vadd.f32 %v5865, %v5730
  %v5867 = vadd.f32 %v5866, %v5731
  %5868 = vadd.xlane.f32.xlu0 %v5867
  %v5869 = vpop.xlane.xlu0 %5868
  %v5870 = vadd.f32 %v5732, %v5733
  %v5871 = vadd.f32 %v5870, %v5734
  %v5872 = vadd.f32 %v5871, %v5735
  %5873 = vadd.xlane.f32.xlu0 %v5872
  %v5874 = vpop.xlane.xlu0 %5873
  %v5875 = vadd.f32 %v5736, %v5737
  %v5876 = vadd.f32 %v5875, %v5738
  %v5877 = vadd.f32 %v5876, %v5739
  %5878 = vadd.xlane.f32.xlu0 %v5877
  %v5879 = vpop.xlane.xlu0 %5878
  %v5880 = vadd.f32 %v5740, %v5741
  %v5881 = vadd.f32 %v5880, %v5742
  %v5882 = vadd.f32 %v5881, %v5743
  %5883 = vadd.xlane.f32.xlu0 %v5882
  %v5884 = vpop.xlane.xlu0 %5883
  %v5885 = vadd.f32 %v5744, %v5745
  %v5886 = vadd.f32 %v5885, %v5746
  %v5887 = vadd.f32 %v5886, %v5747
  %5888 = vadd.xlane.f32.xlu0 %v5887
  %v5889 = vpop.xlane.xlu0 %5888
  %v5890 = vadd.f32 %v5748, %v5749
  %v5891 = vadd.f32 %v5890, %v5750
  %v5892 = vadd.f32 %v5891, %v5751
  %5893 = vadd.xlane.f32.xlu0 %v5892
  %v5894 = vpop.xlane.xlu0 %5893
  %v5895 = vadd.f32 %v5752, %v5753
  %v5896 = vadd.f32 %v5895, %v5754
  %v5897 = vadd.f32 %v5896, %v5755
  %5898 = vadd.xlane.f32.xlu0 %v5897
  %v5899 = vpop.xlane.xlu0 %5898
  %v5900 = vadd.f32 %v5756, %v5757
  %v5901 = vadd.f32 %v5900, %v5758
  %v5902 = vadd.f32 %v5901, %v5759
  %5903 = vadd.xlane.f32.xlu0 %v5902
  %v5904 = vpop.xlane.xlu0 %5903
  %v5905 = vadd.f32 %v5760, %v5761
  %v5906 = vadd.f32 %v5905, %v5762
  %v5907 = vadd.f32 %v5906, %v5763
  %5908 = vadd.xlane.f32.xlu0 %v5907
  %v5909 = vpop.xlane.xlu0 %5908
  %v5910 = vadd.f32 %v5764, %v5765
  %v5911 = vadd.f32 %v5910, %v5766
  %v5912 = vadd.f32 %v5911, %v5767
  %5913 = vadd.xlane.f32.xlu0 %v5912
  %v5914 = vpop.xlane.xlu0 %5913
  %v5915 = vadd.f32 %v5768, %v5769
  %v5916 = vadd.f32 %v5915, %v5770
  %v5917 = vadd.f32 %v5916, %v5771
  %5918 = vadd.xlane.f32.xlu0 %v5917
  %v5919 = vpop.xlane.xlu0 %5918
  %v5920 = vadd.f32 %v5772, %v5773
  %v5921 = vadd.f32 %v5920, %v5774
  %v5922 = vadd.f32 %v5921, %v5775
  %5923 = vadd.xlane.f32.xlu0 %v5922
  %v5924 = vpop.xlane.xlu0 %5923
  %v5925 = vadd.f32 %v5776, %v5777
  %v5926 = vadd.f32 %v5925, %v5778
  %v5927 = vadd.f32 %v5926, %v5779
  %5928 = vadd.xlane.f32.xlu0 %v5927
  %v5929 = vpop.xlane.xlu0 %5928
  %v5930 = vadd.f32 %v5780, %v5781
  %v5931 = vadd.f32 %v5930, %v5782
  %v5932 = vadd.f32 %v5931, %v5783
  %5933 = vadd.xlane.f32.xlu0 %v5932
  %v5934 = vpop.xlane.xlu0 %5933
  %v5935 = vadd.f32 %v5784, %v5785
  %v5936 = vadd.f32 %v5935, %v5786
  %v5937 = vadd.f32 %v5936, %v5787
  %5938 = vadd.xlane.f32.xlu0 %v5937
  %v5939 = vpop.xlane.xlu0 %5938
  %v5940 = vadd.f32 %v5788, %v5789
  %v5941 = vadd.f32 %v5940, %v5790
  %v5942 = vadd.f32 %v5941, %v5791
  %5943 = vadd.xlane.f32.xlu0 %v5942
  %v5944 = vpop.xlane.xlu0 %5943
  %v5945 = vadd.f32 %v5792, %v5793
  %v5946 = vadd.f32 %v5945, %v5794
  %v5947 = vadd.f32 %v5946, %v5795
  %5948 = vadd.xlane.f32.xlu0 %v5947
  %v5949 = vpop.xlane.xlu0 %5948
  %v5950 = vadd.f32 %v5796, %v5797
  %v5951 = vadd.f32 %v5950, %v5798
  %v5952 = vadd.f32 %v5951, %v5799
  %5953 = vadd.xlane.f32.xlu0 %v5952
  %v5954 = vpop.xlane.xlu0 %5953
  %v5955 = vadd.f32 %v5800, %v5801
  %v5956 = vadd.f32 %v5955, %v5802
  %v5957 = vadd.f32 %v5956, %v5803
  %5958 = vadd.xlane.f32.xlu0 %v5957
  %v5959 = vpop.xlane.xlu0 %5958
  %v5960 = vadd.f32 %v5804, %v5805
  %v5961 = vadd.f32 %v5960, %v5806
  %v5962 = vadd.f32 %v5961, %v5807
  %5963 = vadd.xlane.f32.xlu0 %v5962
  %v5964 = vpop.xlane.xlu0 %5963
  %v5965 = vadd.f32 %v5808, %v5809
  %v5966 = vadd.f32 %v5965, %v5810
  %v5967 = vadd.f32 %v5966, %v5811
  %5968 = vadd.xlane.f32.xlu0 %v5967
  %v5969 = vpop.xlane.xlu0 %5968
  %v5970 = vadd.f32 %v5812, %v5813
  %v5971 = vadd.f32 %v5970, %v5814
  %v5972 = vadd.f32 %v5971, %v5815
  %5973 = vadd.xlane.f32.xlu0 %v5972
  %v5974 = vpop.xlane.xlu0 %5973
  %v5975 = vadd.f32 %v5816, %v5817
  %v5976 = vadd.f32 %v5975, %v5818
  %v5977 = vadd.f32 %v5976, %v5819
  %5978 = vadd.xlane.f32.xlu0 %v5977
  %v5979 = vpop.xlane.xlu0 %5978
  %v5980 = vmul.f32 %v5824, 0.001953125
  %v5981 = vmul.f32 %v5829, 0.001953125
  %v5982 = vmul.f32 %v5834, 0.001953125
  %v5983 = vmul.f32 %v5839, 0.001953125
  %v5984 = vmul.f32 %v5844, 0.001953125
  %v5985 = vmul.f32 %v5849, 0.001953125
  %v5986 = vmul.f32 %v5854, 0.001953125
  %v5987 = vmul.f32 %v5859, 0.001953125
  %v5988 = vmul.f32 %v5864, 0.001953125
  %v5989 = vmul.f32 %v5869, 0.001953125
  %v5990 = vmul.f32 %v5874, 0.001953125
  %v5991 = vmul.f32 %v5879, 0.001953125
  %v5992 = vmul.f32 %v5884, 0.001953125
  %v5993 = vmul.f32 %v5889, 0.001953125
  %v5994 = vmul.f32 %v5894, 0.001953125
  %v5995 = vmul.f32 %v5899, 0.001953125
  %v5996 = vmul.f32 %v5904, 0.001953125
  %v5997 = vmul.f32 %v5909, 0.001953125
  %v5998 = vmul.f32 %v5914, 0.001953125
  %v5999 = vmul.f32 %v5919, 0.001953125
  %v6000 = vmul.f32 %v5924, 0.001953125
  %v6001 = vmul.f32 %v5929, 0.001953125
  %v6002 = vmul.f32 %v5934, 0.001953125
  %v6003 = vmul.f32 %v5939, 0.001953125
  %v6004 = vmul.f32 %v5944, 0.001953125
  %v6005 = vmul.f32 %v5949, 0.001953125
  %v6006 = vmul.f32 %v5954, 0.001953125
  %v6007 = vmul.f32 %v5959, 0.001953125
  %v6008 = vmul.f32 %v5964, 0.001953125
  %v6009 = vmul.f32 %v5969, 0.001953125
  %v6010 = vmul.f32 %v5974, 0.001953125
  %v6011 = vmul.f32 %v5979, 0.001953125
  %v6012 = vmul.f32 %v5660, %v5660
  %v6013 = vmul.f32 %v5661, %v5661
  %v6014 = vmul.f32 %v5662, %v5662
  %v6015 = vmul.f32 %v5663, %v5663
  %v6016 = vmul.f32 %v5664, %v5664
  %v6017 = vmul.f32 %v5665, %v5665
  %v6018 = vmul.f32 %v5666, %v5666
  %v6019 = vmul.f32 %v5667, %v5667
  %v6020 = vmul.f32 %v5668, %v5668
  %v6021 = vmul.f32 %v5669, %v5669
  %v6022 = vmul.f32 %v5670, %v5670
  %v6023 = vmul.f32 %v5671, %v5671
  %v6024 = vmul.f32 %v5672, %v5672
  %v6025 = vmul.f32 %v5673, %v5673
  %v6026 = vmul.f32 %v5674, %v5674
  %v6027 = vmul.f32 %v5675, %v5675
  %v6028 = vmul.f32 %v5676, %v5676
  %v6029 = vmul.f32 %v5677, %v5677
  %v6030 = vmul.f32 %v5678, %v5678
  %v6031 = vmul.f32 %v5679, %v5679
  %v6032 = vmul.f32 %v5680, %v5680
  %v6033 = vmul.f32 %v5681, %v5681
  %v6034 = vmul.f32 %v5682, %v5682
  %v6035 = vmul.f32 %v5683, %v5683
  %v6036 = vmul.f32 %v5684, %v5684
  %v6037 = vmul.f32 %v5685, %v5685
  %v6038 = vmul.f32 %v5686, %v5686
  %v6039 = vmul.f32 %v5687, %v5687
  %v6040 = vmul.f32 %v5688, %v5688
  %v6041 = vmul.f32 %v5689, %v5689
  %v6042 = vmul.f32 %v5690, %v5690
  %v6043 = vmul.f32 %v5691, %v5691
  %v6044 = vsub.f32 %v5980, %v6012
  %v6045 = vsub.f32 %v5981, %v6013
  %v6046 = vsub.f32 %v5982, %v6014
  %v6047 = vsub.f32 %v5983, %v6015
  %v6048 = vsub.f32 %v5984, %v6016
  %v6049 = vsub.f32 %v5985, %v6017
  %v6050 = vsub.f32 %v5986, %v6018
  %v6051 = vsub.f32 %v5987, %v6019
  %v6052 = vsub.f32 %v5988, %v6020
  %v6053 = vsub.f32 %v5989, %v6021
  %v6054 = vsub.f32 %v5990, %v6022
  %v6055 = vsub.f32 %v5991, %v6023
  %v6056 = vsub.f32 %v5992, %v6024
  %v6057 = vsub.f32 %v5993, %v6025
  %v6058 = vsub.f32 %v5994, %v6026
  %v6059 = vsub.f32 %v5995, %v6027
  %v6060 = vsub.f32 %v5996, %v6028
  %v6061 = vsub.f32 %v5997, %v6029
  %v6062 = vsub.f32 %v5998, %v6030
  %v6063 = vsub.f32 %v5999, %v6031
  %v6064 = vsub.f32 %v6000, %v6032
  %v6065 = vsub.f32 %v6001, %v6033
  %v6066 = vsub.f32 %v6002, %v6034
  %v6067 = vsub.f32 %v6003, %v6035
  %v6068 = vsub.f32 %v6004, %v6036
  %v6069 = vsub.f32 %v6005, %v6037
  %v6070 = vsub.f32 %v6006, %v6038
  %v6071 = vsub.f32 %v6007, %v6039
  %v6072 = vsub.f32 %v6008, %v6040
  %v6073 = vsub.f32 %v6009, %v6041
  %v6074 = vsub.f32 %v6010, %v6042
  %v6075 = vsub.f32 %v6011, %v6043
  %v6076 = vld [vmem:[%s8] sm:$0xff]
  %v6077 = vld [vmem:[%s8 + $0x8] sm:$0xff]
  %v6078 = vld [vmem:[%s8 + $0x10] sm:$0xff]
  %v6079 = vld [vmem:[%s8 + $0x18] sm:$0xff]
  %v6080 = vld [vmem:[%s8 + $0x20] sm:$0xff]
  %v6081 = vld [vmem:[%s8 + $0x28] sm:$0xff]
  %v6082 = vld [vmem:[%s8 + $0x30] sm:$0xff]
  %v6083 = vld [vmem:[%s8 + $0x38] sm:$0xff]
  %v6084 = vld [vmem:[%s8 + $0x40] sm:$0xff]
  %v6085 = vld [vmem:[%s8 + $0x48] sm:$0xff]
  %v6086 = vld [vmem:[%s8 + $0x50] sm:$0xff]
  %v6087 = vld [vmem:[%s8 + $0x58] sm:$0xff]
  %v6088 = vld [vmem:[%s8 + $0x60] sm:$0xff]
  %v6089 = vld [vmem:[%s8 + $0x68] sm:$0xff]
  %v6090 = vld [vmem:[%s8 + $0x70] sm:$0xff]
  %v6091 = vld [vmem:[%s8 + $0x78] sm:$0xff]
  %v6092 = vld [vmem:[%s8 + $0x80] sm:$0xff]
  %v6093 = vld [vmem:[%s8 + $0x88] sm:$0xff]
  %v6094 = vld [vmem:[%s8 + $0x90] sm:$0xff]
  %v6095 = vld [vmem:[%s8 + $0x98] sm:$0xff]
  %v6096 = vld [vmem:[%s8 + $0xa0] sm:$0xff]
  %v6097 = vld [vmem:[%s8 + $0xa8] sm:$0xff]
  %v6098 = vld [vmem:[%s8 + $0xb0] sm:$0xff]
  %v6099 = vld [vmem:[%s8 + $0xb8] sm:$0xff]
  %v6100 = vld [vmem:[%s8 + $0xc0] sm:$0xff]
  %v6101 = vld [vmem:[%s8 + $0xc8] sm:$0xff]
  %v6102 = vld [vmem:[%s8 + $0xd0] sm:$0xff]
  %v6103 = vld [vmem:[%s8 + $0xd8] sm:$0xff]
  %v6104 = vld [vmem:[%s8 + $0xe0] sm:$0xff]
  %v6105 = vld [vmem:[%s8 + $0xe8] sm:$0xff]
  %v6106 = vld [vmem:[%s8 + $0xf0] sm:$0xff]
  %v6107 = vld [vmem:[%s8 + $0xf8] sm:$0xff]
  %v6108 = vadd.f32 %v6044, 1e-05
  %v6109 = vadd.f32 %v6045, 1e-05
  %v6110 = vadd.f32 %v6046, 1e-05
  %v6111 = vadd.f32 %v6047, 1e-05
  %v6112 = vadd.f32 %v6048, 1e-05
  %v6113 = vadd.f32 %v6049, 1e-05
  %v6114 = vadd.f32 %v6050, 1e-05
  %v6115 = vadd.f32 %v6051, 1e-05
  %v6116 = vadd.f32 %v6052, 1e-05
  %v6117 = vadd.f32 %v6053, 1e-05
  %v6118 = vadd.f32 %v6054, 1e-05
  %v6119 = vadd.f32 %v6055, 1e-05
  %v6120 = vadd.f32 %v6056, 1e-05
  %v6121 = vadd.f32 %v6057, 1e-05
  %v6122 = vadd.f32 %v6058, 1e-05
  %v6123 = vadd.f32 %v6059, 1e-05
  %v6124 = vadd.f32 %v6060, 1e-05
  %v6125 = vadd.f32 %v6061, 1e-05
  %v6126 = vadd.f32 %v6062, 1e-05
  %v6127 = vadd.f32 %v6063, 1e-05
  %v6128 = vadd.f32 %v6064, 1e-05
  %v6129 = vadd.f32 %v6065, 1e-05
  %v6130 = vadd.f32 %v6066, 1e-05
  %v6131 = vadd.f32 %v6067, 1e-05
  %v6132 = vadd.f32 %v6068, 1e-05
  %v6133 = vadd.f32 %v6069, 1e-05
  %v6134 = vadd.f32 %v6070, 1e-05
  %v6135 = vadd.f32 %v6071, 1e-05
  %v6136 = vadd.f32 %v6072, 1e-05
  %v6137 = vadd.f32 %v6073, 1e-05
  %v6138 = vadd.f32 %v6074, 1e-05
  %v6139 = vadd.f32 %v6075, 1e-05
  %v6140 = vrsqrt.pop %v6108
  %v6141 = vrsqrt.pop %v6109
  %v6142 = vrsqrt.pop %v6110
  %v6143 = vrsqrt.pop %v6111
  %v6144 = vrsqrt.pop %v6112
  %v6145 = vrsqrt.pop %v6113
  %v6146 = vrsqrt.pop %v6114
  %v6147 = vrsqrt.pop %v6115
  %v6148 = vrsqrt.pop %v6116
  %v6149 = vrsqrt.pop %v6117
  %v6150 = vrsqrt.pop %v6118
  %v6151 = vrsqrt.pop %v6119
  %v6152 = vrsqrt.pop %v6120
  %v6153 = vrsqrt.pop %v6121
  %v6154 = vrsqrt.pop %v6122
  %v6155 = vrsqrt.pop %v6123
  %v6156 = vrsqrt.pop %v6124
  %v6157 = vrsqrt.pop %v6125
  %v6158 = vrsqrt.pop %v6126
  %v6159 = vrsqrt.pop %v6127
  %v6160 = vrsqrt.pop %v6128
  %v6161 = vrsqrt.pop %v6129
  %v6162 = vrsqrt.pop %v6130
  %v6163 = vrsqrt.pop %v6131
  %v6164 = vrsqrt.pop %v6132
  %v6165 = vrsqrt.pop %v6133
  %v6166 = vrsqrt.pop %v6134
  %v6167 = vrsqrt.pop %v6135
  %v6168 = vrsqrt.pop %v6136
  %v6169 = vrsqrt.pop %v6137
  %v6170 = vrsqrt.pop %v6138
  %v6171 = vrsqrt.pop %v6139
  %v6172 = vmul.f32 %v6076, %v6140
  %v6173 = vmul.f32 %v6077, %v6141
  %v6174 = vmul.f32 %v6078, %v6142
  %v6175 = vmul.f32 %v6079, %v6143
  %v6176 = vmul.f32 %v6080, %v6144
  %v6177 = vmul.f32 %v6081, %v6145
  %v6178 = vmul.f32 %v6082, %v6146
  %v6179 = vmul.f32 %v6083, %v6147
  %v6180 = vmul.f32 %v6084, %v6148
  %v6181 = vmul.f32 %v6085, %v6149
  %v6182 = vmul.f32 %v6086, %v6150
  %v6183 = vmul.f32 %v6087, %v6151
  %v6184 = vmul.f32 %v6088, %v6152
  %v6185 = vmul.f32 %v6089, %v6153
  %v6186 = vmul.f32 %v6090, %v6154
  %v6187 = vmul.f32 %v6091, %v6155
  %v6188 = vmul.f32 %v6092, %v6156
  %v6189 = vmul.f32 %v6093, %v6157
  %v6190 = vmul.f32 %v6094, %v6158
  %v6191 = vmul.f32 %v6095, %v6159
  %v6192 = vmul.f32 %v6096, %v6160
  %v6193 = vmul.f32 %v6097, %v6161
  %v6194 = vmul.f32 %v6098, %v6162
  %v6195 = vmul.f32 %v6099, %v6163
  %v6196 = vmul.f32 %v6100, %v6164
  %v6197 = vmul.f32 %v6101, %v6165
  %v6198 = vmul.f32 %v6102, %v6166
  %v6199 = vmul.f32 %v6103, %v6167
  %v6200 = vmul.f32 %v6104, %v6168
  %v6201 = vmul.f32 %v6105, %v6169
  %v6202 = vmul.f32 %v6106, %v6170
  %v6203 = vmul.f32 %v6107, %v6171
  %v6204 = vld [vmem:[%s9] sm:$0xff]
  %v6205 = vld [vmem:[%s9 + $0x8] sm:$0xff]
  %v6206 = vld [vmem:[%s9 + $0x10] sm:$0xff]
  %v6207 = vld [vmem:[%s9 + $0x18] sm:$0xff]
  %v6208 = vld [vmem:[%s9 + $0x20] sm:$0xff]
  %v6209 = vld [vmem:[%s9 + $0x28] sm:$0xff]
  %v6210 = vld [vmem:[%s9 + $0x30] sm:$0xff]
  %v6211 = vld [vmem:[%s9 + $0x38] sm:$0xff]
  %v6212 = vld [vmem:[%s9 + $0x40] sm:$0xff]
  %v6213 = vld [vmem:[%s9 + $0x48] sm:$0xff]
  %v6214 = vld [vmem:[%s9 + $0x50] sm:$0xff]
  %v6215 = vld [vmem:[%s9 + $0x58] sm:$0xff]
  %v6216 = vld [vmem:[%s9 + $0x60] sm:$0xff]
  %v6217 = vld [vmem:[%s9 + $0x68] sm:$0xff]
  %v6218 = vld [vmem:[%s9 + $0x70] sm:$0xff]
  %v6219 = vld [vmem:[%s9 + $0x78] sm:$0xff]
  %v6220 = vld [vmem:[%s9 + $0x80] sm:$0xff]
  %v6221 = vld [vmem:[%s9 + $0x88] sm:$0xff]
  %v6222 = vld [vmem:[%s9 + $0x90] sm:$0xff]
  %v6223 = vld [vmem:[%s9 + $0x98] sm:$0xff]
  %v6224 = vld [vmem:[%s9 + $0xa0] sm:$0xff]
  %v6225 = vld [vmem:[%s9 + $0xa8] sm:$0xff]
  %v6226 = vld [vmem:[%s9 + $0xb0] sm:$0xff]
  %v6227 = vld [vmem:[%s9 + $0xb8] sm:$0xff]
  %v6228 = vld [vmem:[%s9 + $0xc0] sm:$0xff]
  %v6229 = vld [vmem:[%s9 + $0xc8] sm:$0xff]
  %v6230 = vld [vmem:[%s9 + $0xd0] sm:$0xff]
  %v6231 = vld [vmem:[%s9 + $0xd8] sm:$0xff]
  %v6232 = vld [vmem:[%s9 + $0xe0] sm:$0xff]
  %v6233 = vld [vmem:[%s9 + $0xe8] sm:$0xff]
  %v6234 = vld [vmem:[%s9 + $0xf0] sm:$0xff]
  %v6235 = vld [vmem:[%s9 + $0xf8] sm:$0xff]
  %v6236 = vmul.f32 %v5660, %v6172
  %v6237 = vmul.f32 %v5661, %v6173
  %v6238 = vmul.f32 %v5662, %v6174
  %v6239 = vmul.f32 %v5663, %v6175
  %v6240 = vmul.f32 %v5664, %v6176
  %v6241 = vmul.f32 %v5665, %v6177
  %v6242 = vmul.f32 %v5666, %v6178
  %v6243 = vmul.f32 %v5667, %v6179
  %v6244 = vmul.f32 %v5668, %v6180
  %v6245 = vmul.f32 %v5669, %v6181
  %v6246 = vmul.f32 %v5670, %v6182
  %v6247 = vmul.f32 %v5671, %v6183
  %v6248 = vmul.f32 %v5672, %v6184
  %v6249 = vmul.f32 %v5673, %v6185
  %v6250 = vmul.f32 %v5674, %v6186
  %v6251 = vmul.f32 %v5675, %v6187
  %v6252 = vmul.f32 %v5676, %v6188
  %v6253 = vmul.f32 %v5677, %v6189
  %v6254 = vmul.f32 %v5678, %v6190
  %v6255 = vmul.f32 %v5679, %v6191
  %v6256 = vmul.f32 %v5680, %v6192
  %v6257 = vmul.f32 %v5681, %v6193
  %v6258 = vmul.f32 %v5682, %v6194
  %v6259 = vmul.f32 %v5683, %v6195
  %v6260 = vmul.f32 %v5684, %v6196
  %v6261 = vmul.f32 %v5685, %v6197
  %v6262 = vmul.f32 %v5686, %v6198
  %v6263 = vmul.f32 %v5687, %v6199
  %v6264 = vmul.f32 %v5688, %v6200
  %v6265 = vmul.f32 %v5689, %v6201
  %v6266 = vmul.f32 %v5690, %v6202
  %v6267 = vmul.f32 %v5691, %v6203
  %v6268 = vsub.f32 %v6204, %v6236
  %v6269 = vsub.f32 %v6205, %v6237
  %v6270 = vsub.f32 %v6206, %v6238
  %v6271 = vsub.f32 %v6207, %v6239
  %v6272 = vsub.f32 %v6208, %v6240
  %v6273 = vsub.f32 %v6209, %v6241
  %v6274 = vsub.f32 %v6210, %v6242
  %v6275 = vsub.f32 %v6211, %v6243
  %v6276 = vsub.f32 %v6212, %v6244
  %v6277 = vsub.f32 %v6213, %v6245
  %v6278 = vsub.f32 %v6214, %v6246
  %v6279 = vsub.f32 %v6215, %v6247
  %v6280 = vsub.f32 %v6216, %v6248
  %v6281 = vsub.f32 %v6217, %v6249
  %v6282 = vsub.f32 %v6218, %v6250
  %v6283 = vsub.f32 %v6219, %v6251
  %v6284 = vsub.f32 %v6220, %v6252
  %v6285 = vsub.f32 %v6221, %v6253
  %v6286 = vsub.f32 %v6222, %v6254
  %v6287 = vsub.f32 %v6223, %v6255
  %v6288 = vsub.f32 %v6224, %v6256
  %v6289 = vsub.f32 %v6225, %v6257
  %v6290 = vsub.f32 %v6226, %v6258
  %v6291 = vsub.f32 %v6227, %v6259
  %v6292 = vsub.f32 %v6228, %v6260
  %v6293 = vsub.f32 %v6229, %v6261
  %v6294 = vsub.f32 %v6230, %v6262
  %v6295 = vsub.f32 %v6231, %v6263
  %v6296 = vsub.f32 %v6232, %v6264
  %v6297 = vsub.f32 %v6233, %v6265
  %v6298 = vsub.f32 %v6234, %v6266
  %v6299 = vsub.f32 %v6235, %v6267
  %6301 = vset.pattern.permute.xlu0 0
  %6302 = vperm.xlu0 %6301, %v6172
  %v6303 = vpop.permute.xlu0 %6302
  %6306 = vset.pattern.permute.xlu0 0
  %6307 = vperm.xlu0 %6306, %v6173
  %v6308 = vpop.permute.xlu0 %6307
  %6311 = vset.pattern.permute.xlu0 0
  %6312 = vperm.xlu0 %6311, %v6174
  %v6313 = vpop.permute.xlu0 %6312
  %6316 = vset.pattern.permute.xlu0 0
  %6317 = vperm.xlu0 %6316, %v6175
  %v6318 = vpop.permute.xlu0 %6317
  %6321 = vset.pattern.permute.xlu0 0
  %6322 = vperm.xlu0 %6321, %v6176
  %v6323 = vpop.permute.xlu0 %6322
  %6326 = vset.pattern.permute.xlu0 0
  %6327 = vperm.xlu0 %6326, %v6177
  %v6328 = vpop.permute.xlu0 %6327
  %6331 = vset.pattern.permute.xlu0 0
  %6332 = vperm.xlu0 %6331, %v6178
  %v6333 = vpop.permute.xlu0 %6332
  %6336 = vset.pattern.permute.xlu0 0
  %6337 = vperm.xlu0 %6336, %v6179
  %v6338 = vpop.permute.xlu0 %6337
  %6341 = vset.pattern.permute.xlu0 0
  %6342 = vperm.xlu0 %6341, %v6180
  %v6343 = vpop.permute.xlu0 %6342
  %6346 = vset.pattern.permute.xlu0 0
  %6347 = vperm.xlu0 %6346, %v6181
  %v6348 = vpop.permute.xlu0 %6347
  %6351 = vset.pattern.permute.xlu0 0
  %6352 = vperm.xlu0 %6351, %v6182
  %v6353 = vpop.permute.xlu0 %6352
  %6356 = vset.pattern.permute.xlu0 0
  %6357 = vperm.xlu0 %6356, %v6183
  %v6358 = vpop.permute.xlu0 %6357
  %6361 = vset.pattern.permute.xlu0 0
  %6362 = vperm.xlu0 %6361, %v6184
  %v6363 = vpop.permute.xlu0 %6362
  %6366 = vset.pattern.permute.xlu0 0
  %6367 = vperm.xlu0 %6366, %v6185
  %v6368 = vpop.permute.xlu0 %6367
  %6371 = vset.pattern.permute.xlu0 0
  %6372 = vperm.xlu0 %6371, %v6186
  %v6373 = vpop.permute.xlu0 %6372
  %6376 = vset.pattern.permute.xlu0 0
  %6377 = vperm.xlu0 %6376, %v6187
  %v6378 = vpop.permute.xlu0 %6377
  %6381 = vset.pattern.permute.xlu0 0
  %6382 = vperm.xlu0 %6381, %v6188
  %v6383 = vpop.permute.xlu0 %6382
  %6386 = vset.pattern.permute.xlu0 0
  %6387 = vperm.xlu0 %6386, %v6189
  %v6388 = vpop.permute.xlu0 %6387
  %6391 = vset.pattern.permute.xlu0 0
  %6392 = vperm.xlu0 %6391, %v6190
  %v6393 = vpop.permute.xlu0 %6392
  %6396 = vset.pattern.permute.xlu0 0
  %6397 = vperm.xlu0 %6396, %v6191
  %v6398 = vpop.permute.xlu0 %6397
  %6401 = vset.pattern.permute.xlu0 0
  %6402 = vperm.xlu0 %6401, %v6192
  %v6403 = vpop.permute.xlu0 %6402
  %6406 = vset.pattern.permute.xlu0 0
  %6407 = vperm.xlu0 %6406, %v6193
  %v6408 = vpop.permute.xlu0 %6407
  %6411 = vset.pattern.permute.xlu0 0
  %6412 = vperm.xlu0 %6411, %v6194
  %v6413 = vpop.permute.xlu0 %6412
  %6416 = vset.pattern.permute.xlu0 0
  %6417 = vperm.xlu0 %6416, %v6195
  %v6418 = vpop.permute.xlu0 %6417
  %6421 = vset.pattern.permute.xlu0 0
  %6422 = vperm.xlu0 %6421, %v6196
  %v6423 = vpop.permute.xlu0 %6422
  %6426 = vset.pattern.permute.xlu0 0
  %6427 = vperm.xlu0 %6426, %v6197
  %v6428 = vpop.permute.xlu0 %6427
  %6431 = vset.pattern.permute.xlu0 0
  %6432 = vperm.xlu0 %6431, %v6198
  %v6433 = vpop.permute.xlu0 %6432
  %6436 = vset.pattern.permute.xlu0 0
  %6437 = vperm.xlu0 %6436, %v6199
  %v6438 = vpop.permute.xlu0 %6437
  %6441 = vset.pattern.permute.xlu0 0
  %6442 = vperm.xlu0 %6441, %v6200
  %v6443 = vpop.permute.xlu0 %6442
  %6446 = vset.pattern.permute.xlu0 0
  %6447 = vperm.xlu0 %6446, %v6201
  %v6448 = vpop.permute.xlu0 %6447
  %6451 = vset.pattern.permute.xlu0 0
  %6452 = vperm.xlu0 %6451, %v6202
  %v6453 = vpop.permute.xlu0 %6452
  %6456 = vset.pattern.permute.xlu0 0
  %6457 = vperm.xlu0 %6456, %v6203
  %v6458 = vpop.permute.xlu0 %6457
  %v6460 = vmul.f32 %v5053, %v6303
  %v6461 = vmul.f32 %v5055, %v6303
  %v6462 = vmul.f32 %v5310, %v6303
  %v6463 = vmul.f32 %v5312, %v6303
  %v6464 = vmul.f32 %v5059, %v6308
  %v6465 = vmul.f32 %v5061, %v6308
  %v6466 = vmul.f32 %v5316, %v6308
  %v6467 = vmul.f32 %v5318, %v6308
  %v6468 = vmul.f32 %v5065, %v6313
  %v6469 = vmul.f32 %v5067, %v6313
  %v6470 = vmul.f32 %v5322, %v6313
  %v6471 = vmul.f32 %v5324, %v6313
  %v6472 = vmul.f32 %v5071, %v6318
  %v6473 = vmul.f32 %v5073, %v6318
  %v6474 = vmul.f32 %v5328, %v6318
  %v6475 = vmul.f32 %v5330, %v6318
  %v6476 = vmul.f32 %v5077, %v6323
  %v6477 = vmul.f32 %v5079, %v6323
  %v6478 = vmul.f32 %v5334, %v6323
  %v6479 = vmul.f32 %v5336, %v6323
  %v6480 = vmul.f32 %v5083, %v6328
  %v6481 = vmul.f32 %v5085, %v6328
  %v6482 = vmul.f32 %v5340, %v6328
  %v6483 = vmul.f32 %v5342, %v6328
  %v6484 = vmul.f32 %v5089, %v6333
  %v6485 = vmul.f32 %v5091, %v6333
  %v6486 = vmul.f32 %v5346, %v6333
  %v6487 = vmul.f32 %v5348, %v6333
  %v6488 = vmul.f32 %v5095, %v6338
  %v6489 = vmul.f32 %v5097, %v6338
  %v6490 = vmul.f32 %v5352, %v6338
  %v6491 = vmul.f32 %v5354, %v6338
  %v6492 = vmul.f32 %v5101, %v6343
  %v6493 = vmul.f32 %v5103, %v6343
  %v6494 = vmul.f32 %v5358, %v6343
  %v6495 = vmul.f32 %v5360, %v6343
  %v6496 = vmul.f32 %v5107, %v6348
  %v6497 = vmul.f32 %v5109, %v6348
  %v6498 = vmul.f32 %v5364, %v6348
  %v6499 = vmul.f32 %v5366, %v6348
  %v6500 = vmul.f32 %v5113, %v6353
  %v6501 = vmul.f32 %v5115, %v6353
  %v6502 = vmul.f32 %v5370, %v6353
  %v6503 = vmul.f32 %v5372, %v6353
  %v6504 = vmul.f32 %v5119, %v6358
  %v6505 = vmul.f32 %v5121, %v6358
  %v6506 = vmul.f32 %v5376, %v6358
  %v6507 = vmul.f32 %v5378, %v6358
  %v6508 = vmul.f32 %v5125, %v6363
  %v6509 = vmul.f32 %v5127, %v6363
  %v6510 = vmul.f32 %v5382, %v6363
  %v6511 = vmul.f32 %v5384, %v6363
  %v6512 = vmul.f32 %v5131, %v6368
  %v6513 = vmul.f32 %v5133, %v6368
  %v6514 = vmul.f32 %v5388, %v6368
  %v6515 = vmul.f32 %v5390, %v6368
  %v6516 = vmul.f32 %v5137, %v6373
  %v6517 = vmul.f32 %v5139, %v6373
  %v6518 = vmul.f32 %v5394, %v6373
  %v6519 = vmul.f32 %v5396, %v6373
  %v6520 = vmul.f32 %v5143, %v6378
  %v6521 = vmul.f32 %v5145, %v6378
  %v6522 = vmul.f32 %v5400, %v6378
  %v6523 = vmul.f32 %v5402, %v6378
  %v6524 = vmul.f32 %v5149, %v6383
  %v6525 = vmul.f32 %v5151, %v6383
  %v6526 = vmul.f32 %v5406, %v6383
  %v6527 = vmul.f32 %v5408, %v6383
  %v6528 = vmul.f32 %v5155, %v6388
  %v6529 = vmul.f32 %v5157, %v6388
  %v6530 = vmul.f32 %v5412, %v6388
  %v6531 = vmul.f32 %v5414, %v6388
  %v6532 = vmul.f32 %v5161, %v6393
  %v6533 = vmul.f32 %v5163, %v6393
  %v6534 = vmul.f32 %v5418, %v6393
  %v6535 = vmul.f32 %v5420, %v6393
  %v6536 = vmul.f32 %v5167, %v6398
  %v6537 = vmul.f32 %v5169, %v6398
  %v6538 = vmul.f32 %v5424, %v6398
  %v6539 = vmul.f32 %v5426, %v6398
  %v6540 = vmul.f32 %v5173, %v6403
  %v6541 = vmul.f32 %v5175, %v6403
  %v6542 = vmul.f32 %v5430, %v6403
  %v6543 = vmul.f32 %v5432, %v6403
  %v6544 = vmul.f32 %v5179, %v6408
  %v6545 = vmul.f32 %v5181, %v6408
  %v6546 = vmul.f32 %v5436, %v6408
  %v6547 = vmul.f32 %v5438, %v6408
  %v6548 = vmul.f32 %v5185, %v6413
  %v6549 = vmul.f32 %v5187, %v6413
  %v6550 = vmul.f32 %v5442, %v6413
  %v6551 = vmul.f32 %v5444, %v6413
  %v6552 = vmul.f32 %v5191, %v6418
  %v6553 = vmul.f32 %v5193, %v6418
  %v6554 = vmul.f32 %v5448, %v6418
  %v6555 = vmul.f32 %v5450, %v6418
  %v6556 = vmul.f32 %v5197, %v6423
  %v6557 = vmul.f32 %v5199, %v6423
  %v6558 = vmul.f32 %v5454, %v6423
  %v6559 = vmul.f32 %v5456, %v6423
  %v6560 = vmul.f32 %v5203, %v6428
  %v6561 = vmul.f32 %v5205, %v6428
  %v6562 = vmul.f32 %v5460, %v6428
  %v6563 = vmul.f32 %v5462, %v6428
  %v6564 = vmul.f32 %v5209, %v6433
  %v6565 = vmul.f32 %v5211, %v6433
  %v6566 = vmul.f32 %v5466, %v6433
  %v6567 = vmul.f32 %v5468, %v6433
  %v6568 = vmul.f32 %v5215, %v6438
  %v6569 = vmul.f32 %v5217, %v6438
  %v6570 = vmul.f32 %v5472, %v6438
  %v6571 = vmul.f32 %v5474, %v6438
  %v6572 = vmul.f32 %v5221, %v6443
  %v6573 = vmul.f32 %v5223, %v6443
  %v6574 = vmul.f32 %v5478, %v6443
  %v6575 = vmul.f32 %v5480, %v6443
  %v6576 = vmul.f32 %v5227, %v6448
  %v6577 = vmul.f32 %v5229, %v6448
  %v6578 = vmul.f32 %v5484, %v6448
  %v6579 = vmul.f32 %v5486, %v6448
  %v6580 = vmul.f32 %v5233, %v6453
  %v6581 = vmul.f32 %v5235, %v6453
  %v6582 = vmul.f32 %v5490, %v6453
  %v6583 = vmul.f32 %v5492, %v6453
  %v6584 = vmul.f32 %v5239, %v6458
  %v6585 = vmul.f32 %v5241, %v6458
  %v6586 = vmul.f32 %v5496, %v6458
  %v6587 = vmul.f32 %v5498, %v6458
  %6589 = vset.pattern.permute.xlu0 0
  %6590 = vperm.xlu0 %6589, %v6268
  %v6591 = vpop.permute.xlu0 %6590
  %6594 = vset.pattern.permute.xlu0 0
  %6595 = vperm.xlu0 %6594, %v6269
  %v6596 = vpop.permute.xlu0 %6595
  %6599 = vset.pattern.permute.xlu0 0
  %6600 = vperm.xlu0 %6599, %v6270
  %v6601 = vpop.permute.xlu0 %6600
  %6604 = vset.pattern.permute.xlu0 0
  %6605 = vperm.xlu0 %6604, %v6271
  %v6606 = vpop.permute.xlu0 %6605
  %6609 = vset.pattern.permute.xlu0 0
  %6610 = vperm.xlu0 %6609, %v6272
  %v6611 = vpop.permute.xlu0 %6610
  %6614 = vset.pattern.permute.xlu0 0
  %6615 = vperm.xlu0 %6614, %v6273
  %v6616 = vpop.permute.xlu0 %6615
  %6619 = vset.pattern.permute.xlu0 0
  %6620 = vperm.xlu0 %6619, %v6274
  %v6621 = vpop.permute.xlu0 %6620
  %6624 = vset.pattern.permute.xlu0 0
  %6625 = vperm.xlu0 %6624, %v6275
  %v6626 = vpop.permute.xlu0 %6625
  %6629 = vset.pattern.permute.xlu0 0
  %6630 = vperm.xlu0 %6629, %v6276
  %v6631 = vpop.permute.xlu0 %6630
  %6634 = vset.pattern.permute.xlu0 0
  %6635 = vperm.xlu0 %6634, %v6277
  %v6636 = vpop.permute.xlu0 %6635
  %6639 = vset.pattern.permute.xlu0 0
  %6640 = vperm.xlu0 %6639, %v6278
  %v6641 = vpop.permute.xlu0 %6640
  %6644 = vset.pattern.permute.xlu0 0
  %6645 = vperm.xlu0 %6644, %v6279
  %v6646 = vpop.permute.xlu0 %6645
  %6649 = vset.pattern.permute.xlu0 0
  %6650 = vperm.xlu0 %6649, %v6280
  %v6651 = vpop.permute.xlu0 %6650
  %6654 = vset.pattern.permute.xlu0 0
  %6655 = vperm.xlu0 %6654, %v6281
  %v6656 = vpop.permute.xlu0 %6655
  %6659 = vset.pattern.permute.xlu0 0
  %6660 = vperm.xlu0 %6659, %v6282
  %v6661 = vpop.permute.xlu0 %6660
  %6664 = vset.pattern.permute.xlu0 0
  %6665 = vperm.xlu0 %6664, %v6283
  %v6666 = vpop.permute.xlu0 %6665
  %6669 = vset.pattern.permute.xlu0 0
  %6670 = vperm.xlu0 %6669, %v6284
  %v6671 = vpop.permute.xlu0 %6670
  %6674 = vset.pattern.permute.xlu0 0
  %6675 = vperm.xlu0 %6674, %v6285
  %v6676 = vpop.permute.xlu0 %6675
  %6679 = vset.pattern.permute.xlu0 0
  %6680 = vperm.xlu0 %6679, %v6286
  %v6681 = vpop.permute.xlu0 %6680
  %6684 = vset.pattern.permute.xlu0 0
  %6685 = vperm.xlu0 %6684, %v6287
  %v6686 = vpop.permute.xlu0 %6685
  %6689 = vset.pattern.permute.xlu0 0
  %6690 = vperm.xlu0 %6689, %v6288
  %v6691 = vpop.permute.xlu0 %6690
  %6694 = vset.pattern.permute.xlu0 0
  %6695 = vperm.xlu0 %6694, %v6289
  %v6696 = vpop.permute.xlu0 %6695
  %6699 = vset.pattern.permute.xlu0 0
  %6700 = vperm.xlu0 %6699, %v6290
  %v6701 = vpop.permute.xlu0 %6700
  %6704 = vset.pattern.permute.xlu0 0
  %6705 = vperm.xlu0 %6704, %v6291
  %v6706 = vpop.permute.xlu0 %6705
  %6709 = vset.pattern.permute.xlu0 0
  %6710 = vperm.xlu0 %6709, %v6292
  %v6711 = vpop.permute.xlu0 %6710
  %6714 = vset.pattern.permute.xlu0 0
  %6715 = vperm.xlu0 %6714, %v6293
  %v6716 = vpop.permute.xlu0 %6715
  %6719 = vset.pattern.permute.xlu0 0
  %6720 = vperm.xlu0 %6719, %v6294
  %v6721 = vpop.permute.xlu0 %6720
  %6724 = vset.pattern.permute.xlu0 0
  %6725 = vperm.xlu0 %6724, %v6295
  %v6726 = vpop.permute.xlu0 %6725
  %6729 = vset.pattern.permute.xlu0 0
  %6730 = vperm.xlu0 %6729, %v6296
  %v6731 = vpop.permute.xlu0 %6730
  %6734 = vset.pattern.permute.xlu0 0
  %6735 = vperm.xlu0 %6734, %v6297
  %v6736 = vpop.permute.xlu0 %6735
  %6739 = vset.pattern.permute.xlu0 0
  %6740 = vperm.xlu0 %6739, %v6298
  %v6741 = vpop.permute.xlu0 %6740
  %6744 = vset.pattern.permute.xlu0 0
  %6745 = vperm.xlu0 %6744, %v6299
  %v6746 = vpop.permute.xlu0 %6745
  %v6748 = vadd.f32 %v6460, %v6591
  %v6749 = vadd.f32 %v6461, %v6591
  %v6750 = vadd.f32 %v6462, %v6591
  %v6751 = vadd.f32 %v6463, %v6591
  %v6752 = vadd.f32 %v6464, %v6596
  %v6753 = vadd.f32 %v6465, %v6596
  %v6754 = vadd.f32 %v6466, %v6596
  %v6755 = vadd.f32 %v6467, %v6596
  %v6756 = vadd.f32 %v6468, %v6601
  %v6757 = vadd.f32 %v6469, %v6601
  %v6758 = vadd.f32 %v6470, %v6601
  %v6759 = vadd.f32 %v6471, %v6601
  %v6760 = vadd.f32 %v6472, %v6606
  %v6761 = vadd.f32 %v6473, %v6606
  %v6762 = vadd.f32 %v6474, %v6606
  %v6763 = vadd.f32 %v6475, %v6606
  %v6764 = vadd.f32 %v6476, %v6611
  %v6765 = vadd.f32 %v6477, %v6611
  %v6766 = vadd.f32 %v6478, %v6611
  %v6767 = vadd.f32 %v6479, %v6611
  %v6768 = vadd.f32 %v6480, %v6616
  %v6769 = vadd.f32 %v6481, %v6616
  %v6770 = vadd.f32 %v6482, %v6616
  %v6771 = vadd.f32 %v6483, %v6616
  %v6772 = vadd.f32 %v6484, %v6621
  %v6773 = vadd.f32 %v6485, %v6621
  %v6774 = vadd.f32 %v6486, %v6621
  %v6775 = vadd.f32 %v6487, %v6621
  %v6776 = vadd.f32 %v6488, %v6626
  %v6777 = vadd.f32 %v6489, %v6626
  %v6778 = vadd.f32 %v6490, %v6626
  %v6779 = vadd.f32 %v6491, %v6626
  %v6780 = vadd.f32 %v6492, %v6631
  %v6781 = vadd.f32 %v6493, %v6631
  %v6782 = vadd.f32 %v6494, %v6631
  %v6783 = vadd.f32 %v6495, %v6631
  %v6784 = vadd.f32 %v6496, %v6636
  %v6785 = vadd.f32 %v6497, %v6636
  %v6786 = vadd.f32 %v6498, %v6636
  %v6787 = vadd.f32 %v6499, %v6636
  %v6788 = vadd.f32 %v6500, %v6641
  %v6789 = vadd.f32 %v6501, %v6641
  %v6790 = vadd.f32 %v6502, %v6641
  %v6791 = vadd.f32 %v6503, %v6641
  %v6792 = vadd.f32 %v6504, %v6646
  %v6793 = vadd.f32 %v6505, %v6646
  %v6794 = vadd.f32 %v6506, %v6646
  %v6795 = vadd.f32 %v6507, %v6646
  %v6796 = vadd.f32 %v6508, %v6651
  %v6797 = vadd.f32 %v6509, %v6651
  %v6798 = vadd.f32 %v6510, %v6651
  %v6799 = vadd.f32 %v6511, %v6651
  %v6800 = vadd.f32 %v6512, %v6656
  %v6801 = vadd.f32 %v6513, %v6656
  %v6802 = vadd.f32 %v6514, %v6656
  %v6803 = vadd.f32 %v6515, %v6656
  %v6804 = vadd.f32 %v6516, %v6661
  %v6805 = vadd.f32 %v6517, %v6661
  %v6806 = vadd.f32 %v6518, %v6661
  %v6807 = vadd.f32 %v6519, %v6661
  %v6808 = vadd.f32 %v6520, %v6666
  %v6809 = vadd.f32 %v6521, %v6666
  %v6810 = vadd.f32 %v6522, %v6666
  %v6811 = vadd.f32 %v6523, %v6666
  %v6812 = vadd.f32 %v6524, %v6671
  %v6813 = vadd.f32 %v6525, %v6671
  %v6814 = vadd.f32 %v6526, %v6671
  %v6815 = vadd.f32 %v6527, %v6671
  %v6816 = vadd.f32 %v6528, %v6676
  %v6817 = vadd.f32 %v6529, %v6676
  %v6818 = vadd.f32 %v6530, %v6676
  %v6819 = vadd.f32 %v6531, %v6676
  %v6820 = vadd.f32 %v6532, %v6681
  %v6821 = vadd.f32 %v6533, %v6681
  %v6822 = vadd.f32 %v6534, %v6681
  %v6823 = vadd.f32 %v6535, %v6681
  %v6824 = vadd.f32 %v6536, %v6686
  %v6825 = vadd.f32 %v6537, %v6686
  %v6826 = vadd.f32 %v6538, %v6686
  %v6827 = vadd.f32 %v6539, %v6686
  %v6828 = vadd.f32 %v6540, %v6691
  %v6829 = vadd.f32 %v6541, %v6691
  %v6830 = vadd.f32 %v6542, %v6691
  %v6831 = vadd.f32 %v6543, %v6691
  %v6832 = vadd.f32 %v6544, %v6696
  %v6833 = vadd.f32 %v6545, %v6696
  %v6834 = vadd.f32 %v6546, %v6696
  %v6835 = vadd.f32 %v6547, %v6696
  %v6836 = vadd.f32 %v6548, %v6701
  %v6837 = vadd.f32 %v6549, %v6701
  %v6838 = vadd.f32 %v6550, %v6701
  %v6839 = vadd.f32 %v6551, %v6701
  %v6840 = vadd.f32 %v6552, %v6706
  %v6841 = vadd.f32 %v6553, %v6706
  %v6842 = vadd.f32 %v6554, %v6706
  %v6843 = vadd.f32 %v6555, %v6706
  %v6844 = vadd.f32 %v6556, %v6711
  %v6845 = vadd.f32 %v6557, %v6711
  %v6846 = vadd.f32 %v6558, %v6711
  %v6847 = vadd.f32 %v6559, %v6711
  %v6848 = vadd.f32 %v6560, %v6716
  %v6849 = vadd.f32 %v6561, %v6716
  %v6850 = vadd.f32 %v6562, %v6716
  %v6851 = vadd.f32 %v6563, %v6716
  %v6852 = vadd.f32 %v6564, %v6721
  %v6853 = vadd.f32 %v6565, %v6721
  %v6854 = vadd.f32 %v6566, %v6721
  %v6855 = vadd.f32 %v6567, %v6721
  %v6856 = vadd.f32 %v6568, %v6726
  %v6857 = vadd.f32 %v6569, %v6726
  %v6858 = vadd.f32 %v6570, %v6726
  %v6859 = vadd.f32 %v6571, %v6726
  %v6860 = vadd.f32 %v6572, %v6731
  %v6861 = vadd.f32 %v6573, %v6731
  %v6862 = vadd.f32 %v6574, %v6731
  %v6863 = vadd.f32 %v6575, %v6731
  %v6864 = vadd.f32 %v6576, %v6736
  %v6865 = vadd.f32 %v6577, %v6736
  %v6866 = vadd.f32 %v6578, %v6736
  %v6867 = vadd.f32 %v6579, %v6736
  %v6868 = vadd.f32 %v6580, %v6741
  %v6869 = vadd.f32 %v6581, %v6741
  %v6870 = vadd.f32 %v6582, %v6741
  %v6871 = vadd.f32 %v6583, %v6741
  %v6872 = vadd.f32 %v6584, %v6746
  %v6873 = vadd.f32 %v6585, %v6746
  %v6874 = vadd.f32 %v6586, %v6746
  %v6875 = vadd.f32 %v6587, %v6746
  %v6876 = vadd.f32 %v6748, %v51
  %v6877 = vadd.f32 %v6749, %v52
  %v6878 = vadd.f32 %v6752, %v53
  %v6879 = vadd.f32 %v6753, %v54
  %v6880 = vadd.f32 %v6756, %v55
  %v6881 = vadd.f32 %v6757, %v56
  %v6882 = vadd.f32 %v6760, %v57
  %v6883 = vadd.f32 %v6761, %v58
  %v6884 = vadd.f32 %v6764, %v59
  %v6885 = vadd.f32 %v6765, %v60
  %v6886 = vadd.f32 %v6768, %v61
  %v6887 = vadd.f32 %v6769, %v62
  %v6888 = vadd.f32 %v6772, %v63
  %v6889 = vadd.f32 %v6773, %v64
  %v6890 = vadd.f32 %v6776, %v65
  %v6891 = vadd.f32 %v6777, %v66
  %v6892 = vadd.f32 %v6780, %v67
  %v6893 = vadd.f32 %v6781, %v68
  %v6894 = vadd.f32 %v6784, %v69
  %v6895 = vadd.f32 %v6785, %v70
  %v6896 = vadd.f32 %v6788, %v71
  %v6897 = vadd.f32 %v6789, %v72
  %v6898 = vadd.f32 %v6792, %v73
  %v6899 = vadd.f32 %v6793, %v74
  %v6900 = vadd.f32 %v6796, %v75
  %v6901 = vadd.f32 %v6797, %v76
  %v6902 = vadd.f32 %v6800, %v77
  %v6903 = vadd.f32 %v6801, %v78
  %v6904 = vadd.f32 %v6804, %v79
  %v6905 = vadd.f32 %v6805, %v80
  %v6906 = vadd.f32 %v6808, %v81
  %v6907 = vadd.f32 %v6809, %v82
  %v6908 = vadd.f32 %v6812, %v83
  %v6909 = vadd.f32 %v6813, %v84
  %v6910 = vadd.f32 %v6816, %v85
  %v6911 = vadd.f32 %v6817, %v86
  %v6912 = vadd.f32 %v6820, %v87
  %v6913 = vadd.f32 %v6821, %v88
  %v6914 = vadd.f32 %v6824, %v89
  %v6915 = vadd.f32 %v6825, %v90
  %v6916 = vadd.f32 %v6828, %v91
  %v6917 = vadd.f32 %v6829, %v92
  %v6918 = vadd.f32 %v6832, %v93
  %v6919 = vadd.f32 %v6833, %v94
  %v6920 = vadd.f32 %v6836, %v95
  %v6921 = vadd.f32 %v6837, %v96
  %v6922 = vadd.f32 %v6840, %v97
  %v6923 = vadd.f32 %v6841, %v98
  %v6924 = vadd.f32 %v6844, %v99
  %v6925 = vadd.f32 %v6845, %v100
  %v6926 = vadd.f32 %v6848, %v101
  %v6927 = vadd.f32 %v6849, %v102
  %v6928 = vadd.f32 %v6852, %v103
  %v6929 = vadd.f32 %v6853, %v104
  %v6930 = vadd.f32 %v6856, %v105
  %v6931 = vadd.f32 %v6857, %v106
  %v6932 = vadd.f32 %v6860, %v107
  %v6933 = vadd.f32 %v6861, %v108
  %v6934 = vadd.f32 %v6864, %v109
  %v6935 = vadd.f32 %v6865, %v110
  %v6936 = vadd.f32 %v6868, %v111
  %v6937 = vadd.f32 %v6869, %v112
  %v6938 = vadd.f32 %v6872, %v113
  %v6939 = vadd.f32 %v6873, %v114
  %v6940 = vmax.f32 %v6876, 0.0
  %v6941 = vmax.f32 %v6877, 0.0
  %v6942 = vmax.f32 %v6878, 0.0
  %v6943 = vmax.f32 %v6879, 0.0
  %v6944 = vmax.f32 %v6880, 0.0
  %v6945 = vmax.f32 %v6881, 0.0
  %v6946 = vmax.f32 %v6882, 0.0
  %v6947 = vmax.f32 %v6883, 0.0
  %v6948 = vmax.f32 %v6884, 0.0
  %v6949 = vmax.f32 %v6885, 0.0
  %v6950 = vmax.f32 %v6886, 0.0
  %v6951 = vmax.f32 %v6887, 0.0
  %v6952 = vmax.f32 %v6888, 0.0
  %v6953 = vmax.f32 %v6889, 0.0
  %v6954 = vmax.f32 %v6890, 0.0
  %v6955 = vmax.f32 %v6891, 0.0
  %v6956 = vmax.f32 %v6892, 0.0
  %v6957 = vmax.f32 %v6893, 0.0
  %v6958 = vmax.f32 %v6894, 0.0
  %v6959 = vmax.f32 %v6895, 0.0
  %v6960 = vmax.f32 %v6896, 0.0
  %v6961 = vmax.f32 %v6897, 0.0
  %v6962 = vmax.f32 %v6898, 0.0
  %v6963 = vmax.f32 %v6899, 0.0
  %v6964 = vmax.f32 %v6900, 0.0
  %v6965 = vmax.f32 %v6901, 0.0
  %v6966 = vmax.f32 %v6902, 0.0
  %v6967 = vmax.f32 %v6903, 0.0
  %v6968 = vmax.f32 %v6904, 0.0
  %v6969 = vmax.f32 %v6905, 0.0
  %v6970 = vmax.f32 %v6906, 0.0
  %v6971 = vmax.f32 %v6907, 0.0
  %v6972 = vmax.f32 %v6908, 0.0
  %v6973 = vmax.f32 %v6909, 0.0
  %v6974 = vmax.f32 %v6910, 0.0
  %v6975 = vmax.f32 %v6911, 0.0
  %v6976 = vmax.f32 %v6912, 0.0
  %v6977 = vmax.f32 %v6913, 0.0
  %v6978 = vmax.f32 %v6914, 0.0
  %v6979 = vmax.f32 %v6915, 0.0
  %v6980 = vmax.f32 %v6916, 0.0
  %v6981 = vmax.f32 %v6917, 0.0
  %v6982 = vmax.f32 %v6918, 0.0
  %v6983 = vmax.f32 %v6919, 0.0
  %v6984 = vmax.f32 %v6920, 0.0
  %v6985 = vmax.f32 %v6921, 0.0
  %v6986 = vmax.f32 %v6922, 0.0
  %v6987 = vmax.f32 %v6923, 0.0
  %v6988 = vmax.f32 %v6924, 0.0
  %v6989 = vmax.f32 %v6925, 0.0
  %v6990 = vmax.f32 %v6926, 0.0
  %v6991 = vmax.f32 %v6927, 0.0
  %v6992 = vmax.f32 %v6928, 0.0
  %v6993 = vmax.f32 %v6929, 0.0
  %v6994 = vmax.f32 %v6930, 0.0
  %v6995 = vmax.f32 %v6931, 0.0
  %v6996 = vmax.f32 %v6932, 0.0
  %v6997 = vmax.f32 %v6933, 0.0
  %v6998 = vmax.f32 %v6934, 0.0
  %v6999 = vmax.f32 %v6935, 0.0
  %v7000 = vmax.f32 %v6936, 0.0
  %v7001 = vmax.f32 %v6937, 0.0
  %v7002 = vmax.f32 %v6938, 0.0
  %v7003 = vmax.f32 %v6939, 0.0
  %7004 = vst [vmem:[%s10] sm:$0xff] %v6940
  %7005 = vst [vmem:[%s10 + $0x8] sm:$0xff] %v6941
  %7006 = vst [vmem:[%s10 + $0x10] sm:$0xff] %v6942
  %7007 = vst [vmem:[%s10 + $0x18] sm:$0xff] %v6943
  %7008 = vst [vmem:[%s10 + $0x20] sm:$0xff] %v6944
  %7009 = vst [vmem:[%s10 + $0x28] sm:$0xff] %v6945
  %7010 = vst [vmem:[%s10 + $0x30] sm:$0xff] %v6946
  %7011 = vst [vmem:[%s10 + $0x38] sm:$0xff] %v6947
  %7012 = vst [vmem:[%s10 + $0x40] sm:$0xff] %v6948
  %7013 = vst [vmem:[%s10 + $0x48] sm:$0xff] %v6949
  %7014 = vst [vmem:[%s10 + $0x50] sm:$0xff] %v6950
  %7015 = vst [vmem:[%s10 + $0x58] sm:$0xff] %v6951
  %7016 = vst [vmem:[%s10 + $0x60] sm:$0xff] %v6952
  %7017 = vst [vmem:[%s10 + $0x68] sm:$0xff] %v6953
  %7018 = vst [vmem:[%s10 + $0x70] sm:$0xff] %v6954
  %7019 = vst [vmem:[%s10 + $0x78] sm:$0xff] %v6955
  %7020 = vst [vmem:[%s10 + $0x80] sm:$0xff] %v6956
  %7021 = vst [vmem:[%s10 + $0x88] sm:$0xff] %v6957
  %7022 = vst [vmem:[%s10 + $0x90] sm:$0xff] %v6958
  %7023 = vst [vmem:[%s10 + $0x98] sm:$0xff] %v6959
  %7024 = vst [vmem:[%s10 + $0xa0] sm:$0xff] %v6960
  %7025 = vst [vmem:[%s10 + $0xa8] sm:$0xff] %v6961
  %7026 = vst [vmem:[%s10 + $0xb0] sm:$0xff] %v6962
  %7027 = vst [vmem:[%s10 + $0xb8] sm:$0xff] %v6963
  %7028 = vst [vmem:[%s10 + $0xc0] sm:$0xff] %v6964
  %7029 = vst [vmem:[%s10 + $0xc8] sm:$0xff] %v6965
  %7030 = vst [vmem:[%s10 + $0xd0] sm:$0xff] %v6966
  %7031 = vst [vmem:[%s10 + $0xd8] sm:$0xff] %v6967
  %7032 = vst [vmem:[%s10 + $0xe0] sm:$0xff] %v6968
  %7033 = vst [vmem:[%s10 + $0xe8] sm:$0xff] %v6969
  %7034 = vst [vmem:[%s10 + $0xf0] sm:$0xff] %v6970
  %7035 = vst [vmem:[%s10 + $0xf8] sm:$0xff] %v6971
  %7036 = vst [vmem:[%s10 + $0x100] sm:$0xff] %v6972
  %7037 = vst [vmem:[%s10 + $0x108] sm:$0xff] %v6973
  %7038 = vst [vmem:[%s10 + $0x110] sm:$0xff] %v6974
  %7039 = vst [vmem:[%s10 + $0x118] sm:$0xff] %v6975
  %7040 = vst [vmem:[%s10 + $0x120] sm:$0xff] %v6976
  %7041 = vst [vmem:[%s10 + $0x128] sm:$0xff] %v6977
  %7042 = vst [vmem:[%s10 + $0x130] sm:$0xff] %v6978
  %7043 = vst [vmem:[%s10 + $0x138] sm:$0xff] %v6979
  %7044 = vst [vmem:[%s10 + $0x140] sm:$0xff] %v6980
  %7045 = vst [vmem:[%s10 + $0x148] sm:$0xff] %v6981
  %7046 = vst [vmem:[%s10 + $0x150] sm:$0xff] %v6982
  %7047 = vst [vmem:[%s10 + $0x158] sm:$0xff] %v6983
  %7048 = vst [vmem:[%s10 + $0x160] sm:$0xff] %v6984
  %7049 = vst [vmem:[%s10 + $0x168] sm:$0xff] %v6985
  %7050 = vst [vmem:[%s10 + $0x170] sm:$0xff] %v6986
  %7051 = vst [vmem:[%s10 + $0x178] sm:$0xff] %v6987
  %7052 = vst [vmem:[%s10 + $0x180] sm:$0xff] %v6988
  %7053 = vst [vmem:[%s10 + $0x188] sm:$0xff] %v6989
  %7054 = vst [vmem:[%s10 + $0x190] sm:$0xff] %v6990
  %7055 = vst [vmem:[%s10 + $0x198] sm:$0xff] %v6991
  %7056 = vst [vmem:[%s10 + $0x1a0] sm:$0xff] %v6992
  %7057 = vst [vmem:[%s10 + $0x1a8] sm:$0xff] %v6993
  %7058 = vst [vmem:[%s10 + $0x1b0] sm:$0xff] %v6994
  %7059 = vst [vmem:[%s10 + $0x1b8] sm:$0xff] %v6995
  %7060 = vst [vmem:[%s10 + $0x1c0] sm:$0xff] %v6996
  %7061 = vst [vmem:[%s10 + $0x1c8] sm:$0xff] %v6997
  %7062 = vst [vmem:[%s10 + $0x1d0] sm:$0xff] %v6998
  %7063 = vst [vmem:[%s10 + $0x1d8] sm:$0xff] %v6999
  %7064 = vst [vmem:[%s10 + $0x1e0] sm:$0xff] %v7000
  %7065 = vst [vmem:[%s10 + $0x1e8] sm:$0xff] %v7001
  %7066 = vst [vmem:[%s10 + $0x1f0] sm:$0xff] %v7002
  %7067 = vst [vmem:[%s10 + $0x1f8] sm:$0xff] %v7003
  %v7068 = vld [vmem:[%s228] sm:$0xff]
  %v7069 = vld [vmem:[%s228 + $0x8] sm:$0xff]
  %v7070 = vld [vmem:[%s228 + $0x10] sm:$0xff]
  %v7071 = vld [vmem:[%s228 + $0x18] sm:$0xff]
  %v7072 = vld [vmem:[%s228 + $0x20] sm:$0xff]
  %v7073 = vld [vmem:[%s228 + $0x28] sm:$0xff]
  %v7074 = vld [vmem:[%s228 + $0x30] sm:$0xff]
  %v7075 = vld [vmem:[%s228 + $0x38] sm:$0xff]
  %v7076 = vld [vmem:[%s228 + $0x40] sm:$0xff]
  %v7077 = vld [vmem:[%s228 + $0x48] sm:$0xff]
  %v7078 = vld [vmem:[%s228 + $0x50] sm:$0xff]
  %v7079 = vld [vmem:[%s228 + $0x58] sm:$0xff]
  %v7080 = vld [vmem:[%s228 + $0x60] sm:$0xff]
  %v7081 = vld [vmem:[%s228 + $0x68] sm:$0xff]
  %v7082 = vld [vmem:[%s228 + $0x70] sm:$0xff]
  %v7083 = vld [vmem:[%s228 + $0x78] sm:$0xff]
  %v7084 = vld [vmem:[%s228 + $0x80] sm:$0xff]
  %v7085 = vld [vmem:[%s228 + $0x88] sm:$0xff]
  %v7086 = vld [vmem:[%s228 + $0x90] sm:$0xff]
  %v7087 = vld [vmem:[%s228 + $0x98] sm:$0xff]
  %v7088 = vld [vmem:[%s228 + $0xa0] sm:$0xff]
  %v7089 = vld [vmem:[%s228 + $0xa8] sm:$0xff]
  %v7090 = vld [vmem:[%s228 + $0xb0] sm:$0xff]
  %v7091 = vld [vmem:[%s228 + $0xb8] sm:$0xff]
  %v7092 = vld [vmem:[%s228 + $0xc0] sm:$0xff]
  %v7093 = vld [vmem:[%s228 + $0xc8] sm:$0xff]
  %v7094 = vld [vmem:[%s228 + $0xd0] sm:$0xff]
  %v7095 = vld [vmem:[%s228 + $0xd8] sm:$0xff]
  %v7096 = vld [vmem:[%s228 + $0xe0] sm:$0xff]
  %v7097 = vld [vmem:[%s228 + $0xe8] sm:$0xff]
  %v7098 = vld [vmem:[%s228 + $0xf0] sm:$0xff]
  %v7099 = vld [vmem:[%s228 + $0xf8] sm:$0xff]
  %v7100 = vld [vmem:[%s228 + $0x100] sm:$0xff]
  %v7101 = vld [vmem:[%s228 + $0x108] sm:$0xff]
  %v7102 = vld [vmem:[%s228 + $0x110] sm:$0xff]
  %v7103 = vld [vmem:[%s228 + $0x118] sm:$0xff]
  %v7104 = vld [vmem:[%s228 + $0x120] sm:$0xff]
  %v7105 = vld [vmem:[%s228 + $0x128] sm:$0xff]
  %v7106 = vld [vmem:[%s228 + $0x130] sm:$0xff]
  %v7107 = vld [vmem:[%s228 + $0x138] sm:$0xff]
  %v7108 = vld [vmem:[%s228 + $0x140] sm:$0xff]
  %v7109 = vld [vmem:[%s228 + $0x148] sm:$0xff]
  %v7110 = vld [vmem:[%s228 + $0x150] sm:$0xff]
  %v7111 = vld [vmem:[%s228 + $0x158] sm:$0xff]
  %v7112 = vld [vmem:[%s228 + $0x160] sm:$0xff]
  %v7113 = vld [vmem:[%s228 + $0x168] sm:$0xff]
  %v7114 = vld [vmem:[%s228 + $0x170] sm:$0xff]
  %v7115 = vld [vmem:[%s228 + $0x178] sm:$0xff]
  %v7116 = vld [vmem:[%s228 + $0x180] sm:$0xff]
  %v7117 = vld [vmem:[%s228 + $0x188] sm:$0xff]
  %v7118 = vld [vmem:[%s228 + $0x190] sm:$0xff]
  %v7119 = vld [vmem:[%s228 + $0x198] sm:$0xff]
  %v7120 = vld [vmem:[%s228 + $0x1a0] sm:$0xff]
  %v7121 = vld [vmem:[%s228 + $0x1a8] sm:$0xff]
  %v7122 = vld [vmem:[%s228 + $0x1b0] sm:$0xff]
  %v7123 = vld [vmem:[%s228 + $0x1b8] sm:$0xff]
  %v7124 = vld [vmem:[%s228 + $0x1c0] sm:$0xff]
  %v7125 = vld [vmem:[%s228 + $0x1c8] sm:$0xff]
  %v7126 = vld [vmem:[%s228 + $0x1d0] sm:$0xff]
  %v7127 = vld [vmem:[%s228 + $0x1d8] sm:$0xff]
  %v7128 = vld [vmem:[%s228 + $0x1e0] sm:$0xff]
  %v7129 = vld [vmem:[%s228 + $0x1e8] sm:$0xff]
  %v7130 = vld [vmem:[%s228 + $0x1f0] sm:$0xff]
  %v7131 = vld [vmem:[%s228 + $0x1f8] sm:$0xff]
  %v7132 = vadd.f32 %v6750, %v7068
  %v7133 = vadd.f32 %v6751, %v7069
  %v7134 = vadd.f32 %v6754, %v7070
  %v7135 = vadd.f32 %v6755, %v7071
  %v7136 = vadd.f32 %v6758, %v7072
  %v7137 = vadd.f32 %v6759, %v7073
  %v7138 = vadd.f32 %v6762, %v7074
  %v7139 = vadd.f32 %v6763, %v7075
  %v7140 = vadd.f32 %v6766, %v7076
  %v7141 = vadd.f32 %v6767, %v7077
  %v7142 = vadd.f32 %v6770, %v7078
  %v7143 = vadd.f32 %v6771, %v7079
  %v7144 = vadd.f32 %v6774, %v7080
  %v7145 = vadd.f32 %v6775, %v7081
  %v7146 = vadd.f32 %v6778, %v7082
  %v7147 = vadd.f32 %v6779, %v7083
  %v7148 = vadd.f32 %v6782, %v7084
  %v7149 = vadd.f32 %v6783, %v7085
  %v7150 = vadd.f32 %v6786, %v7086
  %v7151 = vadd.f32 %v6787, %v7087
  %v7152 = vadd.f32 %v6790, %v7088
  %v7153 = vadd.f32 %v6791, %v7089
  %v7154 = vadd.f32 %v6794, %v7090
  %v7155 = vadd.f32 %v6795, %v7091
  %v7156 = vadd.f32 %v6798, %v7092
  %v7157 = vadd.f32 %v6799, %v7093
  %v7158 = vadd.f32 %v6802, %v7094
  %v7159 = vadd.f32 %v6803, %v7095
  %v7160 = vadd.f32 %v6806, %v7096
  %v7161 = vadd.f32 %v6807, %v7097
  %v7162 = vadd.f32 %v6810, %v7098
  %v7163 = vadd.f32 %v6811, %v7099
  %v7164 = vadd.f32 %v6814, %v7100
  %v7165 = vadd.f32 %v6815, %v7101
  %v7166 = vadd.f32 %v6818, %v7102
  %v7167 = vadd.f32 %v6819, %v7103
  %v7168 = vadd.f32 %v6822, %v7104
  %v7169 = vadd.f32 %v6823, %v7105
  %v7170 = vadd.f32 %v6826, %v7106
  %v7171 = vadd.f32 %v6827, %v7107
  %v7172 = vadd.f32 %v6830, %v7108
  %v7173 = vadd.f32 %v6831, %v7109
  %v7174 = vadd.f32 %v6834, %v7110
  %v7175 = vadd.f32 %v6835, %v7111
  %v7176 = vadd.f32 %v6838, %v7112
  %v7177 = vadd.f32 %v6839, %v7113
  %v7178 = vadd.f32 %v6842, %v7114
  %v7179 = vadd.f32 %v6843, %v7115
  %v7180 = vadd.f32 %v6846, %v7116
  %v7181 = vadd.f32 %v6847, %v7117
  %v7182 = vadd.f32 %v6850, %v7118
  %v7183 = vadd.f32 %v6851, %v7119
  %v7184 = vadd.f32 %v6854, %v7120
  %v7185 = vadd.f32 %v6855, %v7121
  %v7186 = vadd.f32 %v6858, %v7122
  %v7187 = vadd.f32 %v6859, %v7123
  %v7188 = vadd.f32 %v6862, %v7124
  %v7189 = vadd.f32 %v6863, %v7125
  %v7190 = vadd.f32 %v6866, %v7126
  %v7191 = vadd.f32 %v6867, %v7127
  %v7192 = vadd.f32 %v6870, %v7128
  %v7193 = vadd.f32 %v6871, %v7129
  %v7194 = vadd.f32 %v6874, %v7130
  %v7195 = vadd.f32 %v6875, %v7131
  %v7196 = vmax.f32 %v7132, 0.0
  %v7197 = vmax.f32 %v7133, 0.0
  %v7198 = vmax.f32 %v7134, 0.0
  %v7199 = vmax.f32 %v7135, 0.0
  %v7200 = vmax.f32 %v7136, 0.0
  %v7201 = vmax.f32 %v7137, 0.0
  %v7202 = vmax.f32 %v7138, 0.0
  %v7203 = vmax.f32 %v7139, 0.0
  %v7204 = vmax.f32 %v7140, 0.0
  %v7205 = vmax.f32 %v7141, 0.0
  %v7206 = vmax.f32 %v7142, 0.0
  %v7207 = vmax.f32 %v7143, 0.0
  %v7208 = vmax.f32 %v7144, 0.0
  %v7209 = vmax.f32 %v7145, 0.0
  %v7210 = vmax.f32 %v7146, 0.0
  %v7211 = vmax.f32 %v7147, 0.0
  %v7212 = vmax.f32 %v7148, 0.0
  %v7213 = vmax.f32 %v7149, 0.0
  %v7214 = vmax.f32 %v7150, 0.0
  %v7215 = vmax.f32 %v7151, 0.0
  %v7216 = vmax.f32 %v7152, 0.0
  %v7217 = vmax.f32 %v7153, 0.0
  %v7218 = vmax.f32 %v7154, 0.0
  %v7219 = vmax.f32 %v7155, 0.0
  %v7220 = vmax.f32 %v7156, 0.0
  %v7221 = vmax.f32 %v7157, 0.0
  %v7222 = vmax.f32 %v7158, 0.0
  %v7223 = vmax.f32 %v7159, 0.0
  %v7224 = vmax.f32 %v7160, 0.0
  %v7225 = vmax.f32 %v7161, 0.0
  %v7226 = vmax.f32 %v7162, 0.0
  %v7227 = vmax.f32 %v7163, 0.0
  %v7228 = vmax.f32 %v7164, 0.0
  %v7229 = vmax.f32 %v7165, 0.0
  %v7230 = vmax.f32 %v7166, 0.0
  %v7231 = vmax.f32 %v7167, 0.0
  %v7232 = vmax.f32 %v7168, 0.0
  %v7233 = vmax.f32 %v7169, 0.0
  %v7234 = vmax.f32 %v7170, 0.0
  %v7235 = vmax.f32 %v7171, 0.0
  %v7236 = vmax.f32 %v7172, 0.0
  %v7237 = vmax.f32 %v7173, 0.0
  %v7238 = vmax.f32 %v7174, 0.0
  %v7239 = vmax.f32 %v7175, 0.0
  %v7240 = vmax.f32 %v7176, 0.0
  %v7241 = vmax.f32 %v7177, 0.0
  %v7242 = vmax.f32 %v7178, 0.0
  %v7243 = vmax.f32 %v7179, 0.0
  %v7244 = vmax.f32 %v7180, 0.0
  %v7245 = vmax.f32 %v7181, 0.0
  %v7246 = vmax.f32 %v7182, 0.0
  %v7247 = vmax.f32 %v7183, 0.0
  %v7248 = vmax.f32 %v7184, 0.0
  %v7249 = vmax.f32 %v7185, 0.0
  %v7250 = vmax.f32 %v7186, 0.0
  %v7251 = vmax.f32 %v7187, 0.0
  %v7252 = vmax.f32 %v7188, 0.0
  %v7253 = vmax.f32 %v7189, 0.0
  %v7254 = vmax.f32 %v7190, 0.0
  %v7255 = vmax.f32 %v7191, 0.0
  %v7256 = vmax.f32 %v7192, 0.0
  %v7257 = vmax.f32 %v7193, 0.0
  %v7258 = vmax.f32 %v7194, 0.0
  %v7259 = vmax.f32 %v7195, 0.0
  %s7260 = scalar_lea.vmem %s10, 512
  %7261 = vst [vmem:[%s7260] sm:$0xff] %v7196
  %7262 = vst [vmem:[%s7260 + $0x8] sm:$0xff] %v7197
  %7263 = vst [vmem:[%s7260 + $0x10] sm:$0xff] %v7198
  %7264 = vst [vmem:[%s7260 + $0x18] sm:$0xff] %v7199
  %7265 = vst [vmem:[%s7260 + $0x20] sm:$0xff] %v7200
  %7266 = vst [vmem:[%s7260 + $0x28] sm:$0xff] %v7201
  %7267 = vst [vmem:[%s7260 + $0x30] sm:$0xff] %v7202
  %7268 = vst [vmem:[%s7260 + $0x38] sm:$0xff] %v7203
  %7269 = vst [vmem:[%s7260 + $0x40] sm:$0xff] %v7204
  %7270 = vst [vmem:[%s7260 + $0x48] sm:$0xff] %v7205
  %7271 = vst [vmem:[%s7260 + $0x50] sm:$0xff] %v7206
  %7272 = vst [vmem:[%s7260 + $0x58] sm:$0xff] %v7207
  %7273 = vst [vmem:[%s7260 + $0x60] sm:$0xff] %v7208
  %7274 = vst [vmem:[%s7260 + $0x68] sm:$0xff] %v7209
  %7275 = vst [vmem:[%s7260 + $0x70] sm:$0xff] %v7210
  %7276 = vst [vmem:[%s7260 + $0x78] sm:$0xff] %v7211
  %7277 = vst [vmem:[%s7260 + $0x80] sm:$0xff] %v7212
  %7278 = vst [vmem:[%s7260 + $0x88] sm:$0xff] %v7213
  %7279 = vst [vmem:[%s7260 + $0x90] sm:$0xff] %v7214
  %7280 = vst [vmem:[%s7260 + $0x98] sm:$0xff] %v7215
  %7281 = vst [vmem:[%s7260 + $0xa0] sm:$0xff] %v7216
  %7282 = vst [vmem:[%s7260 + $0xa8] sm:$0xff] %v7217
  %7283 = vst [vmem:[%s7260 + $0xb0] sm:$0xff] %v7218
  %7284 = vst [vmem:[%s7260 + $0xb8] sm:$0xff] %v7219
  %7285 = vst [vmem:[%s7260 + $0xc0] sm:$0xff] %v7220
  %7286 = vst [vmem:[%s7260 + $0xc8] sm:$0xff] %v7221
  %7287 = vst [vmem:[%s7260 + $0xd0] sm:$0xff] %v7222
  %7288 = vst [vmem:[%s7260 + $0xd8] sm:$0xff] %v7223
  %7289 = vst [vmem:[%s7260 + $0xe0] sm:$0xff] %v7224
  %7290 = vst [vmem:[%s7260 + $0xe8] sm:$0xff] %v7225
  %7291 = vst [vmem:[%s7260 + $0xf0] sm:$0xff] %v7226
  %7292 = vst [vmem:[%s7260 + $0xf8] sm:$0xff] %v7227
  %7293 = vst [vmem:[%s7260 + $0x100] sm:$0xff] %v7228
  %7294 = vst [vmem:[%s7260 + $0x108] sm:$0xff] %v7229
  %7295 = vst [vmem:[%s7260 + $0x110] sm:$0xff] %v7230
  %7296 = vst [vmem:[%s7260 + $0x118] sm:$0xff] %v7231
  %7297 = vst [vmem:[%s7260 + $0x120] sm:$0xff] %v7232
  %7298 = vst [vmem:[%s7260 + $0x128] sm:$0xff] %v7233
  %7299 = vst [vmem:[%s7260 + $0x130] sm:$0xff] %v7234
  %7300 = vst [vmem:[%s7260 + $0x138] sm:$0xff] %v7235
  %7301 = vst [vmem:[%s7260 + $0x140] sm:$0xff] %v7236
  %7302 = vst [vmem:[%s7260 + $0x148] sm:$0xff] %v7237
  %7303 = vst [vmem:[%s7260 + $0x150] sm:$0xff] %v7238
  %7304 = vst [vmem:[%s7260 + $0x158] sm:$0xff] %v7239
  %7305 = vst [vmem:[%s7260 + $0x160] sm:$0xff] %v7240
  %7306 = vst [vmem:[%s7260 + $0x168] sm:$0xff] %v7241
  %7307 = vst [vmem:[%s7260 + $0x170] sm:$0xff] %v7242
  %7308 = vst [vmem:[%s7260 + $0x178] sm:$0xff] %v7243
  %7309 = vst [vmem:[%s7260 + $0x180] sm:$0xff] %v7244
  %7310 = vst [vmem:[%s7260 + $0x188] sm:$0xff] %v7245
  %7311 = vst [vmem:[%s7260 + $0x190] sm:$0xff] %v7246
  %7312 = vst [vmem:[%s7260 + $0x198] sm:$0xff] %v7247
  %7313 = vst [vmem:[%s7260 + $0x1a0] sm:$0xff] %v7248
  %7314 = vst [vmem:[%s7260 + $0x1a8] sm:$0xff] %v7249
  %7315 = vst [vmem:[%s7260 + $0x1b0] sm:$0xff] %v7250
  %7316 = vst [vmem:[%s7260 + $0x1b8] sm:$0xff] %v7251
  %7317 = vst [vmem:[%s7260 + $0x1c0] sm:$0xff] %v7252
  %7318 = vst [vmem:[%s7260 + $0x1c8] sm:$0xff] %v7253
  %7319 = vst [vmem:[%s7260 + $0x1d0] sm:$0xff] %v7254
  %7320 = vst [vmem:[%s7260 + $0x1d8] sm:$0xff] %v7255
  %7321 = vst [vmem:[%s7260 + $0x1e0] sm:$0xff] %v7256
  %7322 = vst [vmem:[%s7260 + $0x1e8] sm:$0xff] %v7257
  %7323 = vst [vmem:[%s7260 + $0x1f0] sm:$0xff] %v7258
  %7324 = vst [vmem:[%s7260 + $0x1f8] sm:$0xff] %v7259
  // Predicated region
  $region42: #{bottleneck_forward.1} parent=0 // pred_check
    _
  $region43: #{bottleneck_forward.1} parent=0 // pred_check_branch
    %7326 = sbr.rel (0) target = $region45
  $region44: #{bottleneck_forward.1} parent=0 // pred_region
    _
  $region45: #{bottleneck_forward.1} parent=0 // pred_fallthru
    _
  // Predicated region
  $region46: #{bottleneck_forward.1} parent=0 // pred_check
    _
  $region47: #{bottleneck_forward.1} parent=0 // pred_check_branch
    %7328 = sbr.rel (0) target = $region49
  $region48: #{bottleneck_forward.1} parent=0 // pred_region
    _
  $region49: #{bottleneck_forward.1} parent=0 // pred_fallthru
    _

</llo_original>
